<compile_context>
chip_gen: v7x
topology: tpu7x:2x2x1
jax: 0.10.0
libtpu: 0.0.40
codegen_flags: <defaults>
</compile_context>

<pallas_src>
import numpy as np
import jax
import jax.numpy as jnp
from jax.experimental import pallas as pl
from jax.experimental.pallas import tpu as pltpu


# Query-tile cap: 512 lanes keeps double-buffered (res, q, out) tiles tiny even
# at production channel counts, yet is large enough to amortize per-step
# pipeline overhead (~85% of HBM roofline on v5e/v6e/v7x).
_MAX_TILE_NQ = 512


def _choose_tile(n: int, max_tile: int = _MAX_TILE_NQ) -> int:
    """Largest tile <= max_tile that divides n and is lane-aligned (mult of 128),
    falling back to the full extent (always legal as a BlockSpec dim)."""
    if n <= max_tile:
        return n
    t = max_tile - (max_tile % 128)
    while t >= 128:
        if n % t == 0:
            return t
        t -= 128
    return n


def _pool_kv(kv, stride):
    """Stride x stride average pooling (reference-point sampling of kv)."""
    B, C, H, W = kv.shape
    assert H % stride == 0 and W % stride == 0, "kv spatial dims must divide the stride"
    Hd, Wd = H // stride, W // stride
    return kv.reshape(B, C, Hd, stride, Wd, stride).mean(axis=(3, 5))


# ---------------------------------------------------------------------------
# Fused cross-attention + residual-update kernel.
# ---------------------------------------------------------------------------
def _make_attn_kernel(n_heads: int, head_dim: int, scale: float, sign: float):
    def kernel(res_ref, q_ref, kv_ref,
               wqt_ref, bq_ref, wk_ref, bk_ref,
               wvt_ref, bv_ref, wot_ref, bo_ref, out_ref):
        f32 = jnp.float32

        # Token-major query tile; channel-major keys; token-major values.
        q_t = jnp.transpose(q_ref[...].astype(f32))            # (T,  Cq)
        kv = kv_ref[...].astype(f32)                            # (Ckv, Nk)
        kv_t = jnp.transpose(kv)                                 # (Nk, Ckv)

        # 1x1-conv projections (all standard (M,K)x(K,N) matmuls).
        q_tok = jnp.dot(q_t, wqt_ref[...],
                        preferred_element_type=f32) + bq_ref[...]   # (T,  Ckv)
        k_ch = jnp.dot(wk_ref[...], kv,
                       preferred_element_type=f32) + bk_ref[...]    # (Ckv, Nk)
        v_tok = jnp.dot(kv_t, wvt_ref[...],
                        preferred_element_type=f32) + bv_ref[...]   # (Nk, Ckv)

        wot = wot_ref[...]                                           # (Ckv, Cq)
        acc = bo_ref[...]                                            # (1,  Cq) -> broadcasts
        for h in range(n_heads):
            lo, hi = h * head_dim, (h + 1) * head_dim
            s = jnp.dot(q_tok[:, lo:hi], k_ch[lo:hi, :],
                        preferred_element_type=f32) * scale          # (T, Nk)
            s = s - jnp.max(s, axis=-1, keepdims=True)
            p = jnp.exp(s)
            p = p / jnp.sum(p, axis=-1, keepdims=True)
            o_h = jnp.dot(p, v_tok[:, lo:hi],
                          preferred_element_type=f32)                # (T, dh)
            acc = acc + jnp.dot(o_h, wot[lo:hi, :],
                                preferred_element_type=f32)          # (T, Cq)

        y = jnp.transpose(acc)                                       # (Cq, T)
        out_ref[...] = (res_ref[...].astype(f32) + sign * y).astype(out_ref.dtype)

    return kernel


def _cross_attention_pallas(res, q, kv, wq_t, bq_row, wk, bk_col,
                            wv_t, bv_row, wo_t, bo_row, *, n_heads, sign):
    """out[b, :, n] = res[b, :, n] + sign * MHA(q[b], kv[b])[:, n]."""
    B, Cq, Nq = q.shape
    _, Ckv, Nk = kv.shape
    dh = Ckv // n_heads
    scale = float(dh) ** -0.5

    tile = _choose_tile(Nq)
    grid = (B, Nq // tile)

    kernel = _make_attn_kernel(n_heads, dh, scale, float(sign))

    def const2(shape):
        return pl.BlockSpec(shape, lambda b, t: (0, 0))

    big_spec = pl.BlockSpec((None, Cq, tile), lambda b, t: (b, 0, t))
    in_specs = [
        big_spec,                                                  # res tile
        big_spec,                                                  # q tile
        pl.BlockSpec((None, Ckv, Nk), lambda b, t: (b, 0, 0)),     # pooled kv (small)
        const2(wq_t.shape), const2(bq_row.shape),
        const2(wk.shape), const2(bk_col.shape),
        const2(wv_t.shape), const2(bv_row.shape),
        const2(wo_t.shape), const2(bo_row.shape),
    ]
    out_spec = pl.BlockSpec((None, Cq, tile), lambda b, t: (b, 0, t))

    return pl.pallas_call(
        kernel,
        out_shape=jax.ShapeDtypeStruct((B, Cq, Nq), q.dtype),
        grid=grid,
        in_specs=in_specs,
        out_specs=out_spec,
        compiler_params=pltpu.CompilerParams(
            dimension_semantics=("parallel", "parallel"),
            vmem_limit_bytes=32 * 1024 * 1024,
        ),
    )(res, q, kv, wq_t, bq_row, wk, bk_col, wv_t, bv_row, wo_t, bo_row)


# ---------------------------------------------------------------------------
# DAT cross-attention block (simplified DAttentionBaseline) and AttentionBU.
# ---------------------------------------------------------------------------
class DATCrossAttentionPallas:
    """Multi-head cross attention: queries from a fine level, keys/values from a
    coarser level sampled on a stride-4 reference grid."""

    def __init__(self, q_channels, kv_channels, n_heads, stride, key):
        assert kv_channels % n_heads == 0 and q_channels % n_heads == 0
        self.Cq, self.Ckv = q_channels, kv_channels
        self.n_heads, self.stride = n_heads, stride

        ks = jax.random.split(key, 8)

        def w(k, o, i):
            return jax.random.normal(k, (o, i), jnp.float32) * (float(i) ** -0.5)

        def b(k, o):
            return 0.1 * jax.random.normal(k, (o, 1), jnp.float32)

        self.wq = w(ks[0], kv_channels, q_channels)    # proj_q : Cq  -> Ckv
        self.wk = w(ks[1], kv_channels, kv_channels)   # proj_k : Ckv -> Ckv
        self.wv = w(ks[2], kv_channels, kv_channels)   # proj_v : Ckv -> Ckv
        self.wo = w(ks[3], q_channels, kv_channels)    # proj_out: Ckv -> Cq
        self.bq, self.bk = b(ks[4], kv_channels), b(ks[5], kv_channels)
        self.bv, self.bo = b(ks[6], kv_channels), b(ks[7], q_channels)

        # Kernel-friendly (pre-transposed / row-vector) copies — tiny, built once.
        self.wq_t, self.wv_t, self.wo_t = self.wq.T, self.wv.T, self.wo.T
        self.bq_row = self.bq.reshape(1, -1)
        self.bv_row = self.bv.reshape(1, -1)
        self.bo_row = self.bo.reshape(1, -1)
        self.bk_col = self.bk                           # column bias for channel-major K

    def __call__(self, q, kv, res_tail, sign):
        B, Cq, Hq, Wq = q.shape
        _, Ckv, _, _ = kv.shape
        assert Cq == self.Cq and Ckv == self.Ckv

        kv_ds = _pool_kv(kv, self.stride)                       # (B, Ckv, Hd, Wd)
        kv_flat = kv_ds.reshape(B, Ckv, -1)                     # (B, Ckv, Nk)
        q_flat = q.reshape(B, Cq, Hq * Wq)                      # lane-dense, no transpose
        res_flat = res_tail.reshape(B, Cq, Hq * Wq)

        out = _cross_attention_pallas(
            res_flat, q_flat, kv_flat,
            self.wq_t, self.bq_row, self.wk, self.bk_col,
            self.wv_t, self.bv_row, self.wo_t, self.bo_row,
            n_heads=self.n_heads, sign=sign)
        return out.reshape(B, Cq, Hq, Wq)


def _attention_block_ref(block, q, kv, res_tail, sign):
    """Pure-JAX reference of one block (same math as the Pallas kernel)."""
    B, Cq, Hq, Wq = q.shape
    kvf = _pool_kv(kv, block.stride).reshape(B, block.Ckv, -1)
    qf = q.reshape(B, Cq, Hq * Wq)

    Q = jnp.einsum('oc,bcn->bon', block.wq, qf) + block.bq[None]
    K = jnp.einsum('oc,bcn->bon', block.wk, kvf) + block.bk[None]
    V = jnp.einsum('oc,bcn->bon', block.wv, kvf) + block.bv[None]

    nh, dh = block.n_heads, block.Ckv // block.n_heads
    Qh, Kh, Vh = (x.reshape(B, nh, dh, -1) for x in (Q, K, V))
    S = jnp.einsum('bhdq,bhdk->bhqk', Qh, Kh) * (float(dh) ** -0.5)
    P = jax.nn.softmax(S, axis=-1)
    O = jnp.einsum('bhqk,bhdk->bhdq', P, Vh).reshape(B, block.Ckv, -1)
    y = jnp.einsum('oc,bcn->bon', block.wo, O) + block.bo[None]
    return res_tail + sign * y.reshape(B, Cq, Hq, Wq)


class AttentionBUPallas:
    """JAX/Pallas re-implementation of the PyTorch AttentionBU forward pass."""

    def __init__(self, variable_dims, use_all_channels=False, seed=0):
        self.use_all_channels = use_all_channels
        dims_rev = list(variable_dims)[::-1]

        keys = jax.random.split(jax.random.PRNGKey(seed),
                                max(1, len(dims_rev) * len(dims_rev)))
        self.blocks = []
        num = 0
        for i in range(len(dims_rev)):
            for j in range(i):
                q_c = dims_rev[i][-3] // 2
                kv_c = dims_rev[j][-3]
                if not self.use_all_channels:
                    assert dims_rev[i][-3] == dims_rev[j][-3]
                    kv_c = kv_c // 2
                self.blocks.append(DATCrossAttentionPallas(
                    q_channels=q_c, kv_channels=kv_c, n_heads=4, stride=4,
                    key=keys[num]))
                num += 1

    def _forward(self, hidden_variables, rev, block_apply):
        hv = list(hidden_variables)[::-1]
        results = []
        num = 0
        for i in range(len(hv)):
            c_i = hv[i].shape[1]
            q_c1 = c_i // 2
            q_c2 = c_i - q_c1
            res = hv[i]
            for j in range(i):
                q = hv[i][:, :q_c1]
                kv_c1 = hv[j].shape[1] // 2
                src = results[j] if rev else hv[j]
                kv = src if self.use_all_channels else src[:, :kv_c1]
                sign = -1.0 if rev else 1.0
                # attn is padded with zeros on the first q_c2 channels, so only
                # the last q_c1 channels of res are updated (fused in-kernel).
                new_tail = block_apply(self.blocks[num], q, kv, res[:, q_c2:], sign)
                res = jnp.concatenate([res[:, :q_c2], new_tail], axis=1)
                num += 1
            results.append(res)
        results = results[::-1]
        b = hidden_variables[0].shape[0]
        log_jac = jnp.zeros((len(hidden_variables), b), jnp.float32)
        return results, log_jac

    def __call__(self, hidden_variables, rev=False):
        return self._forward(hidden_variables, rev,
                             lambda blk, q, kv, tail, sg: blk(q, kv, tail, sg))

    def reference_forward(self, hidden_variables, rev=False):
        return self._forward(hidden_variables, rev, _attention_block_ref)


if __name__ == "__main__":
    # Three hierarchy levels (finest -> coarsest); equal channel counts as
    # required by the module when use_all_channels=False.
    variable_dims = [(16, 32, 32), (16, 16, 16), (16, 8, 8)]
    B = 2

    key = jax.random.PRNGKey(0)
    k1, k2, k3 = jax.random.split(key, 3)
    hidden = [jax.random.normal(k, (B, c, h, w), dtype=jnp.float32)
              for k, (c, h, w) in zip((k1, k2, k3), variable_dims)]

    mod = AttentionBUPallas(variable_dims, use_all_channels=False, seed=0)

    results, log_jac = mod(hidden, rev=False)
    results = [jax.block_until_ready(r) for r in results]
    log_jac = jax.block_until_ready(log_jac)

    results_ref, log_jac_ref = mod.reference_forward(hidden, rev=False)
    for r, rr in zip(results, results_ref):
        np.testing.assert_allclose(np.asarray(r), np.asarray(rr),
                                   rtol=2e-2, atol=2e-2)
    np.testing.assert_allclose(np.asarray(log_jac), np.asarray(log_jac_ref),
                               rtol=0, atol=1e-6)

    print("KERNEL_OK")
</pallas_src>

<mosaic_0001>
module attributes {stable_mosaic.version = 11 : i64} {
  func.func @kernel(%arg0: i32, %arg1: i32, %arg2: memref<1x8x256xf32, #tpu.memory_space<vmem>>, %arg3: memref<1x8x256xf32, #tpu.memory_space<vmem>>, %arg4: memref<1x8x4xf32, #tpu.memory_space<vmem>>, %arg5: memref<8x8xf32, #tpu.memory_space<vmem>>, %arg6: memref<1x8xf32, #tpu.memory_space<vmem>>, %arg7: memref<8x8xf32, #tpu.memory_space<vmem>>, %arg8: memref<8x1xf32, #tpu.memory_space<vmem>>, %arg9: memref<8x8xf32, #tpu.memory_space<vmem>>, %arg10: memref<1x8xf32, #tpu.memory_space<vmem>>, %arg11: memref<8x8xf32, #tpu.memory_space<vmem>>, %arg12: memref<1x8xf32, #tpu.memory_space<vmem>>, %arg13: memref<1x8x256xf32, #tpu.memory_space<vmem>>) attributes {dimension_semantics = [#tpu.dimension_semantics<parallel>, #tpu.dimension_semantics<parallel>], iteration_bounds = array<i64: 2, 1>, scalar_prefetch = 0 : i64, scratch_operands = 0 : i64, tpu.core_type = #tpu.core_type<tc>, window_params = [{transform_indices = @transform_0, window_bounds = array<i64: 1, 8, 256>}, {transform_indices = @transform_1, window_bounds = array<i64: 1, 8, 256>}, {transform_indices = @transform_2, window_bounds = array<i64: 1, 8, 4>}, {pipeline_mode = #tpu.pipeline_mode<synchronous>, transform_indices = @transform_3, window_bounds = array<i64: 8, 8>}, {pipeline_mode = #tpu.pipeline_mode<synchronous>, transform_indices = @transform_4, window_bounds = array<i64: 1, 8>}, {pipeline_mode = #tpu.pipeline_mode<synchronous>, transform_indices = @transform_5, window_bounds = array<i64: 8, 8>}, {pipeline_mode = #tpu.pipeline_mode<synchronous>, transform_indices = @transform_6, window_bounds = array<i64: 8, 1>}, {pipeline_mode = #tpu.pipeline_mode<synchronous>, transform_indices = @transform_7, window_bounds = array<i64: 8, 8>}, {pipeline_mode = #tpu.pipeline_mode<synchronous>, transform_indices = @transform_8, window_bounds = array<i64: 1, 8>}, {pipeline_mode = #tpu.pipeline_mode<synchronous>, transform_indices = @transform_9, window_bounds = array<i64: 8, 8>}, {pipeline_mode = #tpu.pipeline_mode<synchronous>, transform_indices = @transform_10, window_bounds = array<i64: 1, 8>}, {transform_indices = @transform_11, window_bounds = array<i64: 1, 8, 256>}]} {
    %c0 = arith.constant 0 : index
    %c0_0 = arith.constant 0 : index
    %c0_1 = arith.constant 0 : index
    %0 = vector.load %arg3[%c0, %c0_0, %c0_1] : memref<1x8x256xf32, #tpu.memory_space<vmem>>, vector<1x8x256xf32>
    %1 = vector.shape_cast %0 : vector<1x8x256xf32> to vector<8x256xf32>
    %2 = tpu.transpose %1, [1, 0] : vector<8x256xf32> -> vector<256x8xf32>
    %c0_2 = arith.constant 0 : index
    %c0_3 = arith.constant 0 : index
    %c0_4 = arith.constant 0 : index
    %3 = vector.load %arg4[%c0_2, %c0_3, %c0_4] : memref<1x8x4xf32, #tpu.memory_space<vmem>>, vector<1x8x4xf32>
    %4 = vector.shape_cast %3 : vector<1x8x4xf32> to vector<8x4xf32>
    %5 = tpu.transpose %4, [1, 0] : vector<8x4xf32> -> vector<4x8xf32>
    %c0_5 = arith.constant 0 : index
    %c0_6 = arith.constant 0 : index
    %6 = vector.load %arg5[%c0_5, %c0_6] : memref<8x8xf32, #tpu.memory_space<vmem>>, vector<8x8xf32>
    %cst = arith.constant dense<0.000000e+00> : vector<256x8xf32>
    %7 = tpu.matmul %2, %6, %cst {dimension_numbers = #tpu.dot_dimension_numbers<[1], [0], [0], [1], [0, 0, 1, 1], [], []>} : vector<256x8xf32>, vector<8x8xf32>, vector<256x8xf32> -> vector<256x8xf32>
    %c0_7 = arith.constant 0 : index
    %c0_8 = arith.constant 0 : index
    %8 = vector.load %arg6[%c0_7, %c0_8] : memref<1x8xf32, #tpu.memory_space<vmem>>, vector<1x8xf32>
    %9 = vector.broadcast %8 : vector<1x8xf32> to vector<256x8xf32>
    %10 = arith.addf %7, %9 : vector<256x8xf32>
    %c0_9 = arith.constant 0 : index
    %c0_10 = arith.constant 0 : index
    %11 = vector.load %arg7[%c0_9, %c0_10] : memref<8x8xf32, #tpu.memory_space<vmem>>, vector<8x8xf32>
    %cst_11 = arith.constant dense<0.000000e+00> : vector<8x4xf32>
    %12 = tpu.matmul %11, %4, %cst_11 {dimension_numbers = #tpu.dot_dimension_numbers<[1], [0], [0], [1], [0, 0, 1, 1], [], []>} : vector<8x8xf32>, vector<8x4xf32>, vector<8x4xf32> -> vector<8x4xf32>
    %c0_12 = arith.constant 0 : index
    %c0_13 = arith.constant 0 : index
    %13 = vector.load %arg8[%c0_12, %c0_13] : memref<8x1xf32, #tpu.memory_space<vmem>>, vector<8x1xf32>
    %14 = vector.broadcast %13 : vector<8x1xf32> to vector<8x4xf32>
    %15 = arith.addf %12, %14 : vector<8x4xf32>
    %c0_14 = arith.constant 0 : index
    %c0_15 = arith.constant 0 : index
    %16 = vector.load %arg9[%c0_14, %c0_15] : memref<8x8xf32, #tpu.memory_space<vmem>>, vector<8x8xf32>
    %cst_16 = arith.constant dense<0.000000e+00> : vector<4x8xf32>
    %17 = tpu.matmul %5, %16, %cst_16 {dimension_numbers = #tpu.dot_dimension_numbers<[1], [0], [0], [1], [0, 0, 1, 1], [], []>} : vector<4x8xf32>, vector<8x8xf32>, vector<4x8xf32> -> vector<4x8xf32>
    %c0_17 = arith.constant 0 : index
    %c0_18 = arith.constant 0 : index
    %18 = vector.load %arg10[%c0_17, %c0_18] : memref<1x8xf32, #tpu.memory_space<vmem>>, vector<1x8xf32>
    %19 = vector.broadcast %18 : vector<1x8xf32> to vector<4x8xf32>
    %20 = arith.addf %17, %19 : vector<4x8xf32>
    %c0_19 = arith.constant 0 : index
    %c0_20 = arith.constant 0 : index
    %21 = vector.load %arg11[%c0_19, %c0_20] : memref<8x8xf32, #tpu.memory_space<vmem>>, vector<8x8xf32>
    %c0_21 = arith.constant 0 : index
    %c0_22 = arith.constant 0 : index
    %22 = vector.load %arg12[%c0_21, %c0_22] : memref<1x8xf32, #tpu.memory_space<vmem>>, vector<1x8xf32>
    %23 = vector.extract_strided_slice %10 {offsets = [0, 0], sizes = [256, 2], strides = [1, 1]} : vector<256x8xf32> to vector<256x2xf32>
    %24 = vector.extract_strided_slice %15 {offsets = [0, 0], sizes = [2, 4], strides = [1, 1]} : vector<8x4xf32> to vector<2x4xf32>
    %cst_23 = arith.constant dense<0.000000e+00> : vector<256x4xf32>
    %25 = tpu.matmul %23, %24, %cst_23 {dimension_numbers = #tpu.dot_dimension_numbers<[1], [0], [0], [1], [0, 0, 1, 1], [], []>} : vector<256x2xf32>, vector<2x4xf32>, vector<256x4xf32> -> vector<256x4xf32>
    %cst_24 = arith.constant 0.707106769 : f32
    %26 = vector.broadcast %cst_24 : f32 to vector<256x4xf32>
    %27 = arith.mulf %25, %26 : vector<256x4xf32>
    %cst_25 = arith.constant dense<0xFF800000> : vector<256xf32>
    %28 = vector.multi_reduction <maximumf>, %27, %cst_25 [1] : vector<256x4xf32> to vector<256xf32>
    %29 = vector.shape_cast %28 : vector<256xf32> to vector<256x1xf32>
    %30 = vector.broadcast %29 : vector<256x1xf32> to vector<256x4xf32>
    %31 = arith.subf %27, %30 : vector<256x4xf32>
    %32 = math.exp %31 : vector<256x4xf32>
    %cst_26 = arith.constant dense<0.000000e+00> : vector<256xf32>
    %33 = vector.multi_reduction <add>, %32, %cst_26 [1] : vector<256x4xf32> to vector<256xf32>
    %34 = vector.shape_cast %33 : vector<256xf32> to vector<256x1xf32>
    %35 = vector.broadcast %34 : vector<256x1xf32> to vector<256x4xf32>
    %36 = arith.divf %32, %35 : vector<256x4xf32>
    %37 = vector.extract_strided_slice %20 {offsets = [0, 0], sizes = [4, 2], strides = [1, 1]} : vector<4x8xf32> to vector<4x2xf32>
    %cst_27 = arith.constant dense<0.000000e+00> : vector<256x2xf32>
    %38 = tpu.matmul %36, %37, %cst_27 {dimension_numbers = #tpu.dot_dimension_numbers<[1], [0], [0], [1], [0, 0, 1, 1], [], []>} : vector<256x4xf32>, vector<4x2xf32>, vector<256x2xf32> -> vector<256x2xf32>
    %39 = vector.extract_strided_slice %21 {offsets = [0, 0], sizes = [2, 8], strides = [1, 1]} : vector<8x8xf32> to vector<2x8xf32>
    %cst_28 = arith.constant dense<0.000000e+00> : vector<256x8xf32>
    %40 = tpu.matmul %38, %39, %cst_28 {dimension_numbers = #tpu.dot_dimension_numbers<[1], [0], [0], [1], [0, 0, 1, 1], [], []>} : vector<256x2xf32>, vector<2x8xf32>, vector<256x8xf32> -> vector<256x8xf32>
    %41 = vector.broadcast %22 : vector<1x8xf32> to vector<256x8xf32>
    %42 = arith.addf %41, %40 : vector<256x8xf32>
    %43 = vector.extract_strided_slice %10 {offsets = [0, 2], sizes = [256, 2], strides = [1, 1]} : vector<256x8xf32> to vector<256x2xf32>
    %44 = vector.extract_strided_slice %15 {offsets = [2, 0], sizes = [2, 4], strides = [1, 1]} : vector<8x4xf32> to vector<2x4xf32>
    %cst_29 = arith.constant dense<0.000000e+00> : vector<256x4xf32>
    %45 = tpu.matmul %43, %44, %cst_29 {dimension_numbers = #tpu.dot_dimension_numbers<[1], [0], [0], [1], [0, 0, 1, 1], [], []>} : vector<256x2xf32>, vector<2x4xf32>, vector<256x4xf32> -> vector<256x4xf32>
    %cst_30 = arith.constant 0.707106769 : f32
    %46 = vector.broadcast %cst_30 : f32 to vector<256x4xf32>
    %47 = arith.mulf %45, %46 : vector<256x4xf32>
    %cst_31 = arith.constant dense<0xFF800000> : vector<256xf32>
    %48 = vector.multi_reduction <maximumf>, %47, %cst_31 [1] : vector<256x4xf32> to vector<256xf32>
    %49 = vector.shape_cast %48 : vector<256xf32> to vector<256x1xf32>
    %50 = vector.broadcast %49 : vector<256x1xf32> to vector<256x4xf32>
    %51 = arith.subf %47, %50 : vector<256x4xf32>
    %52 = math.exp %51 : vector<256x4xf32>
    %cst_32 = arith.constant dense<0.000000e+00> : vector<256xf32>
    %53 = vector.multi_reduction <add>, %52, %cst_32 [1] : vector<256x4xf32> to vector<256xf32>
    %54 = vector.shape_cast %53 : vector<256xf32> to vector<256x1xf32>
    %55 = vector.broadcast %54 : vector<256x1xf32> to vector<256x4xf32>
    %56 = arith.divf %52, %55 : vector<256x4xf32>
    %57 = vector.extract_strided_slice %20 {offsets = [0, 2], sizes = [4, 2], strides = [1, 1]} : vector<4x8xf32> to vector<4x2xf32>
    %cst_33 = arith.constant dense<0.000000e+00> : vector<256x2xf32>
    %58 = tpu.matmul %56, %57, %cst_33 {dimension_numbers = #tpu.dot_dimension_numbers<[1], [0], [0], [1], [0, 0, 1, 1], [], []>} : vector<256x4xf32>, vector<4x2xf32>, vector<256x2xf32> -> vector<256x2xf32>
    %59 = vector.extract_strided_slice %21 {offsets = [2, 0], sizes = [2, 8], strides = [1, 1]} : vector<8x8xf32> to vector<2x8xf32>
    %cst_34 = arith.constant dense<0.000000e+00> : vector<256x8xf32>
    %60 = tpu.matmul %58, %59, %cst_34 {dimension_numbers = #tpu.dot_dimension_numbers<[1], [0], [0], [1], [0, 0, 1, 1], [], []>} : vector<256x2xf32>, vector<2x8xf32>, vector<256x8xf32> -> vector<256x8xf32>
    %61 = arith.addf %42, %60 : vector<256x8xf32>
    %62 = vector.extract_strided_slice %10 {offsets = [0, 4], sizes = [256, 2], strides = [1, 1]} : vector<256x8xf32> to vector<256x2xf32>
    %63 = vector.extract_strided_slice %15 {offsets = [4, 0], sizes = [2, 4], strides = [1, 1]} : vector<8x4xf32> to vector<2x4xf32>
    %cst_35 = arith.constant dense<0.000000e+00> : vector<256x4xf32>
    %64 = tpu.matmul %62, %63, %cst_35 {dimension_numbers = #tpu.dot_dimension_numbers<[1], [0], [0], [1], [0, 0, 1, 1], [], []>} : vector<256x2xf32>, vector<2x4xf32>, vector<256x4xf32> -> vector<256x4xf32>
    %cst_36 = arith.constant 0.707106769 : f32
    %65 = vector.broadcast %cst_36 : f32 to vector<256x4xf32>
    %66 = arith.mulf %64, %65 : vector<256x4xf32>
    %cst_37 = arith.constant dense<0xFF800000> : vector<256xf32>
    %67 = vector.multi_reduction <maximumf>, %66, %cst_37 [1] : vector<256x4xf32> to vector<256xf32>
    %68 = vector.shape_cast %67 : vector<256xf32> to vector<256x1xf32>
    %69 = vector.broadcast %68 : vector<256x1xf32> to vector<256x4xf32>
    %70 = arith.subf %66, %69 : vector<256x4xf32>
    %71 = math.exp %70 : vector<256x4xf32>
    %cst_38 = arith.constant dense<0.000000e+00> : vector<256xf32>
    %72 = vector.multi_reduction <add>, %71, %cst_38 [1] : vector<256x4xf32> to vector<256xf32>
    %73 = vector.shape_cast %72 : vector<256xf32> to vector<256x1xf32>
    %74 = vector.broadcast %73 : vector<256x1xf32> to vector<256x4xf32>
    %75 = arith.divf %71, %74 : vector<256x4xf32>
    %76 = vector.extract_strided_slice %20 {offsets = [0, 4], sizes = [4, 2], strides = [1, 1]} : vector<4x8xf32> to vector<4x2xf32>
    %cst_39 = arith.constant dense<0.000000e+00> : vector<256x2xf32>
    %77 = tpu.matmul %75, %76, %cst_39 {dimension_numbers = #tpu.dot_dimension_numbers<[1], [0], [0], [1], [0, 0, 1, 1], [], []>} : vector<256x4xf32>, vector<4x2xf32>, vector<256x2xf32> -> vector<256x2xf32>
    %78 = vector.extract_strided_slice %21 {offsets = [4, 0], sizes = [2, 8], strides = [1, 1]} : vector<8x8xf32> to vector<2x8xf32>
    %cst_40 = arith.constant dense<0.000000e+00> : vector<256x8xf32>
    %79 = tpu.matmul %77, %78, %cst_40 {dimension_numbers = #tpu.dot_dimension_numbers<[1], [0], [0], [1], [0, 0, 1, 1], [], []>} : vector<256x2xf32>, vector<2x8xf32>, vector<256x8xf32> -> vector<256x8xf32>
    %80 = arith.addf %61, %79 : vector<256x8xf32>
    %81 = vector.extract_strided_slice %10 {offsets = [0, 6], sizes = [256, 2], strides = [1, 1]} : vector<256x8xf32> to vector<256x2xf32>
    %82 = vector.extract_strided_slice %15 {offsets = [6, 0], sizes = [2, 4], strides = [1, 1]} : vector<8x4xf32> to vector<2x4xf32>
    %cst_41 = arith.constant dense<0.000000e+00> : vector<256x4xf32>
    %83 = tpu.matmul %81, %82, %cst_41 {dimension_numbers = #tpu.dot_dimension_numbers<[1], [0], [0], [1], [0, 0, 1, 1], [], []>} : vector<256x2xf32>, vector<2x4xf32>, vector<256x4xf32> -> vector<256x4xf32>
    %cst_42 = arith.constant 0.707106769 : f32
    %84 = vector.broadcast %cst_42 : f32 to vector<256x4xf32>
    %85 = arith.mulf %83, %84 : vector<256x4xf32>
    %cst_43 = arith.constant dense<0xFF800000> : vector<256xf32>
    %86 = vector.multi_reduction <maximumf>, %85, %cst_43 [1] : vector<256x4xf32> to vector<256xf32>
    %87 = vector.shape_cast %86 : vector<256xf32> to vector<256x1xf32>
    %88 = vector.broadcast %87 : vector<256x1xf32> to vector<256x4xf32>
    %89 = arith.subf %85, %88 : vector<256x4xf32>
    %90 = math.exp %89 : vector<256x4xf32>
    %cst_44 = arith.constant dense<0.000000e+00> : vector<256xf32>
    %91 = vector.multi_reduction <add>, %90, %cst_44 [1] : vector<256x4xf32> to vector<256xf32>
    %92 = vector.shape_cast %91 : vector<256xf32> to vector<256x1xf32>
    %93 = vector.broadcast %92 : vector<256x1xf32> to vector<256x4xf32>
    %94 = arith.divf %90, %93 : vector<256x4xf32>
    %95 = vector.extract_strided_slice %20 {offsets = [0, 6], sizes = [4, 2], strides = [1, 1]} : vector<4x8xf32> to vector<4x2xf32>
    %cst_45 = arith.constant dense<0.000000e+00> : vector<256x2xf32>
    %96 = tpu.matmul %94, %95, %cst_45 {dimension_numbers = #tpu.dot_dimension_numbers<[1], [0], [0], [1], [0, 0, 1, 1], [], []>} : vector<256x4xf32>, vector<4x2xf32>, vector<256x2xf32> -> vector<256x2xf32>
    %97 = vector.extract_strided_slice %21 {offsets = [6, 0], sizes = [2, 8], strides = [1, 1]} : vector<8x8xf32> to vector<2x8xf32>
    %cst_46 = arith.constant dense<0.000000e+00> : vector<256x8xf32>
    %98 = tpu.matmul %96, %97, %cst_46 {dimension_numbers = #tpu.dot_dimension_numbers<[1], [0], [0], [1], [0, 0, 1, 1], [], []>} : vector<256x2xf32>, vector<2x8xf32>, vector<256x8xf32> -> vector<256x8xf32>
    %99 = arith.addf %80, %98 : vector<256x8xf32>
    %100 = tpu.transpose %99, [1, 0] : vector<256x8xf32> -> vector<8x256xf32>
    %c0_47 = arith.constant 0 : index
    %c0_48 = arith.constant 0 : index
    %c0_49 = arith.constant 0 : index
    %101 = vector.load %arg2[%c0_47, %c0_48, %c0_49] : memref<1x8x256xf32, #tpu.memory_space<vmem>>, vector<1x8x256xf32>
    %102 = vector.shape_cast %101 : vector<1x8x256xf32> to vector<8x256xf32>
    %cst_50 = arith.constant 1.000000e+00 : f32
    %103 = vector.broadcast %cst_50 : f32 to vector<8x256xf32>
    %104 = arith.mulf %103, %100 : vector<8x256xf32>
    %105 = arith.addf %102, %104 : vector<8x256xf32>
    %c0_51 = arith.constant 0 : index
    %c0_52 = arith.constant 0 : index
    %c0_53 = arith.constant 0 : index
    %106 = vector.load %arg13[%c0_51, %c0_52, %c0_53] : memref<1x8x256xf32, #tpu.memory_space<vmem>>, vector<1x8x256xf32>
    %107 = vector.shape_cast %106 : vector<1x8x256xf32> to vector<8x256xf32>
    %108 = vector.shape_cast %105 : vector<8x256xf32> to vector<1x8x256xf32>
    tpu.vector_store %arg13[%c0_51, %c0_52, %c0_53], %108 {strides = array<i32>} : memref<1x8x256xf32, #tpu.memory_space<vmem>>, vector<1x8x256xf32>,
    return
  }
  func.func @transform_0(%arg0: i32, %arg1: i32) -> (i32, i32, i32) {
    %c0_i32 = arith.constant 0 : i32
    %c0_i32_0 = arith.constant 0 : i32
    return %arg0, %c0_i32, %arg1 : i32, i32, i32
  }
  func.func @transform_1(%arg0: i32, %arg1: i32) -> (i32, i32, i32) {
    %c0_i32 = arith.constant 0 : i32
    %c0_i32_0 = arith.constant 0 : i32
    return %arg0, %c0_i32, %arg1 : i32, i32, i32
  }
  func.func @transform_2(%arg0: i32, %arg1: i32) -> (i32, i32, i32) {
    %c0_i32 = arith.constant 0 : i32
    %c0_i32_0 = arith.constant 0 : i32
    %c0_i32_1 = arith.constant 0 : i32
    return %arg0, %c0_i32, %c0_i32_0 : i32, i32, i32
  }
  func.func @transform_3(%arg0: i32, %arg1: i32) -> (i32, i32) {
    %c0_i32 = arith.constant 0 : i32
    %c0_i32_0 = arith.constant 0 : i32
    %c0_i32_1 = arith.constant 0 : i32
    return %c0_i32, %c0_i32_0 : i32, i32
  }
  func.func @transform_4(%arg0: i32, %arg1: i32) -> (i32, i32) {
    %c0_i32 = arith.constant 0 : i32
    %c0_i32_0 = arith.constant 0 : i32
    %c0_i32_1 = arith.constant 0 : i32
    return %c0_i32, %c0_i32_0 : i32, i32
  }
  func.func @transform_5(%arg0: i32, %arg1: i32) -> (i32, i32) {
    %c0_i32 = arith.constant 0 : i32
    %c0_i32_0 = arith.constant 0 : i32
    %c0_i32_1 = arith.constant 0 : i32
    return %c0_i32, %c0_i32_0 : i32, i32
  }
  func.func @transform_6(%arg0: i32, %arg1: i32) -> (i32, i32) {
    %c0_i32 = arith.constant 0 : i32
    %c0_i32_0 = arith.constant 0 : i32
    %c0_i32_1 = arith.constant 0 : i32
    return %c0_i32, %c0_i32_0 : i32, i32
  }
  func.func @transform_7(%arg0: i32, %arg1: i32) -> (i32, i32) {
    %c0_i32 = arith.constant 0 : i32
    %c0_i32_0 = arith.constant 0 : i32
    %c0_i32_1 = arith.constant 0 : i32
    return %c0_i32, %c0_i32_0 : i32, i32
  }
  func.func @transform_8(%arg0: i32, %arg1: i32) -> (i32, i32) {
    %c0_i32 = arith.constant 0 : i32
    %c0_i32_0 = arith.constant 0 : i32
    %c0_i32_1 = arith.constant 0 : i32
    return %c0_i32, %c0_i32_0 : i32, i32
  }
  func.func @transform_9(%arg0: i32, %arg1: i32) -> (i32, i32) {
    %c0_i32 = arith.constant 0 : i32
    %c0_i32_0 = arith.constant 0 : i32
    %c0_i32_1 = arith.constant 0 : i32
    return %c0_i32, %c0_i32_0 : i32, i32
  }
  func.func @transform_10(%arg0: i32, %arg1: i32) -> (i32, i32) {
    %c0_i32 = arith.constant 0 : i32
    %c0_i32_0 = arith.constant 0 : i32
    %c0_i32_1 = arith.constant 0 : i32
    return %c0_i32, %c0_i32_0 : i32, i32
  }
  func.func @transform_11(%arg0: i32, %arg1: i32) -> (i32, i32, i32) {
    %c0_i32 = arith.constant 0 : i32
    %c0_i32_0 = arith.constant 0 : i32
    return %arg0, %c0_i32, %arg1 : i32, i32, i32
  }
}

</mosaic_0001>

<llo_original>
// kernel: tpu_custom_call.1
$region0: #{tpu_custom_call.1}
  #allocation0 [shape = 'u32[]', space=smem, size = 0x4, offset = 0x4, fixed_abs, tag = 'smem constant byte address 0x4 - core index']
  #allocation1 [shape = 'u32[144,128]{1,0:T(1,128)}', space=vmem, size = 0x12000, scoped, tag = 'internal scratch']
  %s0 = inlined_call_operand.vmem [shape: f32[2,8,256], index: 0, kind: input, shape index: {}]
  %s1 = inlined_call_operand.hbm [shape: f32[2,8,256], index: 1, kind: input, shape index: {}]
  %s2 = inlined_call_operand.vmem [shape: f32[2,8,4], index: 2, kind: input, shape index: {}]
  %s3 = inlined_call_operand.hbm [shape: f32[8,8], index: 3, kind: input, shape index: {}]
  %s4 = inlined_call_operand.hbm [shape: f32[1,8], index: 4, kind: input, shape index: {}]
  %s5 = inlined_call_operand.vmem [shape: f32[8,8], index: 5, kind: input, shape index: {}]
  %s6 = inlined_call_operand.vmem [shape: f32[8,1], index: 6, kind: input, shape index: {}]
  %s7 = inlined_call_operand.vmem [shape: f32[8,8], index: 7, kind: input, shape index: {}]
  %s8 = inlined_call_operand.vmem [shape: f32[1,8], index: 8, kind: input, shape index: {}]
  %s9 = inlined_call_operand.vmem [shape: f32[8,8], index: 9, kind: input, shape index: {}]
  %s10 = inlined_call_operand.vmem [shape: f32[1,8], index: 10, kind: input, shape index: {}]
  %s11 = inlined_call_operand.hbm [shape: f32[2,8,256], index: 11, kind: output, shape index: {}]
  %s12 = sld [smem:[#allocation0]]
  $region89: #{tpu_custom_call.1} parent=0
    _
  %s14 = ssub.s32 1, %s12
  %s15 = scalar_select 0, %s14, %s12
  $region1: #{tpu_custom_call.1} parent=0
    #allocation2 [shape = 'u8[16384]{0}', space=vmem, size = 0x4000, scoped, tag = 'input window, operand 1']
    #allocation3 [shape = 's32[2]{0}', space=sflag, size = 0x8, scoped, tag = 'scoped memory for tpu_custom_call.1']
    #allocation4 [shape = 's32[2]{0}', space=sflag, size = 0x8, scoped, tag = 'scoped memory for tpu_custom_call.1']
    #allocation5 [shape = 'u8[4096]{0}', space=vmem, size = 0x1000, scoped, tag = 'input window, operand 3, single buffered']
    #allocation6 [shape = 's32[1]{0}', space=sflag, size = 0x4, scoped, tag = 'scoped memory for tpu_custom_call.1']
    #allocation7 [shape = 'u8[512]{0}', space=vmem, size = 0x400, scoped, tag = 'input window, operand 4, single buffered']
    #allocation8 [shape = 'u8[16384]{0}', space=vmem, size = 0x4000, scoped, tag = 'output window, operand 0']
    %16 = vsyncpa [#allocation3], 0
    %s17 = scalar_lea.sflag [#allocation3], 1
    %18 = vsyncpa %s17, 0
    %19 = vsyncpa [#allocation6], 0
    %20 = vsyncpa [#allocation4], 0
    %s21 = scalar_lea.sflag [#allocation4], 1
    %22 = vsyncpa %s21, 0
    loop: start=0, step=1, limit=4
    $region2: #{tpu_custom_call.1} parent=1 // loop_pre_header
      _
    $region3: #{tpu_custom_call.1} parent=1 // loop_header
      %s24 = sphi 0, %s28
      %p25 = scmp.ge.s32.totalorder %s24, 4
      %s31 = sphi 0, %s43
      %s32 = sphi 0, %s39
      %s33 = sphi 0, %s31
      %s34 = sphi 0, %s32
      %s35 = sphi 0, %s33
      %s36 = sphi 0, %s34
      %s48 = sphi 0, %s50
      %s51 = sphi 0, %s48
      %s52 = sphi 0, %s51
      %s68 = sphi 0, %s52
      %s76 = sphi 0, %s78
      %s79 = sphi 0, %s76
      %s80 = sphi 0, %s79
      %s96 = sphi 0, %s80
      %s102 = sphi 0, %s104
      %s105 = sphi 0, %s102
      %s106 = sphi 0, %s105
      %s122 = sphi 0, %s106
      %s126 = sphi 0, %s126
      %s128 = sphi 0, %s126
      %s129 = sphi 0, %s128
      %s143 = sphi 0, %s129
      %s147 = sphi 0, %s147
      %s149 = sphi 0, %s147
      %s150 = sphi 0, %s149
      %s164 = sphi 0, %s150
      %s168 = sphi 0, %s168
      %s170 = sphi 0, %s168
      %s171 = sphi 0, %s170
      %s185 = sphi 0, %s171
      %s189 = sphi 0, %s189
      %s191 = sphi 0, %s189
      %s192 = sphi 0, %s191
      %s206 = sphi 0, %s192
      %s210 = sphi 0, %s210
      %s212 = sphi 0, %s210
      %s213 = sphi 0, %s212
      %s227 = sphi 0, %s213
      %s231 = sphi 0, %s231
      %s233 = sphi 0, %s231
      %s234 = sphi 0, %s233
      %s248 = sphi 0, %s234
      %s252 = sphi 0, %s252
      %s254 = sphi 0, %s252
      %s255 = sphi 0, %s254
      %s269 = sphi 0, %s255
      %s273 = sphi 0, %s273
      %s275 = sphi 0, %s273
      %s276 = sphi 0, %s275
      %s290 = sphi 0, %s276
      %s298 = sphi 0, %s300
      %s301 = sphi 0, %s298
      %s302 = sphi 0, %s301
      %s318 = sphi 0, %s302
    $region4: #{tpu_custom_call.1} parent=1 // loop_header_branch
      %27 = sbr.rel (%p25) target = $region8
    $region5: #{tpu_custom_call.1} parent=1 // loop_body
      %s29 = ssub.s32 %s24, 1
      %s30 = ssub.s32 %s24, 2
      %s37 = sadd.s32 1, %s32
      %p38 = scmp.ge.s32.totalorder %s37, 1
      %s39 = scalar_select %p38, 0, %s37
      %s40 = sadd.s32 1, %s31
      %s41 = scalar_select %p38, %s40, %s31
      %p42 = scmp.ge.s32.totalorder %s41, 2
      %s43 = scalar_select %p42, 0, %s41
      %s44 = ssub.s32 %s31, %s43
      %s45 = ssub.s32 %s32, %s39
      %s46 = sor.u32 %s44, %s45
      %p47 = scmp.eq.s32.totalorder %s46, 0
      %s49 = sadd.s32 %s48, 1
      %s50 = scalar_select %p47, %s48, %s49
      %p53 = pneg %p47
      %p54 = scmp.eq.s32.totalorder %s24, 1
      %p55 = por %p53, %p54
      %p56 = scmp.ne.s32.totalorder %s48, %s51
      %p57 = scmp.eq.s32.totalorder %s24, 0
      %p58 = por %p56, %p57
      %p59 = scmp.ne.s32.totalorder %s48, %s51
      %p60 = scmp.eq.s32.totalorder %s29, 1
      %p61 = por %p59, %p60
      %p62 = scmp.ne.s32.totalorder %s51, %s52
      %p63 = scmp.eq.s32.totalorder %s29, 0
      %p64 = por %p62, %p63
      %p65 = scmp.ne.s32.totalorder %s51, %s52
      %p66 = scmp.eq.s32.totalorder %s30, 1
      %p67 = por %p65, %p66
      %p69 = scmp.ne.s32.totalorder %s52, %s68
      %p70 = scmp.eq.s32.totalorder %s30, 0
      %p71 = por %p69, %p70
      %s72 = ssub.s32 %s31, %s43
      %s73 = ssub.s32 %s32, %s39
      %s74 = sor.u32 %s72, %s73
      %p75 = scmp.eq.s32.totalorder %s74, 0
      %s77 = sadd.s32 %s76, 1
      %s78 = scalar_select %p75, %s76, %s77
      %p81 = pneg %p75
      %p82 = scmp.eq.s32.totalorder %s24, 1
      %p83 = por %p81, %p82
      %p84 = scmp.ne.s32.totalorder %s76, %s79
      %p85 = scmp.eq.s32.totalorder %s24, 0
      %p86 = por %p84, %p85
      %p87 = scmp.ne.s32.totalorder %s76, %s79
      %p88 = scmp.eq.s32.totalorder %s29, 1
      %p89 = por %p87, %p88
      %p90 = scmp.ne.s32.totalorder %s79, %s80
      %p91 = scmp.eq.s32.totalorder %s29, 0
      %p92 = por %p90, %p91
      %p93 = scmp.ne.s32.totalorder %s79, %s80
      %p94 = scmp.eq.s32.totalorder %s30, 1
      %p95 = por %p93, %p94
      %p97 = scmp.ne.s32.totalorder %s80, %s96
      %p98 = scmp.eq.s32.totalorder %s30, 0
      %p99 = por %p97, %p98
      %s100 = ssub.s32 %s31, %s43
      %p101 = scmp.eq.s32.totalorder %s100, 0
      %s103 = sadd.s32 %s102, 1
      %s104 = scalar_select %p101, %s102, %s103
      %p107 = pneg %p101
      %p108 = scmp.eq.s32.totalorder %s24, 1
      %p109 = por %p107, %p108
      %p110 = scmp.ne.s32.totalorder %s102, %s105
      %p111 = scmp.eq.s32.totalorder %s24, 0
      %p112 = por %p110, %p111
      %p113 = scmp.ne.s32.totalorder %s102, %s105
      %p114 = scmp.eq.s32.totalorder %s29, 1
      %p115 = por %p113, %p114
      %p116 = scmp.ne.s32.totalorder %s105, %s106
      %p117 = scmp.eq.s32.totalorder %s29, 0
      %p118 = por %p116, %p117
      %p119 = scmp.ne.s32.totalorder %s105, %s106
      %p120 = scmp.eq.s32.totalorder %s30, 1
      %p121 = por %p119, %p120
      %p123 = scmp.ne.s32.totalorder %s106, %s122
      %p124 = scmp.eq.s32.totalorder %s30, 0
      %p125 = por %p123, %p124
      %s127 = sadd.s32 %s126, 1
      %p130 = scmp.eq.s32.totalorder %s24, 1
      %p131 = scmp.ne.s32.totalorder %s126, %s128
      %p132 = scmp.eq.s32.totalorder %s24, 0
      %p133 = por %p131, %p132
      %p134 = scmp.ne.s32.totalorder %s126, %s128
      %p135 = scmp.eq.s32.totalorder %s29, 1
      %p136 = por %p134, %p135
      %p137 = scmp.ne.s32.totalorder %s128, %s129
      %p138 = scmp.eq.s32.totalorder %s29, 0
      %p139 = por %p137, %p138
      %p140 = scmp.ne.s32.totalorder %s128, %s129
      %p141 = scmp.eq.s32.totalorder %s30, 1
      %p142 = por %p140, %p141
      %p144 = scmp.ne.s32.totalorder %s129, %s143
      %p145 = scmp.eq.s32.totalorder %s30, 0
      %p146 = por %p144, %p145
      %s148 = sadd.s32 %s147, 1
      %p151 = scmp.eq.s32.totalorder %s24, 1
      %p152 = scmp.ne.s32.totalorder %s147, %s149
      %p153 = scmp.eq.s32.totalorder %s24, 0
      %p154 = por %p152, %p153
      %p155 = scmp.ne.s32.totalorder %s147, %s149
      %p156 = scmp.eq.s32.totalorder %s29, 1
      %p157 = por %p155, %p156
      %p158 = scmp.ne.s32.totalorder %s149, %s150
      %p159 = scmp.eq.s32.totalorder %s29, 0
      %p160 = por %p158, %p159
      %p161 = scmp.ne.s32.totalorder %s149, %s150
      %p162 = scmp.eq.s32.totalorder %s30, 1
      %p163 = por %p161, %p162
      %p165 = scmp.ne.s32.totalorder %s150, %s164
      %p166 = scmp.eq.s32.totalorder %s30, 0
      %p167 = por %p165, %p166
      %s169 = sadd.s32 %s168, 1
      %p172 = scmp.eq.s32.totalorder %s24, 1
      %p173 = scmp.ne.s32.totalorder %s168, %s170
      %p174 = scmp.eq.s32.totalorder %s24, 0
      %p175 = por %p173, %p174
      %p176 = scmp.ne.s32.totalorder %s168, %s170
      %p177 = scmp.eq.s32.totalorder %s29, 1
      %p178 = por %p176, %p177
      %p179 = scmp.ne.s32.totalorder %s170, %s171
      %p180 = scmp.eq.s32.totalorder %s29, 0
      %p181 = por %p179, %p180
      %p182 = scmp.ne.s32.totalorder %s170, %s171
      %p183 = scmp.eq.s32.totalorder %s30, 1
      %p184 = por %p182, %p183
      %p186 = scmp.ne.s32.totalorder %s171, %s185
      %p187 = scmp.eq.s32.totalorder %s30, 0
      %p188 = por %p186, %p187
      %s190 = sadd.s32 %s189, 1
      %p193 = scmp.eq.s32.totalorder %s24, 1
      %p194 = scmp.ne.s32.totalorder %s189, %s191
      %p195 = scmp.eq.s32.totalorder %s24, 0
      %p196 = por %p194, %p195
      %p197 = scmp.ne.s32.totalorder %s189, %s191
      %p198 = scmp.eq.s32.totalorder %s29, 1
      %p199 = por %p197, %p198
      %p200 = scmp.ne.s32.totalorder %s191, %s192
      %p201 = scmp.eq.s32.totalorder %s29, 0
      %p202 = por %p200, %p201
      %p203 = scmp.ne.s32.totalorder %s191, %s192
      %p204 = scmp.eq.s32.totalorder %s30, 1
      %p205 = por %p203, %p204
      %p207 = scmp.ne.s32.totalorder %s192, %s206
      %p208 = scmp.eq.s32.totalorder %s30, 0
      %p209 = por %p207, %p208
      %s211 = sadd.s32 %s210, 1
      %p214 = scmp.eq.s32.totalorder %s24, 1
      %p215 = scmp.ne.s32.totalorder %s210, %s212
      %p216 = scmp.eq.s32.totalorder %s24, 0
      %p217 = por %p215, %p216
      %p218 = scmp.ne.s32.totalorder %s210, %s212
      %p219 = scmp.eq.s32.totalorder %s29, 1
      %p220 = por %p218, %p219
      %p221 = scmp.ne.s32.totalorder %s212, %s213
      %p222 = scmp.eq.s32.totalorder %s29, 0
      %p223 = por %p221, %p222
      %p224 = scmp.ne.s32.totalorder %s212, %s213
      %p225 = scmp.eq.s32.totalorder %s30, 1
      %p226 = por %p224, %p225
      %p228 = scmp.ne.s32.totalorder %s213, %s227
      %p229 = scmp.eq.s32.totalorder %s30, 0
      %p230 = por %p228, %p229
      %s232 = sadd.s32 %s231, 1
      %p235 = scmp.eq.s32.totalorder %s24, 1
      %p236 = scmp.ne.s32.totalorder %s231, %s233
      %p237 = scmp.eq.s32.totalorder %s24, 0
      %p238 = por %p236, %p237
      %p239 = scmp.ne.s32.totalorder %s231, %s233
      %p240 = scmp.eq.s32.totalorder %s29, 1
      %p241 = por %p239, %p240
      %p242 = scmp.ne.s32.totalorder %s233, %s234
      %p243 = scmp.eq.s32.totalorder %s29, 0
      %p244 = por %p242, %p243
      %p245 = scmp.ne.s32.totalorder %s233, %s234
      %p246 = scmp.eq.s32.totalorder %s30, 1
      %p247 = por %p245, %p246
      %p249 = scmp.ne.s32.totalorder %s234, %s248
      %p250 = scmp.eq.s32.totalorder %s30, 0
      %p251 = por %p249, %p250
      %s253 = sadd.s32 %s252, 1
      %p256 = scmp.eq.s32.totalorder %s24, 1
      %p257 = scmp.ne.s32.totalorder %s252, %s254
      %p258 = scmp.eq.s32.totalorder %s24, 0
      %p259 = por %p257, %p258
      %p260 = scmp.ne.s32.totalorder %s252, %s254
      %p261 = scmp.eq.s32.totalorder %s29, 1
      %p262 = por %p260, %p261
      %p263 = scmp.ne.s32.totalorder %s254, %s255
      %p264 = scmp.eq.s32.totalorder %s29, 0
      %p265 = por %p263, %p264
      %p266 = scmp.ne.s32.totalorder %s254, %s255
      %p267 = scmp.eq.s32.totalorder %s30, 1
      %p268 = por %p266, %p267
      %p270 = scmp.ne.s32.totalorder %s255, %s269
      %p271 = scmp.eq.s32.totalorder %s30, 0
      %p272 = por %p270, %p271
      %s274 = sadd.s32 %s273, 1
      %p277 = scmp.eq.s32.totalorder %s24, 1
      %p278 = scmp.ne.s32.totalorder %s273, %s275
      %p279 = scmp.eq.s32.totalorder %s24, 0
      %p280 = por %p278, %p279
      %p281 = scmp.ne.s32.totalorder %s273, %s275
      %p282 = scmp.eq.s32.totalorder %s29, 1
      %p283 = por %p281, %p282
      %p284 = scmp.ne.s32.totalorder %s275, %s276
      %p285 = scmp.eq.s32.totalorder %s29, 0
      %p286 = por %p284, %p285
      %p287 = scmp.ne.s32.totalorder %s275, %s276
      %p288 = scmp.eq.s32.totalorder %s30, 1
      %p289 = por %p287, %p288
      %p291 = scmp.ne.s32.totalorder %s276, %s290
      %p292 = scmp.eq.s32.totalorder %s30, 0
      %p293 = por %p291, %p292
      %s294 = ssub.s32 %s31, %s43
      %s295 = ssub.s32 %s32, %s39
      %s296 = sor.u32 %s294, %s295
      %p297 = scmp.eq.s32.totalorder %s296, 0
      %s299 = sadd.s32 %s298, 1
      %s300 = scalar_select %p297, %s298, %s299
      %p303 = pneg %p297
      %p304 = scmp.eq.s32.totalorder %s24, 1
      %p305 = por %p303, %p304
      %p306 = scmp.ne.s32.totalorder %s298, %s301
      %p307 = scmp.eq.s32.totalorder %s24, 0
      %p308 = por %p306, %p307
      %p309 = scmp.ne.s32.totalorder %s298, %s301
      %p310 = scmp.eq.s32.totalorder %s29, 1
      %p311 = por %p309, %p310
      %p312 = scmp.ne.s32.totalorder %s301, %s302
      %p313 = scmp.eq.s32.totalorder %s29, 0
      %p314 = por %p312, %p313
      %p315 = scmp.ne.s32.totalorder %s301, %s302
      %p316 = scmp.eq.s32.totalorder %s30, 1
      %p317 = por %p315, %p316
      %p319 = scmp.ne.s32.totalorder %s302, %s318
      %p320 = scmp.eq.s32.totalorder %s30, 0
      %p321 = por %p319, %p320
      %p322 = scmp.le.s32.totalorder 1, %s24
      %p323 = scmp.lt.s32.totalorder %s24, 3
      %p324 = pnand %p322, %p323
      %p325 = pneg %p324
      // Predicated region
      $region9: #{tpu_custom_call.1} parent=5 // pred_check
        _
      $region10: #{tpu_custom_call.1} parent=5 // pred_check_branch
        %327 = sbr.rel (%p324) target = $region12
      $region11: #{tpu_custom_call.1} parent=5 // pred_region
        %s328 = ssub.s32 %s24, 1
        // Predicated region
        $region13: #{tpu_custom_call.1} parent=11 // pred_check
          %p329 = pneg %p139
        $region14: #{tpu_custom_call.1} parent=11 // pred_check_branch
          %331 = sbr.rel (%p329) target = $region16
        $region15: #{tpu_custom_call.1} parent=11 // pred_region
          %s333 = ssub.s32 128, 128
          %334 = vsyncadd [#allocation6], %s333
          %s336 = sshll.u32 [#allocation5], 4
          %s337 = int_to_ptr.vmem [resolvable:$true] %s336
          %339 = dma.hbm_to_vmem [thread:$0]  %s3, 128, %s337, [#allocation6]
        $region16: #{tpu_custom_call.1} parent=11 // pred_fallthru
          _
        // Predicated region
        $region17: #{tpu_custom_call.1} parent=11 // pred_check
          %p340 = pneg %p160
        $region18: #{tpu_custom_call.1} parent=11 // pred_check_branch
          %342 = sbr.rel (%p340) target = $region20
        $region19: #{tpu_custom_call.1} parent=11 // pred_region
          %s344 = ssub.s32 16, 16
          %345 = vsyncadd [#allocation6], %s344
          %s347 = sshll.u32 [#allocation7], 4
          %s348 = int_to_ptr.vmem [resolvable:$true] %s347
          %350 = dma.hbm_to_vmem [thread:$0]  %s4, 16, %s348, [#allocation6]
        $region20: #{tpu_custom_call.1} parent=11 // pred_fallthru
          _
        // Predicated region
        $region21: #{tpu_custom_call.1} parent=11 // pred_check
          %p351 = pneg %p181
        $region22: #{tpu_custom_call.1} parent=11 // pred_check_branch
          %353 = sbr.rel (%p351) target = $region24
        $region23: #{tpu_custom_call.1} parent=11 // pred_region
          _
        $region24: #{tpu_custom_call.1} parent=11 // pred_fallthru
          _
        // Predicated region
        $region25: #{tpu_custom_call.1} parent=11 // pred_check
          %p354 = pneg %p202
        $region26: #{tpu_custom_call.1} parent=11 // pred_check_branch
          %356 = sbr.rel (%p354) target = $region28
        $region27: #{tpu_custom_call.1} parent=11 // pred_region
          _
        $region28: #{tpu_custom_call.1} parent=11 // pred_fallthru
          _
        // Predicated region
        $region29: #{tpu_custom_call.1} parent=11 // pred_check
          %p357 = pneg %p223
        $region30: #{tpu_custom_call.1} parent=11 // pred_check_branch
          %359 = sbr.rel (%p357) target = $region32
        $region31: #{tpu_custom_call.1} parent=11 // pred_region
          _
        $region32: #{tpu_custom_call.1} parent=11 // pred_fallthru
          _
        // Predicated region
        $region33: #{tpu_custom_call.1} parent=11 // pred_check
          %p360 = pneg %p244
        $region34: #{tpu_custom_call.1} parent=11 // pred_check_branch
          %362 = sbr.rel (%p360) target = $region36
        $region35: #{tpu_custom_call.1} parent=11 // pred_region
          _
        $region36: #{tpu_custom_call.1} parent=11 // pred_fallthru
          _
        // Predicated region
        $region37: #{tpu_custom_call.1} parent=11 // pred_check
          %p363 = pneg %p265
        $region38: #{tpu_custom_call.1} parent=11 // pred_check_branch
          %365 = sbr.rel (%p363) target = $region40
        $region39: #{tpu_custom_call.1} parent=11 // pred_region
          _
        $region40: #{tpu_custom_call.1} parent=11 // pred_fallthru
          _
        // Predicated region
        $region41: #{tpu_custom_call.1} parent=11 // pred_check
          %p366 = pneg %p286
        $region42: #{tpu_custom_call.1} parent=11 // pred_check_branch
          %368 = sbr.rel (%p366) target = $region44
        $region43: #{tpu_custom_call.1} parent=11 // pred_region
          _
        $region44: #{tpu_custom_call.1} parent=11 // pred_fallthru
          _
      $region12: #{tpu_custom_call.1} parent=5 // pred_fallthru
        _
      %p369 = scmp.lt.s32.totalorder %s24, 2
      // Predicated region
      $region45: #{tpu_custom_call.1} parent=5 // pred_check
        %p370 = pneg %p369
      $region46: #{tpu_custom_call.1} parent=5 // pred_check_branch
        %372 = sbr.rel (%p370) target = $region48
      $region47: #{tpu_custom_call.1} parent=5 // pred_region
        // Predicated region
        $region49: #{tpu_custom_call.1} parent=47 // pred_check
          %p373 = pneg %p58
        $region50: #{tpu_custom_call.1} parent=47 // pred_check_branch
          %375 = sbr.rel (%p373) target = $region52
        $region51: #{tpu_custom_call.1} parent=47 // pred_region
          %s376 = smul.u32 2, %s32
          %p377 = scmp.lt.s32.totalorder %s31, 1
          %s378 = scalar_select %p377, %s31, 1
          %p379 = scmp.lt.s32.totalorder %s376, 1
          %s380 = scalar_select %p379, %s376, 1
          %s381 = smul.addr %s378, 2
          %s382 = sadd.s32 %s380, %s381
          %s383 = smul.addr %s382, 8
          %s384 = scalar_lea.vmem %s0, %s383
          %s385 = smul.u32 2, %s32
        $region52: #{tpu_custom_call.1} parent=47 // pred_fallthru
          _
        // Predicated region
        $region53: #{tpu_custom_call.1} parent=47 // pred_check
          %p386 = pneg %p86
        $region54: #{tpu_custom_call.1} parent=47 // pred_check_branch
          %388 = sbr.rel (%p386) target = $region56
        $region55: #{tpu_custom_call.1} parent=47 // pred_region
          %s389 = sand.u32 %s76, 1
          %s390 = scalar_lea.sflag [#allocation3], %s389
          %s391 = sand.u32 %s76, 1
          %s392 = smul.addr %s391, 16
          %s393 = scalar_lea.vmem [#allocation2], %s392
          %s394 = smul.u32 2, %s32
          %s396 = ssub.s32 256, 256
          %397 = vsyncadd %s390, %s396
          %s398 = smul.addr %s31, 2
          %s399 = sadd.s32 %s394, %s398
          %s400 = smul.addr %s399, 128
          %s401 = scalar_lea.hbm %s1, %s400
          %s403 = sshll.u32 %s393, 4
          %s404 = int_to_ptr.vmem [resolvable:$true] %s403
          %406 = dma.hbm_to_vmem [thread:$0]  %s401, 256, %s404, %s390
        $region56: #{tpu_custom_call.1} parent=47 // pred_fallthru
          _
        // Predicated region
        $region57: #{tpu_custom_call.1} parent=47 // pred_check
          %p407 = pneg %p112
        $region58: #{tpu_custom_call.1} parent=47 // pred_check_branch
          %409 = sbr.rel (%p407) target = $region60
        $region59: #{tpu_custom_call.1} parent=47 // pred_region
          %p410 = scmp.lt.s32.totalorder %s31, 1
          %s411 = scalar_select %p410, %s31, 1
          %s412 = smul.addr %s411, 8
          %s413 = scalar_lea.vmem %s2, %s412
        $region60: #{tpu_custom_call.1} parent=47 // pred_fallthru
          _
      $region48: #{tpu_custom_call.1} parent=5 // pred_fallthru
        _
      %p414 = scmp.le.s32.totalorder 1, %s24
      %p415 = scmp.lt.s32.totalorder %s24, 3
      %p416 = pnand %p414, %p415
      %p417 = pneg %p416
      // Predicated region
      $region61: #{tpu_custom_call.1} parent=5 // pred_check
        _
      $region62: #{tpu_custom_call.1} parent=5 // pred_check_branch
        %419 = sbr.rel (%p416) target = $region64
      $region63: #{tpu_custom_call.1} parent=5 // pred_region
        %s420 = ssub.s32 %s24, 1
        %s421 = sand.u32 %s79, 1
        %s422 = scalar_lea.sflag [#allocation3], %s421
        %s423 = sand.u32 %s79, 1
        %s424 = smul.addr %s423, 16
        %s425 = scalar_lea.vmem [#allocation2], %s424
        // Predicated region
        $region65: #{tpu_custom_call.1} parent=63 // pred_check
          %p426 = pneg %p92
        $region66: #{tpu_custom_call.1} parent=63 // pred_check_branch
          %428 = sbr.rel (%p426) target = $region68
        $region67: #{tpu_custom_call.1} parent=63 // pred_region
          %429 = dma.done %s422, 256
        $region68: #{tpu_custom_call.1} parent=63 // pred_fallthru
          _
        // Predicated region
        $region69: #{tpu_custom_call.1} parent=63 // pred_check
          %p430 = pneg %p139
        $region70: #{tpu_custom_call.1} parent=63 // pred_check_branch
          %432 = sbr.rel (%p430) target = $region72
        $region71: #{tpu_custom_call.1} parent=63 // pred_region
          %433 = dma.done [#allocation6], 128
        $region72: #{tpu_custom_call.1} parent=63 // pred_fallthru
          _
        // Predicated region
        $region73: #{tpu_custom_call.1} parent=63 // pred_check
          %p434 = pneg %p160
        $region74: #{tpu_custom_call.1} parent=63 // pred_check_branch
          %436 = sbr.rel (%p434) target = $region76
        $region75: #{tpu_custom_call.1} parent=63 // pred_region
          %437 = dma.done [#allocation6], 16
        $region76: #{tpu_custom_call.1} parent=63 // pred_fallthru
          _
        %s438 = smul.u32 2, %s34
        %p439 = scmp.lt.s32.totalorder %s33, 1
        %s440 = scalar_select %p439, %s33, 1
        %p441 = scmp.lt.s32.totalorder %s438, 1
        %s442 = scalar_select %p441, %s438, 1
        %s443 = smul.addr %s440, 2
        %s444 = sadd.s32 %s442, %s443
        %s445 = smul.addr %s444, 8
        %s446 = scalar_lea.vmem %s0, %s445
        %p447 = pneg %p64
        %p448 = pneg %p61
        %s449 = sand.u32 %s79, 1
        %s450 = scalar_lea.sflag [#allocation3], %s449
        %s451 = sand.u32 %s79, 1
        %s452 = smul.addr %s451, 16
        %s453 = scalar_lea.vmem [#allocation2], %s452
        %p454 = pneg %p92
        %p455 = pneg %p89
        %p456 = scmp.lt.s32.totalorder %s33, 1
        %s457 = scalar_select %p456, %s33, 1
        %s458 = smul.addr %s457, 8
        %s459 = scalar_lea.vmem %s2, %s458
        %p460 = pneg %p118
        %p461 = pneg %p115
        %p462 = pneg %p139
        %p463 = pneg %p136
        %p464 = pneg %p160
        %p465 = pneg %p157
        %p466 = pneg %p181
        %p467 = pneg %p178
        %p468 = pneg %p202
        %p469 = pneg %p199
        %p470 = pneg %p223
        %p471 = pneg %p220
        %p472 = pneg %p244
        %p473 = pneg %p241
        %p474 = pneg %p265
        %p475 = pneg %p262
        %p476 = pneg %p286
        %p477 = pneg %p283
        %p478 = pneg %p314
        %p479 = pneg %p311
        %s480 = sand.u32 %s301, 1
        %s481 = scalar_lea.sflag [#allocation4], %s480
        %s482 = sand.u32 %s301, 1
        %s483 = smul.addr %s482, 16
        %s484 = scalar_lea.vmem [#allocation8], %s483
        %s485 = smul.u32 2, %s34
        %p486 = scmp.lt.s32.totalorder %s33, 1
        %s487 = scalar_select %p486, %s33, 1
        %p488 = scmp.lt.s32.totalorder %s485, 1
        %s489 = scalar_select %p488, %s485, 1
        %s490 = smul.addr %s487, 2
        %s491 = sadd.s32 %s489, %s490
        %s492 = smul.addr %s491, 8
        %s493 = scalar_lea.vmem %s0, %s492
        %s494 = smul.u32 2, %s34
        %s495 = smul.u32 2, %s34
        %p496 = scmp.lt.s32.totalorder %s33, 1
        %s497 = scalar_select %p496, %s33, 1
        %s498 = smul.addr %s497, 8
        %s499 = scalar_lea.vmem %s2, %s498
        %s500 = smul.u32 2, %s34
        %v501 = vld [vmem:[%s425] sm:$0xff]
        %v502 = vld [vmem:[%s425 + $0x8] sm:$0xff]
        %503 = vxpose.xlu0.b32.start [1/16] %v501, 128
        %504 = vxpose.xlu0.b32.cont [2/16] 0.0, 128
        %505 = vxpose.xlu0.b32.cont [3/16] 0.0, 128
        %506 = vxpose.xlu0.b32.cont [4/16] 0.0, 128
        %507 = vxpose.xlu0.b32.cont [5/16] 0.0, 128
        %508 = vxpose.xlu0.b32.cont [6/16] 0.0, 128
        %509 = vxpose.xlu0.b32.cont [7/16] 0.0, 128
        %510 = vxpose.xlu0.b32.cont [8/16] 0.0, 128
        %511 = vxpose.xlu0.b32.cont [9/16] 0.0, 128
        %512 = vxpose.xlu0.b32.cont [10/16] 0.0, 128
        %513 = vxpose.xlu0.b32.cont [11/16] 0.0, 128
        %514 = vxpose.xlu0.b32.cont [12/16] 0.0, 128
        %515 = vxpose.xlu0.b32.cont [13/16] 0.0, 128
        %516 = vxpose.xlu0.b32.cont [14/16] 0.0, 128
        %517 = vxpose.xlu0.b32.cont [15/16] 0.0, 128
        %518 = vxpose.xlu0.b32.end [16/16] 0.0, 128
        %v519 = vpop.trf.xlu0
        %v520 = vpop.trf.xlu0
        %v521 = vpop.trf.xlu0
        %v522 = vpop.trf.xlu0
        %v523 = vpop.trf.xlu0
        %v524 = vpop.trf.xlu0
        %v525 = vpop.trf.xlu0
        %v526 = vpop.trf.xlu0
        %v527 = vpop.trf.xlu0
        %v528 = vpop.trf.xlu0
        %v529 = vpop.trf.xlu0
        %v530 = vpop.trf.xlu0
        %v531 = vpop.trf.xlu0
        %v532 = vpop.trf.xlu0
        %v533 = vpop.trf.xlu0
        %v534 = vpop.trf.xlu0
        %535 = vxpose.xlu0.b32.start [1/16] %v502, 128
        %536 = vxpose.xlu0.b32.cont [2/16] 0.0, 128
        %537 = vxpose.xlu0.b32.cont [3/16] 0.0, 128
        %538 = vxpose.xlu0.b32.cont [4/16] 0.0, 128
        %539 = vxpose.xlu0.b32.cont [5/16] 0.0, 128
        %540 = vxpose.xlu0.b32.cont [6/16] 0.0, 128
        %541 = vxpose.xlu0.b32.cont [7/16] 0.0, 128
        %542 = vxpose.xlu0.b32.cont [8/16] 0.0, 128
        %543 = vxpose.xlu0.b32.cont [9/16] 0.0, 128
        %544 = vxpose.xlu0.b32.cont [10/16] 0.0, 128
        %545 = vxpose.xlu0.b32.cont [11/16] 0.0, 128
        %546 = vxpose.xlu0.b32.cont [12/16] 0.0, 128
        %547 = vxpose.xlu0.b32.cont [13/16] 0.0, 128
        %548 = vxpose.xlu0.b32.cont [14/16] 0.0, 128
        %549 = vxpose.xlu0.b32.cont [15/16] 0.0, 128
        %550 = vxpose.xlu0.b32.end [16/16] 0.0, 128
        %v551 = vpop.trf.xlu0
        %v552 = vpop.trf.xlu0
        %v553 = vpop.trf.xlu0
        %v554 = vpop.trf.xlu0
        %v555 = vpop.trf.xlu0
        %v556 = vpop.trf.xlu0
        %v557 = vpop.trf.xlu0
        %v558 = vpop.trf.xlu0
        %v559 = vpop.trf.xlu0
        %v560 = vpop.trf.xlu0
        %v561 = vpop.trf.xlu0
        %v562 = vpop.trf.xlu0
        %v563 = vpop.trf.xlu0
        %v564 = vpop.trf.xlu0
        %v565 = vpop.trf.xlu0
        %v566 = vpop.trf.xlu0
        %v567 = vld [vmem:[%s499] sm:$0xff]
        %568 = vxpose.xlu0.b32.start [1/16] %v567, 128
        %569 = vxpose.xlu0.b32.cont [2/16] 0.0, 128
        %570 = vxpose.xlu0.b32.cont [3/16] 0.0, 128
        %571 = vxpose.xlu0.b32.cont [4/16] 0.0, 128
        %572 = vxpose.xlu0.b32.cont [5/16] 0.0, 128
        %573 = vxpose.xlu0.b32.cont [6/16] 0.0, 128
        %574 = vxpose.xlu0.b32.cont [7/16] 0.0, 128
        %575 = vxpose.xlu0.b32.cont [8/16] 0.0, 128
        %576 = vxpose.xlu0.b32.cont [9/16] 0.0, 128
        %577 = vxpose.xlu0.b32.cont [10/16] 0.0, 128
        %578 = vxpose.xlu0.b32.cont [11/16] 0.0, 128
        %579 = vxpose.xlu0.b32.cont [12/16] 0.0, 128
        %580 = vxpose.xlu0.b32.cont [13/16] 0.0, 128
        %581 = vxpose.xlu0.b32.cont [14/16] 0.0, 128
        %582 = vxpose.xlu0.b32.cont [15/16] 0.0, 128
        %583 = vxpose.xlu0.b32.end [16/16] 0.0, 128
        %v584 = vpop.trf.xlu0
        %v585 = vpop.trf.xlu0
        %v586 = vpop.trf.xlu0
        %v587 = vpop.trf.xlu0
        %v588 = vpop.trf.xlu0
        %v589 = vpop.trf.xlu0
        %v590 = vpop.trf.xlu0
        %v591 = vpop.trf.xlu0
        %v592 = vpop.trf.xlu0
        %v593 = vpop.trf.xlu0
        %v594 = vpop.trf.xlu0
        %v595 = vpop.trf.xlu0
        %v596 = vpop.trf.xlu0
        %v597 = vpop.trf.xlu0
        %v598 = vpop.trf.xlu0
        %v599 = vpop.trf.xlu0
        %v600 = vld [vmem:[#allocation5] sm:$0xff]
        %v601 = vld [vmem:[#allocation7] sm:$0x1]
        %v603 = vlaneseq
        %v604 = vshrl.u32 %v603, 7
        %v605 = vsub.s32 0, %v604
        %v606 = vrot.slane %v601, %v605
        %vm608 = vcmask 64512
        %v610 = vsel %vm608, %v519, 0
        %v613 = vsel %vm608, %v520, 0
        %v616 = vsel %vm608, %v521, 0
        %v619 = vsel %vm608, %v522, 0
        %v622 = vsel %vm608, %v523, 0
        %v625 = vsel %vm608, %v524, 0
        %v628 = vsel %vm608, %v525, 0
        %v631 = vsel %vm608, %v526, 0
        %v634 = vsel %vm608, %v527, 0
        %v637 = vsel %vm608, %v528, 0
        %v640 = vsel %vm608, %v529, 0
        %v643 = vsel %vm608, %v530, 0
        %v646 = vsel %vm608, %v531, 0
        %v649 = vsel %vm608, %v532, 0
        %v652 = vsel %vm608, %v533, 0
        %v655 = vsel %vm608, %v534, 0
        %v658 = vsel %vm608, %v551, 0
        %v661 = vsel %vm608, %v552, 0
        %v664 = vsel %vm608, %v553, 0
        %v667 = vsel %vm608, %v554, 0
        %v670 = vsel %vm608, %v555, 0
        %v673 = vsel %vm608, %v556, 0
        %v676 = vsel %vm608, %v557, 0
        %v679 = vsel %vm608, %v558, 0
        %v682 = vsel %vm608, %v559, 0
        %v685 = vsel %vm608, %v560, 0
        %v688 = vsel %vm608, %v561, 0
        %v691 = vsel %vm608, %v562, 0
        %v694 = vsel %vm608, %v563, 0
        %v697 = vsel %vm608, %v564, 0
        %v700 = vsel %vm608, %v565, 0
        %v703 = vsel %vm608, %v566, 0
        %705 = vmatprep.subr.mxu0 0.0
        %706 = vmatpush1.msra.mxu0 %v600
        %707 = vmatprep.subr.mxu0 0.0
        %708 = vmatpush1.msra.mxu0 0.0
        %709 = vmatprep.subr.mxu0 0.0
        %710 = vmatpush1.msra.mxu0 0.0
        %711 = vmatprep.subr.mxu0 0.0
        %712 = vmatpush1.msra.mxu0 0.0
        %713 = vmatprep.subr.mxu0 0.0
        %714 = vmatpush1.msra.mxu0 0.0
        %715 = vmatprep.subr.mxu0 0.0
        %716 = vmatpush1.msra.mxu0 0.0
        %717 = vmatprep.subr.mxu0 0.0
        %718 = vmatpush1.msra.mxu0 0.0
        %719 = vmatprep.subr.mxu0 0.0
        %720 = vmatpush1.msra.mxu0 0.0
        %721 = vmatprep.subr.mxu0 0.0
        %722 = vmatpush1.msra.mxu0 0.0
        %723 = vmatprep.subr.mxu0 0.0
        %724 = vmatpush1.msra.mxu0 0.0
        %725 = vmatprep.subr.mxu0 0.0
        %726 = vmatpush1.msra.mxu0 0.0
        %727 = vmatprep.subr.mxu0 0.0
        %728 = vmatpush1.msra.mxu0 0.0
        %729 = vmatprep.subr.mxu0 0.0
        %730 = vmatpush1.msra.mxu0 0.0
        %731 = vmatprep.subr.mxu0 0.0
        %732 = vmatpush1.msra.mxu0 0.0
        %733 = vmatprep.subr.mxu0 0.0
        %734 = vmatpush1.msra.mxu0 0.0
        %735 = vmatprep.subr.mxu0 0.0
        %736 = vmatpush1.msra.mxu0 0.0
        %737 = vmatprep.subr.mxu0 0.0
        %738 = vmatpush1.msra.mxu0 0.0
        %739 = vmatprep.subr.mxu0 0.0
        %740 = vmatpush1.msra.mxu0 0.0
        %741 = vmatprep.subr.mxu0 0.0
        %742 = vmatpush1.msra.mxu0 0.0
        %743 = vmatprep.subr.mxu0 0.0
        %744 = vmatpush1.msra.mxu0 0.0
        %745 = vmatprep.subr.mxu0 0.0
        %746 = vmatpush1.msra.mxu0 0.0
        %747 = vmatprep.subr.mxu0 0.0
        %748 = vmatpush1.msra.mxu0 0.0
        %749 = vmatprep.subr.mxu0 0.0
        %750 = vmatpush1.msra.mxu0 0.0
        %751 = vmatprep.subr.mxu0 0.0
        %752 = vmatpush1.msra.mxu0 0.0
        %753 = vmatprep.subr.mxu0 0.0
        %754 = vmatpush1.msra.mxu0 0.0
        %755 = vmatprep.subr.mxu0 0.0
        %756 = vmatpush1.msra.mxu0 0.0
        %757 = vmatprep.subr.mxu0 0.0
        %758 = vmatpush1.msra.mxu0 0.0
        %759 = vmatprep.subr.mxu0 0.0
        %760 = vmatpush1.msra.mxu0 0.0
        %761 = vmatprep.subr.mxu0 0.0
        %762 = vmatpush1.msra.mxu0 0.0
        %763 = vmatprep.subr.mxu0 0.0
        %764 = vmatpush1.msra.mxu0 0.0
        %765 = vmatprep.subr.mxu0 0.0
        %766 = vmatpush1.msra.mxu0 0.0
        %767 = vmatprep.subr.mxu0 0.0
        %768 = vmatpush1.msra.mxu0 0.0
        %769 = vmatprep.mubr.f32.mxu0 0.0
        %770 = vmatmul.mubr.f32.gmra.mrb[0].mxu0 %v610
        %v771 = vpop.f32.mrb[0].mxu0
        %v772 = vadd.f32 %v606, %v771
        %v773 = vpop.f32.mrb[0].mxu0
        %774 = vmatprep.mubr.f32.mxu0 0.0
        %775 = vmatmul.mubr.f32.gmra.mrb[0].mxu0 %v613
        %v776 = vpop.f32.mrb[0].mxu0
        %v777 = vadd.f32 %v606, %v776
        %v778 = vpop.f32.mrb[0].mxu0
        %779 = vmatprep.mubr.f32.mxu0 0.0
        %780 = vmatmul.mubr.f32.gmra.mrb[0].mxu0 %v616
        %v781 = vpop.f32.mrb[0].mxu0
        %v782 = vadd.f32 %v606, %v781
        %v783 = vpop.f32.mrb[0].mxu0
        %784 = vmatprep.mubr.f32.mxu0 0.0
        %785 = vmatmul.mubr.f32.gmra.mrb[0].mxu0 %v619
        %v786 = vpop.f32.mrb[0].mxu0
        %v787 = vadd.f32 %v606, %v786
        %v788 = vpop.f32.mrb[0].mxu0
        %789 = vmatprep.mubr.f32.mxu0 0.0
        %790 = vmatmul.mubr.f32.gmra.mrb[0].mxu0 %v622
        %v791 = vpop.f32.mrb[0].mxu0
        %v792 = vadd.f32 %v606, %v791
        %v793 = vpop.f32.mrb[0].mxu0
        %794 = vmatprep.mubr.f32.mxu0 0.0
        %795 = vmatmul.mubr.f32.gmra.mrb[0].mxu0 %v625
        %v796 = vpop.f32.mrb[0].mxu0
        %v797 = vadd.f32 %v606, %v796
        %v798 = vpop.f32.mrb[0].mxu0
        %799 = vmatprep.mubr.f32.mxu0 0.0
        %800 = vmatmul.mubr.f32.gmra.mrb[0].mxu0 %v628
        %v801 = vpop.f32.mrb[0].mxu0
        %v802 = vadd.f32 %v606, %v801
        %v803 = vpop.f32.mrb[0].mxu0
        %804 = vmatprep.mubr.f32.mxu0 0.0
        %805 = vmatmul.mubr.f32.gmra.mrb[0].mxu0 %v631
        %v806 = vpop.f32.mrb[0].mxu0
        %v807 = vadd.f32 %v606, %v806
        %v808 = vpop.f32.mrb[0].mxu0
        %809 = vmatprep.mubr.f32.mxu0 0.0
        %810 = vmatmul.mubr.f32.gmra.mrb[0].mxu0 %v634
        %v811 = vpop.f32.mrb[0].mxu0
        %v812 = vadd.f32 %v606, %v811
        %v813 = vpop.f32.mrb[0].mxu0
        %814 = vmatprep.mubr.f32.mxu0 0.0
        %815 = vmatmul.mubr.f32.gmra.mrb[0].mxu0 %v637
        %v816 = vpop.f32.mrb[0].mxu0
        %v817 = vadd.f32 %v606, %v816
        %v818 = vpop.f32.mrb[0].mxu0
        %819 = vmatprep.mubr.f32.mxu0 0.0
        %820 = vmatmul.mubr.f32.gmra.mrb[0].mxu0 %v640
        %v821 = vpop.f32.mrb[0].mxu0
        %v822 = vadd.f32 %v606, %v821
        %v823 = vpop.f32.mrb[0].mxu0
        %824 = vmatprep.mubr.f32.mxu0 0.0
        %825 = vmatmul.mubr.f32.gmra.mrb[0].mxu0 %v643
        %v826 = vpop.f32.mrb[0].mxu0
        %v827 = vadd.f32 %v606, %v826
        %v828 = vpop.f32.mrb[0].mxu0
        %829 = vmatprep.mubr.f32.mxu0 0.0
        %830 = vmatmul.mubr.f32.gmra.mrb[0].mxu0 %v646
        %v831 = vpop.f32.mrb[0].mxu0
        %v832 = vadd.f32 %v606, %v831
        %v833 = vpop.f32.mrb[0].mxu0
        %834 = vmatprep.mubr.f32.mxu0 0.0
        %835 = vmatmul.mubr.f32.gmra.mrb[0].mxu0 %v649
        %v836 = vpop.f32.mrb[0].mxu0
        %v837 = vadd.f32 %v606, %v836
        %v838 = vpop.f32.mrb[0].mxu0
        %839 = vmatprep.mubr.f32.mxu0 0.0
        %840 = vmatmul.mubr.f32.gmra.mrb[0].mxu0 %v652
        %v841 = vpop.f32.mrb[0].mxu0
        %v842 = vadd.f32 %v606, %v841
        %v843 = vpop.f32.mrb[0].mxu0
        %844 = vmatprep.mubr.f32.mxu0 0.0
        %845 = vmatmul.mubr.f32.gmra.mrb[0].mxu0 %v655
        %v846 = vpop.f32.mrb[0].mxu0
        %v847 = vadd.f32 %v606, %v846
        %v848 = vpop.f32.mrb[0].mxu0
        %849 = vmatprep.mubr.f32.mxu0 0.0
        %850 = vmatmul.mubr.f32.gmra.mrb[0].mxu0 %v658
        %v851 = vpop.f32.mrb[0].mxu0
        %v852 = vadd.f32 %v606, %v851
        %v853 = vpop.f32.mrb[0].mxu0
        %854 = vmatprep.mubr.f32.mxu0 0.0
        %855 = vmatmul.mubr.f32.gmra.mrb[0].mxu0 %v661
        %v856 = vpop.f32.mrb[0].mxu0
        %v857 = vadd.f32 %v606, %v856
        %v858 = vpop.f32.mrb[0].mxu0
        %859 = vmatprep.mubr.f32.mxu0 0.0
        %860 = vmatmul.mubr.f32.gmra.mrb[0].mxu0 %v664
        %v861 = vpop.f32.mrb[0].mxu0
        %v862 = vadd.f32 %v606, %v861
        %v863 = vpop.f32.mrb[0].mxu0
        %864 = vmatprep.mubr.f32.mxu0 0.0
        %865 = vmatmul.mubr.f32.gmra.mrb[0].mxu0 %v667
        %v866 = vpop.f32.mrb[0].mxu0
        %v867 = vadd.f32 %v606, %v866
        %v868 = vpop.f32.mrb[0].mxu0
        %869 = vmatprep.mubr.f32.mxu0 0.0
        %870 = vmatmul.mubr.f32.gmra.mrb[0].mxu0 %v670
        %v871 = vpop.f32.mrb[0].mxu0
        %v872 = vadd.f32 %v606, %v871
        %v873 = vpop.f32.mrb[0].mxu0
        %874 = vmatprep.mubr.f32.mxu0 0.0
        %875 = vmatmul.mubr.f32.gmra.mrb[0].mxu0 %v673
        %v876 = vpop.f32.mrb[0].mxu0
        %v877 = vadd.f32 %v606, %v876
        %v878 = vpop.f32.mrb[0].mxu0
        %879 = vmatprep.mubr.f32.mxu0 0.0
        %880 = vmatmul.mubr.f32.gmra.mrb[0].mxu0 %v676
        %v881 = vpop.f32.mrb[0].mxu0
        %v882 = vadd.f32 %v606, %v881
        %v883 = vpop.f32.mrb[0].mxu0
        %884 = vmatprep.mubr.f32.mxu0 0.0
        %885 = vmatmul.mubr.f32.gmra.mrb[0].mxu0 %v679
        %v886 = vpop.f32.mrb[0].mxu0
        %v887 = vadd.f32 %v606, %v886
        %v888 = vpop.f32.mrb[0].mxu0
        %889 = vmatprep.mubr.f32.mxu0 0.0
        %890 = vmatmul.mubr.f32.gmra.mrb[0].mxu0 %v682
        %v891 = vpop.f32.mrb[0].mxu0
        %v892 = vadd.f32 %v606, %v891
        %v893 = vpop.f32.mrb[0].mxu0
        %894 = vmatprep.mubr.f32.mxu0 0.0
        %895 = vmatmul.mubr.f32.gmra.mrb[0].mxu0 %v685
        %v896 = vpop.f32.mrb[0].mxu0
        %v897 = vadd.f32 %v606, %v896
        %v898 = vpop.f32.mrb[0].mxu0
        %899 = vmatprep.mubr.f32.mxu0 0.0
        %900 = vmatmul.mubr.f32.gmra.mrb[0].mxu0 %v688
        %v901 = vpop.f32.mrb[0].mxu0
        %v902 = vadd.f32 %v606, %v901
        %v903 = vpop.f32.mrb[0].mxu0
        %904 = vmatprep.mubr.f32.mxu0 0.0
        %905 = vmatmul.mubr.f32.gmra.mrb[0].mxu0 %v691
        %v906 = vpop.f32.mrb[0].mxu0
        %v907 = vadd.f32 %v606, %v906
        %v908 = vpop.f32.mrb[0].mxu0
        %909 = vmatprep.mubr.f32.mxu0 0.0
        %910 = vmatmul.mubr.f32.gmra.mrb[0].mxu0 %v694
        %v911 = vpop.f32.mrb[0].mxu0
        %v912 = vadd.f32 %v606, %v911
        %v913 = vpop.f32.mrb[0].mxu0
        %914 = vmatprep.mubr.f32.mxu0 0.0
        %915 = vmatmul.mubr.f32.gmra.mrb[0].mxu0 %v697
        %v916 = vpop.f32.mrb[0].mxu0
        %v917 = vadd.f32 %v606, %v916
        %v918 = vpop.f32.mrb[0].mxu0
        %919 = vmatprep.mubr.f32.mxu0 0.0
        %920 = vmatmul.mubr.f32.gmra.mrb[0].mxu0 %v700
        %v921 = vpop.f32.mrb[0].mxu0
        %v922 = vadd.f32 %v606, %v921
        %v923 = vpop.f32.mrb[0].mxu0
        %924 = vmatprep.mubr.f32.mxu0 0.0
        %925 = vmatmul.mubr.f32.gmra.mrb[0].mxu0 %v703
        %v926 = vpop.f32.mrb[0].mxu0
        %v927 = vadd.f32 %v606, %v926
        %v928 = vpop.f32.mrb[0].mxu0
        %929 = vdwg.mxu0
        %v930 = vld [vmem:[%s5] sm:$0xff]
        %v931 = vld [vmem:[%s6] sm:$0xff]
        %933 = vset.pattern.permute.xlu0 0
        %934 = vperm.xlu0 %933, %v931
        %v935 = vpop.permute.xlu0 %934
        %v938 = vsel %vm608, %v930, 0
        %940 = vmatprep.subr.mxu0 0.0
        %941 = vmatpush1.msra.mxu0 %v567
        %942 = vmatprep.subr.mxu0 0.0
        %943 = vmatpush1.msra.mxu0 0.0
        %944 = vmatprep.subr.mxu0 0.0
        %945 = vmatpush1.msra.mxu0 0.0
        %946 = vmatprep.subr.mxu0 0.0
        %947 = vmatpush1.msra.mxu0 0.0
        %948 = vmatprep.subr.mxu0 0.0
        %949 = vmatpush1.msra.mxu0 0.0
        %950 = vmatprep.subr.mxu0 0.0
        %951 = vmatpush1.msra.mxu0 0.0
        %952 = vmatprep.subr.mxu0 0.0
        %953 = vmatpush1.msra.mxu0 0.0
        %954 = vmatprep.subr.mxu0 0.0
        %955 = vmatpush1.msra.mxu0 0.0
        %956 = vmatprep.subr.mxu0 0.0
        %957 = vmatpush1.msra.mxu0 0.0
        %958 = vmatprep.subr.mxu0 0.0
        %959 = vmatpush1.msra.mxu0 0.0
        %960 = vmatprep.subr.mxu0 0.0
        %961 = vmatpush1.msra.mxu0 0.0
        %962 = vmatprep.subr.mxu0 0.0
        %963 = vmatpush1.msra.mxu0 0.0
        %964 = vmatprep.subr.mxu0 0.0
        %965 = vmatpush1.msra.mxu0 0.0
        %966 = vmatprep.subr.mxu0 0.0
        %967 = vmatpush1.msra.mxu0 0.0
        %968 = vmatprep.subr.mxu0 0.0
        %969 = vmatpush1.msra.mxu0 0.0
        %970 = vmatprep.subr.mxu0 0.0
        %971 = vmatpush1.msra.mxu0 0.0
        %972 = vmatprep.subr.mxu0 0.0
        %973 = vmatpush1.msra.mxu0 0.0
        %974 = vmatprep.subr.mxu0 0.0
        %975 = vmatpush1.msra.mxu0 0.0
        %976 = vmatprep.subr.mxu0 0.0
        %977 = vmatpush1.msra.mxu0 0.0
        %978 = vmatprep.subr.mxu0 0.0
        %979 = vmatpush1.msra.mxu0 0.0
        %980 = vmatprep.subr.mxu0 0.0
        %981 = vmatpush1.msra.mxu0 0.0
        %982 = vmatprep.subr.mxu0 0.0
        %983 = vmatpush1.msra.mxu0 0.0
        %984 = vmatprep.subr.mxu0 0.0
        %985 = vmatpush1.msra.mxu0 0.0
        %986 = vmatprep.subr.mxu0 0.0
        %987 = vmatpush1.msra.mxu0 0.0
        %988 = vmatprep.subr.mxu0 0.0
        %989 = vmatpush1.msra.mxu0 0.0
        %990 = vmatprep.subr.mxu0 0.0
        %991 = vmatpush1.msra.mxu0 0.0
        %992 = vmatprep.subr.mxu0 0.0
        %993 = vmatpush1.msra.mxu0 0.0
        %994 = vmatprep.subr.mxu0 0.0
        %995 = vmatpush1.msra.mxu0 0.0
        %996 = vmatprep.subr.mxu0 0.0
        %997 = vmatpush1.msra.mxu0 0.0
        %998 = vmatprep.subr.mxu0 0.0
        %999 = vmatpush1.msra.mxu0 0.0
        %1000 = vmatprep.subr.mxu0 0.0
        %1001 = vmatpush1.msra.mxu0 0.0
        %1002 = vmatprep.subr.mxu0 0.0
        %1003 = vmatpush1.msra.mxu0 0.0
        %1004 = vmatprep.mubr.f32.mxu0 0.0
        %1005 = vmatmul.mubr.f32.gmra.mrb[0].mxu0 %v938
        %v1006 = vpop.f32.mrb[0].mxu0
        %v1007 = vadd.f32 %v935, %v1006
        %v1008 = vpop.f32.mrb[0].mxu0
        %1009 = vdwg.mxu0
        %v1010 = vld [vmem:[%s7] sm:$0xff]
        %v1011 = vld [vmem:[%s8] sm:$0x1]
        %v1013 = vlaneseq
        %v1014 = vshrl.u32 %v1013, 7
        %v1015 = vsub.s32 0, %v1014
        %v1016 = vrot.slane %v1011, %v1015
        %v1019 = vsel %vm608, %v584, 0
        %1021 = vmatprep.subr.mxu0 0.0
        %1022 = vmatpush1.msra.mxu0 %v1010
        %1023 = vmatprep.subr.mxu0 0.0
        %1024 = vmatpush1.msra.mxu0 0.0
        %1025 = vmatprep.subr.mxu0 0.0
        %1026 = vmatpush1.msra.mxu0 0.0
        %1027 = vmatprep.subr.mxu0 0.0
        %1028 = vmatpush1.msra.mxu0 0.0
        %1029 = vmatprep.subr.mxu0 0.0
        %1030 = vmatpush1.msra.mxu0 0.0
        %1031 = vmatprep.subr.mxu0 0.0
        %1032 = vmatpush1.msra.mxu0 0.0
        %1033 = vmatprep.subr.mxu0 0.0
        %1034 = vmatpush1.msra.mxu0 0.0
        %1035 = vmatprep.subr.mxu0 0.0
        %1036 = vmatpush1.msra.mxu0 0.0
        %1037 = vmatprep.subr.mxu0 0.0
        %1038 = vmatpush1.msra.mxu0 0.0
        %1039 = vmatprep.subr.mxu0 0.0
        %1040 = vmatpush1.msra.mxu0 0.0
        %1041 = vmatprep.subr.mxu0 0.0
        %1042 = vmatpush1.msra.mxu0 0.0
        %1043 = vmatprep.subr.mxu0 0.0
        %1044 = vmatpush1.msra.mxu0 0.0
        %1045 = vmatprep.subr.mxu0 0.0
        %1046 = vmatpush1.msra.mxu0 0.0
        %1047 = vmatprep.subr.mxu0 0.0
        %1048 = vmatpush1.msra.mxu0 0.0
        %1049 = vmatprep.subr.mxu0 0.0
        %1050 = vmatpush1.msra.mxu0 0.0
        %1051 = vmatprep.subr.mxu0 0.0
        %1052 = vmatpush1.msra.mxu0 0.0
        %1053 = vmatprep.subr.mxu0 0.0
        %1054 = vmatpush1.msra.mxu0 0.0
        %1055 = vmatprep.subr.mxu0 0.0
        %1056 = vmatpush1.msra.mxu0 0.0
        %1057 = vmatprep.subr.mxu0 0.0
        %1058 = vmatpush1.msra.mxu0 0.0
        %1059 = vmatprep.subr.mxu0 0.0
        %1060 = vmatpush1.msra.mxu0 0.0
        %1061 = vmatprep.subr.mxu0 0.0
        %1062 = vmatpush1.msra.mxu0 0.0
        %1063 = vmatprep.subr.mxu0 0.0
        %1064 = vmatpush1.msra.mxu0 0.0
        %1065 = vmatprep.subr.mxu0 0.0
        %1066 = vmatpush1.msra.mxu0 0.0
        %1067 = vmatprep.subr.mxu0 0.0
        %1068 = vmatpush1.msra.mxu0 0.0
        %1069 = vmatprep.subr.mxu0 0.0
        %1070 = vmatpush1.msra.mxu0 0.0
        %1071 = vmatprep.subr.mxu0 0.0
        %1072 = vmatpush1.msra.mxu0 0.0
        %1073 = vmatprep.subr.mxu0 0.0
        %1074 = vmatpush1.msra.mxu0 0.0
        %1075 = vmatprep.subr.mxu0 0.0
        %1076 = vmatpush1.msra.mxu0 0.0
        %1077 = vmatprep.subr.mxu0 0.0
        %1078 = vmatpush1.msra.mxu0 0.0
        %1079 = vmatprep.subr.mxu0 0.0
        %1080 = vmatpush1.msra.mxu0 0.0
        %1081 = vmatprep.subr.mxu0 0.0
        %1082 = vmatpush1.msra.mxu0 0.0
        %1083 = vmatprep.subr.mxu0 0.0
        %1084 = vmatpush1.msra.mxu0 0.0
        %1085 = vmatprep.mubr.f32.mxu0 0.0
        %1086 = vmatmul.mubr.f32.gmra.mrb[0].mxu0 %v1019
        %v1087 = vpop.f32.mrb[0].mxu0
        %v1088 = vadd.f32 %v1016, %v1087
        %v1089 = vpop.f32.mrb[0].mxu0
        %1090 = vdwg.mxu0
        %v1091 = vld [vmem:[%s9] sm:$0xff]
        %v1092 = vld [vmem:[%s10] sm:$0x1]
        %vm1093 = vcmask 15360
        %v1095 = vsel %vm1093, %v772, 0
        %v1098 = vsel %vm1093, %v777, 0
        %v1101 = vsel %vm1093, %v782, 0
        %v1104 = vsel %vm1093, %v787, 0
        %v1107 = vsel %vm1093, %v792, 0
        %v1110 = vsel %vm1093, %v797, 0
        %v1113 = vsel %vm1093, %v802, 0
        %v1116 = vsel %vm1093, %v807, 0
        %v1119 = vsel %vm1093, %v812, 0
        %v1122 = vsel %vm1093, %v817, 0
        %v1125 = vsel %vm1093, %v822, 0
        %v1128 = vsel %vm1093, %v827, 0
        %v1131 = vsel %vm1093, %v832, 0
        %v1134 = vsel %vm1093, %v837, 0
        %v1137 = vsel %vm1093, %v842, 0
        %v1140 = vsel %vm1093, %v847, 0
        %v1143 = vsel %vm1093, %v852, 0
        %v1146 = vsel %vm1093, %v857, 0
        %v1149 = vsel %vm1093, %v862, 0
        %v1152 = vsel %vm1093, %v867, 0
        %v1155 = vsel %vm1093, %v872, 0
        %v1158 = vsel %vm1093, %v877, 0
        %v1161 = vsel %vm1093, %v882, 0
        %v1164 = vsel %vm1093, %v887, 0
        %v1167 = vsel %vm1093, %v892, 0
        %v1170 = vsel %vm1093, %v897, 0
        %v1173 = vsel %vm1093, %v902, 0
        %v1176 = vsel %vm1093, %v907, 0
        %v1179 = vsel %vm1093, %v912, 0
        %v1182 = vsel %vm1093, %v917, 0
        %v1185 = vsel %vm1093, %v922, 0
        %v1188 = vsel %vm1093, %v927, 0
        %vm1190 = vcmask 1041408
        %v1192 = vsel %vm1190, %v1007, 0
        %1194 = vmatprep.subr.mxu0 0.0
        %1195 = vmatpush1.msra.mxu0 %v1192
        %1196 = vmatprep.subr.mxu0 0.0
        %1197 = vmatpush1.msra.mxu0 0.0
        %1198 = vmatprep.subr.mxu0 0.0
        %1199 = vmatpush1.msra.mxu0 0.0
        %1200 = vmatprep.subr.mxu0 0.0
        %1201 = vmatpush1.msra.mxu0 0.0
        %1202 = vmatprep.subr.mxu0 0.0
        %1203 = vmatpush1.msra.mxu0 0.0
        %1204 = vmatprep.subr.mxu0 0.0
        %1205 = vmatpush1.msra.mxu0 0.0
        %1206 = vmatprep.subr.mxu0 0.0
        %1207 = vmatpush1.msra.mxu0 0.0
        %1208 = vmatprep.subr.mxu0 0.0
        %1209 = vmatpush1.msra.mxu0 0.0
        %1210 = vmatprep.subr.mxu0 0.0
        %1211 = vmatpush1.msra.mxu0 0.0
        %1212 = vmatprep.subr.mxu0 0.0
        %1213 = vmatpush1.msra.mxu0 0.0
        %1214 = vmatprep.subr.mxu0 0.0
        %1215 = vmatpush1.msra.mxu0 0.0
        %1216 = vmatprep.subr.mxu0 0.0
        %1217 = vmatpush1.msra.mxu0 0.0
        %1218 = vmatprep.subr.mxu0 0.0
        %1219 = vmatpush1.msra.mxu0 0.0
        %1220 = vmatprep.subr.mxu0 0.0
        %1221 = vmatpush1.msra.mxu0 0.0
        %1222 = vmatprep.subr.mxu0 0.0
        %1223 = vmatpush1.msra.mxu0 0.0
        %1224 = vmatprep.subr.mxu0 0.0
        %1225 = vmatpush1.msra.mxu0 0.0
        %1226 = vmatprep.subr.mxu0 0.0
        %1227 = vmatpush1.msra.mxu0 0.0
        %1228 = vmatprep.subr.mxu0 0.0
        %1229 = vmatpush1.msra.mxu0 0.0
        %1230 = vmatprep.subr.mxu0 0.0
        %1231 = vmatpush1.msra.mxu0 0.0
        %1232 = vmatprep.subr.mxu0 0.0
        %1233 = vmatpush1.msra.mxu0 0.0
        %1234 = vmatprep.subr.mxu0 0.0
        %1235 = vmatpush1.msra.mxu0 0.0
        %1236 = vmatprep.subr.mxu0 0.0
        %1237 = vmatpush1.msra.mxu0 0.0
        %1238 = vmatprep.subr.mxu0 0.0
        %1239 = vmatpush1.msra.mxu0 0.0
        %1240 = vmatprep.subr.mxu0 0.0
        %1241 = vmatpush1.msra.mxu0 0.0
        %1242 = vmatprep.subr.mxu0 0.0
        %1243 = vmatpush1.msra.mxu0 0.0
        %1244 = vmatprep.subr.mxu0 0.0
        %1245 = vmatpush1.msra.mxu0 0.0
        %1246 = vmatprep.subr.mxu0 0.0
        %1247 = vmatpush1.msra.mxu0 0.0
        %1248 = vmatprep.subr.mxu0 0.0
        %1249 = vmatpush1.msra.mxu0 0.0
        %1250 = vmatprep.subr.mxu0 0.0
        %1251 = vmatpush1.msra.mxu0 0.0
        %1252 = vmatprep.subr.mxu0 0.0
        %1253 = vmatpush1.msra.mxu0 0.0
        %1254 = vmatprep.subr.mxu0 0.0
        %1255 = vmatpush1.msra.mxu0 0.0
        %1256 = vmatprep.subr.mxu0 0.0
        %1257 = vmatpush1.msra.mxu0 0.0
        %1258 = vmatprep.mubr.f32.mxu0 0.0
        %1259 = vmatmul.mubr.f32.gmra.mrb[0].mxu0 %v1095
        %v1260 = vpop.f32.mrb[0].mxu0
        %v1261 = vadd.f32 0.0, %v1260
        %v1262 = vpop.f32.mrb[0].mxu0
        %1263 = vmatprep.mubr.f32.mxu0 0.0
        %1264 = vmatmul.mubr.f32.gmra.mrb[0].mxu0 %v1098
        %v1265 = vpop.f32.mrb[0].mxu0
        %v1266 = vadd.f32 0.0, %v1265
        %v1267 = vpop.f32.mrb[0].mxu0
        %1268 = vmatprep.mubr.f32.mxu0 0.0
        %1269 = vmatmul.mubr.f32.gmra.mrb[0].mxu0 %v1101
        %v1270 = vpop.f32.mrb[0].mxu0
        %v1271 = vadd.f32 0.0, %v1270
        %v1272 = vpop.f32.mrb[0].mxu0
        %1273 = vmatprep.mubr.f32.mxu0 0.0
        %1274 = vmatmul.mubr.f32.gmra.mrb[0].mxu0 %v1104
        %v1275 = vpop.f32.mrb[0].mxu0
        %v1276 = vadd.f32 0.0, %v1275
        %v1277 = vpop.f32.mrb[0].mxu0
        %1278 = vmatprep.mubr.f32.mxu0 0.0
        %1279 = vmatmul.mubr.f32.gmra.mrb[0].mxu0 %v1107
        %v1280 = vpop.f32.mrb[0].mxu0
        %v1281 = vadd.f32 0.0, %v1280
        %v1282 = vpop.f32.mrb[0].mxu0
        %1283 = vmatprep.mubr.f32.mxu0 0.0
        %1284 = vmatmul.mubr.f32.gmra.mrb[0].mxu0 %v1110
        %v1285 = vpop.f32.mrb[0].mxu0
        %v1286 = vadd.f32 0.0, %v1285
        %v1287 = vpop.f32.mrb[0].mxu0
        %1288 = vmatprep.mubr.f32.mxu0 0.0
        %1289 = vmatmul.mubr.f32.gmra.mrb[0].mxu0 %v1113
        %v1290 = vpop.f32.mrb[0].mxu0
        %v1291 = vadd.f32 0.0, %v1290
        %v1292 = vpop.f32.mrb[0].mxu0
        %1293 = vmatprep.mubr.f32.mxu0 0.0
        %1294 = vmatmul.mubr.f32.gmra.mrb[0].mxu0 %v1116
        %v1295 = vpop.f32.mrb[0].mxu0
        %v1296 = vadd.f32 0.0, %v1295
        %v1297 = vpop.f32.mrb[0].mxu0
        %1298 = vmatprep.mubr.f32.mxu0 0.0
        %1299 = vmatmul.mubr.f32.gmra.mrb[0].mxu0 %v1119
        %v1300 = vpop.f32.mrb[0].mxu0
        %v1301 = vadd.f32 0.0, %v1300
        %v1302 = vpop.f32.mrb[0].mxu0
        %1303 = vmatprep.mubr.f32.mxu0 0.0
        %1304 = vmatmul.mubr.f32.gmra.mrb[0].mxu0 %v1122
        %v1305 = vpop.f32.mrb[0].mxu0
        %v1306 = vadd.f32 0.0, %v1305
        %v1307 = vpop.f32.mrb[0].mxu0
        %1308 = vmatprep.mubr.f32.mxu0 0.0
        %1309 = vmatmul.mubr.f32.gmra.mrb[0].mxu0 %v1125
        %v1310 = vpop.f32.mrb[0].mxu0
        %v1311 = vadd.f32 0.0, %v1310
        %v1312 = vpop.f32.mrb[0].mxu0
        %1313 = vmatprep.mubr.f32.mxu0 0.0
        %1314 = vmatmul.mubr.f32.gmra.mrb[0].mxu0 %v1128
        %v1315 = vpop.f32.mrb[0].mxu0
        %v1316 = vadd.f32 0.0, %v1315
        %v1317 = vpop.f32.mrb[0].mxu0
        %1318 = vmatprep.mubr.f32.mxu0 0.0
        %1319 = vmatmul.mubr.f32.gmra.mrb[0].mxu0 %v1131
        %v1320 = vpop.f32.mrb[0].mxu0
        %v1321 = vadd.f32 0.0, %v1320
        %v1322 = vpop.f32.mrb[0].mxu0
        %1323 = vmatprep.mubr.f32.mxu0 0.0
        %1324 = vmatmul.mubr.f32.gmra.mrb[0].mxu0 %v1134
        %v1325 = vpop.f32.mrb[0].mxu0
        %v1326 = vadd.f32 0.0, %v1325
        %v1327 = vpop.f32.mrb[0].mxu0
        %1328 = vmatprep.mubr.f32.mxu0 0.0
        %1329 = vmatmul.mubr.f32.gmra.mrb[0].mxu0 %v1137
        %v1330 = vpop.f32.mrb[0].mxu0
        %v1331 = vadd.f32 0.0, %v1330
        %v1332 = vpop.f32.mrb[0].mxu0
        %1333 = vmatprep.mubr.f32.mxu0 0.0
        %1334 = vmatmul.mubr.f32.gmra.mrb[0].mxu0 %v1140
        %v1335 = vpop.f32.mrb[0].mxu0
        %v1336 = vadd.f32 0.0, %v1335
        %v1337 = vpop.f32.mrb[0].mxu0
        %1338 = vmatprep.mubr.f32.mxu0 0.0
        %1339 = vmatmul.mubr.f32.gmra.mrb[0].mxu0 %v1143
        %v1340 = vpop.f32.mrb[0].mxu0
        %v1341 = vadd.f32 0.0, %v1340
        %v1342 = vpop.f32.mrb[0].mxu0
        %1343 = vmatprep.mubr.f32.mxu0 0.0
        %1344 = vmatmul.mubr.f32.gmra.mrb[0].mxu0 %v1146
        %v1345 = vpop.f32.mrb[0].mxu0
        %v1346 = vadd.f32 0.0, %v1345
        %v1347 = vpop.f32.mrb[0].mxu0
        %1348 = vmatprep.mubr.f32.mxu0 0.0
        %1349 = vmatmul.mubr.f32.gmra.mrb[0].mxu0 %v1149
        %v1350 = vpop.f32.mrb[0].mxu0
        %v1351 = vadd.f32 0.0, %v1350
        %v1352 = vpop.f32.mrb[0].mxu0
        %1353 = vmatprep.mubr.f32.mxu0 0.0
        %1354 = vmatmul.mubr.f32.gmra.mrb[0].mxu0 %v1152
        %v1355 = vpop.f32.mrb[0].mxu0
        %v1356 = vadd.f32 0.0, %v1355
        %v1357 = vpop.f32.mrb[0].mxu0
        %1358 = vmatprep.mubr.f32.mxu0 0.0
        %1359 = vmatmul.mubr.f32.gmra.mrb[0].mxu0 %v1155
        %v1360 = vpop.f32.mrb[0].mxu0
        %v1361 = vadd.f32 0.0, %v1360
        %v1362 = vpop.f32.mrb[0].mxu0
        %1363 = vmatprep.mubr.f32.mxu0 0.0
        %1364 = vmatmul.mubr.f32.gmra.mrb[0].mxu0 %v1158
        %v1365 = vpop.f32.mrb[0].mxu0
        %v1366 = vadd.f32 0.0, %v1365
        %v1367 = vpop.f32.mrb[0].mxu0
        %1368 = vmatprep.mubr.f32.mxu0 0.0
        %1369 = vmatmul.mubr.f32.gmra.mrb[0].mxu0 %v1161
        %v1370 = vpop.f32.mrb[0].mxu0
        %v1371 = vadd.f32 0.0, %v1370
        %v1372 = vpop.f32.mrb[0].mxu0
        %1373 = vmatprep.mubr.f32.mxu0 0.0
        %1374 = vmatmul.mubr.f32.gmra.mrb[0].mxu0 %v1164
        %v1375 = vpop.f32.mrb[0].mxu0
        %v1376 = vadd.f32 0.0, %v1375
        %v1377 = vpop.f32.mrb[0].mxu0
        %1378 = vmatprep.mubr.f32.mxu0 0.0
        %1379 = vmatmul.mubr.f32.gmra.mrb[0].mxu0 %v1167
        %v1380 = vpop.f32.mrb[0].mxu0
        %v1381 = vadd.f32 0.0, %v1380
        %v1382 = vpop.f32.mrb[0].mxu0
        %1383 = vmatprep.mubr.f32.mxu0 0.0
        %1384 = vmatmul.mubr.f32.gmra.mrb[0].mxu0 %v1170
        %v1385 = vpop.f32.mrb[0].mxu0
        %v1386 = vadd.f32 0.0, %v1385
        %v1387 = vpop.f32.mrb[0].mxu0
        %1388 = vmatprep.mubr.f32.mxu0 0.0
        %1389 = vmatmul.mubr.f32.gmra.mrb[0].mxu0 %v1173
        %v1390 = vpop.f32.mrb[0].mxu0
        %v1391 = vadd.f32 0.0, %v1390
        %v1392 = vpop.f32.mrb[0].mxu0
        %1393 = vmatprep.mubr.f32.mxu0 0.0
        %1394 = vmatmul.mubr.f32.gmra.mrb[0].mxu0 %v1176
        %v1395 = vpop.f32.mrb[0].mxu0
        %v1396 = vadd.f32 0.0, %v1395
        %v1397 = vpop.f32.mrb[0].mxu0
        %1398 = vmatprep.mubr.f32.mxu0 0.0
        %1399 = vmatmul.mubr.f32.gmra.mrb[0].mxu0 %v1179
        %v1400 = vpop.f32.mrb[0].mxu0
        %v1401 = vadd.f32 0.0, %v1400
        %v1402 = vpop.f32.mrb[0].mxu0
        %1403 = vmatprep.mubr.f32.mxu0 0.0
        %1404 = vmatmul.mubr.f32.gmra.mrb[0].mxu0 %v1182
        %v1405 = vpop.f32.mrb[0].mxu0
        %v1406 = vadd.f32 0.0, %v1405
        %v1407 = vpop.f32.mrb[0].mxu0
        %1408 = vmatprep.mubr.f32.mxu0 0.0
        %1409 = vmatmul.mubr.f32.gmra.mrb[0].mxu0 %v1185
        %v1410 = vpop.f32.mrb[0].mxu0
        %v1411 = vadd.f32 0.0, %v1410
        %v1412 = vpop.f32.mrb[0].mxu0
        %1413 = vmatprep.mubr.f32.mxu0 0.0
        %1414 = vmatmul.mubr.f32.gmra.mrb[0].mxu0 %v1188
        %v1415 = vpop.f32.mrb[0].mxu0
        %v1416 = vadd.f32 0.0, %v1415
        %v1417 = vpop.f32.mrb[0].mxu0
        %1418 = vdwg.mxu0
        %v1419 = vmul.f32 %v1261, 0.70710677
        %v1420 = vmul.f32 %v1266, 0.70710677
        %v1421 = vmul.f32 %v1271, 0.70710677
        %v1422 = vmul.f32 %v1276, 0.70710677
        %v1423 = vmul.f32 %v1281, 0.70710677
        %v1424 = vmul.f32 %v1286, 0.70710677
        %v1425 = vmul.f32 %v1291, 0.70710677
        %v1426 = vmul.f32 %v1296, 0.70710677
        %v1427 = vmul.f32 %v1301, 0.70710677
        %v1428 = vmul.f32 %v1306, 0.70710677
        %v1429 = vmul.f32 %v1311, 0.70710677
        %v1430 = vmul.f32 %v1316, 0.70710677
        %v1431 = vmul.f32 %v1321, 0.70710677
        %v1432 = vmul.f32 %v1326, 0.70710677
        %v1433 = vmul.f32 %v1331, 0.70710677
        %v1434 = vmul.f32 %v1336, 0.70710677
        %v1435 = vmul.f32 %v1341, 0.70710677
        %v1436 = vmul.f32 %v1346, 0.70710677
        %v1437 = vmul.f32 %v1351, 0.70710677
        %v1438 = vmul.f32 %v1356, 0.70710677
        %v1439 = vmul.f32 %v1361, 0.70710677
        %v1440 = vmul.f32 %v1366, 0.70710677
        %v1441 = vmul.f32 %v1371, 0.70710677
        %v1442 = vmul.f32 %v1376, 0.70710677
        %v1443 = vmul.f32 %v1381, 0.70710677
        %v1444 = vmul.f32 %v1386, 0.70710677
        %v1445 = vmul.f32 %v1391, 0.70710677
        %v1446 = vmul.f32 %v1396, 0.70710677
        %v1447 = vmul.f32 %v1401, 0.70710677
        %v1448 = vmul.f32 %v1406, 0.70710677
        %v1449 = vmul.f32 %v1411, 0.70710677
        %v1450 = vmul.f32 %v1416, 0.70710677
        %vm1451 = vcmask 31744
        %v1452 = vsel %vm1451, %v1419, -inf
        %1453 = vmax.xlane.f32.xlu0 %v1452
        %v1454 = vpop.xlane.xlu0 %1453
        %v1455 = vsel %vm1451, %v1420, -inf
        %1456 = vmax.xlane.f32.xlu0 %v1455
        %v1457 = vpop.xlane.xlu0 %1456
        %v1458 = vsel %vm1451, %v1421, -inf
        %1459 = vmax.xlane.f32.xlu0 %v1458
        %v1460 = vpop.xlane.xlu0 %1459
        %v1461 = vsel %vm1451, %v1422, -inf
        %1462 = vmax.xlane.f32.xlu0 %v1461
        %v1463 = vpop.xlane.xlu0 %1462
        %v1464 = vsel %vm1451, %v1423, -inf
        %1465 = vmax.xlane.f32.xlu0 %v1464
        %v1466 = vpop.xlane.xlu0 %1465
        %v1467 = vsel %vm1451, %v1424, -inf
        %1468 = vmax.xlane.f32.xlu0 %v1467
        %v1469 = vpop.xlane.xlu0 %1468
        %v1470 = vsel %vm1451, %v1425, -inf
        %1471 = vmax.xlane.f32.xlu0 %v1470
        %v1472 = vpop.xlane.xlu0 %1471
        %v1473 = vsel %vm1451, %v1426, -inf
        %1474 = vmax.xlane.f32.xlu0 %v1473
        %v1475 = vpop.xlane.xlu0 %1474
        %v1476 = vsel %vm1451, %v1427, -inf
        %1477 = vmax.xlane.f32.xlu0 %v1476
        %v1478 = vpop.xlane.xlu0 %1477
        %v1479 = vsel %vm1451, %v1428, -inf
        %1480 = vmax.xlane.f32.xlu0 %v1479
        %v1481 = vpop.xlane.xlu0 %1480
        %v1482 = vsel %vm1451, %v1429, -inf
        %1483 = vmax.xlane.f32.xlu0 %v1482
        %v1484 = vpop.xlane.xlu0 %1483
        %v1485 = vsel %vm1451, %v1430, -inf
        %1486 = vmax.xlane.f32.xlu0 %v1485
        %v1487 = vpop.xlane.xlu0 %1486
        %v1488 = vsel %vm1451, %v1431, -inf
        %1489 = vmax.xlane.f32.xlu0 %v1488
        %v1490 = vpop.xlane.xlu0 %1489
        %v1491 = vsel %vm1451, %v1432, -inf
        %1492 = vmax.xlane.f32.xlu0 %v1491
        %v1493 = vpop.xlane.xlu0 %1492
        %v1494 = vsel %vm1451, %v1433, -inf
        %1495 = vmax.xlane.f32.xlu0 %v1494
        %v1496 = vpop.xlane.xlu0 %1495
        %v1497 = vsel %vm1451, %v1434, -inf
        %1498 = vmax.xlane.f32.xlu0 %v1497
        %v1499 = vpop.xlane.xlu0 %1498
        %v1500 = vsel %vm1451, %v1435, -inf
        %1501 = vmax.xlane.f32.xlu0 %v1500
        %v1502 = vpop.xlane.xlu0 %1501
        %v1503 = vsel %vm1451, %v1436, -inf
        %1504 = vmax.xlane.f32.xlu0 %v1503
        %v1505 = vpop.xlane.xlu0 %1504
        %v1506 = vsel %vm1451, %v1437, -inf
        %1507 = vmax.xlane.f32.xlu0 %v1506
        %v1508 = vpop.xlane.xlu0 %1507
        %v1509 = vsel %vm1451, %v1438, -inf
        %1510 = vmax.xlane.f32.xlu0 %v1509
        %v1511 = vpop.xlane.xlu0 %1510
        %v1512 = vsel %vm1451, %v1439, -inf
        %1513 = vmax.xlane.f32.xlu0 %v1512
        %v1514 = vpop.xlane.xlu0 %1513
        %v1515 = vsel %vm1451, %v1440, -inf
        %1516 = vmax.xlane.f32.xlu0 %v1515
        %v1517 = vpop.xlane.xlu0 %1516
        %v1518 = vsel %vm1451, %v1441, -inf
        %1519 = vmax.xlane.f32.xlu0 %v1518
        %v1520 = vpop.xlane.xlu0 %1519
        %v1521 = vsel %vm1451, %v1442, -inf
        %1522 = vmax.xlane.f32.xlu0 %v1521
        %v1523 = vpop.xlane.xlu0 %1522
        %v1524 = vsel %vm1451, %v1443, -inf
        %1525 = vmax.xlane.f32.xlu0 %v1524
        %v1526 = vpop.xlane.xlu0 %1525
        %v1527 = vsel %vm1451, %v1444, -inf
        %1528 = vmax.xlane.f32.xlu0 %v1527
        %v1529 = vpop.xlane.xlu0 %1528
        %v1530 = vsel %vm1451, %v1445, -inf
        %1531 = vmax.xlane.f32.xlu0 %v1530
        %v1532 = vpop.xlane.xlu0 %1531
        %v1533 = vsel %vm1451, %v1446, -inf
        %1534 = vmax.xlane.f32.xlu0 %v1533
        %v1535 = vpop.xlane.xlu0 %1534
        %v1536 = vsel %vm1451, %v1447, -inf
        %1537 = vmax.xlane.f32.xlu0 %v1536
        %v1538 = vpop.xlane.xlu0 %1537
        %v1539 = vsel %vm1451, %v1448, -inf
        %1540 = vmax.xlane.f32.xlu0 %v1539
        %v1541 = vpop.xlane.xlu0 %1540
        %v1542 = vsel %vm1451, %v1449, -inf
        %1543 = vmax.xlane.f32.xlu0 %v1542
        %v1544 = vpop.xlane.xlu0 %1543
        %v1545 = vsel %vm1451, %v1450, -inf
        %1546 = vmax.xlane.f32.xlu0 %v1545
        %v1547 = vpop.xlane.xlu0 %1546
        %v1548 = vsub.f32 %v1419, %v1454
        %v1549 = vsub.f32 %v1420, %v1457
        %v1550 = vsub.f32 %v1421, %v1460
        %v1551 = vsub.f32 %v1422, %v1463
        %v1552 = vsub.f32 %v1423, %v1466
        %v1553 = vsub.f32 %v1424, %v1469
        %v1554 = vsub.f32 %v1425, %v1472
        %v1555 = vsub.f32 %v1426, %v1475
        %v1556 = vsub.f32 %v1427, %v1478
        %v1557 = vsub.f32 %v1428, %v1481
        %v1558 = vsub.f32 %v1429, %v1484
        %v1559 = vsub.f32 %v1430, %v1487
        %v1560 = vsub.f32 %v1431, %v1490
        %v1561 = vsub.f32 %v1432, %v1493
        %v1562 = vsub.f32 %v1433, %v1496
        %v1563 = vsub.f32 %v1434, %v1499
        %v1564 = vsub.f32 %v1435, %v1502
        %v1565 = vsub.f32 %v1436, %v1505
        %v1566 = vsub.f32 %v1437, %v1508
        %v1567 = vsub.f32 %v1438, %v1511
        %v1568 = vsub.f32 %v1439, %v1514
        %v1569 = vsub.f32 %v1440, %v1517
        %v1570 = vsub.f32 %v1441, %v1520
        %v1571 = vsub.f32 %v1442, %v1523
        %v1572 = vsub.f32 %v1443, %v1526
        %v1573 = vsub.f32 %v1444, %v1529
        %v1574 = vsub.f32 %v1445, %v1532
        %v1575 = vsub.f32 %v1446, %v1535
        %v1576 = vsub.f32 %v1447, %v1538
        %v1577 = vsub.f32 %v1448, %v1541
        %v1578 = vsub.f32 %v1449, %v1544
        %v1579 = vsub.f32 %v1450, %v1547
        %v1580 = vmul.f32 %v1548, 1.442695
        %v1581 = vpow.pop %v1580
        %v1582 = vmul.f32 %v1549, 1.442695
        %v1583 = vpow.pop %v1582
        %v1584 = vmul.f32 %v1550, 1.442695
        %v1585 = vpow.pop %v1584
        %v1586 = vmul.f32 %v1551, 1.442695
        %v1587 = vpow.pop %v1586
        %v1588 = vmul.f32 %v1552, 1.442695
        %v1589 = vpow.pop %v1588
        %v1590 = vmul.f32 %v1553, 1.442695
        %v1591 = vpow.pop %v1590
        %v1592 = vmul.f32 %v1554, 1.442695
        %v1593 = vpow.pop %v1592
        %v1594 = vmul.f32 %v1555, 1.442695
        %v1595 = vpow.pop %v1594
        %v1596 = vmul.f32 %v1556, 1.442695
        %v1597 = vpow.pop %v1596
        %v1598 = vmul.f32 %v1557, 1.442695
        %v1599 = vpow.pop %v1598
        %v1600 = vmul.f32 %v1558, 1.442695
        %v1601 = vpow.pop %v1600
        %v1602 = vmul.f32 %v1559, 1.442695
        %v1603 = vpow.pop %v1602
        %v1604 = vmul.f32 %v1560, 1.442695
        %v1605 = vpow.pop %v1604
        %v1606 = vmul.f32 %v1561, 1.442695
        %v1607 = vpow.pop %v1606
        %v1608 = vmul.f32 %v1562, 1.442695
        %v1609 = vpow.pop %v1608
        %v1610 = vmul.f32 %v1563, 1.442695
        %v1611 = vpow.pop %v1610
        %v1612 = vmul.f32 %v1564, 1.442695
        %v1613 = vpow.pop %v1612
        %v1614 = vmul.f32 %v1565, 1.442695
        %v1615 = vpow.pop %v1614
        %v1616 = vmul.f32 %v1566, 1.442695
        %v1617 = vpow.pop %v1616
        %v1618 = vmul.f32 %v1567, 1.442695
        %v1619 = vpow.pop %v1618
        %v1620 = vmul.f32 %v1568, 1.442695
        %v1621 = vpow.pop %v1620
        %v1622 = vmul.f32 %v1569, 1.442695
        %v1623 = vpow.pop %v1622
        %v1624 = vmul.f32 %v1570, 1.442695
        %v1625 = vpow.pop %v1624
        %v1626 = vmul.f32 %v1571, 1.442695
        %v1627 = vpow.pop %v1626
        %v1628 = vmul.f32 %v1572, 1.442695
        %v1629 = vpow.pop %v1628
        %v1630 = vmul.f32 %v1573, 1.442695
        %v1631 = vpow.pop %v1630
        %v1632 = vmul.f32 %v1574, 1.442695
        %v1633 = vpow.pop %v1632
        %v1634 = vmul.f32 %v1575, 1.442695
        %v1635 = vpow.pop %v1634
        %v1636 = vmul.f32 %v1576, 1.442695
        %v1637 = vpow.pop %v1636
        %v1638 = vmul.f32 %v1577, 1.442695
        %v1639 = vpow.pop %v1638
        %v1640 = vmul.f32 %v1578, 1.442695
        %v1641 = vpow.pop %v1640
        %v1642 = vmul.f32 %v1579, 1.442695
        %v1643 = vpow.pop %v1642
        %v1644 = vsel %vm1451, %v1581, 0.0
        %1645 = vadd.xlane.f32.xlu0 %v1644
        %v1646 = vpop.xlane.xlu0 %1645
        %v1647 = vsel %vm1451, %v1583, 0.0
        %1648 = vadd.xlane.f32.xlu0 %v1647
        %v1649 = vpop.xlane.xlu0 %1648
        %v1650 = vsel %vm1451, %v1585, 0.0
        %1651 = vadd.xlane.f32.xlu0 %v1650
        %v1652 = vpop.xlane.xlu0 %1651
        %v1653 = vsel %vm1451, %v1587, 0.0
        %1654 = vadd.xlane.f32.xlu0 %v1653
        %v1655 = vpop.xlane.xlu0 %1654
        %v1656 = vsel %vm1451, %v1589, 0.0
        %1657 = vadd.xlane.f32.xlu0 %v1656
        %v1658 = vpop.xlane.xlu0 %1657
        %v1659 = vsel %vm1451, %v1591, 0.0
        %1660 = vadd.xlane.f32.xlu0 %v1659
        %v1661 = vpop.xlane.xlu0 %1660
        %v1662 = vsel %vm1451, %v1593, 0.0
        %1663 = vadd.xlane.f32.xlu0 %v1662
        %v1664 = vpop.xlane.xlu0 %1663
        %v1665 = vsel %vm1451, %v1595, 0.0
        %1666 = vadd.xlane.f32.xlu0 %v1665
        %v1667 = vpop.xlane.xlu0 %1666
        %v1668 = vsel %vm1451, %v1597, 0.0
        %1669 = vadd.xlane.f32.xlu0 %v1668
        %v1670 = vpop.xlane.xlu0 %1669
        %v1671 = vsel %vm1451, %v1599, 0.0
        %1672 = vadd.xlane.f32.xlu0 %v1671
        %v1673 = vpop.xlane.xlu0 %1672
        %v1674 = vsel %vm1451, %v1601, 0.0
        %1675 = vadd.xlane.f32.xlu0 %v1674
        %v1676 = vpop.xlane.xlu0 %1675
        %v1677 = vsel %vm1451, %v1603, 0.0
        %1678 = vadd.xlane.f32.xlu0 %v1677
        %v1679 = vpop.xlane.xlu0 %1678
        %v1680 = vsel %vm1451, %v1605, 0.0
        %1681 = vadd.xlane.f32.xlu0 %v1680
        %v1682 = vpop.xlane.xlu0 %1681
        %v1683 = vsel %vm1451, %v1607, 0.0
        %1684 = vadd.xlane.f32.xlu0 %v1683
        %v1685 = vpop.xlane.xlu0 %1684
        %v1686 = vsel %vm1451, %v1609, 0.0
        %1687 = vadd.xlane.f32.xlu0 %v1686
        %v1688 = vpop.xlane.xlu0 %1687
        %v1689 = vsel %vm1451, %v1611, 0.0
        %1690 = vadd.xlane.f32.xlu0 %v1689
        %v1691 = vpop.xlane.xlu0 %1690
        %v1692 = vsel %vm1451, %v1613, 0.0
        %1693 = vadd.xlane.f32.xlu0 %v1692
        %v1694 = vpop.xlane.xlu0 %1693
        %v1695 = vsel %vm1451, %v1615, 0.0
        %1696 = vadd.xlane.f32.xlu0 %v1695
        %v1697 = vpop.xlane.xlu0 %1696
        %v1698 = vsel %vm1451, %v1617, 0.0
        %1699 = vadd.xlane.f32.xlu0 %v1698
        %v1700 = vpop.xlane.xlu0 %1699
        %v1701 = vsel %vm1451, %v1619, 0.0
        %1702 = vadd.xlane.f32.xlu0 %v1701
        %v1703 = vpop.xlane.xlu0 %1702
        %v1704 = vsel %vm1451, %v1621, 0.0
        %1705 = vadd.xlane.f32.xlu0 %v1704
        %v1706 = vpop.xlane.xlu0 %1705
        %v1707 = vsel %vm1451, %v1623, 0.0
        %1708 = vadd.xlane.f32.xlu0 %v1707
        %v1709 = vpop.xlane.xlu0 %1708
        %v1710 = vsel %vm1451, %v1625, 0.0
        %1711 = vadd.xlane.f32.xlu0 %v1710
        %v1712 = vpop.xlane.xlu0 %1711
        %v1713 = vsel %vm1451, %v1627, 0.0
        %1714 = vadd.xlane.f32.xlu0 %v1713
        %v1715 = vpop.xlane.xlu0 %1714
        %v1716 = vsel %vm1451, %v1629, 0.0
        %1717 = vadd.xlane.f32.xlu0 %v1716
        %v1718 = vpop.xlane.xlu0 %1717
        %v1719 = vsel %vm1451, %v1631, 0.0
        %1720 = vadd.xlane.f32.xlu0 %v1719
        %v1721 = vpop.xlane.xlu0 %1720
        %v1722 = vsel %vm1451, %v1633, 0.0
        %1723 = vadd.xlane.f32.xlu0 %v1722
        %v1724 = vpop.xlane.xlu0 %1723
        %v1725 = vsel %vm1451, %v1635, 0.0
        %1726 = vadd.xlane.f32.xlu0 %v1725
        %v1727 = vpop.xlane.xlu0 %1726
        %v1728 = vsel %vm1451, %v1637, 0.0
        %1729 = vadd.xlane.f32.xlu0 %v1728
        %v1730 = vpop.xlane.xlu0 %1729
        %v1731 = vsel %vm1451, %v1639, 0.0
        %1732 = vadd.xlane.f32.xlu0 %v1731
        %v1733 = vpop.xlane.xlu0 %1732
        %v1734 = vsel %vm1451, %v1641, 0.0
        %1735 = vadd.xlane.f32.xlu0 %v1734
        %v1736 = vpop.xlane.xlu0 %1735
        %v1737 = vsel %vm1451, %v1643, 0.0
        %1738 = vadd.xlane.f32.xlu0 %v1737
        %v1739 = vpop.xlane.xlu0 %1738
        %v1740 = vrcp.pop %v1646
        %v1741 = vmul.f32 %v1581, %v1740
        %v1742 = vrcp.pop %v1649
        %v1743 = vmul.f32 %v1583, %v1742
        %v1744 = vrcp.pop %v1652
        %v1745 = vmul.f32 %v1585, %v1744
        %v1746 = vrcp.pop %v1655
        %v1747 = vmul.f32 %v1587, %v1746
        %v1748 = vrcp.pop %v1658
        %v1749 = vmul.f32 %v1589, %v1748
        %v1750 = vrcp.pop %v1661
        %v1751 = vmul.f32 %v1591, %v1750
        %v1752 = vrcp.pop %v1664
        %v1753 = vmul.f32 %v1593, %v1752
        %v1754 = vrcp.pop %v1667
        %v1755 = vmul.f32 %v1595, %v1754
        %v1756 = vrcp.pop %v1670
        %v1757 = vmul.f32 %v1597, %v1756
        %v1758 = vrcp.pop %v1673
        %v1759 = vmul.f32 %v1599, %v1758
        %v1760 = vrcp.pop %v1676
        %v1761 = vmul.f32 %v1601, %v1760
        %v1762 = vrcp.pop %v1679
        %v1763 = vmul.f32 %v1603, %v1762
        %v1764 = vrcp.pop %v1682
        %v1765 = vmul.f32 %v1605, %v1764
        %v1766 = vrcp.pop %v1685
        %v1767 = vmul.f32 %v1607, %v1766
        %v1768 = vrcp.pop %v1688
        %v1769 = vmul.f32 %v1609, %v1768
        %v1770 = vrcp.pop %v1691
        %v1771 = vmul.f32 %v1611, %v1770
        %v1772 = vrcp.pop %v1694
        %v1773 = vmul.f32 %v1613, %v1772
        %v1774 = vrcp.pop %v1697
        %v1775 = vmul.f32 %v1615, %v1774
        %v1776 = vrcp.pop %v1700
        %v1777 = vmul.f32 %v1617, %v1776
        %v1778 = vrcp.pop %v1703
        %v1779 = vmul.f32 %v1619, %v1778
        %v1780 = vrcp.pop %v1706
        %v1781 = vmul.f32 %v1621, %v1780
        %v1782 = vrcp.pop %v1709
        %v1783 = vmul.f32 %v1623, %v1782
        %v1784 = vrcp.pop %v1712
        %v1785 = vmul.f32 %v1625, %v1784
        %v1786 = vrcp.pop %v1715
        %v1787 = vmul.f32 %v1627, %v1786
        %v1788 = vrcp.pop %v1718
        %v1789 = vmul.f32 %v1629, %v1788
        %v1790 = vrcp.pop %v1721
        %v1791 = vmul.f32 %v1631, %v1790
        %v1792 = vrcp.pop %v1724
        %v1793 = vmul.f32 %v1633, %v1792
        %v1794 = vrcp.pop %v1727
        %v1795 = vmul.f32 %v1635, %v1794
        %v1796 = vrcp.pop %v1730
        %v1797 = vmul.f32 %v1637, %v1796
        %v1798 = vrcp.pop %v1733
        %v1799 = vmul.f32 %v1639, %v1798
        %v1800 = vrcp.pop %v1736
        %v1801 = vmul.f32 %v1641, %v1800
        %v1802 = vrcp.pop %v1739
        %v1803 = vmul.f32 %v1643, %v1802
        %v1805 = vsel %vm1451, %v1741, 0
        %v1808 = vsel %vm1451, %v1743, 0
        %v1811 = vsel %vm1451, %v1745, 0
        %v1814 = vsel %vm1451, %v1747, 0
        %v1817 = vsel %vm1451, %v1749, 0
        %v1820 = vsel %vm1451, %v1751, 0
        %v1823 = vsel %vm1451, %v1753, 0
        %v1826 = vsel %vm1451, %v1755, 0
        %v1829 = vsel %vm1451, %v1757, 0
        %v1832 = vsel %vm1451, %v1759, 0
        %v1835 = vsel %vm1451, %v1761, 0
        %v1838 = vsel %vm1451, %v1763, 0
        %v1841 = vsel %vm1451, %v1765, 0
        %v1844 = vsel %vm1451, %v1767, 0
        %v1847 = vsel %vm1451, %v1769, 0
        %v1850 = vsel %vm1451, %v1771, 0
        %v1853 = vsel %vm1451, %v1773, 0
        %v1856 = vsel %vm1451, %v1775, 0
        %v1859 = vsel %vm1451, %v1777, 0
        %v1862 = vsel %vm1451, %v1779, 0
        %v1865 = vsel %vm1451, %v1781, 0
        %v1868 = vsel %vm1451, %v1783, 0
        %v1871 = vsel %vm1451, %v1785, 0
        %v1874 = vsel %vm1451, %v1787, 0
        %v1877 = vsel %vm1451, %v1789, 0
        %v1880 = vsel %vm1451, %v1791, 0
        %v1883 = vsel %vm1451, %v1793, 0
        %v1886 = vsel %vm1451, %v1795, 0
        %v1889 = vsel %vm1451, %v1797, 0
        %v1892 = vsel %vm1451, %v1799, 0
        %v1895 = vsel %vm1451, %v1801, 0
        %v1898 = vsel %vm1451, %v1803, 0
        %vm1900 = vcmask 1043456
        %v1902 = vsel %vm1900, %v1088, 0
        %1904 = vmatprep.subr.mxu0 0.0
        %1905 = vmatpush1.msra.mxu0 %v1902
        %1906 = vmatprep.subr.mxu0 0.0
        %1907 = vmatpush1.msra.mxu0 0.0
        %1908 = vmatprep.subr.mxu0 0.0
        %1909 = vmatpush1.msra.mxu0 0.0
        %1910 = vmatprep.subr.mxu0 0.0
        %1911 = vmatpush1.msra.mxu0 0.0
        %1912 = vmatprep.subr.mxu0 0.0
        %1913 = vmatpush1.msra.mxu0 0.0
        %1914 = vmatprep.subr.mxu0 0.0
        %1915 = vmatpush1.msra.mxu0 0.0
        %1916 = vmatprep.subr.mxu0 0.0
        %1917 = vmatpush1.msra.mxu0 0.0
        %1918 = vmatprep.subr.mxu0 0.0
        %1919 = vmatpush1.msra.mxu0 0.0
        %1920 = vmatprep.subr.mxu0 0.0
        %1921 = vmatpush1.msra.mxu0 0.0
        %1922 = vmatprep.subr.mxu0 0.0
        %1923 = vmatpush1.msra.mxu0 0.0
        %1924 = vmatprep.subr.mxu0 0.0
        %1925 = vmatpush1.msra.mxu0 0.0
        %1926 = vmatprep.subr.mxu0 0.0
        %1927 = vmatpush1.msra.mxu0 0.0
        %1928 = vmatprep.subr.mxu0 0.0
        %1929 = vmatpush1.msra.mxu0 0.0
        %1930 = vmatprep.subr.mxu0 0.0
        %1931 = vmatpush1.msra.mxu0 0.0
        %1932 = vmatprep.subr.mxu0 0.0
        %1933 = vmatpush1.msra.mxu0 0.0
        %1934 = vmatprep.subr.mxu0 0.0
        %1935 = vmatpush1.msra.mxu0 0.0
        %1936 = vmatprep.subr.mxu0 0.0
        %1937 = vmatpush1.msra.mxu0 0.0
        %1938 = vmatprep.subr.mxu0 0.0
        %1939 = vmatpush1.msra.mxu0 0.0
        %1940 = vmatprep.subr.mxu0 0.0
        %1941 = vmatpush1.msra.mxu0 0.0
        %1942 = vmatprep.subr.mxu0 0.0
        %1943 = vmatpush1.msra.mxu0 0.0
        %1944 = vmatprep.subr.mxu0 0.0
        %1945 = vmatpush1.msra.mxu0 0.0
        %1946 = vmatprep.subr.mxu0 0.0
        %1947 = vmatpush1.msra.mxu0 0.0
        %1948 = vmatprep.subr.mxu0 0.0
        %1949 = vmatpush1.msra.mxu0 0.0
        %1950 = vmatprep.subr.mxu0 0.0
        %1951 = vmatpush1.msra.mxu0 0.0
        %1952 = vmatprep.subr.mxu0 0.0
        %1953 = vmatpush1.msra.mxu0 0.0
        %1954 = vmatprep.subr.mxu0 0.0
        %1955 = vmatpush1.msra.mxu0 0.0
        %1956 = vmatprep.subr.mxu0 0.0
        %1957 = vmatpush1.msra.mxu0 0.0
        %1958 = vmatprep.subr.mxu0 0.0
        %1959 = vmatpush1.msra.mxu0 0.0
        %1960 = vmatprep.subr.mxu0 0.0
        %1961 = vmatpush1.msra.mxu0 0.0
        %1962 = vmatprep.subr.mxu0 0.0
        %1963 = vmatpush1.msra.mxu0 0.0
        %1964 = vmatprep.subr.mxu0 0.0
        %1965 = vmatpush1.msra.mxu0 0.0
        %1966 = vmatprep.subr.mxu0 0.0
        %1967 = vmatpush1.msra.mxu0 0.0
        %1968 = vmatprep.mubr.f32.mxu0 0.0
        %1969 = vmatmul.mubr.f32.gmra.mrb[0].mxu0 %v1805
        %v1970 = vpop.f32.mrb[0].mxu0
        %v1971 = vadd.f32 0.0, %v1970
        %v1972 = vpop.f32.mrb[0].mxu0
        %1973 = vmatprep.mubr.f32.mxu0 0.0
        %1974 = vmatmul.mubr.f32.gmra.mrb[0].mxu0 %v1808
        %v1975 = vpop.f32.mrb[0].mxu0
        %v1976 = vadd.f32 0.0, %v1975
        %v1977 = vpop.f32.mrb[0].mxu0
        %1978 = vmatprep.mubr.f32.mxu0 0.0
        %1979 = vmatmul.mubr.f32.gmra.mrb[0].mxu0 %v1811
        %v1980 = vpop.f32.mrb[0].mxu0
        %v1981 = vadd.f32 0.0, %v1980
        %v1982 = vpop.f32.mrb[0].mxu0
        %1983 = vmatprep.mubr.f32.mxu0 0.0
        %1984 = vmatmul.mubr.f32.gmra.mrb[0].mxu0 %v1814
        %v1985 = vpop.f32.mrb[0].mxu0
        %v1986 = vadd.f32 0.0, %v1985
        %v1987 = vpop.f32.mrb[0].mxu0
        %1988 = vmatprep.mubr.f32.mxu0 0.0
        %1989 = vmatmul.mubr.f32.gmra.mrb[0].mxu0 %v1817
        %v1990 = vpop.f32.mrb[0].mxu0
        %v1991 = vadd.f32 0.0, %v1990
        %v1992 = vpop.f32.mrb[0].mxu0
        %1993 = vmatprep.mubr.f32.mxu0 0.0
        %1994 = vmatmul.mubr.f32.gmra.mrb[0].mxu0 %v1820
        %v1995 = vpop.f32.mrb[0].mxu0
        %v1996 = vadd.f32 0.0, %v1995
        %v1997 = vpop.f32.mrb[0].mxu0
        %1998 = vmatprep.mubr.f32.mxu0 0.0
        %1999 = vmatmul.mubr.f32.gmra.mrb[0].mxu0 %v1823
        %v2000 = vpop.f32.mrb[0].mxu0
        %v2001 = vadd.f32 0.0, %v2000
        %v2002 = vpop.f32.mrb[0].mxu0
        %2003 = vmatprep.mubr.f32.mxu0 0.0
        %2004 = vmatmul.mubr.f32.gmra.mrb[0].mxu0 %v1826
        %v2005 = vpop.f32.mrb[0].mxu0
        %v2006 = vadd.f32 0.0, %v2005
        %v2007 = vpop.f32.mrb[0].mxu0
        %2008 = vmatprep.mubr.f32.mxu0 0.0
        %2009 = vmatmul.mubr.f32.gmra.mrb[0].mxu0 %v1829
        %v2010 = vpop.f32.mrb[0].mxu0
        %v2011 = vadd.f32 0.0, %v2010
        %v2012 = vpop.f32.mrb[0].mxu0
        %2013 = vmatprep.mubr.f32.mxu0 0.0
        %2014 = vmatmul.mubr.f32.gmra.mrb[0].mxu0 %v1832
        %v2015 = vpop.f32.mrb[0].mxu0
        %v2016 = vadd.f32 0.0, %v2015
        %v2017 = vpop.f32.mrb[0].mxu0
        %2018 = vmatprep.mubr.f32.mxu0 0.0
        %2019 = vmatmul.mubr.f32.gmra.mrb[0].mxu0 %v1835
        %v2020 = vpop.f32.mrb[0].mxu0
        %v2021 = vadd.f32 0.0, %v2020
        %v2022 = vpop.f32.mrb[0].mxu0
        %2023 = vmatprep.mubr.f32.mxu0 0.0
        %2024 = vmatmul.mubr.f32.gmra.mrb[0].mxu0 %v1838
        %v2025 = vpop.f32.mrb[0].mxu0
        %v2026 = vadd.f32 0.0, %v2025
        %v2027 = vpop.f32.mrb[0].mxu0
        %2028 = vmatprep.mubr.f32.mxu0 0.0
        %2029 = vmatmul.mubr.f32.gmra.mrb[0].mxu0 %v1841
        %v2030 = vpop.f32.mrb[0].mxu0
        %v2031 = vadd.f32 0.0, %v2030
        %v2032 = vpop.f32.mrb[0].mxu0
        %2033 = vmatprep.mubr.f32.mxu0 0.0
        %2034 = vmatmul.mubr.f32.gmra.mrb[0].mxu0 %v1844
        %v2035 = vpop.f32.mrb[0].mxu0
        %v2036 = vadd.f32 0.0, %v2035
        %v2037 = vpop.f32.mrb[0].mxu0
        %2038 = vmatprep.mubr.f32.mxu0 0.0
        %2039 = vmatmul.mubr.f32.gmra.mrb[0].mxu0 %v1847
        %v2040 = vpop.f32.mrb[0].mxu0
        %v2041 = vadd.f32 0.0, %v2040
        %v2042 = vpop.f32.mrb[0].mxu0
        %2043 = vmatprep.mubr.f32.mxu0 0.0
        %2044 = vmatmul.mubr.f32.gmra.mrb[0].mxu0 %v1850
        %v2045 = vpop.f32.mrb[0].mxu0
        %v2046 = vadd.f32 0.0, %v2045
        %v2047 = vpop.f32.mrb[0].mxu0
        %2048 = vmatprep.mubr.f32.mxu0 0.0
        %2049 = vmatmul.mubr.f32.gmra.mrb[0].mxu0 %v1853
        %v2050 = vpop.f32.mrb[0].mxu0
        %v2051 = vadd.f32 0.0, %v2050
        %v2052 = vpop.f32.mrb[0].mxu0
        %2053 = vmatprep.mubr.f32.mxu0 0.0
        %2054 = vmatmul.mubr.f32.gmra.mrb[0].mxu0 %v1856
        %v2055 = vpop.f32.mrb[0].mxu0
        %v2056 = vadd.f32 0.0, %v2055
        %v2057 = vpop.f32.mrb[0].mxu0
        %2058 = vmatprep.mubr.f32.mxu0 0.0
        %2059 = vmatmul.mubr.f32.gmra.mrb[0].mxu0 %v1859
        %v2060 = vpop.f32.mrb[0].mxu0
        %v2061 = vadd.f32 0.0, %v2060
        %v2062 = vpop.f32.mrb[0].mxu0
        %2063 = vmatprep.mubr.f32.mxu0 0.0
        %2064 = vmatmul.mubr.f32.gmra.mrb[0].mxu0 %v1862
        %v2065 = vpop.f32.mrb[0].mxu0
        %v2066 = vadd.f32 0.0, %v2065
        %v2067 = vpop.f32.mrb[0].mxu0
        %2068 = vmatprep.mubr.f32.mxu0 0.0
        %2069 = vmatmul.mubr.f32.gmra.mrb[0].mxu0 %v1865
        %v2070 = vpop.f32.mrb[0].mxu0
        %v2071 = vadd.f32 0.0, %v2070
        %v2072 = vpop.f32.mrb[0].mxu0
        %2073 = vmatprep.mubr.f32.mxu0 0.0
        %2074 = vmatmul.mubr.f32.gmra.mrb[0].mxu0 %v1868
        %v2075 = vpop.f32.mrb[0].mxu0
        %v2076 = vadd.f32 0.0, %v2075
        %v2077 = vpop.f32.mrb[0].mxu0
        %2078 = vmatprep.mubr.f32.mxu0 0.0
        %2079 = vmatmul.mubr.f32.gmra.mrb[0].mxu0 %v1871
        %v2080 = vpop.f32.mrb[0].mxu0
        %v2081 = vadd.f32 0.0, %v2080
        %v2082 = vpop.f32.mrb[0].mxu0
        %2083 = vmatprep.mubr.f32.mxu0 0.0
        %2084 = vmatmul.mubr.f32.gmra.mrb[0].mxu0 %v1874
        %v2085 = vpop.f32.mrb[0].mxu0
        %v2086 = vadd.f32 0.0, %v2085
        %v2087 = vpop.f32.mrb[0].mxu0
        %2088 = vmatprep.mubr.f32.mxu0 0.0
        %2089 = vmatmul.mubr.f32.gmra.mrb[0].mxu0 %v1877
        %v2090 = vpop.f32.mrb[0].mxu0
        %v2091 = vadd.f32 0.0, %v2090
        %v2092 = vpop.f32.mrb[0].mxu0
        %2093 = vmatprep.mubr.f32.mxu0 0.0
        %2094 = vmatmul.mubr.f32.gmra.mrb[0].mxu0 %v1880
        %v2095 = vpop.f32.mrb[0].mxu0
        %v2096 = vadd.f32 0.0, %v2095
        %v2097 = vpop.f32.mrb[0].mxu0
        %2098 = vmatprep.mubr.f32.mxu0 0.0
        %2099 = vmatmul.mubr.f32.gmra.mrb[0].mxu0 %v1883
        %v2100 = vpop.f32.mrb[0].mxu0
        %v2101 = vadd.f32 0.0, %v2100
        %v2102 = vpop.f32.mrb[0].mxu0
        %2103 = vmatprep.mubr.f32.mxu0 0.0
        %2104 = vmatmul.mubr.f32.gmra.mrb[0].mxu0 %v1886
        %v2105 = vpop.f32.mrb[0].mxu0
        %v2106 = vadd.f32 0.0, %v2105
        %v2107 = vpop.f32.mrb[0].mxu0
        %2108 = vmatprep.mubr.f32.mxu0 0.0
        %2109 = vmatmul.mubr.f32.gmra.mrb[0].mxu0 %v1889
        %v2110 = vpop.f32.mrb[0].mxu0
        %v2111 = vadd.f32 0.0, %v2110
        %v2112 = vpop.f32.mrb[0].mxu0
        %2113 = vmatprep.mubr.f32.mxu0 0.0
        %2114 = vmatmul.mubr.f32.gmra.mrb[0].mxu0 %v1892
        %v2115 = vpop.f32.mrb[0].mxu0
        %v2116 = vadd.f32 0.0, %v2115
        %v2117 = vpop.f32.mrb[0].mxu0
        %2118 = vmatprep.mubr.f32.mxu0 0.0
        %2119 = vmatmul.mubr.f32.gmra.mrb[0].mxu0 %v1895
        %v2120 = vpop.f32.mrb[0].mxu0
        %v2121 = vadd.f32 0.0, %v2120
        %v2122 = vpop.f32.mrb[0].mxu0
        %2123 = vmatprep.mubr.f32.mxu0 0.0
        %2124 = vmatmul.mubr.f32.gmra.mrb[0].mxu0 %v1898
        %v2125 = vpop.f32.mrb[0].mxu0
        %v2126 = vadd.f32 0.0, %v2125
        %v2127 = vpop.f32.mrb[0].mxu0
        %2128 = vdwg.mxu0
        %v2130 = vsel %vm1093, %v1971, 0
        %v2133 = vsel %vm1093, %v1976, 0
        %v2136 = vsel %vm1093, %v1981, 0
        %v2139 = vsel %vm1093, %v1986, 0
        %v2142 = vsel %vm1093, %v1991, 0
        %v2145 = vsel %vm1093, %v1996, 0
        %v2148 = vsel %vm1093, %v2001, 0
        %v2151 = vsel %vm1093, %v2006, 0
        %v2154 = vsel %vm1093, %v2011, 0
        %v2157 = vsel %vm1093, %v2016, 0
        %v2160 = vsel %vm1093, %v2021, 0
        %v2163 = vsel %vm1093, %v2026, 0
        %v2166 = vsel %vm1093, %v2031, 0
        %v2169 = vsel %vm1093, %v2036, 0
        %v2172 = vsel %vm1093, %v2041, 0
        %v2175 = vsel %vm1093, %v2046, 0
        %v2178 = vsel %vm1093, %v2051, 0
        %v2181 = vsel %vm1093, %v2056, 0
        %v2184 = vsel %vm1093, %v2061, 0
        %v2187 = vsel %vm1093, %v2066, 0
        %v2190 = vsel %vm1093, %v2071, 0
        %v2193 = vsel %vm1093, %v2076, 0
        %v2196 = vsel %vm1093, %v2081, 0
        %v2199 = vsel %vm1093, %v2086, 0
        %v2202 = vsel %vm1093, %v2091, 0
        %v2205 = vsel %vm1093, %v2096, 0
        %v2208 = vsel %vm1093, %v2101, 0
        %v2211 = vsel %vm1093, %v2106, 0
        %v2214 = vsel %vm1093, %v2111, 0
        %v2217 = vsel %vm1093, %v2116, 0
        %v2220 = vsel %vm1093, %v2121, 0
        %v2223 = vsel %vm1093, %v2126, 0
        %v2226 = vsel %vm1190, %v1091, 0
        %2228 = vmatprep.subr.mxu0 0.0
        %2229 = vmatpush1.msra.mxu0 %v2226
        %2230 = vmatprep.subr.mxu0 0.0
        %2231 = vmatpush1.msra.mxu0 0.0
        %2232 = vmatprep.subr.mxu0 0.0
        %2233 = vmatpush1.msra.mxu0 0.0
        %2234 = vmatprep.subr.mxu0 0.0
        %2235 = vmatpush1.msra.mxu0 0.0
        %2236 = vmatprep.subr.mxu0 0.0
        %2237 = vmatpush1.msra.mxu0 0.0
        %2238 = vmatprep.subr.mxu0 0.0
        %2239 = vmatpush1.msra.mxu0 0.0
        %2240 = vmatprep.subr.mxu0 0.0
        %2241 = vmatpush1.msra.mxu0 0.0
        %2242 = vmatprep.subr.mxu0 0.0
        %2243 = vmatpush1.msra.mxu0 0.0
        %2244 = vmatprep.subr.mxu0 0.0
        %2245 = vmatpush1.msra.mxu0 0.0
        %2246 = vmatprep.subr.mxu0 0.0
        %2247 = vmatpush1.msra.mxu0 0.0
        %2248 = vmatprep.subr.mxu0 0.0
        %2249 = vmatpush1.msra.mxu0 0.0
        %2250 = vmatprep.subr.mxu0 0.0
        %2251 = vmatpush1.msra.mxu0 0.0
        %2252 = vmatprep.subr.mxu0 0.0
        %2253 = vmatpush1.msra.mxu0 0.0
        %2254 = vmatprep.subr.mxu0 0.0
        %2255 = vmatpush1.msra.mxu0 0.0
        %2256 = vmatprep.subr.mxu0 0.0
        %2257 = vmatpush1.msra.mxu0 0.0
        %2258 = vmatprep.subr.mxu0 0.0
        %2259 = vmatpush1.msra.mxu0 0.0
        %2260 = vmatprep.subr.mxu0 0.0
        %2261 = vmatpush1.msra.mxu0 0.0
        %2262 = vmatprep.subr.mxu0 0.0
        %2263 = vmatpush1.msra.mxu0 0.0
        %2264 = vmatprep.subr.mxu0 0.0
        %2265 = vmatpush1.msra.mxu0 0.0
        %2266 = vmatprep.subr.mxu0 0.0
        %2267 = vmatpush1.msra.mxu0 0.0
        %2268 = vmatprep.subr.mxu0 0.0
        %2269 = vmatpush1.msra.mxu0 0.0
        %2270 = vmatprep.subr.mxu0 0.0
        %2271 = vmatpush1.msra.mxu0 0.0
        %2272 = vmatprep.subr.mxu0 0.0
        %2273 = vmatpush1.msra.mxu0 0.0
        %2274 = vmatprep.subr.mxu0 0.0
        %2275 = vmatpush1.msra.mxu0 0.0
        %2276 = vmatprep.subr.mxu0 0.0
        %2277 = vmatpush1.msra.mxu0 0.0
        %2278 = vmatprep.subr.mxu0 0.0
        %2279 = vmatpush1.msra.mxu0 0.0
        %2280 = vmatprep.subr.mxu0 0.0
        %2281 = vmatpush1.msra.mxu0 0.0
        %2282 = vmatprep.subr.mxu0 0.0
        %2283 = vmatpush1.msra.mxu0 0.0
        %2284 = vmatprep.subr.mxu0 0.0
        %2285 = vmatpush1.msra.mxu0 0.0
        %2286 = vmatprep.subr.mxu0 0.0
        %2287 = vmatpush1.msra.mxu0 0.0
        %2288 = vmatprep.subr.mxu0 0.0
        %2289 = vmatpush1.msra.mxu0 0.0
        %2290 = vmatprep.subr.mxu0 0.0
        %2291 = vmatpush1.msra.mxu0 0.0
        %2292 = vmatprep.mubr.f32.mxu0 0.0
        %2293 = vmatmul.mubr.f32.gmra.mrb[0].mxu0 %v2130
        %v2294 = vpop.f32.mrb[0].mxu0
        %v2295 = vadd.f32 0.0, %v2294
        %v2296 = vpop.f32.mrb[0].mxu0
        %2297 = vmatprep.mubr.f32.mxu0 0.0
        %2298 = vmatmul.mubr.f32.gmra.mrb[0].mxu0 %v2133
        %v2299 = vpop.f32.mrb[0].mxu0
        %v2300 = vadd.f32 0.0, %v2299
        %v2301 = vpop.f32.mrb[0].mxu0
        %2302 = vmatprep.mubr.f32.mxu0 0.0
        %2303 = vmatmul.mubr.f32.gmra.mrb[0].mxu0 %v2136
        %v2304 = vpop.f32.mrb[0].mxu0
        %v2305 = vadd.f32 0.0, %v2304
        %v2306 = vpop.f32.mrb[0].mxu0
        %2307 = vmatprep.mubr.f32.mxu0 0.0
        %2308 = vmatmul.mubr.f32.gmra.mrb[0].mxu0 %v2139
        %v2309 = vpop.f32.mrb[0].mxu0
        %v2310 = vadd.f32 0.0, %v2309
        %v2311 = vpop.f32.mrb[0].mxu0
        %2312 = vmatprep.mubr.f32.mxu0 0.0
        %2313 = vmatmul.mubr.f32.gmra.mrb[0].mxu0 %v2142
        %v2314 = vpop.f32.mrb[0].mxu0
        %v2315 = vadd.f32 0.0, %v2314
        %v2316 = vpop.f32.mrb[0].mxu0
        %2317 = vmatprep.mubr.f32.mxu0 0.0
        %2318 = vmatmul.mubr.f32.gmra.mrb[0].mxu0 %v2145
        %v2319 = vpop.f32.mrb[0].mxu0
        %v2320 = vadd.f32 0.0, %v2319
        %v2321 = vpop.f32.mrb[0].mxu0
        %2322 = vmatprep.mubr.f32.mxu0 0.0
        %2323 = vmatmul.mubr.f32.gmra.mrb[0].mxu0 %v2148
        %v2324 = vpop.f32.mrb[0].mxu0
        %v2325 = vadd.f32 0.0, %v2324
        %v2326 = vpop.f32.mrb[0].mxu0
        %2327 = vmatprep.mubr.f32.mxu0 0.0
        %2328 = vmatmul.mubr.f32.gmra.mrb[0].mxu0 %v2151
        %v2329 = vpop.f32.mrb[0].mxu0
        %v2330 = vadd.f32 0.0, %v2329
        %v2331 = vpop.f32.mrb[0].mxu0
        %2332 = vmatprep.mubr.f32.mxu0 0.0
        %2333 = vmatmul.mubr.f32.gmra.mrb[0].mxu0 %v2154
        %v2334 = vpop.f32.mrb[0].mxu0
        %v2335 = vadd.f32 0.0, %v2334
        %v2336 = vpop.f32.mrb[0].mxu0
        %2337 = vmatprep.mubr.f32.mxu0 0.0
        %2338 = vmatmul.mubr.f32.gmra.mrb[0].mxu0 %v2157
        %v2339 = vpop.f32.mrb[0].mxu0
        %v2340 = vadd.f32 0.0, %v2339
        %v2341 = vpop.f32.mrb[0].mxu0
        %2342 = vmatprep.mubr.f32.mxu0 0.0
        %2343 = vmatmul.mubr.f32.gmra.mrb[0].mxu0 %v2160
        %v2344 = vpop.f32.mrb[0].mxu0
        %v2345 = vadd.f32 0.0, %v2344
        %v2346 = vpop.f32.mrb[0].mxu0
        %2347 = vmatprep.mubr.f32.mxu0 0.0
        %2348 = vmatmul.mubr.f32.gmra.mrb[0].mxu0 %v2163
        %v2349 = vpop.f32.mrb[0].mxu0
        %v2350 = vadd.f32 0.0, %v2349
        %v2351 = vpop.f32.mrb[0].mxu0
        %2352 = vmatprep.mubr.f32.mxu0 0.0
        %2353 = vmatmul.mubr.f32.gmra.mrb[0].mxu0 %v2166
        %v2354 = vpop.f32.mrb[0].mxu0
        %v2355 = vadd.f32 0.0, %v2354
        %v2356 = vpop.f32.mrb[0].mxu0
        %2357 = vmatprep.mubr.f32.mxu0 0.0
        %2358 = vmatmul.mubr.f32.gmra.mrb[0].mxu0 %v2169
        %v2359 = vpop.f32.mrb[0].mxu0
        %v2360 = vadd.f32 0.0, %v2359
        %v2361 = vpop.f32.mrb[0].mxu0
        %2362 = vmatprep.mubr.f32.mxu0 0.0
        %2363 = vmatmul.mubr.f32.gmra.mrb[0].mxu0 %v2172
        %v2364 = vpop.f32.mrb[0].mxu0
        %v2365 = vadd.f32 0.0, %v2364
        %v2366 = vpop.f32.mrb[0].mxu0
        %2367 = vmatprep.mubr.f32.mxu0 0.0
        %2368 = vmatmul.mubr.f32.gmra.mrb[0].mxu0 %v2175
        %v2369 = vpop.f32.mrb[0].mxu0
        %v2370 = vadd.f32 0.0, %v2369
        %v2371 = vpop.f32.mrb[0].mxu0
        %2372 = vmatprep.mubr.f32.mxu0 0.0
        %2373 = vmatmul.mubr.f32.gmra.mrb[0].mxu0 %v2178
        %v2374 = vpop.f32.mrb[0].mxu0
        %v2375 = vadd.f32 0.0, %v2374
        %v2376 = vpop.f32.mrb[0].mxu0
        %2377 = vmatprep.mubr.f32.mxu0 0.0
        %2378 = vmatmul.mubr.f32.gmra.mrb[0].mxu0 %v2181
        %v2379 = vpop.f32.mrb[0].mxu0
        %v2380 = vadd.f32 0.0, %v2379
        %v2381 = vpop.f32.mrb[0].mxu0
        %2382 = vmatprep.mubr.f32.mxu0 0.0
        %2383 = vmatmul.mubr.f32.gmra.mrb[0].mxu0 %v2184
        %v2384 = vpop.f32.mrb[0].mxu0
        %v2385 = vadd.f32 0.0, %v2384
        %v2386 = vpop.f32.mrb[0].mxu0
        %2387 = vmatprep.mubr.f32.mxu0 0.0
        %2388 = vmatmul.mubr.f32.gmra.mrb[0].mxu0 %v2187
        %v2389 = vpop.f32.mrb[0].mxu0
        %v2390 = vadd.f32 0.0, %v2389
        %v2391 = vpop.f32.mrb[0].mxu0
        %2392 = vmatprep.mubr.f32.mxu0 0.0
        %2393 = vmatmul.mubr.f32.gmra.mrb[0].mxu0 %v2190
        %v2394 = vpop.f32.mrb[0].mxu0
        %v2395 = vadd.f32 0.0, %v2394
        %v2396 = vpop.f32.mrb[0].mxu0
        %2397 = vmatprep.mubr.f32.mxu0 0.0
        %2398 = vmatmul.mubr.f32.gmra.mrb[0].mxu0 %v2193
        %v2399 = vpop.f32.mrb[0].mxu0
        %v2400 = vadd.f32 0.0, %v2399
        %v2401 = vpop.f32.mrb[0].mxu0
        %2402 = vmatprep.mubr.f32.mxu0 0.0
        %2403 = vmatmul.mubr.f32.gmra.mrb[0].mxu0 %v2196
        %v2404 = vpop.f32.mrb[0].mxu0
        %v2405 = vadd.f32 0.0, %v2404
        %v2406 = vpop.f32.mrb[0].mxu0
        %2407 = vmatprep.mubr.f32.mxu0 0.0
        %2408 = vmatmul.mubr.f32.gmra.mrb[0].mxu0 %v2199
        %v2409 = vpop.f32.mrb[0].mxu0
        %v2410 = vadd.f32 0.0, %v2409
        %v2411 = vpop.f32.mrb[0].mxu0
        %2412 = vmatprep.mubr.f32.mxu0 0.0
        %2413 = vmatmul.mubr.f32.gmra.mrb[0].mxu0 %v2202
        %v2414 = vpop.f32.mrb[0].mxu0
        %v2415 = vadd.f32 0.0, %v2414
        %v2416 = vpop.f32.mrb[0].mxu0
        %2417 = vmatprep.mubr.f32.mxu0 0.0
        %2418 = vmatmul.mubr.f32.gmra.mrb[0].mxu0 %v2205
        %v2419 = vpop.f32.mrb[0].mxu0
        %v2420 = vadd.f32 0.0, %v2419
        %v2421 = vpop.f32.mrb[0].mxu0
        %2422 = vmatprep.mubr.f32.mxu0 0.0
        %2423 = vmatmul.mubr.f32.gmra.mrb[0].mxu0 %v2208
        %v2424 = vpop.f32.mrb[0].mxu0
        %v2425 = vadd.f32 0.0, %v2424
        %v2426 = vpop.f32.mrb[0].mxu0
        %2427 = vmatprep.mubr.f32.mxu0 0.0
        %2428 = vmatmul.mubr.f32.gmra.mrb[0].mxu0 %v2211
        %v2429 = vpop.f32.mrb[0].mxu0
        %v2430 = vadd.f32 0.0, %v2429
        %v2431 = vpop.f32.mrb[0].mxu0
        %2432 = vmatprep.mubr.f32.mxu0 0.0
        %2433 = vmatmul.mubr.f32.gmra.mrb[0].mxu0 %v2214
        %v2434 = vpop.f32.mrb[0].mxu0
        %v2435 = vadd.f32 0.0, %v2434
        %v2436 = vpop.f32.mrb[0].mxu0
        %2437 = vmatprep.mubr.f32.mxu0 0.0
        %2438 = vmatmul.mubr.f32.gmra.mrb[0].mxu0 %v2217
        %v2439 = vpop.f32.mrb[0].mxu0
        %v2440 = vadd.f32 0.0, %v2439
        %v2441 = vpop.f32.mrb[0].mxu0
        %2442 = vmatprep.mubr.f32.mxu0 0.0
        %2443 = vmatmul.mubr.f32.gmra.mrb[0].mxu0 %v2220
        %v2444 = vpop.f32.mrb[0].mxu0
        %v2445 = vadd.f32 0.0, %v2444
        %v2446 = vpop.f32.mrb[0].mxu0
        %2447 = vmatprep.mubr.f32.mxu0 0.0
        %2448 = vmatmul.mubr.f32.gmra.mrb[0].mxu0 %v2223
        %v2449 = vpop.f32.mrb[0].mxu0
        %v2450 = vadd.f32 0.0, %v2449
        %v2451 = vpop.f32.mrb[0].mxu0
        %2452 = vdwg.mxu0
        %v2454 = vlaneseq
        %v2455 = vshrl.u32 %v2454, 7
        %v2456 = vsub.s32 0, %v2455
        %v2457 = vrot.slane %v1092, %v2456
        %v2459 = vadd.f32 %v2457, %v2295
        %v2460 = vadd.f32 %v2457, %v2300
        %v2461 = vadd.f32 %v2457, %v2305
        %v2462 = vadd.f32 %v2457, %v2310
        %v2463 = vadd.f32 %v2457, %v2315
        %v2464 = vadd.f32 %v2457, %v2320
        %v2465 = vadd.f32 %v2457, %v2325
        %v2466 = vadd.f32 %v2457, %v2330
        %v2467 = vadd.f32 %v2457, %v2335
        %v2468 = vadd.f32 %v2457, %v2340
        %v2469 = vadd.f32 %v2457, %v2345
        %v2470 = vadd.f32 %v2457, %v2350
        %v2471 = vadd.f32 %v2457, %v2355
        %v2472 = vadd.f32 %v2457, %v2360
        %v2473 = vadd.f32 %v2457, %v2365
        %v2474 = vadd.f32 %v2457, %v2370
        %v2475 = vadd.f32 %v2457, %v2375
        %v2476 = vadd.f32 %v2457, %v2380
        %v2477 = vadd.f32 %v2457, %v2385
        %v2478 = vadd.f32 %v2457, %v2390
        %v2479 = vadd.f32 %v2457, %v2395
        %v2480 = vadd.f32 %v2457, %v2400
        %v2481 = vadd.f32 %v2457, %v2405
        %v2482 = vadd.f32 %v2457, %v2410
        %v2483 = vadd.f32 %v2457, %v2415
        %v2484 = vadd.f32 %v2457, %v2420
        %v2485 = vadd.f32 %v2457, %v2425
        %v2486 = vadd.f32 %v2457, %v2430
        %v2487 = vadd.f32 %v2457, %v2435
        %v2488 = vadd.f32 %v2457, %v2440
        %v2489 = vadd.f32 %v2457, %v2445
        %v2490 = vadd.f32 %v2457, %v2450
        %2491 = vrot.lane.b32.xlu0 %v772, 126
        %v2492 = vpop.permute.xlu0 %2491
        %2493 = vrot.lane.b32.xlu0 %v777, 126
        %v2494 = vpop.permute.xlu0 %2493
        %2495 = vrot.lane.b32.xlu0 %v782, 126
        %v2496 = vpop.permute.xlu0 %2495
        %2497 = vrot.lane.b32.xlu0 %v787, 126
        %v2498 = vpop.permute.xlu0 %2497
        %2499 = vrot.lane.b32.xlu0 %v792, 126
        %v2500 = vpop.permute.xlu0 %2499
        %2501 = vrot.lane.b32.xlu0 %v797, 126
        %v2502 = vpop.permute.xlu0 %2501
        %2503 = vrot.lane.b32.xlu0 %v802, 126
        %v2504 = vpop.permute.xlu0 %2503
        %2505 = vrot.lane.b32.xlu0 %v807, 126
        %v2506 = vpop.permute.xlu0 %2505
        %2507 = vrot.lane.b32.xlu0 %v812, 126
        %v2508 = vpop.permute.xlu0 %2507
        %2509 = vrot.lane.b32.xlu0 %v817, 126
        %v2510 = vpop.permute.xlu0 %2509
        %2511 = vrot.lane.b32.xlu0 %v822, 126
        %v2512 = vpop.permute.xlu0 %2511
        %2513 = vrot.lane.b32.xlu0 %v827, 126
        %v2514 = vpop.permute.xlu0 %2513
        %2515 = vrot.lane.b32.xlu0 %v832, 126
        %v2516 = vpop.permute.xlu0 %2515
        %2517 = vrot.lane.b32.xlu0 %v837, 126
        %v2518 = vpop.permute.xlu0 %2517
        %2519 = vrot.lane.b32.xlu0 %v842, 126
        %v2520 = vpop.permute.xlu0 %2519
        %2521 = vrot.lane.b32.xlu0 %v847, 126
        %v2522 = vpop.permute.xlu0 %2521
        %2523 = vrot.lane.b32.xlu0 %v852, 126
        %v2524 = vpop.permute.xlu0 %2523
        %2525 = vrot.lane.b32.xlu0 %v857, 126
        %v2526 = vpop.permute.xlu0 %2525
        %2527 = vrot.lane.b32.xlu0 %v862, 126
        %v2528 = vpop.permute.xlu0 %2527
        %2529 = vrot.lane.b32.xlu0 %v867, 126
        %v2530 = vpop.permute.xlu0 %2529
        %2531 = vrot.lane.b32.xlu0 %v872, 126
        %v2532 = vpop.permute.xlu0 %2531
        %2533 = vrot.lane.b32.xlu0 %v877, 126
        %v2534 = vpop.permute.xlu0 %2533
        %2535 = vrot.lane.b32.xlu0 %v882, 126
        %v2536 = vpop.permute.xlu0 %2535
        %2537 = vrot.lane.b32.xlu0 %v887, 126
        %v2538 = vpop.permute.xlu0 %2537
        %2539 = vrot.lane.b32.xlu0 %v892, 126
        %v2540 = vpop.permute.xlu0 %2539
        %2541 = vrot.lane.b32.xlu0 %v897, 126
        %v2542 = vpop.permute.xlu0 %2541
        %2543 = vrot.lane.b32.xlu0 %v902, 126
        %v2544 = vpop.permute.xlu0 %2543
        %2545 = vrot.lane.b32.xlu0 %v907, 126
        %v2546 = vpop.permute.xlu0 %2545
        %2547 = vrot.lane.b32.xlu0 %v912, 126
        %v2548 = vpop.permute.xlu0 %2547
        %2549 = vrot.lane.b32.xlu0 %v917, 126
        %v2550 = vpop.permute.xlu0 %2549
        %2551 = vrot.lane.b32.xlu0 %v922, 126
        %v2552 = vpop.permute.xlu0 %2551
        %2553 = vrot.lane.b32.xlu0 %v927, 126
        %v2554 = vpop.permute.xlu0 %2553
        %v2555 = vrot.slane %v1007, 2
        %v2556 = vsel %vm1093, %v2492, 0
        %v2558 = vsel %vm1093, %v2494, 0
        %v2560 = vsel %vm1093, %v2496, 0
        %v2562 = vsel %vm1093, %v2498, 0
        %v2564 = vsel %vm1093, %v2500, 0
        %v2566 = vsel %vm1093, %v2502, 0
        %v2568 = vsel %vm1093, %v2504, 0
        %v2570 = vsel %vm1093, %v2506, 0
        %v2572 = vsel %vm1093, %v2508, 0
        %v2574 = vsel %vm1093, %v2510, 0
        %v2576 = vsel %vm1093, %v2512, 0
        %v2578 = vsel %vm1093, %v2514, 0
        %v2580 = vsel %vm1093, %v2516, 0
        %v2582 = vsel %vm1093, %v2518, 0
        %v2584 = vsel %vm1093, %v2520, 0
        %v2586 = vsel %vm1093, %v2522, 0
        %v2588 = vsel %vm1093, %v2524, 0
        %v2590 = vsel %vm1093, %v2526, 0
        %v2592 = vsel %vm1093, %v2528, 0
        %v2594 = vsel %vm1093, %v2530, 0
        %v2596 = vsel %vm1093, %v2532, 0
        %v2598 = vsel %vm1093, %v2534, 0
        %v2600 = vsel %vm1093, %v2536, 0
        %v2602 = vsel %vm1093, %v2538, 0
        %v2604 = vsel %vm1093, %v2540, 0
        %v2606 = vsel %vm1093, %v2542, 0
        %v2608 = vsel %vm1093, %v2544, 0
        %v2610 = vsel %vm1093, %v2546, 0
        %v2612 = vsel %vm1093, %v2548, 0
        %v2614 = vsel %vm1093, %v2550, 0
        %v2616 = vsel %vm1093, %v2552, 0
        %v2618 = vsel %vm1093, %v2554, 0
        %v2620 = vsel %vm1190, %v2555, 0
        %2622 = vmatprep.subr.mxu0 0.0
        %2623 = vmatpush1.msra.mxu0 %v2620
        %2624 = vmatprep.subr.mxu0 0.0
        %2625 = vmatpush1.msra.mxu0 0.0
        %2626 = vmatprep.subr.mxu0 0.0
        %2627 = vmatpush1.msra.mxu0 0.0
        %2628 = vmatprep.subr.mxu0 0.0
        %2629 = vmatpush1.msra.mxu0 0.0
        %2630 = vmatprep.subr.mxu0 0.0
        %2631 = vmatpush1.msra.mxu0 0.0
        %2632 = vmatprep.subr.mxu0 0.0
        %2633 = vmatpush1.msra.mxu0 0.0
        %2634 = vmatprep.subr.mxu0 0.0
        %2635 = vmatpush1.msra.mxu0 0.0
        %2636 = vmatprep.subr.mxu0 0.0
        %2637 = vmatpush1.msra.mxu0 0.0
        %2638 = vmatprep.subr.mxu0 0.0
        %2639 = vmatpush1.msra.mxu0 0.0
        %2640 = vmatprep.subr.mxu0 0.0
        %2641 = vmatpush1.msra.mxu0 0.0
        %2642 = vmatprep.subr.mxu0 0.0
        %2643 = vmatpush1.msra.mxu0 0.0
        %2644 = vmatprep.subr.mxu0 0.0
        %2645 = vmatpush1.msra.mxu0 0.0
        %2646 = vmatprep.subr.mxu0 0.0
        %2647 = vmatpush1.msra.mxu0 0.0
        %2648 = vmatprep.subr.mxu0 0.0
        %2649 = vmatpush1.msra.mxu0 0.0
        %2650 = vmatprep.subr.mxu0 0.0
        %2651 = vmatpush1.msra.mxu0 0.0
        %2652 = vmatprep.subr.mxu0 0.0
        %2653 = vmatpush1.msra.mxu0 0.0
        %2654 = vmatprep.subr.mxu0 0.0
        %2655 = vmatpush1.msra.mxu0 0.0
        %2656 = vmatprep.subr.mxu0 0.0
        %2657 = vmatpush1.msra.mxu0 0.0
        %2658 = vmatprep.subr.mxu0 0.0
        %2659 = vmatpush1.msra.mxu0 0.0
        %2660 = vmatprep.subr.mxu0 0.0
        %2661 = vmatpush1.msra.mxu0 0.0
        %2662 = vmatprep.subr.mxu0 0.0
        %2663 = vmatpush1.msra.mxu0 0.0
        %2664 = vmatprep.subr.mxu0 0.0
        %2665 = vmatpush1.msra.mxu0 0.0
        %2666 = vmatprep.subr.mxu0 0.0
        %2667 = vmatpush1.msra.mxu0 0.0
        %2668 = vmatprep.subr.mxu0 0.0
        %2669 = vmatpush1.msra.mxu0 0.0
        %2670 = vmatprep.subr.mxu0 0.0
        %2671 = vmatpush1.msra.mxu0 0.0
        %2672 = vmatprep.subr.mxu0 0.0
        %2673 = vmatpush1.msra.mxu0 0.0
        %2674 = vmatprep.subr.mxu0 0.0
        %2675 = vmatpush1.msra.mxu0 0.0
        %2676 = vmatprep.subr.mxu0 0.0
        %2677 = vmatpush1.msra.mxu0 0.0
        %2678 = vmatprep.subr.mxu0 0.0
        %2679 = vmatpush1.msra.mxu0 0.0
        %2680 = vmatprep.subr.mxu0 0.0
        %2681 = vmatpush1.msra.mxu0 0.0
        %2682 = vmatprep.subr.mxu0 0.0
        %2683 = vmatpush1.msra.mxu0 0.0
        %2684 = vmatprep.subr.mxu0 0.0
        %2685 = vmatpush1.msra.mxu0 0.0
        %2686 = vmatprep.mubr.f32.mxu0 0.0
        %2687 = vmatmul.mubr.f32.gmra.mrb[0].mxu0 %v2556
        %v2688 = vpop.f32.mrb[0].mxu0
        %v2689 = vadd.f32 0.0, %v2688
        %v2690 = vpop.f32.mrb[0].mxu0
        %2691 = vmatprep.mubr.f32.mxu0 0.0
        %2692 = vmatmul.mubr.f32.gmra.mrb[0].mxu0 %v2558
        %v2693 = vpop.f32.mrb[0].mxu0
        %v2694 = vadd.f32 0.0, %v2693
        %v2695 = vpop.f32.mrb[0].mxu0
        %2696 = vmatprep.mubr.f32.mxu0 0.0
        %2697 = vmatmul.mubr.f32.gmra.mrb[0].mxu0 %v2560
        %v2698 = vpop.f32.mrb[0].mxu0
        %v2699 = vadd.f32 0.0, %v2698
        %v2700 = vpop.f32.mrb[0].mxu0
        %2701 = vmatprep.mubr.f32.mxu0 0.0
        %2702 = vmatmul.mubr.f32.gmra.mrb[0].mxu0 %v2562
        %v2703 = vpop.f32.mrb[0].mxu0
        %v2704 = vadd.f32 0.0, %v2703
        %v2705 = vpop.f32.mrb[0].mxu0
        %2706 = vmatprep.mubr.f32.mxu0 0.0
        %2707 = vmatmul.mubr.f32.gmra.mrb[0].mxu0 %v2564
        %v2708 = vpop.f32.mrb[0].mxu0
        %v2709 = vadd.f32 0.0, %v2708
        %v2710 = vpop.f32.mrb[0].mxu0
        %2711 = vmatprep.mubr.f32.mxu0 0.0
        %2712 = vmatmul.mubr.f32.gmra.mrb[0].mxu0 %v2566
        %v2713 = vpop.f32.mrb[0].mxu0
        %v2714 = vadd.f32 0.0, %v2713
        %v2715 = vpop.f32.mrb[0].mxu0
        %2716 = vmatprep.mubr.f32.mxu0 0.0
        %2717 = vmatmul.mubr.f32.gmra.mrb[0].mxu0 %v2568
        %v2718 = vpop.f32.mrb[0].mxu0
        %v2719 = vadd.f32 0.0, %v2718
        %v2720 = vpop.f32.mrb[0].mxu0
        %2721 = vmatprep.mubr.f32.mxu0 0.0
        %2722 = vmatmul.mubr.f32.gmra.mrb[0].mxu0 %v2570
        %v2723 = vpop.f32.mrb[0].mxu0
        %v2724 = vadd.f32 0.0, %v2723
        %v2725 = vpop.f32.mrb[0].mxu0
        %2726 = vmatprep.mubr.f32.mxu0 0.0
        %2727 = vmatmul.mubr.f32.gmra.mrb[0].mxu0 %v2572
        %v2728 = vpop.f32.mrb[0].mxu0
        %v2729 = vadd.f32 0.0, %v2728
        %v2730 = vpop.f32.mrb[0].mxu0
        %2731 = vmatprep.mubr.f32.mxu0 0.0
        %2732 = vmatmul.mubr.f32.gmra.mrb[0].mxu0 %v2574
        %v2733 = vpop.f32.mrb[0].mxu0
        %v2734 = vadd.f32 0.0, %v2733
        %v2735 = vpop.f32.mrb[0].mxu0
        %2736 = vmatprep.mubr.f32.mxu0 0.0
        %2737 = vmatmul.mubr.f32.gmra.mrb[0].mxu0 %v2576
        %v2738 = vpop.f32.mrb[0].mxu0
        %v2739 = vadd.f32 0.0, %v2738
        %v2740 = vpop.f32.mrb[0].mxu0
        %2741 = vmatprep.mubr.f32.mxu0 0.0
        %2742 = vmatmul.mubr.f32.gmra.mrb[0].mxu0 %v2578
        %v2743 = vpop.f32.mrb[0].mxu0
        %v2744 = vadd.f32 0.0, %v2743
        %v2745 = vpop.f32.mrb[0].mxu0
        %2746 = vmatprep.mubr.f32.mxu0 0.0
        %2747 = vmatmul.mubr.f32.gmra.mrb[0].mxu0 %v2580
        %v2748 = vpop.f32.mrb[0].mxu0
        %v2749 = vadd.f32 0.0, %v2748
        %v2750 = vpop.f32.mrb[0].mxu0
        %2751 = vmatprep.mubr.f32.mxu0 0.0
        %2752 = vmatmul.mubr.f32.gmra.mrb[0].mxu0 %v2582
        %v2753 = vpop.f32.mrb[0].mxu0
        %v2754 = vadd.f32 0.0, %v2753
        %v2755 = vpop.f32.mrb[0].mxu0
        %2756 = vmatprep.mubr.f32.mxu0 0.0
        %2757 = vmatmul.mubr.f32.gmra.mrb[0].mxu0 %v2584
        %v2758 = vpop.f32.mrb[0].mxu0
        %v2759 = vadd.f32 0.0, %v2758
        %v2760 = vpop.f32.mrb[0].mxu0
        %2761 = vmatprep.mubr.f32.mxu0 0.0
        %2762 = vmatmul.mubr.f32.gmra.mrb[0].mxu0 %v2586
        %v2763 = vpop.f32.mrb[0].mxu0
        %v2764 = vadd.f32 0.0, %v2763
        %v2765 = vpop.f32.mrb[0].mxu0
        %2766 = vmatprep.mubr.f32.mxu0 0.0
        %2767 = vmatmul.mubr.f32.gmra.mrb[0].mxu0 %v2588
        %v2768 = vpop.f32.mrb[0].mxu0
        %v2769 = vadd.f32 0.0, %v2768
        %v2770 = vpop.f32.mrb[0].mxu0
        %2771 = vmatprep.mubr.f32.mxu0 0.0
        %2772 = vmatmul.mubr.f32.gmra.mrb[0].mxu0 %v2590
        %v2773 = vpop.f32.mrb[0].mxu0
        %v2774 = vadd.f32 0.0, %v2773
        %v2775 = vpop.f32.mrb[0].mxu0
        %2776 = vmatprep.mubr.f32.mxu0 0.0
        %2777 = vmatmul.mubr.f32.gmra.mrb[0].mxu0 %v2592
        %v2778 = vpop.f32.mrb[0].mxu0
        %v2779 = vadd.f32 0.0, %v2778
        %v2780 = vpop.f32.mrb[0].mxu0
        %2781 = vmatprep.mubr.f32.mxu0 0.0
        %2782 = vmatmul.mubr.f32.gmra.mrb[0].mxu0 %v2594
        %v2783 = vpop.f32.mrb[0].mxu0
        %v2784 = vadd.f32 0.0, %v2783
        %v2785 = vpop.f32.mrb[0].mxu0
        %2786 = vmatprep.mubr.f32.mxu0 0.0
        %2787 = vmatmul.mubr.f32.gmra.mrb[0].mxu0 %v2596
        %v2788 = vpop.f32.mrb[0].mxu0
        %v2789 = vadd.f32 0.0, %v2788
        %v2790 = vpop.f32.mrb[0].mxu0
        %2791 = vmatprep.mubr.f32.mxu0 0.0
        %2792 = vmatmul.mubr.f32.gmra.mrb[0].mxu0 %v2598
        %v2793 = vpop.f32.mrb[0].mxu0
        %v2794 = vadd.f32 0.0, %v2793
        %v2795 = vpop.f32.mrb[0].mxu0
        %2796 = vmatprep.mubr.f32.mxu0 0.0
        %2797 = vmatmul.mubr.f32.gmra.mrb[0].mxu0 %v2600
        %v2798 = vpop.f32.mrb[0].mxu0
        %v2799 = vadd.f32 0.0, %v2798
        %v2800 = vpop.f32.mrb[0].mxu0
        %2801 = vmatprep.mubr.f32.mxu0 0.0
        %2802 = vmatmul.mubr.f32.gmra.mrb[0].mxu0 %v2602
        %v2803 = vpop.f32.mrb[0].mxu0
        %v2804 = vadd.f32 0.0, %v2803
        %v2805 = vpop.f32.mrb[0].mxu0
        %2806 = vmatprep.mubr.f32.mxu0 0.0
        %2807 = vmatmul.mubr.f32.gmra.mrb[0].mxu0 %v2604
        %v2808 = vpop.f32.mrb[0].mxu0
        %v2809 = vadd.f32 0.0, %v2808
        %v2810 = vpop.f32.mrb[0].mxu0
        %2811 = vmatprep.mubr.f32.mxu0 0.0
        %2812 = vmatmul.mubr.f32.gmra.mrb[0].mxu0 %v2606
        %v2813 = vpop.f32.mrb[0].mxu0
        %v2814 = vadd.f32 0.0, %v2813
        %v2815 = vpop.f32.mrb[0].mxu0
        %2816 = vmatprep.mubr.f32.mxu0 0.0
        %2817 = vmatmul.mubr.f32.gmra.mrb[0].mxu0 %v2608
        %v2818 = vpop.f32.mrb[0].mxu0
        %v2819 = vadd.f32 0.0, %v2818
        %v2820 = vpop.f32.mrb[0].mxu0
        %2821 = vmatprep.mubr.f32.mxu0 0.0
        %2822 = vmatmul.mubr.f32.gmra.mrb[0].mxu0 %v2610
        %v2823 = vpop.f32.mrb[0].mxu0
        %v2824 = vadd.f32 0.0, %v2823
        %v2825 = vpop.f32.mrb[0].mxu0
        %2826 = vmatprep.mubr.f32.mxu0 0.0
        %2827 = vmatmul.mubr.f32.gmra.mrb[0].mxu0 %v2612
        %v2828 = vpop.f32.mrb[0].mxu0
        %v2829 = vadd.f32 0.0, %v2828
        %v2830 = vpop.f32.mrb[0].mxu0
        %2831 = vmatprep.mubr.f32.mxu0 0.0
        %2832 = vmatmul.mubr.f32.gmra.mrb[0].mxu0 %v2614
        %v2833 = vpop.f32.mrb[0].mxu0
        %v2834 = vadd.f32 0.0, %v2833
        %v2835 = vpop.f32.mrb[0].mxu0
        %2836 = vmatprep.mubr.f32.mxu0 0.0
        %2837 = vmatmul.mubr.f32.gmra.mrb[0].mxu0 %v2616
        %v2838 = vpop.f32.mrb[0].mxu0
        %v2839 = vadd.f32 0.0, %v2838
        %v2840 = vpop.f32.mrb[0].mxu0
        %2841 = vmatprep.mubr.f32.mxu0 0.0
        %2842 = vmatmul.mubr.f32.gmra.mrb[0].mxu0 %v2618
        %v2843 = vpop.f32.mrb[0].mxu0
        %v2844 = vadd.f32 0.0, %v2843
        %v2845 = vpop.f32.mrb[0].mxu0
        %2846 = vdwg.mxu0
        %v2847 = vmul.f32 %v2689, 0.70710677
        %v2848 = vmul.f32 %v2694, 0.70710677
        %v2849 = vmul.f32 %v2699, 0.70710677
        %v2850 = vmul.f32 %v2704, 0.70710677
        %v2851 = vmul.f32 %v2709, 0.70710677
        %v2852 = vmul.f32 %v2714, 0.70710677
        %v2853 = vmul.f32 %v2719, 0.70710677
        %v2854 = vmul.f32 %v2724, 0.70710677
        %v2855 = vmul.f32 %v2729, 0.70710677
        %v2856 = vmul.f32 %v2734, 0.70710677
        %v2857 = vmul.f32 %v2739, 0.70710677
        %v2858 = vmul.f32 %v2744, 0.70710677
        %v2859 = vmul.f32 %v2749, 0.70710677
        %v2860 = vmul.f32 %v2754, 0.70710677
        %v2861 = vmul.f32 %v2759, 0.70710677
        %v2862 = vmul.f32 %v2764, 0.70710677
        %v2863 = vmul.f32 %v2769, 0.70710677
        %v2864 = vmul.f32 %v2774, 0.70710677
        %v2865 = vmul.f32 %v2779, 0.70710677
        %v2866 = vmul.f32 %v2784, 0.70710677
        %v2867 = vmul.f32 %v2789, 0.70710677
        %v2868 = vmul.f32 %v2794, 0.70710677
        %v2869 = vmul.f32 %v2799, 0.70710677
        %v2870 = vmul.f32 %v2804, 0.70710677
        %v2871 = vmul.f32 %v2809, 0.70710677
        %v2872 = vmul.f32 %v2814, 0.70710677
        %v2873 = vmul.f32 %v2819, 0.70710677
        %v2874 = vmul.f32 %v2824, 0.70710677
        %v2875 = vmul.f32 %v2829, 0.70710677
        %v2876 = vmul.f32 %v2834, 0.70710677
        %v2877 = vmul.f32 %v2839, 0.70710677
        %v2878 = vmul.f32 %v2844, 0.70710677
        %v2879 = vsel %vm1451, %v2847, -inf
        %2880 = vmax.xlane.f32.xlu0 %v2879
        %v2881 = vpop.xlane.xlu0 %2880
        %v2882 = vsel %vm1451, %v2848, -inf
        %2883 = vmax.xlane.f32.xlu0 %v2882
        %v2884 = vpop.xlane.xlu0 %2883
        %v2885 = vsel %vm1451, %v2849, -inf
        %2886 = vmax.xlane.f32.xlu0 %v2885
        %v2887 = vpop.xlane.xlu0 %2886
        %v2888 = vsel %vm1451, %v2850, -inf
        %2889 = vmax.xlane.f32.xlu0 %v2888
        %v2890 = vpop.xlane.xlu0 %2889
        %v2891 = vsel %vm1451, %v2851, -inf
        %2892 = vmax.xlane.f32.xlu0 %v2891
        %v2893 = vpop.xlane.xlu0 %2892
        %v2894 = vsel %vm1451, %v2852, -inf
        %2895 = vmax.xlane.f32.xlu0 %v2894
        %v2896 = vpop.xlane.xlu0 %2895
        %v2897 = vsel %vm1451, %v2853, -inf
        %2898 = vmax.xlane.f32.xlu0 %v2897
        %v2899 = vpop.xlane.xlu0 %2898
        %v2900 = vsel %vm1451, %v2854, -inf
        %2901 = vmax.xlane.f32.xlu0 %v2900
        %v2902 = vpop.xlane.xlu0 %2901
        %v2903 = vsel %vm1451, %v2855, -inf
        %2904 = vmax.xlane.f32.xlu0 %v2903
        %v2905 = vpop.xlane.xlu0 %2904
        %v2906 = vsel %vm1451, %v2856, -inf
        %2907 = vmax.xlane.f32.xlu0 %v2906
        %v2908 = vpop.xlane.xlu0 %2907
        %v2909 = vsel %vm1451, %v2857, -inf
        %2910 = vmax.xlane.f32.xlu0 %v2909
        %v2911 = vpop.xlane.xlu0 %2910
        %v2912 = vsel %vm1451, %v2858, -inf
        %2913 = vmax.xlane.f32.xlu0 %v2912
        %v2914 = vpop.xlane.xlu0 %2913
        %v2915 = vsel %vm1451, %v2859, -inf
        %2916 = vmax.xlane.f32.xlu0 %v2915
        %v2917 = vpop.xlane.xlu0 %2916
        %v2918 = vsel %vm1451, %v2860, -inf
        %2919 = vmax.xlane.f32.xlu0 %v2918
        %v2920 = vpop.xlane.xlu0 %2919
        %v2921 = vsel %vm1451, %v2861, -inf
        %2922 = vmax.xlane.f32.xlu0 %v2921
        %v2923 = vpop.xlane.xlu0 %2922
        %v2924 = vsel %vm1451, %v2862, -inf
        %2925 = vmax.xlane.f32.xlu0 %v2924
        %v2926 = vpop.xlane.xlu0 %2925
        %v2927 = vsel %vm1451, %v2863, -inf
        %2928 = vmax.xlane.f32.xlu0 %v2927
        %v2929 = vpop.xlane.xlu0 %2928
        %v2930 = vsel %vm1451, %v2864, -inf
        %2931 = vmax.xlane.f32.xlu0 %v2930
        %v2932 = vpop.xlane.xlu0 %2931
        %v2933 = vsel %vm1451, %v2865, -inf
        %2934 = vmax.xlane.f32.xlu0 %v2933
        %v2935 = vpop.xlane.xlu0 %2934
        %v2936 = vsel %vm1451, %v2866, -inf
        %2937 = vmax.xlane.f32.xlu0 %v2936
        %v2938 = vpop.xlane.xlu0 %2937
        %v2939 = vsel %vm1451, %v2867, -inf
        %2940 = vmax.xlane.f32.xlu0 %v2939
        %v2941 = vpop.xlane.xlu0 %2940
        %v2942 = vsel %vm1451, %v2868, -inf
        %2943 = vmax.xlane.f32.xlu0 %v2942
        %v2944 = vpop.xlane.xlu0 %2943
        %v2945 = vsel %vm1451, %v2869, -inf
        %2946 = vmax.xlane.f32.xlu0 %v2945
        %v2947 = vpop.xlane.xlu0 %2946
        %v2948 = vsel %vm1451, %v2870, -inf
        %2949 = vmax.xlane.f32.xlu0 %v2948
        %v2950 = vpop.xlane.xlu0 %2949
        %v2951 = vsel %vm1451, %v2871, -inf
        %2952 = vmax.xlane.f32.xlu0 %v2951
        %v2953 = vpop.xlane.xlu0 %2952
        %v2954 = vsel %vm1451, %v2872, -inf
        %2955 = vmax.xlane.f32.xlu0 %v2954
        %v2956 = vpop.xlane.xlu0 %2955
        %v2957 = vsel %vm1451, %v2873, -inf
        %2958 = vmax.xlane.f32.xlu0 %v2957
        %v2959 = vpop.xlane.xlu0 %2958
        %v2960 = vsel %vm1451, %v2874, -inf
        %2961 = vmax.xlane.f32.xlu0 %v2960
        %v2962 = vpop.xlane.xlu0 %2961
        %v2963 = vsel %vm1451, %v2875, -inf
        %2964 = vmax.xlane.f32.xlu0 %v2963
        %v2965 = vpop.xlane.xlu0 %2964
        %v2966 = vsel %vm1451, %v2876, -inf
        %2967 = vmax.xlane.f32.xlu0 %v2966
        %v2968 = vpop.xlane.xlu0 %2967
        %v2969 = vsel %vm1451, %v2877, -inf
        %2970 = vmax.xlane.f32.xlu0 %v2969
        %v2971 = vpop.xlane.xlu0 %2970
        %v2972 = vsel %vm1451, %v2878, -inf
        %2973 = vmax.xlane.f32.xlu0 %v2972
        %v2974 = vpop.xlane.xlu0 %2973
        %v2975 = vsub.f32 %v2847, %v2881
        %v2976 = vsub.f32 %v2848, %v2884
        %v2977 = vsub.f32 %v2849, %v2887
        %v2978 = vsub.f32 %v2850, %v2890
        %v2979 = vsub.f32 %v2851, %v2893
        %v2980 = vsub.f32 %v2852, %v2896
        %v2981 = vsub.f32 %v2853, %v2899
        %v2982 = vsub.f32 %v2854, %v2902
        %v2983 = vsub.f32 %v2855, %v2905
        %v2984 = vsub.f32 %v2856, %v2908
        %v2985 = vsub.f32 %v2857, %v2911
        %v2986 = vsub.f32 %v2858, %v2914
        %v2987 = vsub.f32 %v2859, %v2917
        %v2988 = vsub.f32 %v2860, %v2920
        %v2989 = vsub.f32 %v2861, %v2923
        %v2990 = vsub.f32 %v2862, %v2926
        %v2991 = vsub.f32 %v2863, %v2929
        %v2992 = vsub.f32 %v2864, %v2932
        %v2993 = vsub.f32 %v2865, %v2935
        %v2994 = vsub.f32 %v2866, %v2938
        %v2995 = vsub.f32 %v2867, %v2941
        %v2996 = vsub.f32 %v2868, %v2944
        %v2997 = vsub.f32 %v2869, %v2947
        %v2998 = vsub.f32 %v2870, %v2950
        %v2999 = vsub.f32 %v2871, %v2953
        %v3000 = vsub.f32 %v2872, %v2956
        %v3001 = vsub.f32 %v2873, %v2959
        %v3002 = vsub.f32 %v2874, %v2962
        %v3003 = vsub.f32 %v2875, %v2965
        %v3004 = vsub.f32 %v2876, %v2968
        %v3005 = vsub.f32 %v2877, %v2971
        %v3006 = vsub.f32 %v2878, %v2974
        %v3007 = vmul.f32 %v2975, 1.442695
        %v3008 = vpow.pop %v3007
        %v3009 = vmul.f32 %v2976, 1.442695
        %v3010 = vpow.pop %v3009
        %v3011 = vmul.f32 %v2977, 1.442695
        %v3012 = vpow.pop %v3011
        %v3013 = vmul.f32 %v2978, 1.442695
        %v3014 = vpow.pop %v3013
        %v3015 = vmul.f32 %v2979, 1.442695
        %v3016 = vpow.pop %v3015
        %v3017 = vmul.f32 %v2980, 1.442695
        %v3018 = vpow.pop %v3017
        %v3019 = vmul.f32 %v2981, 1.442695
        %v3020 = vpow.pop %v3019
        %v3021 = vmul.f32 %v2982, 1.442695
        %v3022 = vpow.pop %v3021
        %v3023 = vmul.f32 %v2983, 1.442695
        %v3024 = vpow.pop %v3023
        %v3025 = vmul.f32 %v2984, 1.442695
        %v3026 = vpow.pop %v3025
        %v3027 = vmul.f32 %v2985, 1.442695
        %v3028 = vpow.pop %v3027
        %v3029 = vmul.f32 %v2986, 1.442695
        %v3030 = vpow.pop %v3029
        %v3031 = vmul.f32 %v2987, 1.442695
        %v3032 = vpow.pop %v3031
        %v3033 = vmul.f32 %v2988, 1.442695
        %v3034 = vpow.pop %v3033
        %v3035 = vmul.f32 %v2989, 1.442695
        %v3036 = vpow.pop %v3035
        %v3037 = vmul.f32 %v2990, 1.442695
        %v3038 = vpow.pop %v3037
        %v3039 = vmul.f32 %v2991, 1.442695
        %v3040 = vpow.pop %v3039
        %v3041 = vmul.f32 %v2992, 1.442695
        %v3042 = vpow.pop %v3041
        %v3043 = vmul.f32 %v2993, 1.442695
        %v3044 = vpow.pop %v3043
        %v3045 = vmul.f32 %v2994, 1.442695
        %v3046 = vpow.pop %v3045
        %v3047 = vmul.f32 %v2995, 1.442695
        %v3048 = vpow.pop %v3047
        %v3049 = vmul.f32 %v2996, 1.442695
        %v3050 = vpow.pop %v3049
        %v3051 = vmul.f32 %v2997, 1.442695
        %v3052 = vpow.pop %v3051
        %v3053 = vmul.f32 %v2998, 1.442695
        %v3054 = vpow.pop %v3053
        %v3055 = vmul.f32 %v2999, 1.442695
        %v3056 = vpow.pop %v3055
        %v3057 = vmul.f32 %v3000, 1.442695
        %v3058 = vpow.pop %v3057
        %v3059 = vmul.f32 %v3001, 1.442695
        %v3060 = vpow.pop %v3059
        %v3061 = vmul.f32 %v3002, 1.442695
        %v3062 = vpow.pop %v3061
        %v3063 = vmul.f32 %v3003, 1.442695
        %v3064 = vpow.pop %v3063
        %v3065 = vmul.f32 %v3004, 1.442695
        %v3066 = vpow.pop %v3065
        %v3067 = vmul.f32 %v3005, 1.442695
        %v3068 = vpow.pop %v3067
        %v3069 = vmul.f32 %v3006, 1.442695
        %v3070 = vpow.pop %v3069
        %v3071 = vsel %vm1451, %v3008, 0.0
        %3072 = vadd.xlane.f32.xlu0 %v3071
        %v3073 = vpop.xlane.xlu0 %3072
        %v3074 = vsel %vm1451, %v3010, 0.0
        %3075 = vadd.xlane.f32.xlu0 %v3074
        %v3076 = vpop.xlane.xlu0 %3075
        %v3077 = vsel %vm1451, %v3012, 0.0
        %3078 = vadd.xlane.f32.xlu0 %v3077
        %v3079 = vpop.xlane.xlu0 %3078
        %v3080 = vsel %vm1451, %v3014, 0.0
        %3081 = vadd.xlane.f32.xlu0 %v3080
        %v3082 = vpop.xlane.xlu0 %3081
        %v3083 = vsel %vm1451, %v3016, 0.0
        %3084 = vadd.xlane.f32.xlu0 %v3083
        %v3085 = vpop.xlane.xlu0 %3084
        %v3086 = vsel %vm1451, %v3018, 0.0
        %3087 = vadd.xlane.f32.xlu0 %v3086
        %v3088 = vpop.xlane.xlu0 %3087
        %v3089 = vsel %vm1451, %v3020, 0.0
        %3090 = vadd.xlane.f32.xlu0 %v3089
        %v3091 = vpop.xlane.xlu0 %3090
        %v3092 = vsel %vm1451, %v3022, 0.0
        %3093 = vadd.xlane.f32.xlu0 %v3092
        %v3094 = vpop.xlane.xlu0 %3093
        %v3095 = vsel %vm1451, %v3024, 0.0
        %3096 = vadd.xlane.f32.xlu0 %v3095
        %v3097 = vpop.xlane.xlu0 %3096
        %v3098 = vsel %vm1451, %v3026, 0.0
        %3099 = vadd.xlane.f32.xlu0 %v3098
        %v3100 = vpop.xlane.xlu0 %3099
        %v3101 = vsel %vm1451, %v3028, 0.0
        %3102 = vadd.xlane.f32.xlu0 %v3101
        %v3103 = vpop.xlane.xlu0 %3102
        %v3104 = vsel %vm1451, %v3030, 0.0
        %3105 = vadd.xlane.f32.xlu0 %v3104
        %v3106 = vpop.xlane.xlu0 %3105
        %v3107 = vsel %vm1451, %v3032, 0.0
        %3108 = vadd.xlane.f32.xlu0 %v3107
        %v3109 = vpop.xlane.xlu0 %3108
        %v3110 = vsel %vm1451, %v3034, 0.0
        %3111 = vadd.xlane.f32.xlu0 %v3110
        %v3112 = vpop.xlane.xlu0 %3111
        %v3113 = vsel %vm1451, %v3036, 0.0
        %3114 = vadd.xlane.f32.xlu0 %v3113
        %v3115 = vpop.xlane.xlu0 %3114
        %v3116 = vsel %vm1451, %v3038, 0.0
        %3117 = vadd.xlane.f32.xlu0 %v3116
        %v3118 = vpop.xlane.xlu0 %3117
        %v3119 = vsel %vm1451, %v3040, 0.0
        %3120 = vadd.xlane.f32.xlu0 %v3119
        %v3121 = vpop.xlane.xlu0 %3120
        %v3122 = vsel %vm1451, %v3042, 0.0
        %3123 = vadd.xlane.f32.xlu0 %v3122
        %v3124 = vpop.xlane.xlu0 %3123
        %v3125 = vsel %vm1451, %v3044, 0.0
        %3126 = vadd.xlane.f32.xlu0 %v3125
        %v3127 = vpop.xlane.xlu0 %3126
        %v3128 = vsel %vm1451, %v3046, 0.0
        %3129 = vadd.xlane.f32.xlu0 %v3128
        %v3130 = vpop.xlane.xlu0 %3129
        %v3131 = vsel %vm1451, %v3048, 0.0
        %3132 = vadd.xlane.f32.xlu0 %v3131
        %v3133 = vpop.xlane.xlu0 %3132
        %v3134 = vsel %vm1451, %v3050, 0.0
        %3135 = vadd.xlane.f32.xlu0 %v3134
        %v3136 = vpop.xlane.xlu0 %3135
        %v3137 = vsel %vm1451, %v3052, 0.0
        %3138 = vadd.xlane.f32.xlu0 %v3137
        %v3139 = vpop.xlane.xlu0 %3138
        %v3140 = vsel %vm1451, %v3054, 0.0
        %3141 = vadd.xlane.f32.xlu0 %v3140
        %v3142 = vpop.xlane.xlu0 %3141
        %v3143 = vsel %vm1451, %v3056, 0.0
        %3144 = vadd.xlane.f32.xlu0 %v3143
        %v3145 = vpop.xlane.xlu0 %3144
        %v3146 = vsel %vm1451, %v3058, 0.0
        %3147 = vadd.xlane.f32.xlu0 %v3146
        %v3148 = vpop.xlane.xlu0 %3147
        %v3149 = vsel %vm1451, %v3060, 0.0
        %3150 = vadd.xlane.f32.xlu0 %v3149
        %v3151 = vpop.xlane.xlu0 %3150
        %v3152 = vsel %vm1451, %v3062, 0.0
        %3153 = vadd.xlane.f32.xlu0 %v3152
        %v3154 = vpop.xlane.xlu0 %3153
        %v3155 = vsel %vm1451, %v3064, 0.0
        %3156 = vadd.xlane.f32.xlu0 %v3155
        %v3157 = vpop.xlane.xlu0 %3156
        %v3158 = vsel %vm1451, %v3066, 0.0
        %3159 = vadd.xlane.f32.xlu0 %v3158
        %v3160 = vpop.xlane.xlu0 %3159
        %v3161 = vsel %vm1451, %v3068, 0.0
        %3162 = vadd.xlane.f32.xlu0 %v3161
        %v3163 = vpop.xlane.xlu0 %3162
        %v3164 = vsel %vm1451, %v3070, 0.0
        %3165 = vadd.xlane.f32.xlu0 %v3164
        %v3166 = vpop.xlane.xlu0 %3165
        %v3167 = vrcp.pop %v3073
        %v3168 = vmul.f32 %v3008, %v3167
        %v3169 = vrcp.pop %v3076
        %v3170 = vmul.f32 %v3010, %v3169
        %v3171 = vrcp.pop %v3079
        %v3172 = vmul.f32 %v3012, %v3171
        %v3173 = vrcp.pop %v3082
        %v3174 = vmul.f32 %v3014, %v3173
        %v3175 = vrcp.pop %v3085
        %v3176 = vmul.f32 %v3016, %v3175
        %v3177 = vrcp.pop %v3088
        %v3178 = vmul.f32 %v3018, %v3177
        %v3179 = vrcp.pop %v3091
        %v3180 = vmul.f32 %v3020, %v3179
        %v3181 = vrcp.pop %v3094
        %v3182 = vmul.f32 %v3022, %v3181
        %v3183 = vrcp.pop %v3097
        %v3184 = vmul.f32 %v3024, %v3183
        %v3185 = vrcp.pop %v3100
        %v3186 = vmul.f32 %v3026, %v3185
        %v3187 = vrcp.pop %v3103
        %v3188 = vmul.f32 %v3028, %v3187
        %v3189 = vrcp.pop %v3106
        %v3190 = vmul.f32 %v3030, %v3189
        %v3191 = vrcp.pop %v3109
        %v3192 = vmul.f32 %v3032, %v3191
        %v3193 = vrcp.pop %v3112
        %v3194 = vmul.f32 %v3034, %v3193
        %v3195 = vrcp.pop %v3115
        %v3196 = vmul.f32 %v3036, %v3195
        %v3197 = vrcp.pop %v3118
        %v3198 = vmul.f32 %v3038, %v3197
        %v3199 = vrcp.pop %v3121
        %v3200 = vmul.f32 %v3040, %v3199
        %v3201 = vrcp.pop %v3124
        %v3202 = vmul.f32 %v3042, %v3201
        %v3203 = vrcp.pop %v3127
        %v3204 = vmul.f32 %v3044, %v3203
        %v3205 = vrcp.pop %v3130
        %v3206 = vmul.f32 %v3046, %v3205
        %v3207 = vrcp.pop %v3133
        %v3208 = vmul.f32 %v3048, %v3207
        %v3209 = vrcp.pop %v3136
        %v3210 = vmul.f32 %v3050, %v3209
        %v3211 = vrcp.pop %v3139
        %v3212 = vmul.f32 %v3052, %v3211
        %v3213 = vrcp.pop %v3142
        %v3214 = vmul.f32 %v3054, %v3213
        %v3215 = vrcp.pop %v3145
        %v3216 = vmul.f32 %v3056, %v3215
        %v3217 = vrcp.pop %v3148
        %v3218 = vmul.f32 %v3058, %v3217
        %v3219 = vrcp.pop %v3151
        %v3220 = vmul.f32 %v3060, %v3219
        %v3221 = vrcp.pop %v3154
        %v3222 = vmul.f32 %v3062, %v3221
        %v3223 = vrcp.pop %v3157
        %v3224 = vmul.f32 %v3064, %v3223
        %v3225 = vrcp.pop %v3160
        %v3226 = vmul.f32 %v3066, %v3225
        %v3227 = vrcp.pop %v3163
        %v3228 = vmul.f32 %v3068, %v3227
        %v3229 = vrcp.pop %v3166
        %v3230 = vmul.f32 %v3070, %v3229
        %3231 = vrot.lane.b32.xlu0 %v1088, 126
        %v3232 = vpop.permute.xlu0 %3231
        %v3234 = vsel %vm1451, %v3168, 0
        %v3237 = vsel %vm1451, %v3170, 0
        %v3240 = vsel %vm1451, %v3172, 0
        %v3243 = vsel %vm1451, %v3174, 0
        %v3246 = vsel %vm1451, %v3176, 0
        %v3249 = vsel %vm1451, %v3178, 0
        %v3252 = vsel %vm1451, %v3180, 0
        %v3255 = vsel %vm1451, %v3182, 0
        %v3258 = vsel %vm1451, %v3184, 0
        %v3261 = vsel %vm1451, %v3186, 0
        %v3264 = vsel %vm1451, %v3188, 0
        %v3267 = vsel %vm1451, %v3190, 0
        %v3270 = vsel %vm1451, %v3192, 0
        %v3273 = vsel %vm1451, %v3194, 0
        %v3276 = vsel %vm1451, %v3196, 0
        %v3279 = vsel %vm1451, %v3198, 0
        %v3282 = vsel %vm1451, %v3200, 0
        %v3285 = vsel %vm1451, %v3202, 0
        %v3288 = vsel %vm1451, %v3204, 0
        %v3291 = vsel %vm1451, %v3206, 0
        %v3294 = vsel %vm1451, %v3208, 0
        %v3297 = vsel %vm1451, %v3210, 0
        %v3300 = vsel %vm1451, %v3212, 0
        %v3303 = vsel %vm1451, %v3214, 0
        %v3306 = vsel %vm1451, %v3216, 0
        %v3309 = vsel %vm1451, %v3218, 0
        %v3312 = vsel %vm1451, %v3220, 0
        %v3315 = vsel %vm1451, %v3222, 0
        %v3318 = vsel %vm1451, %v3224, 0
        %v3321 = vsel %vm1451, %v3226, 0
        %v3324 = vsel %vm1451, %v3228, 0
        %v3327 = vsel %vm1451, %v3230, 0
        %v3329 = vsel %vm1900, %v3232, 0
        %3331 = vmatprep.subr.mxu0 0.0
        %3332 = vmatpush1.msra.mxu0 %v3329
        %3333 = vmatprep.subr.mxu0 0.0
        %3334 = vmatpush1.msra.mxu0 0.0
        %3335 = vmatprep.subr.mxu0 0.0
        %3336 = vmatpush1.msra.mxu0 0.0
        %3337 = vmatprep.subr.mxu0 0.0
        %3338 = vmatpush1.msra.mxu0 0.0
        %3339 = vmatprep.subr.mxu0 0.0
        %3340 = vmatpush1.msra.mxu0 0.0
        %3341 = vmatprep.subr.mxu0 0.0
        %3342 = vmatpush1.msra.mxu0 0.0
        %3343 = vmatprep.subr.mxu0 0.0
        %3344 = vmatpush1.msra.mxu0 0.0
        %3345 = vmatprep.subr.mxu0 0.0
        %3346 = vmatpush1.msra.mxu0 0.0
        %3347 = vmatprep.subr.mxu0 0.0
        %3348 = vmatpush1.msra.mxu0 0.0
        %3349 = vmatprep.subr.mxu0 0.0
        %3350 = vmatpush1.msra.mxu0 0.0
        %3351 = vmatprep.subr.mxu0 0.0
        %3352 = vmatpush1.msra.mxu0 0.0
        %3353 = vmatprep.subr.mxu0 0.0
        %3354 = vmatpush1.msra.mxu0 0.0
        %3355 = vmatprep.subr.mxu0 0.0
        %3356 = vmatpush1.msra.mxu0 0.0
        %3357 = vmatprep.subr.mxu0 0.0
        %3358 = vmatpush1.msra.mxu0 0.0
        %3359 = vmatprep.subr.mxu0 0.0
        %3360 = vmatpush1.msra.mxu0 0.0
        %3361 = vmatprep.subr.mxu0 0.0
        %3362 = vmatpush1.msra.mxu0 0.0
        %3363 = vmatprep.subr.mxu0 0.0
        %3364 = vmatpush1.msra.mxu0 0.0
        %3365 = vmatprep.subr.mxu0 0.0
        %3366 = vmatpush1.msra.mxu0 0.0
        %3367 = vmatprep.subr.mxu0 0.0
        %3368 = vmatpush1.msra.mxu0 0.0
        %3369 = vmatprep.subr.mxu0 0.0
        %3370 = vmatpush1.msra.mxu0 0.0
        %3371 = vmatprep.subr.mxu0 0.0
        %3372 = vmatpush1.msra.mxu0 0.0
        %3373 = vmatprep.subr.mxu0 0.0
        %3374 = vmatpush1.msra.mxu0 0.0
        %3375 = vmatprep.subr.mxu0 0.0
        %3376 = vmatpush1.msra.mxu0 0.0
        %3377 = vmatprep.subr.mxu0 0.0
        %3378 = vmatpush1.msra.mxu0 0.0
        %3379 = vmatprep.subr.mxu0 0.0
        %3380 = vmatpush1.msra.mxu0 0.0
        %3381 = vmatprep.subr.mxu0 0.0
        %3382 = vmatpush1.msra.mxu0 0.0
        %3383 = vmatprep.subr.mxu0 0.0
        %3384 = vmatpush1.msra.mxu0 0.0
        %3385 = vmatprep.subr.mxu0 0.0
        %3386 = vmatpush1.msra.mxu0 0.0
        %3387 = vmatprep.subr.mxu0 0.0
        %3388 = vmatpush1.msra.mxu0 0.0
        %3389 = vmatprep.subr.mxu0 0.0
        %3390 = vmatpush1.msra.mxu0 0.0
        %3391 = vmatprep.subr.mxu0 0.0
        %3392 = vmatpush1.msra.mxu0 0.0
        %3393 = vmatprep.subr.mxu0 0.0
        %3394 = vmatpush1.msra.mxu0 0.0
        %3395 = vmatprep.mubr.f32.mxu0 0.0
        %3396 = vmatmul.mubr.f32.gmra.mrb[0].mxu0 %v3234
        %v3397 = vpop.f32.mrb[0].mxu0
        %v3398 = vadd.f32 0.0, %v3397
        %v3399 = vpop.f32.mrb[0].mxu0
        %3400 = vmatprep.mubr.f32.mxu0 0.0
        %3401 = vmatmul.mubr.f32.gmra.mrb[0].mxu0 %v3237
        %v3402 = vpop.f32.mrb[0].mxu0
        %v3403 = vadd.f32 0.0, %v3402
        %v3404 = vpop.f32.mrb[0].mxu0
        %3405 = vmatprep.mubr.f32.mxu0 0.0
        %3406 = vmatmul.mubr.f32.gmra.mrb[0].mxu0 %v3240
        %v3407 = vpop.f32.mrb[0].mxu0
        %v3408 = vadd.f32 0.0, %v3407
        %v3409 = vpop.f32.mrb[0].mxu0
        %3410 = vmatprep.mubr.f32.mxu0 0.0
        %3411 = vmatmul.mubr.f32.gmra.mrb[0].mxu0 %v3243
        %v3412 = vpop.f32.mrb[0].mxu0
        %v3413 = vadd.f32 0.0, %v3412
        %v3414 = vpop.f32.mrb[0].mxu0
        %3415 = vmatprep.mubr.f32.mxu0 0.0
        %3416 = vmatmul.mubr.f32.gmra.mrb[0].mxu0 %v3246
        %v3417 = vpop.f32.mrb[0].mxu0
        %v3418 = vadd.f32 0.0, %v3417
        %v3419 = vpop.f32.mrb[0].mxu0
        %3420 = vmatprep.mubr.f32.mxu0 0.0
        %3421 = vmatmul.mubr.f32.gmra.mrb[0].mxu0 %v3249
        %v3422 = vpop.f32.mrb[0].mxu0
        %v3423 = vadd.f32 0.0, %v3422
        %v3424 = vpop.f32.mrb[0].mxu0
        %3425 = vmatprep.mubr.f32.mxu0 0.0
        %3426 = vmatmul.mubr.f32.gmra.mrb[0].mxu0 %v3252
        %v3427 = vpop.f32.mrb[0].mxu0
        %v3428 = vadd.f32 0.0, %v3427
        %v3429 = vpop.f32.mrb[0].mxu0
        %3430 = vmatprep.mubr.f32.mxu0 0.0
        %3431 = vmatmul.mubr.f32.gmra.mrb[0].mxu0 %v3255
        %v3432 = vpop.f32.mrb[0].mxu0
        %v3433 = vadd.f32 0.0, %v3432
        %v3434 = vpop.f32.mrb[0].mxu0
        %3435 = vmatprep.mubr.f32.mxu0 0.0
        %3436 = vmatmul.mubr.f32.gmra.mrb[0].mxu0 %v3258
        %v3437 = vpop.f32.mrb[0].mxu0
        %v3438 = vadd.f32 0.0, %v3437
        %v3439 = vpop.f32.mrb[0].mxu0
        %3440 = vmatprep.mubr.f32.mxu0 0.0
        %3441 = vmatmul.mubr.f32.gmra.mrb[0].mxu0 %v3261
        %v3442 = vpop.f32.mrb[0].mxu0
        %v3443 = vadd.f32 0.0, %v3442
        %v3444 = vpop.f32.mrb[0].mxu0
        %3445 = vmatprep.mubr.f32.mxu0 0.0
        %3446 = vmatmul.mubr.f32.gmra.mrb[0].mxu0 %v3264
        %v3447 = vpop.f32.mrb[0].mxu0
        %v3448 = vadd.f32 0.0, %v3447
        %v3449 = vpop.f32.mrb[0].mxu0
        %3450 = vmatprep.mubr.f32.mxu0 0.0
        %3451 = vmatmul.mubr.f32.gmra.mrb[0].mxu0 %v3267
        %v3452 = vpop.f32.mrb[0].mxu0
        %v3453 = vadd.f32 0.0, %v3452
        %v3454 = vpop.f32.mrb[0].mxu0
        %3455 = vmatprep.mubr.f32.mxu0 0.0
        %3456 = vmatmul.mubr.f32.gmra.mrb[0].mxu0 %v3270
        %v3457 = vpop.f32.mrb[0].mxu0
        %v3458 = vadd.f32 0.0, %v3457
        %v3459 = vpop.f32.mrb[0].mxu0
        %3460 = vmatprep.mubr.f32.mxu0 0.0
        %3461 = vmatmul.mubr.f32.gmra.mrb[0].mxu0 %v3273
        %v3462 = vpop.f32.mrb[0].mxu0
        %v3463 = vadd.f32 0.0, %v3462
        %v3464 = vpop.f32.mrb[0].mxu0
        %3465 = vmatprep.mubr.f32.mxu0 0.0
        %3466 = vmatmul.mubr.f32.gmra.mrb[0].mxu0 %v3276
        %v3467 = vpop.f32.mrb[0].mxu0
        %v3468 = vadd.f32 0.0, %v3467
        %v3469 = vpop.f32.mrb[0].mxu0
        %3470 = vmatprep.mubr.f32.mxu0 0.0
        %3471 = vmatmul.mubr.f32.gmra.mrb[0].mxu0 %v3279
        %v3472 = vpop.f32.mrb[0].mxu0
        %v3473 = vadd.f32 0.0, %v3472
        %v3474 = vpop.f32.mrb[0].mxu0
        %3475 = vmatprep.mubr.f32.mxu0 0.0
        %3476 = vmatmul.mubr.f32.gmra.mrb[0].mxu0 %v3282
        %v3477 = vpop.f32.mrb[0].mxu0
        %v3478 = vadd.f32 0.0, %v3477
        %v3479 = vpop.f32.mrb[0].mxu0
        %3480 = vmatprep.mubr.f32.mxu0 0.0
        %3481 = vmatmul.mubr.f32.gmra.mrb[0].mxu0 %v3285
        %v3482 = vpop.f32.mrb[0].mxu0
        %v3483 = vadd.f32 0.0, %v3482
        %v3484 = vpop.f32.mrb[0].mxu0
        %3485 = vmatprep.mubr.f32.mxu0 0.0
        %3486 = vmatmul.mubr.f32.gmra.mrb[0].mxu0 %v3288
        %v3487 = vpop.f32.mrb[0].mxu0
        %v3488 = vadd.f32 0.0, %v3487
        %v3489 = vpop.f32.mrb[0].mxu0
        %3490 = vmatprep.mubr.f32.mxu0 0.0
        %3491 = vmatmul.mubr.f32.gmra.mrb[0].mxu0 %v3291
        %v3492 = vpop.f32.mrb[0].mxu0
        %v3493 = vadd.f32 0.0, %v3492
        %v3494 = vpop.f32.mrb[0].mxu0
        %3495 = vmatprep.mubr.f32.mxu0 0.0
        %3496 = vmatmul.mubr.f32.gmra.mrb[0].mxu0 %v3294
        %v3497 = vpop.f32.mrb[0].mxu0
        %v3498 = vadd.f32 0.0, %v3497
        %v3499 = vpop.f32.mrb[0].mxu0
        %3500 = vmatprep.mubr.f32.mxu0 0.0
        %3501 = vmatmul.mubr.f32.gmra.mrb[0].mxu0 %v3297
        %v3502 = vpop.f32.mrb[0].mxu0
        %v3503 = vadd.f32 0.0, %v3502
        %v3504 = vpop.f32.mrb[0].mxu0
        %3505 = vmatprep.mubr.f32.mxu0 0.0
        %3506 = vmatmul.mubr.f32.gmra.mrb[0].mxu0 %v3300
        %v3507 = vpop.f32.mrb[0].mxu0
        %v3508 = vadd.f32 0.0, %v3507
        %v3509 = vpop.f32.mrb[0].mxu0
        %3510 = vmatprep.mubr.f32.mxu0 0.0
        %3511 = vmatmul.mubr.f32.gmra.mrb[0].mxu0 %v3303
        %v3512 = vpop.f32.mrb[0].mxu0
        %v3513 = vadd.f32 0.0, %v3512
        %v3514 = vpop.f32.mrb[0].mxu0
        %3515 = vmatprep.mubr.f32.mxu0 0.0
        %3516 = vmatmul.mubr.f32.gmra.mrb[0].mxu0 %v3306
        %v3517 = vpop.f32.mrb[0].mxu0
        %v3518 = vadd.f32 0.0, %v3517
        %v3519 = vpop.f32.mrb[0].mxu0
        %3520 = vmatprep.mubr.f32.mxu0 0.0
        %3521 = vmatmul.mubr.f32.gmra.mrb[0].mxu0 %v3309
        %v3522 = vpop.f32.mrb[0].mxu0
        %v3523 = vadd.f32 0.0, %v3522
        %v3524 = vpop.f32.mrb[0].mxu0
        %3525 = vmatprep.mubr.f32.mxu0 0.0
        %3526 = vmatmul.mubr.f32.gmra.mrb[0].mxu0 %v3312
        %v3527 = vpop.f32.mrb[0].mxu0
        %v3528 = vadd.f32 0.0, %v3527
        %v3529 = vpop.f32.mrb[0].mxu0
        %3530 = vmatprep.mubr.f32.mxu0 0.0
        %3531 = vmatmul.mubr.f32.gmra.mrb[0].mxu0 %v3315
        %v3532 = vpop.f32.mrb[0].mxu0
        %v3533 = vadd.f32 0.0, %v3532
        %v3534 = vpop.f32.mrb[0].mxu0
        %3535 = vmatprep.mubr.f32.mxu0 0.0
        %3536 = vmatmul.mubr.f32.gmra.mrb[0].mxu0 %v3318
        %v3537 = vpop.f32.mrb[0].mxu0
        %v3538 = vadd.f32 0.0, %v3537
        %v3539 = vpop.f32.mrb[0].mxu0
        %3540 = vmatprep.mubr.f32.mxu0 0.0
        %3541 = vmatmul.mubr.f32.gmra.mrb[0].mxu0 %v3321
        %v3542 = vpop.f32.mrb[0].mxu0
        %v3543 = vadd.f32 0.0, %v3542
        %v3544 = vpop.f32.mrb[0].mxu0
        %3545 = vmatprep.mubr.f32.mxu0 0.0
        %3546 = vmatmul.mubr.f32.gmra.mrb[0].mxu0 %v3324
        %v3547 = vpop.f32.mrb[0].mxu0
        %v3548 = vadd.f32 0.0, %v3547
        %v3549 = vpop.f32.mrb[0].mxu0
        %3550 = vmatprep.mubr.f32.mxu0 0.0
        %3551 = vmatmul.mubr.f32.gmra.mrb[0].mxu0 %v3327
        %v3552 = vpop.f32.mrb[0].mxu0
        %v3553 = vadd.f32 0.0, %v3552
        %v3554 = vpop.f32.mrb[0].mxu0
        %3555 = vdwg.mxu0
        %v3556 = vrot.slane %v1091, 2
        %v3558 = vsel %vm1093, %v3398, 0
        %v3561 = vsel %vm1093, %v3403, 0
        %v3564 = vsel %vm1093, %v3408, 0
        %v3567 = vsel %vm1093, %v3413, 0
        %v3570 = vsel %vm1093, %v3418, 0
        %v3573 = vsel %vm1093, %v3423, 0
        %v3576 = vsel %vm1093, %v3428, 0
        %v3579 = vsel %vm1093, %v3433, 0
        %v3582 = vsel %vm1093, %v3438, 0
        %v3585 = vsel %vm1093, %v3443, 0
        %v3588 = vsel %vm1093, %v3448, 0
        %v3591 = vsel %vm1093, %v3453, 0
        %v3594 = vsel %vm1093, %v3458, 0
        %v3597 = vsel %vm1093, %v3463, 0
        %v3600 = vsel %vm1093, %v3468, 0
        %v3603 = vsel %vm1093, %v3473, 0
        %v3606 = vsel %vm1093, %v3478, 0
        %v3609 = vsel %vm1093, %v3483, 0
        %v3612 = vsel %vm1093, %v3488, 0
        %v3615 = vsel %vm1093, %v3493, 0
        %v3618 = vsel %vm1093, %v3498, 0
        %v3621 = vsel %vm1093, %v3503, 0
        %v3624 = vsel %vm1093, %v3508, 0
        %v3627 = vsel %vm1093, %v3513, 0
        %v3630 = vsel %vm1093, %v3518, 0
        %v3633 = vsel %vm1093, %v3523, 0
        %v3636 = vsel %vm1093, %v3528, 0
        %v3639 = vsel %vm1093, %v3533, 0
        %v3642 = vsel %vm1093, %v3538, 0
        %v3645 = vsel %vm1093, %v3543, 0
        %v3648 = vsel %vm1093, %v3548, 0
        %v3651 = vsel %vm1093, %v3553, 0
        %v3653 = vsel %vm1190, %v3556, 0
        %3655 = vmatprep.subr.mxu0 0.0
        %3656 = vmatpush1.msra.mxu0 %v3653
        %3657 = vmatprep.subr.mxu0 0.0
        %3658 = vmatpush1.msra.mxu0 0.0
        %3659 = vmatprep.subr.mxu0 0.0
        %3660 = vmatpush1.msra.mxu0 0.0
        %3661 = vmatprep.subr.mxu0 0.0
        %3662 = vmatpush1.msra.mxu0 0.0
        %3663 = vmatprep.subr.mxu0 0.0
        %3664 = vmatpush1.msra.mxu0 0.0
        %3665 = vmatprep.subr.mxu0 0.0
        %3666 = vmatpush1.msra.mxu0 0.0
        %3667 = vmatprep.subr.mxu0 0.0
        %3668 = vmatpush1.msra.mxu0 0.0
        %3669 = vmatprep.subr.mxu0 0.0
        %3670 = vmatpush1.msra.mxu0 0.0
        %3671 = vmatprep.subr.mxu0 0.0
        %3672 = vmatpush1.msra.mxu0 0.0
        %3673 = vmatprep.subr.mxu0 0.0
        %3674 = vmatpush1.msra.mxu0 0.0
        %3675 = vmatprep.subr.mxu0 0.0
        %3676 = vmatpush1.msra.mxu0 0.0
        %3677 = vmatprep.subr.mxu0 0.0
        %3678 = vmatpush1.msra.mxu0 0.0
        %3679 = vmatprep.subr.mxu0 0.0
        %3680 = vmatpush1.msra.mxu0 0.0
        %3681 = vmatprep.subr.mxu0 0.0
        %3682 = vmatpush1.msra.mxu0 0.0
        %3683 = vmatprep.subr.mxu0 0.0
        %3684 = vmatpush1.msra.mxu0 0.0
        %3685 = vmatprep.subr.mxu0 0.0
        %3686 = vmatpush1.msra.mxu0 0.0
        %3687 = vmatprep.subr.mxu0 0.0
        %3688 = vmatpush1.msra.mxu0 0.0
        %3689 = vmatprep.subr.mxu0 0.0
        %3690 = vmatpush1.msra.mxu0 0.0
        %3691 = vmatprep.subr.mxu0 0.0
        %3692 = vmatpush1.msra.mxu0 0.0
        %3693 = vmatprep.subr.mxu0 0.0
        %3694 = vmatpush1.msra.mxu0 0.0
        %3695 = vmatprep.subr.mxu0 0.0
        %3696 = vmatpush1.msra.mxu0 0.0
        %3697 = vmatprep.subr.mxu0 0.0
        %3698 = vmatpush1.msra.mxu0 0.0
        %3699 = vmatprep.subr.mxu0 0.0
        %3700 = vmatpush1.msra.mxu0 0.0
        %3701 = vmatprep.subr.mxu0 0.0
        %3702 = vmatpush1.msra.mxu0 0.0
        %3703 = vmatprep.subr.mxu0 0.0
        %3704 = vmatpush1.msra.mxu0 0.0
        %3705 = vmatprep.subr.mxu0 0.0
        %3706 = vmatpush1.msra.mxu0 0.0
        %3707 = vmatprep.subr.mxu0 0.0
        %3708 = vmatpush1.msra.mxu0 0.0
        %3709 = vmatprep.subr.mxu0 0.0
        %3710 = vmatpush1.msra.mxu0 0.0
        %3711 = vmatprep.subr.mxu0 0.0
        %3712 = vmatpush1.msra.mxu0 0.0
        %3713 = vmatprep.subr.mxu0 0.0
        %3714 = vmatpush1.msra.mxu0 0.0
        %3715 = vmatprep.subr.mxu0 0.0
        %3716 = vmatpush1.msra.mxu0 0.0
        %3717 = vmatprep.subr.mxu0 0.0
        %3718 = vmatpush1.msra.mxu0 0.0
        %3719 = vmatprep.mubr.f32.mxu0 0.0
        %3720 = vmatmul.mubr.f32.gmra.mrb[0].mxu0 %v3558
        %v3721 = vpop.f32.mrb[0].mxu0
        %v3722 = vadd.f32 0.0, %v3721
        %v3723 = vpop.f32.mrb[0].mxu0
        %3724 = vmatprep.mubr.f32.mxu0 0.0
        %3725 = vmatmul.mubr.f32.gmra.mrb[0].mxu0 %v3561
        %v3726 = vpop.f32.mrb[0].mxu0
        %v3727 = vadd.f32 0.0, %v3726
        %v3728 = vpop.f32.mrb[0].mxu0
        %3729 = vmatprep.mubr.f32.mxu0 0.0
        %3730 = vmatmul.mubr.f32.gmra.mrb[0].mxu0 %v3564
        %v3731 = vpop.f32.mrb[0].mxu0
        %v3732 = vadd.f32 0.0, %v3731
        %v3733 = vpop.f32.mrb[0].mxu0
        %3734 = vmatprep.mubr.f32.mxu0 0.0
        %3735 = vmatmul.mubr.f32.gmra.mrb[0].mxu0 %v3567
        %v3736 = vpop.f32.mrb[0].mxu0
        %v3737 = vadd.f32 0.0, %v3736
        %v3738 = vpop.f32.mrb[0].mxu0
        %3739 = vmatprep.mubr.f32.mxu0 0.0
        %3740 = vmatmul.mubr.f32.gmra.mrb[0].mxu0 %v3570
        %v3741 = vpop.f32.mrb[0].mxu0
        %v3742 = vadd.f32 0.0, %v3741
        %v3743 = vpop.f32.mrb[0].mxu0
        %3744 = vmatprep.mubr.f32.mxu0 0.0
        %3745 = vmatmul.mubr.f32.gmra.mrb[0].mxu0 %v3573
        %v3746 = vpop.f32.mrb[0].mxu0
        %v3747 = vadd.f32 0.0, %v3746
        %v3748 = vpop.f32.mrb[0].mxu0
        %3749 = vmatprep.mubr.f32.mxu0 0.0
        %3750 = vmatmul.mubr.f32.gmra.mrb[0].mxu0 %v3576
        %v3751 = vpop.f32.mrb[0].mxu0
        %v3752 = vadd.f32 0.0, %v3751
        %v3753 = vpop.f32.mrb[0].mxu0
        %3754 = vmatprep.mubr.f32.mxu0 0.0
        %3755 = vmatmul.mubr.f32.gmra.mrb[0].mxu0 %v3579
        %v3756 = vpop.f32.mrb[0].mxu0
        %v3757 = vadd.f32 0.0, %v3756
        %v3758 = vpop.f32.mrb[0].mxu0
        %3759 = vmatprep.mubr.f32.mxu0 0.0
        %3760 = vmatmul.mubr.f32.gmra.mrb[0].mxu0 %v3582
        %v3761 = vpop.f32.mrb[0].mxu0
        %v3762 = vadd.f32 0.0, %v3761
        %v3763 = vpop.f32.mrb[0].mxu0
        %3764 = vmatprep.mubr.f32.mxu0 0.0
        %3765 = vmatmul.mubr.f32.gmra.mrb[0].mxu0 %v3585
        %v3766 = vpop.f32.mrb[0].mxu0
        %v3767 = vadd.f32 0.0, %v3766
        %v3768 = vpop.f32.mrb[0].mxu0
        %3769 = vmatprep.mubr.f32.mxu0 0.0
        %3770 = vmatmul.mubr.f32.gmra.mrb[0].mxu0 %v3588
        %v3771 = vpop.f32.mrb[0].mxu0
        %v3772 = vadd.f32 0.0, %v3771
        %v3773 = vpop.f32.mrb[0].mxu0
        %3774 = vmatprep.mubr.f32.mxu0 0.0
        %3775 = vmatmul.mubr.f32.gmra.mrb[0].mxu0 %v3591
        %v3776 = vpop.f32.mrb[0].mxu0
        %v3777 = vadd.f32 0.0, %v3776
        %v3778 = vpop.f32.mrb[0].mxu0
        %3779 = vmatprep.mubr.f32.mxu0 0.0
        %3780 = vmatmul.mubr.f32.gmra.mrb[0].mxu0 %v3594
        %v3781 = vpop.f32.mrb[0].mxu0
        %v3782 = vadd.f32 0.0, %v3781
        %v3783 = vpop.f32.mrb[0].mxu0
        %3784 = vmatprep.mubr.f32.mxu0 0.0
        %3785 = vmatmul.mubr.f32.gmra.mrb[0].mxu0 %v3597
        %v3786 = vpop.f32.mrb[0].mxu0
        %v3787 = vadd.f32 0.0, %v3786
        %v3788 = vpop.f32.mrb[0].mxu0
        %3789 = vmatprep.mubr.f32.mxu0 0.0
        %3790 = vmatmul.mubr.f32.gmra.mrb[0].mxu0 %v3600
        %v3791 = vpop.f32.mrb[0].mxu0
        %v3792 = vadd.f32 0.0, %v3791
        %v3793 = vpop.f32.mrb[0].mxu0
        %3794 = vmatprep.mubr.f32.mxu0 0.0
        %3795 = vmatmul.mubr.f32.gmra.mrb[0].mxu0 %v3603
        %v3796 = vpop.f32.mrb[0].mxu0
        %v3797 = vadd.f32 0.0, %v3796
        %v3798 = vpop.f32.mrb[0].mxu0
        %3799 = vmatprep.mubr.f32.mxu0 0.0
        %3800 = vmatmul.mubr.f32.gmra.mrb[0].mxu0 %v3606
        %v3801 = vpop.f32.mrb[0].mxu0
        %v3802 = vadd.f32 0.0, %v3801
        %v3803 = vpop.f32.mrb[0].mxu0
        %3804 = vmatprep.mubr.f32.mxu0 0.0
        %3805 = vmatmul.mubr.f32.gmra.mrb[0].mxu0 %v3609
        %v3806 = vpop.f32.mrb[0].mxu0
        %v3807 = vadd.f32 0.0, %v3806
        %v3808 = vpop.f32.mrb[0].mxu0
        %3809 = vmatprep.mubr.f32.mxu0 0.0
        %3810 = vmatmul.mubr.f32.gmra.mrb[0].mxu0 %v3612
        %v3811 = vpop.f32.mrb[0].mxu0
        %v3812 = vadd.f32 0.0, %v3811
        %v3813 = vpop.f32.mrb[0].mxu0
        %3814 = vmatprep.mubr.f32.mxu0 0.0
        %3815 = vmatmul.mubr.f32.gmra.mrb[0].mxu0 %v3615
        %v3816 = vpop.f32.mrb[0].mxu0
        %v3817 = vadd.f32 0.0, %v3816
        %v3818 = vpop.f32.mrb[0].mxu0
        %3819 = vmatprep.mubr.f32.mxu0 0.0
        %3820 = vmatmul.mubr.f32.gmra.mrb[0].mxu0 %v3618
        %v3821 = vpop.f32.mrb[0].mxu0
        %v3822 = vadd.f32 0.0, %v3821
        %v3823 = vpop.f32.mrb[0].mxu0
        %3824 = vmatprep.mubr.f32.mxu0 0.0
        %3825 = vmatmul.mubr.f32.gmra.mrb[0].mxu0 %v3621
        %v3826 = vpop.f32.mrb[0].mxu0
        %v3827 = vadd.f32 0.0, %v3826
        %v3828 = vpop.f32.mrb[0].mxu0
        %3829 = vmatprep.mubr.f32.mxu0 0.0
        %3830 = vmatmul.mubr.f32.gmra.mrb[0].mxu0 %v3624
        %v3831 = vpop.f32.mrb[0].mxu0
        %v3832 = vadd.f32 0.0, %v3831
        %v3833 = vpop.f32.mrb[0].mxu0
        %3834 = vmatprep.mubr.f32.mxu0 0.0
        %3835 = vmatmul.mubr.f32.gmra.mrb[0].mxu0 %v3627
        %v3836 = vpop.f32.mrb[0].mxu0
        %v3837 = vadd.f32 0.0, %v3836
        %v3838 = vpop.f32.mrb[0].mxu0
        %3839 = vmatprep.mubr.f32.mxu0 0.0
        %3840 = vmatmul.mubr.f32.gmra.mrb[0].mxu0 %v3630
        %v3841 = vpop.f32.mrb[0].mxu0
        %v3842 = vadd.f32 0.0, %v3841
        %v3843 = vpop.f32.mrb[0].mxu0
        %3844 = vmatprep.mubr.f32.mxu0 0.0
        %3845 = vmatmul.mubr.f32.gmra.mrb[0].mxu0 %v3633
        %v3846 = vpop.f32.mrb[0].mxu0
        %v3847 = vadd.f32 0.0, %v3846
        %v3848 = vpop.f32.mrb[0].mxu0
        %3849 = vmatprep.mubr.f32.mxu0 0.0
        %3850 = vmatmul.mubr.f32.gmra.mrb[0].mxu0 %v3636
        %v3851 = vpop.f32.mrb[0].mxu0
        %v3852 = vadd.f32 0.0, %v3851
        %v3853 = vpop.f32.mrb[0].mxu0
        %3854 = vmatprep.mubr.f32.mxu0 0.0
        %3855 = vmatmul.mubr.f32.gmra.mrb[0].mxu0 %v3639
        %v3856 = vpop.f32.mrb[0].mxu0
        %v3857 = vadd.f32 0.0, %v3856
        %v3858 = vpop.f32.mrb[0].mxu0
        %3859 = vmatprep.mubr.f32.mxu0 0.0
        %3860 = vmatmul.mubr.f32.gmra.mrb[0].mxu0 %v3642
        %v3861 = vpop.f32.mrb[0].mxu0
        %v3862 = vadd.f32 0.0, %v3861
        %v3863 = vpop.f32.mrb[0].mxu0
        %3864 = vmatprep.mubr.f32.mxu0 0.0
        %3865 = vmatmul.mubr.f32.gmra.mrb[0].mxu0 %v3645
        %v3866 = vpop.f32.mrb[0].mxu0
        %v3867 = vadd.f32 0.0, %v3866
        %v3868 = vpop.f32.mrb[0].mxu0
        %3869 = vmatprep.mubr.f32.mxu0 0.0
        %3870 = vmatmul.mubr.f32.gmra.mrb[0].mxu0 %v3648
        %v3871 = vpop.f32.mrb[0].mxu0
        %v3872 = vadd.f32 0.0, %v3871
        %v3873 = vpop.f32.mrb[0].mxu0
        %3874 = vmatprep.mubr.f32.mxu0 0.0
        %3875 = vmatmul.mubr.f32.gmra.mrb[0].mxu0 %v3651
        %v3876 = vpop.f32.mrb[0].mxu0
        %v3877 = vadd.f32 0.0, %v3876
        %v3878 = vpop.f32.mrb[0].mxu0
        %3879 = vdwg.mxu0
        %v3880 = vadd.f32 %v2459, %v3722
        %v3881 = vadd.f32 %v2460, %v3727
        %v3882 = vadd.f32 %v2461, %v3732
        %v3883 = vadd.f32 %v2462, %v3737
        %v3884 = vadd.f32 %v2463, %v3742
        %v3885 = vadd.f32 %v2464, %v3747
        %v3886 = vadd.f32 %v2465, %v3752
        %v3887 = vadd.f32 %v2466, %v3757
        %v3888 = vadd.f32 %v2467, %v3762
        %v3889 = vadd.f32 %v2468, %v3767
        %v3890 = vadd.f32 %v2469, %v3772
        %v3891 = vadd.f32 %v2470, %v3777
        %v3892 = vadd.f32 %v2471, %v3782
        %v3893 = vadd.f32 %v2472, %v3787
        %v3894 = vadd.f32 %v2473, %v3792
        %v3895 = vadd.f32 %v2474, %v3797
        %v3896 = vadd.f32 %v2475, %v3802
        %v3897 = vadd.f32 %v2476, %v3807
        %v3898 = vadd.f32 %v2477, %v3812
        %v3899 = vadd.f32 %v2478, %v3817
        %v3900 = vadd.f32 %v2479, %v3822
        %v3901 = vadd.f32 %v2480, %v3827
        %v3902 = vadd.f32 %v2481, %v3832
        %v3903 = vadd.f32 %v2482, %v3837
        %v3904 = vadd.f32 %v2483, %v3842
        %v3905 = vadd.f32 %v2484, %v3847
        %v3906 = vadd.f32 %v2485, %v3852
        %v3907 = vadd.f32 %v2486, %v3857
        %v3908 = vadd.f32 %v2487, %v3862
        %v3909 = vadd.f32 %v2488, %v3867
        %v3910 = vadd.f32 %v2489, %v3872
        %v3911 = vadd.f32 %v2490, %v3877
        %3912 = vrot.lane.b32.xlu0 %v772, 124
        %v3913 = vpop.permute.xlu0 %3912
        %3914 = vrot.lane.b32.xlu0 %v777, 124
        %v3915 = vpop.permute.xlu0 %3914
        %3916 = vrot.lane.b32.xlu0 %v782, 124
        %v3917 = vpop.permute.xlu0 %3916
        %3918 = vrot.lane.b32.xlu0 %v787, 124
        %v3919 = vpop.permute.xlu0 %3918
        %3920 = vrot.lane.b32.xlu0 %v792, 124
        %v3921 = vpop.permute.xlu0 %3920
        %3922 = vrot.lane.b32.xlu0 %v797, 124
        %v3923 = vpop.permute.xlu0 %3922
        %3924 = vrot.lane.b32.xlu0 %v802, 124
        %v3925 = vpop.permute.xlu0 %3924
        %3926 = vrot.lane.b32.xlu0 %v807, 124
        %v3927 = vpop.permute.xlu0 %3926
        %3928 = vrot.lane.b32.xlu0 %v812, 124
        %v3929 = vpop.permute.xlu0 %3928
        %3930 = vrot.lane.b32.xlu0 %v817, 124
        %v3931 = vpop.permute.xlu0 %3930
        %3932 = vrot.lane.b32.xlu0 %v822, 124
        %v3933 = vpop.permute.xlu0 %3932
        %3934 = vrot.lane.b32.xlu0 %v827, 124
        %v3935 = vpop.permute.xlu0 %3934
        %3936 = vrot.lane.b32.xlu0 %v832, 124
        %v3937 = vpop.permute.xlu0 %3936
        %3938 = vrot.lane.b32.xlu0 %v837, 124
        %v3939 = vpop.permute.xlu0 %3938
        %3940 = vrot.lane.b32.xlu0 %v842, 124
        %v3941 = vpop.permute.xlu0 %3940
        %3942 = vrot.lane.b32.xlu0 %v847, 124
        %v3943 = vpop.permute.xlu0 %3942
        %3944 = vrot.lane.b32.xlu0 %v852, 124
        %v3945 = vpop.permute.xlu0 %3944
        %3946 = vrot.lane.b32.xlu0 %v857, 124
        %v3947 = vpop.permute.xlu0 %3946
        %3948 = vrot.lane.b32.xlu0 %v862, 124
        %v3949 = vpop.permute.xlu0 %3948
        %3950 = vrot.lane.b32.xlu0 %v867, 124
        %v3951 = vpop.permute.xlu0 %3950
        %3952 = vrot.lane.b32.xlu0 %v872, 124
        %v3953 = vpop.permute.xlu0 %3952
        %3954 = vrot.lane.b32.xlu0 %v877, 124
        %v3955 = vpop.permute.xlu0 %3954
        %3956 = vrot.lane.b32.xlu0 %v882, 124
        %v3957 = vpop.permute.xlu0 %3956
        %3958 = vrot.lane.b32.xlu0 %v887, 124
        %v3959 = vpop.permute.xlu0 %3958
        %3960 = vrot.lane.b32.xlu0 %v892, 124
        %v3961 = vpop.permute.xlu0 %3960
        %3962 = vrot.lane.b32.xlu0 %v897, 124
        %v3963 = vpop.permute.xlu0 %3962
        %3964 = vrot.lane.b32.xlu0 %v902, 124
        %v3965 = vpop.permute.xlu0 %3964
        %3966 = vrot.lane.b32.xlu0 %v907, 124
        %v3967 = vpop.permute.xlu0 %3966
        %3968 = vrot.lane.b32.xlu0 %v912, 124
        %v3969 = vpop.permute.xlu0 %3968
        %3970 = vrot.lane.b32.xlu0 %v917, 124
        %v3971 = vpop.permute.xlu0 %3970
        %3972 = vrot.lane.b32.xlu0 %v922, 124
        %v3973 = vpop.permute.xlu0 %3972
        %3974 = vrot.lane.b32.xlu0 %v927, 124
        %v3975 = vpop.permute.xlu0 %3974
        %v3976 = vrot.slane %v1007, 4
        %v3977 = vsel %vm1093, %v3913, 0
        %v3979 = vsel %vm1093, %v3915, 0
        %v3981 = vsel %vm1093, %v3917, 0
        %v3983 = vsel %vm1093, %v3919, 0
        %v3985 = vsel %vm1093, %v3921, 0
        %v3987 = vsel %vm1093, %v3923, 0
        %v3989 = vsel %vm1093, %v3925, 0
        %v3991 = vsel %vm1093, %v3927, 0
        %v3993 = vsel %vm1093, %v3929, 0
        %v3995 = vsel %vm1093, %v3931, 0
        %v3997 = vsel %vm1093, %v3933, 0
        %v3999 = vsel %vm1093, %v3935, 0
        %v4001 = vsel %vm1093, %v3937, 0
        %v4003 = vsel %vm1093, %v3939, 0
        %v4005 = vsel %vm1093, %v3941, 0
        %v4007 = vsel %vm1093, %v3943, 0
        %v4009 = vsel %vm1093, %v3945, 0
        %v4011 = vsel %vm1093, %v3947, 0
        %v4013 = vsel %vm1093, %v3949, 0
        %v4015 = vsel %vm1093, %v3951, 0
        %v4017 = vsel %vm1093, %v3953, 0
        %v4019 = vsel %vm1093, %v3955, 0
        %v4021 = vsel %vm1093, %v3957, 0
        %v4023 = vsel %vm1093, %v3959, 0
        %v4025 = vsel %vm1093, %v3961, 0
        %v4027 = vsel %vm1093, %v3963, 0
        %v4029 = vsel %vm1093, %v3965, 0
        %v4031 = vsel %vm1093, %v3967, 0
        %v4033 = vsel %vm1093, %v3969, 0
        %v4035 = vsel %vm1093, %v3971, 0
        %v4037 = vsel %vm1093, %v3973, 0
        %v4039 = vsel %vm1093, %v3975, 0
        %v4041 = vsel %vm1190, %v3976, 0
        %4043 = vmatprep.subr.mxu0 0.0
        %4044 = vmatpush1.msra.mxu0 %v4041
        %4045 = vmatprep.subr.mxu0 0.0
        %4046 = vmatpush1.msra.mxu0 0.0
        %4047 = vmatprep.subr.mxu0 0.0
        %4048 = vmatpush1.msra.mxu0 0.0
        %4049 = vmatprep.subr.mxu0 0.0
        %4050 = vmatpush1.msra.mxu0 0.0
        %4051 = vmatprep.subr.mxu0 0.0
        %4052 = vmatpush1.msra.mxu0 0.0
        %4053 = vmatprep.subr.mxu0 0.0
        %4054 = vmatpush1.msra.mxu0 0.0
        %4055 = vmatprep.subr.mxu0 0.0
        %4056 = vmatpush1.msra.mxu0 0.0
        %4057 = vmatprep.subr.mxu0 0.0
        %4058 = vmatpush1.msra.mxu0 0.0
        %4059 = vmatprep.subr.mxu0 0.0
        %4060 = vmatpush1.msra.mxu0 0.0
        %4061 = vmatprep.subr.mxu0 0.0
        %4062 = vmatpush1.msra.mxu0 0.0
        %4063 = vmatprep.subr.mxu0 0.0
        %4064 = vmatpush1.msra.mxu0 0.0
        %4065 = vmatprep.subr.mxu0 0.0
        %4066 = vmatpush1.msra.mxu0 0.0
        %4067 = vmatprep.subr.mxu0 0.0
        %4068 = vmatpush1.msra.mxu0 0.0
        %4069 = vmatprep.subr.mxu0 0.0
        %4070 = vmatpush1.msra.mxu0 0.0
        %4071 = vmatprep.subr.mxu0 0.0
        %4072 = vmatpush1.msra.mxu0 0.0
        %4073 = vmatprep.subr.mxu0 0.0
        %4074 = vmatpush1.msra.mxu0 0.0
        %4075 = vmatprep.subr.mxu0 0.0
        %4076 = vmatpush1.msra.mxu0 0.0
        %4077 = vmatprep.subr.mxu0 0.0
        %4078 = vmatpush1.msra.mxu0 0.0
        %4079 = vmatprep.subr.mxu0 0.0
        %4080 = vmatpush1.msra.mxu0 0.0
        %4081 = vmatprep.subr.mxu0 0.0
        %4082 = vmatpush1.msra.mxu0 0.0
        %4083 = vmatprep.subr.mxu0 0.0
        %4084 = vmatpush1.msra.mxu0 0.0
        %4085 = vmatprep.subr.mxu0 0.0
        %4086 = vmatpush1.msra.mxu0 0.0
        %4087 = vmatprep.subr.mxu0 0.0
        %4088 = vmatpush1.msra.mxu0 0.0
        %4089 = vmatprep.subr.mxu0 0.0
        %4090 = vmatpush1.msra.mxu0 0.0
        %4091 = vmatprep.subr.mxu0 0.0
        %4092 = vmatpush1.msra.mxu0 0.0
        %4093 = vmatprep.subr.mxu0 0.0
        %4094 = vmatpush1.msra.mxu0 0.0
        %4095 = vmatprep.subr.mxu0 0.0
        %4096 = vmatpush1.msra.mxu0 0.0
        %4097 = vmatprep.subr.mxu0 0.0
        %4098 = vmatpush1.msra.mxu0 0.0
        %4099 = vmatprep.subr.mxu0 0.0
        %4100 = vmatpush1.msra.mxu0 0.0
        %4101 = vmatprep.subr.mxu0 0.0
        %4102 = vmatpush1.msra.mxu0 0.0
        %4103 = vmatprep.subr.mxu0 0.0
        %4104 = vmatpush1.msra.mxu0 0.0
        %4105 = vmatprep.subr.mxu0 0.0
        %4106 = vmatpush1.msra.mxu0 0.0
        %4107 = vmatprep.mubr.f32.mxu0 0.0
        %4108 = vmatmul.mubr.f32.gmra.mrb[0].mxu0 %v3977
        %v4109 = vpop.f32.mrb[0].mxu0
        %v4110 = vadd.f32 0.0, %v4109
        %v4111 = vpop.f32.mrb[0].mxu0
        %4112 = vmatprep.mubr.f32.mxu0 0.0
        %4113 = vmatmul.mubr.f32.gmra.mrb[0].mxu0 %v3979
        %v4114 = vpop.f32.mrb[0].mxu0
        %v4115 = vadd.f32 0.0, %v4114
        %v4116 = vpop.f32.mrb[0].mxu0
        %4117 = vmatprep.mubr.f32.mxu0 0.0
        %4118 = vmatmul.mubr.f32.gmra.mrb[0].mxu0 %v3981
        %v4119 = vpop.f32.mrb[0].mxu0
        %v4120 = vadd.f32 0.0, %v4119
        %v4121 = vpop.f32.mrb[0].mxu0
        %4122 = vmatprep.mubr.f32.mxu0 0.0
        %4123 = vmatmul.mubr.f32.gmra.mrb[0].mxu0 %v3983
        %v4124 = vpop.f32.mrb[0].mxu0
        %v4125 = vadd.f32 0.0, %v4124
        %v4126 = vpop.f32.mrb[0].mxu0
        %4127 = vmatprep.mubr.f32.mxu0 0.0
        %4128 = vmatmul.mubr.f32.gmra.mrb[0].mxu0 %v3985
        %v4129 = vpop.f32.mrb[0].mxu0
        %v4130 = vadd.f32 0.0, %v4129
        %v4131 = vpop.f32.mrb[0].mxu0
        %4132 = vmatprep.mubr.f32.mxu0 0.0
        %4133 = vmatmul.mubr.f32.gmra.mrb[0].mxu0 %v3987
        %v4134 = vpop.f32.mrb[0].mxu0
        %v4135 = vadd.f32 0.0, %v4134
        %v4136 = vpop.f32.mrb[0].mxu0
        %4137 = vmatprep.mubr.f32.mxu0 0.0
        %4138 = vmatmul.mubr.f32.gmra.mrb[0].mxu0 %v3989
        %v4139 = vpop.f32.mrb[0].mxu0
        %v4140 = vadd.f32 0.0, %v4139
        %v4141 = vpop.f32.mrb[0].mxu0
        %4142 = vmatprep.mubr.f32.mxu0 0.0
        %4143 = vmatmul.mubr.f32.gmra.mrb[0].mxu0 %v3991
        %v4144 = vpop.f32.mrb[0].mxu0
        %v4145 = vadd.f32 0.0, %v4144
        %v4146 = vpop.f32.mrb[0].mxu0
        %4147 = vmatprep.mubr.f32.mxu0 0.0
        %4148 = vmatmul.mubr.f32.gmra.mrb[0].mxu0 %v3993
        %v4149 = vpop.f32.mrb[0].mxu0
        %v4150 = vadd.f32 0.0, %v4149
        %v4151 = vpop.f32.mrb[0].mxu0
        %4152 = vmatprep.mubr.f32.mxu0 0.0
        %4153 = vmatmul.mubr.f32.gmra.mrb[0].mxu0 %v3995
        %v4154 = vpop.f32.mrb[0].mxu0
        %v4155 = vadd.f32 0.0, %v4154
        %v4156 = vpop.f32.mrb[0].mxu0
        %4157 = vmatprep.mubr.f32.mxu0 0.0
        %4158 = vmatmul.mubr.f32.gmra.mrb[0].mxu0 %v3997
        %v4159 = vpop.f32.mrb[0].mxu0
        %v4160 = vadd.f32 0.0, %v4159
        %v4161 = vpop.f32.mrb[0].mxu0
        %4162 = vmatprep.mubr.f32.mxu0 0.0
        %4163 = vmatmul.mubr.f32.gmra.mrb[0].mxu0 %v3999
        %v4164 = vpop.f32.mrb[0].mxu0
        %v4165 = vadd.f32 0.0, %v4164
        %v4166 = vpop.f32.mrb[0].mxu0
        %4167 = vmatprep.mubr.f32.mxu0 0.0
        %4168 = vmatmul.mubr.f32.gmra.mrb[0].mxu0 %v4001
        %v4169 = vpop.f32.mrb[0].mxu0
        %v4170 = vadd.f32 0.0, %v4169
        %v4171 = vpop.f32.mrb[0].mxu0
        %4172 = vmatprep.mubr.f32.mxu0 0.0
        %4173 = vmatmul.mubr.f32.gmra.mrb[0].mxu0 %v4003
        %v4174 = vpop.f32.mrb[0].mxu0
        %v4175 = vadd.f32 0.0, %v4174
        %v4176 = vpop.f32.mrb[0].mxu0
        %4177 = vmatprep.mubr.f32.mxu0 0.0
        %4178 = vmatmul.mubr.f32.gmra.mrb[0].mxu0 %v4005
        %v4179 = vpop.f32.mrb[0].mxu0
        %v4180 = vadd.f32 0.0, %v4179
        %v4181 = vpop.f32.mrb[0].mxu0
        %4182 = vmatprep.mubr.f32.mxu0 0.0
        %4183 = vmatmul.mubr.f32.gmra.mrb[0].mxu0 %v4007
        %v4184 = vpop.f32.mrb[0].mxu0
        %v4185 = vadd.f32 0.0, %v4184
        %v4186 = vpop.f32.mrb[0].mxu0
        %4187 = vmatprep.mubr.f32.mxu0 0.0
        %4188 = vmatmul.mubr.f32.gmra.mrb[0].mxu0 %v4009
        %v4189 = vpop.f32.mrb[0].mxu0
        %v4190 = vadd.f32 0.0, %v4189
        %v4191 = vpop.f32.mrb[0].mxu0
        %4192 = vmatprep.mubr.f32.mxu0 0.0
        %4193 = vmatmul.mubr.f32.gmra.mrb[0].mxu0 %v4011
        %v4194 = vpop.f32.mrb[0].mxu0
        %v4195 = vadd.f32 0.0, %v4194
        %v4196 = vpop.f32.mrb[0].mxu0
        %4197 = vmatprep.mubr.f32.mxu0 0.0
        %4198 = vmatmul.mubr.f32.gmra.mrb[0].mxu0 %v4013
        %v4199 = vpop.f32.mrb[0].mxu0
        %v4200 = vadd.f32 0.0, %v4199
        %v4201 = vpop.f32.mrb[0].mxu0
        %4202 = vmatprep.mubr.f32.mxu0 0.0
        %4203 = vmatmul.mubr.f32.gmra.mrb[0].mxu0 %v4015
        %v4204 = vpop.f32.mrb[0].mxu0
        %v4205 = vadd.f32 0.0, %v4204
        %v4206 = vpop.f32.mrb[0].mxu0
        %4207 = vmatprep.mubr.f32.mxu0 0.0
        %4208 = vmatmul.mubr.f32.gmra.mrb[0].mxu0 %v4017
        %v4209 = vpop.f32.mrb[0].mxu0
        %v4210 = vadd.f32 0.0, %v4209
        %v4211 = vpop.f32.mrb[0].mxu0
        %4212 = vmatprep.mubr.f32.mxu0 0.0
        %4213 = vmatmul.mubr.f32.gmra.mrb[0].mxu0 %v4019
        %v4214 = vpop.f32.mrb[0].mxu0
        %v4215 = vadd.f32 0.0, %v4214
        %v4216 = vpop.f32.mrb[0].mxu0
        %4217 = vmatprep.mubr.f32.mxu0 0.0
        %4218 = vmatmul.mubr.f32.gmra.mrb[0].mxu0 %v4021
        %v4219 = vpop.f32.mrb[0].mxu0
        %v4220 = vadd.f32 0.0, %v4219
        %v4221 = vpop.f32.mrb[0].mxu0
        %4222 = vmatprep.mubr.f32.mxu0 0.0
        %4223 = vmatmul.mubr.f32.gmra.mrb[0].mxu0 %v4023
        %v4224 = vpop.f32.mrb[0].mxu0
        %v4225 = vadd.f32 0.0, %v4224
        %v4226 = vpop.f32.mrb[0].mxu0
        %4227 = vmatprep.mubr.f32.mxu0 0.0
        %4228 = vmatmul.mubr.f32.gmra.mrb[0].mxu0 %v4025
        %v4229 = vpop.f32.mrb[0].mxu0
        %v4230 = vadd.f32 0.0, %v4229
        %v4231 = vpop.f32.mrb[0].mxu0
        %4232 = vmatprep.mubr.f32.mxu0 0.0
        %4233 = vmatmul.mubr.f32.gmra.mrb[0].mxu0 %v4027
        %v4234 = vpop.f32.mrb[0].mxu0
        %v4235 = vadd.f32 0.0, %v4234
        %v4236 = vpop.f32.mrb[0].mxu0
        %4237 = vmatprep.mubr.f32.mxu0 0.0
        %4238 = vmatmul.mubr.f32.gmra.mrb[0].mxu0 %v4029
        %v4239 = vpop.f32.mrb[0].mxu0
        %v4240 = vadd.f32 0.0, %v4239
        %v4241 = vpop.f32.mrb[0].mxu0
        %4242 = vmatprep.mubr.f32.mxu0 0.0
        %4243 = vmatmul.mubr.f32.gmra.mrb[0].mxu0 %v4031
        %v4244 = vpop.f32.mrb[0].mxu0
        %v4245 = vadd.f32 0.0, %v4244
        %v4246 = vpop.f32.mrb[0].mxu0
        %4247 = vmatprep.mubr.f32.mxu0 0.0
        %4248 = vmatmul.mubr.f32.gmra.mrb[0].mxu0 %v4033
        %v4249 = vpop.f32.mrb[0].mxu0
        %v4250 = vadd.f32 0.0, %v4249
        %v4251 = vpop.f32.mrb[0].mxu0
        %4252 = vmatprep.mubr.f32.mxu0 0.0
        %4253 = vmatmul.mubr.f32.gmra.mrb[0].mxu0 %v4035
        %v4254 = vpop.f32.mrb[0].mxu0
        %v4255 = vadd.f32 0.0, %v4254
        %v4256 = vpop.f32.mrb[0].mxu0
        %4257 = vmatprep.mubr.f32.mxu0 0.0
        %4258 = vmatmul.mubr.f32.gmra.mrb[0].mxu0 %v4037
        %v4259 = vpop.f32.mrb[0].mxu0
        %v4260 = vadd.f32 0.0, %v4259
        %v4261 = vpop.f32.mrb[0].mxu0
        %4262 = vmatprep.mubr.f32.mxu0 0.0
        %4263 = vmatmul.mubr.f32.gmra.mrb[0].mxu0 %v4039
        %v4264 = vpop.f32.mrb[0].mxu0
        %v4265 = vadd.f32 0.0, %v4264
        %v4266 = vpop.f32.mrb[0].mxu0
        %4267 = vdwg.mxu0
        %v4268 = vmul.f32 %v4110, 0.70710677
        %v4269 = vmul.f32 %v4115, 0.70710677
        %v4270 = vmul.f32 %v4120, 0.70710677
        %v4271 = vmul.f32 %v4125, 0.70710677
        %v4272 = vmul.f32 %v4130, 0.70710677
        %v4273 = vmul.f32 %v4135, 0.70710677
        %v4274 = vmul.f32 %v4140, 0.70710677
        %v4275 = vmul.f32 %v4145, 0.70710677
        %v4276 = vmul.f32 %v4150, 0.70710677
        %v4277 = vmul.f32 %v4155, 0.70710677
        %v4278 = vmul.f32 %v4160, 0.70710677
        %v4279 = vmul.f32 %v4165, 0.70710677
        %v4280 = vmul.f32 %v4170, 0.70710677
        %v4281 = vmul.f32 %v4175, 0.70710677
        %v4282 = vmul.f32 %v4180, 0.70710677
        %v4283 = vmul.f32 %v4185, 0.70710677
        %v4284 = vmul.f32 %v4190, 0.70710677
        %v4285 = vmul.f32 %v4195, 0.70710677
        %v4286 = vmul.f32 %v4200, 0.70710677
        %v4287 = vmul.f32 %v4205, 0.70710677
        %v4288 = vmul.f32 %v4210, 0.70710677
        %v4289 = vmul.f32 %v4215, 0.70710677
        %v4290 = vmul.f32 %v4220, 0.70710677
        %v4291 = vmul.f32 %v4225, 0.70710677
        %v4292 = vmul.f32 %v4230, 0.70710677
        %v4293 = vmul.f32 %v4235, 0.70710677
        %v4294 = vmul.f32 %v4240, 0.70710677
        %v4295 = vmul.f32 %v4245, 0.70710677
        %v4296 = vmul.f32 %v4250, 0.70710677
        %v4297 = vmul.f32 %v4255, 0.70710677
        %v4298 = vmul.f32 %v4260, 0.70710677
        %v4299 = vmul.f32 %v4265, 0.70710677
        %v4300 = vsel %vm1451, %v4268, -inf
        %4301 = vmax.xlane.f32.xlu0 %v4300
        %v4302 = vpop.xlane.xlu0 %4301
        %v4303 = vsel %vm1451, %v4269, -inf
        %4304 = vmax.xlane.f32.xlu0 %v4303
        %v4305 = vpop.xlane.xlu0 %4304
        %v4306 = vsel %vm1451, %v4270, -inf
        %4307 = vmax.xlane.f32.xlu0 %v4306
        %v4308 = vpop.xlane.xlu0 %4307
        %v4309 = vsel %vm1451, %v4271, -inf
        %4310 = vmax.xlane.f32.xlu0 %v4309
        %v4311 = vpop.xlane.xlu0 %4310
        %v4312 = vsel %vm1451, %v4272, -inf
        %4313 = vmax.xlane.f32.xlu0 %v4312
        %v4314 = vpop.xlane.xlu0 %4313
        %v4315 = vsel %vm1451, %v4273, -inf
        %4316 = vmax.xlane.f32.xlu0 %v4315
        %v4317 = vpop.xlane.xlu0 %4316
        %v4318 = vsel %vm1451, %v4274, -inf
        %4319 = vmax.xlane.f32.xlu0 %v4318
        %v4320 = vpop.xlane.xlu0 %4319
        %v4321 = vsel %vm1451, %v4275, -inf
        %4322 = vmax.xlane.f32.xlu0 %v4321
        %v4323 = vpop.xlane.xlu0 %4322
        %v4324 = vsel %vm1451, %v4276, -inf
        %4325 = vmax.xlane.f32.xlu0 %v4324
        %v4326 = vpop.xlane.xlu0 %4325
        %v4327 = vsel %vm1451, %v4277, -inf
        %4328 = vmax.xlane.f32.xlu0 %v4327
        %v4329 = vpop.xlane.xlu0 %4328
        %v4330 = vsel %vm1451, %v4278, -inf
        %4331 = vmax.xlane.f32.xlu0 %v4330
        %v4332 = vpop.xlane.xlu0 %4331
        %v4333 = vsel %vm1451, %v4279, -inf
        %4334 = vmax.xlane.f32.xlu0 %v4333
        %v4335 = vpop.xlane.xlu0 %4334
        %v4336 = vsel %vm1451, %v4280, -inf
        %4337 = vmax.xlane.f32.xlu0 %v4336
        %v4338 = vpop.xlane.xlu0 %4337
        %v4339 = vsel %vm1451, %v4281, -inf
        %4340 = vmax.xlane.f32.xlu0 %v4339
        %v4341 = vpop.xlane.xlu0 %4340
        %v4342 = vsel %vm1451, %v4282, -inf
        %4343 = vmax.xlane.f32.xlu0 %v4342
        %v4344 = vpop.xlane.xlu0 %4343
        %v4345 = vsel %vm1451, %v4283, -inf
        %4346 = vmax.xlane.f32.xlu0 %v4345
        %v4347 = vpop.xlane.xlu0 %4346
        %v4348 = vsel %vm1451, %v4284, -inf
        %4349 = vmax.xlane.f32.xlu0 %v4348
        %v4350 = vpop.xlane.xlu0 %4349
        %v4351 = vsel %vm1451, %v4285, -inf
        %4352 = vmax.xlane.f32.xlu0 %v4351
        %v4353 = vpop.xlane.xlu0 %4352
        %v4354 = vsel %vm1451, %v4286, -inf
        %4355 = vmax.xlane.f32.xlu0 %v4354
        %v4356 = vpop.xlane.xlu0 %4355
        %v4357 = vsel %vm1451, %v4287, -inf
        %4358 = vmax.xlane.f32.xlu0 %v4357
        %v4359 = vpop.xlane.xlu0 %4358
        %v4360 = vsel %vm1451, %v4288, -inf
        %4361 = vmax.xlane.f32.xlu0 %v4360
        %v4362 = vpop.xlane.xlu0 %4361
        %v4363 = vsel %vm1451, %v4289, -inf
        %4364 = vmax.xlane.f32.xlu0 %v4363
        %v4365 = vpop.xlane.xlu0 %4364
        %v4366 = vsel %vm1451, %v4290, -inf
        %4367 = vmax.xlane.f32.xlu0 %v4366
        %v4368 = vpop.xlane.xlu0 %4367
        %v4369 = vsel %vm1451, %v4291, -inf
        %4370 = vmax.xlane.f32.xlu0 %v4369
        %v4371 = vpop.xlane.xlu0 %4370
        %v4372 = vsel %vm1451, %v4292, -inf
        %4373 = vmax.xlane.f32.xlu0 %v4372
        %v4374 = vpop.xlane.xlu0 %4373
        %v4375 = vsel %vm1451, %v4293, -inf
        %4376 = vmax.xlane.f32.xlu0 %v4375
        %v4377 = vpop.xlane.xlu0 %4376
        %v4378 = vsel %vm1451, %v4294, -inf
        %4379 = vmax.xlane.f32.xlu0 %v4378
        %v4380 = vpop.xlane.xlu0 %4379
        %v4381 = vsel %vm1451, %v4295, -inf
        %4382 = vmax.xlane.f32.xlu0 %v4381
        %v4383 = vpop.xlane.xlu0 %4382
        %v4384 = vsel %vm1451, %v4296, -inf
        %4385 = vmax.xlane.f32.xlu0 %v4384
        %v4386 = vpop.xlane.xlu0 %4385
        %v4387 = vsel %vm1451, %v4297, -inf
        %4388 = vmax.xlane.f32.xlu0 %v4387
        %v4389 = vpop.xlane.xlu0 %4388
        %v4390 = vsel %vm1451, %v4298, -inf
        %4391 = vmax.xlane.f32.xlu0 %v4390
        %v4392 = vpop.xlane.xlu0 %4391
        %v4393 = vsel %vm1451, %v4299, -inf
        %4394 = vmax.xlane.f32.xlu0 %v4393
        %v4395 = vpop.xlane.xlu0 %4394
        %v4396 = vsub.f32 %v4268, %v4302
        %v4397 = vsub.f32 %v4269, %v4305
        %v4398 = vsub.f32 %v4270, %v4308
        %v4399 = vsub.f32 %v4271, %v4311
        %v4400 = vsub.f32 %v4272, %v4314
        %v4401 = vsub.f32 %v4273, %v4317
        %v4402 = vsub.f32 %v4274, %v4320
        %v4403 = vsub.f32 %v4275, %v4323
        %v4404 = vsub.f32 %v4276, %v4326
        %v4405 = vsub.f32 %v4277, %v4329
        %v4406 = vsub.f32 %v4278, %v4332
        %v4407 = vsub.f32 %v4279, %v4335
        %v4408 = vsub.f32 %v4280, %v4338
        %v4409 = vsub.f32 %v4281, %v4341
        %v4410 = vsub.f32 %v4282, %v4344
        %v4411 = vsub.f32 %v4283, %v4347
        %v4412 = vsub.f32 %v4284, %v4350
        %v4413 = vsub.f32 %v4285, %v4353
        %v4414 = vsub.f32 %v4286, %v4356
        %v4415 = vsub.f32 %v4287, %v4359
        %v4416 = vsub.f32 %v4288, %v4362
        %v4417 = vsub.f32 %v4289, %v4365
        %v4418 = vsub.f32 %v4290, %v4368
        %v4419 = vsub.f32 %v4291, %v4371
        %v4420 = vsub.f32 %v4292, %v4374
        %v4421 = vsub.f32 %v4293, %v4377
        %v4422 = vsub.f32 %v4294, %v4380
        %v4423 = vsub.f32 %v4295, %v4383
        %v4424 = vsub.f32 %v4296, %v4386
        %v4425 = vsub.f32 %v4297, %v4389
        %v4426 = vsub.f32 %v4298, %v4392
        %v4427 = vsub.f32 %v4299, %v4395
        %v4428 = vmul.f32 %v4396, 1.442695
        %v4429 = vpow.pop %v4428
        %v4430 = vmul.f32 %v4397, 1.442695
        %v4431 = vpow.pop %v4430
        %v4432 = vmul.f32 %v4398, 1.442695
        %v4433 = vpow.pop %v4432
        %v4434 = vmul.f32 %v4399, 1.442695
        %v4435 = vpow.pop %v4434
        %v4436 = vmul.f32 %v4400, 1.442695
        %v4437 = vpow.pop %v4436
        %v4438 = vmul.f32 %v4401, 1.442695
        %v4439 = vpow.pop %v4438
        %v4440 = vmul.f32 %v4402, 1.442695
        %v4441 = vpow.pop %v4440
        %v4442 = vmul.f32 %v4403, 1.442695
        %v4443 = vpow.pop %v4442
        %v4444 = vmul.f32 %v4404, 1.442695
        %v4445 = vpow.pop %v4444
        %v4446 = vmul.f32 %v4405, 1.442695
        %v4447 = vpow.pop %v4446
        %v4448 = vmul.f32 %v4406, 1.442695
        %v4449 = vpow.pop %v4448
        %v4450 = vmul.f32 %v4407, 1.442695
        %v4451 = vpow.pop %v4450
        %v4452 = vmul.f32 %v4408, 1.442695
        %v4453 = vpow.pop %v4452
        %v4454 = vmul.f32 %v4409, 1.442695
        %v4455 = vpow.pop %v4454
        %v4456 = vmul.f32 %v4410, 1.442695
        %v4457 = vpow.pop %v4456
        %v4458 = vmul.f32 %v4411, 1.442695
        %v4459 = vpow.pop %v4458
        %v4460 = vmul.f32 %v4412, 1.442695
        %v4461 = vpow.pop %v4460
        %v4462 = vmul.f32 %v4413, 1.442695
        %v4463 = vpow.pop %v4462
        %v4464 = vmul.f32 %v4414, 1.442695
        %v4465 = vpow.pop %v4464
        %v4466 = vmul.f32 %v4415, 1.442695
        %v4467 = vpow.pop %v4466
        %v4468 = vmul.f32 %v4416, 1.442695
        %v4469 = vpow.pop %v4468
        %v4470 = vmul.f32 %v4417, 1.442695
        %v4471 = vpow.pop %v4470
        %v4472 = vmul.f32 %v4418, 1.442695
        %v4473 = vpow.pop %v4472
        %v4474 = vmul.f32 %v4419, 1.442695
        %v4475 = vpow.pop %v4474
        %v4476 = vmul.f32 %v4420, 1.442695
        %v4477 = vpow.pop %v4476
        %v4478 = vmul.f32 %v4421, 1.442695
        %v4479 = vpow.pop %v4478
        %v4480 = vmul.f32 %v4422, 1.442695
        %v4481 = vpow.pop %v4480
        %v4482 = vmul.f32 %v4423, 1.442695
        %v4483 = vpow.pop %v4482
        %v4484 = vmul.f32 %v4424, 1.442695
        %v4485 = vpow.pop %v4484
        %v4486 = vmul.f32 %v4425, 1.442695
        %v4487 = vpow.pop %v4486
        %v4488 = vmul.f32 %v4426, 1.442695
        %v4489 = vpow.pop %v4488
        %v4490 = vmul.f32 %v4427, 1.442695
        %v4491 = vpow.pop %v4490
        %v4492 = vsel %vm1451, %v4429, 0.0
        %4493 = vadd.xlane.f32.xlu0 %v4492
        %v4494 = vpop.xlane.xlu0 %4493
        %v4495 = vsel %vm1451, %v4431, 0.0
        %4496 = vadd.xlane.f32.xlu0 %v4495
        %v4497 = vpop.xlane.xlu0 %4496
        %v4498 = vsel %vm1451, %v4433, 0.0
        %4499 = vadd.xlane.f32.xlu0 %v4498
        %v4500 = vpop.xlane.xlu0 %4499
        %v4501 = vsel %vm1451, %v4435, 0.0
        %4502 = vadd.xlane.f32.xlu0 %v4501
        %v4503 = vpop.xlane.xlu0 %4502
        %v4504 = vsel %vm1451, %v4437, 0.0
        %4505 = vadd.xlane.f32.xlu0 %v4504
        %v4506 = vpop.xlane.xlu0 %4505
        %v4507 = vsel %vm1451, %v4439, 0.0
        %4508 = vadd.xlane.f32.xlu0 %v4507
        %v4509 = vpop.xlane.xlu0 %4508
        %v4510 = vsel %vm1451, %v4441, 0.0
        %4511 = vadd.xlane.f32.xlu0 %v4510
        %v4512 = vpop.xlane.xlu0 %4511
        %v4513 = vsel %vm1451, %v4443, 0.0
        %4514 = vadd.xlane.f32.xlu0 %v4513
        %v4515 = vpop.xlane.xlu0 %4514
        %v4516 = vsel %vm1451, %v4445, 0.0
        %4517 = vadd.xlane.f32.xlu0 %v4516
        %v4518 = vpop.xlane.xlu0 %4517
        %v4519 = vsel %vm1451, %v4447, 0.0
        %4520 = vadd.xlane.f32.xlu0 %v4519
        %v4521 = vpop.xlane.xlu0 %4520
        %v4522 = vsel %vm1451, %v4449, 0.0
        %4523 = vadd.xlane.f32.xlu0 %v4522
        %v4524 = vpop.xlane.xlu0 %4523
        %v4525 = vsel %vm1451, %v4451, 0.0
        %4526 = vadd.xlane.f32.xlu0 %v4525
        %v4527 = vpop.xlane.xlu0 %4526
        %v4528 = vsel %vm1451, %v4453, 0.0
        %4529 = vadd.xlane.f32.xlu0 %v4528
        %v4530 = vpop.xlane.xlu0 %4529
        %v4531 = vsel %vm1451, %v4455, 0.0
        %4532 = vadd.xlane.f32.xlu0 %v4531
        %v4533 = vpop.xlane.xlu0 %4532
        %v4534 = vsel %vm1451, %v4457, 0.0
        %4535 = vadd.xlane.f32.xlu0 %v4534
        %v4536 = vpop.xlane.xlu0 %4535
        %v4537 = vsel %vm1451, %v4459, 0.0
        %4538 = vadd.xlane.f32.xlu0 %v4537
        %v4539 = vpop.xlane.xlu0 %4538
        %v4540 = vsel %vm1451, %v4461, 0.0
        %4541 = vadd.xlane.f32.xlu0 %v4540
        %v4542 = vpop.xlane.xlu0 %4541
        %v4543 = vsel %vm1451, %v4463, 0.0
        %4544 = vadd.xlane.f32.xlu0 %v4543
        %v4545 = vpop.xlane.xlu0 %4544
        %v4546 = vsel %vm1451, %v4465, 0.0
        %4547 = vadd.xlane.f32.xlu0 %v4546
        %v4548 = vpop.xlane.xlu0 %4547
        %v4549 = vsel %vm1451, %v4467, 0.0
        %4550 = vadd.xlane.f32.xlu0 %v4549
        %v4551 = vpop.xlane.xlu0 %4550
        %v4552 = vsel %vm1451, %v4469, 0.0
        %4553 = vadd.xlane.f32.xlu0 %v4552
        %v4554 = vpop.xlane.xlu0 %4553
        %v4555 = vsel %vm1451, %v4471, 0.0
        %4556 = vadd.xlane.f32.xlu0 %v4555
        %v4557 = vpop.xlane.xlu0 %4556
        %v4558 = vsel %vm1451, %v4473, 0.0
        %4559 = vadd.xlane.f32.xlu0 %v4558
        %v4560 = vpop.xlane.xlu0 %4559
        %v4561 = vsel %vm1451, %v4475, 0.0
        %4562 = vadd.xlane.f32.xlu0 %v4561
        %v4563 = vpop.xlane.xlu0 %4562
        %v4564 = vsel %vm1451, %v4477, 0.0
        %4565 = vadd.xlane.f32.xlu0 %v4564
        %v4566 = vpop.xlane.xlu0 %4565
        %v4567 = vsel %vm1451, %v4479, 0.0
        %4568 = vadd.xlane.f32.xlu0 %v4567
        %v4569 = vpop.xlane.xlu0 %4568
        %v4570 = vsel %vm1451, %v4481, 0.0
        %4571 = vadd.xlane.f32.xlu0 %v4570
        %v4572 = vpop.xlane.xlu0 %4571
        %v4573 = vsel %vm1451, %v4483, 0.0
        %4574 = vadd.xlane.f32.xlu0 %v4573
        %v4575 = vpop.xlane.xlu0 %4574
        %v4576 = vsel %vm1451, %v4485, 0.0
        %4577 = vadd.xlane.f32.xlu0 %v4576
        %v4578 = vpop.xlane.xlu0 %4577
        %v4579 = vsel %vm1451, %v4487, 0.0
        %4580 = vadd.xlane.f32.xlu0 %v4579
        %v4581 = vpop.xlane.xlu0 %4580
        %v4582 = vsel %vm1451, %v4489, 0.0
        %4583 = vadd.xlane.f32.xlu0 %v4582
        %v4584 = vpop.xlane.xlu0 %4583
        %v4585 = vsel %vm1451, %v4491, 0.0
        %4586 = vadd.xlane.f32.xlu0 %v4585
        %v4587 = vpop.xlane.xlu0 %4586
        %v4588 = vrcp.pop %v4494
        %v4589 = vmul.f32 %v4429, %v4588
        %v4590 = vrcp.pop %v4497
        %v4591 = vmul.f32 %v4431, %v4590
        %v4592 = vrcp.pop %v4500
        %v4593 = vmul.f32 %v4433, %v4592
        %v4594 = vrcp.pop %v4503
        %v4595 = vmul.f32 %v4435, %v4594
        %v4596 = vrcp.pop %v4506
        %v4597 = vmul.f32 %v4437, %v4596
        %v4598 = vrcp.pop %v4509
        %v4599 = vmul.f32 %v4439, %v4598
        %v4600 = vrcp.pop %v4512
        %v4601 = vmul.f32 %v4441, %v4600
        %v4602 = vrcp.pop %v4515
        %v4603 = vmul.f32 %v4443, %v4602
        %v4604 = vrcp.pop %v4518
        %v4605 = vmul.f32 %v4445, %v4604
        %v4606 = vrcp.pop %v4521
        %v4607 = vmul.f32 %v4447, %v4606
        %v4608 = vrcp.pop %v4524
        %v4609 = vmul.f32 %v4449, %v4608
        %v4610 = vrcp.pop %v4527
        %v4611 = vmul.f32 %v4451, %v4610
        %v4612 = vrcp.pop %v4530
        %v4613 = vmul.f32 %v4453, %v4612
        %v4614 = vrcp.pop %v4533
        %v4615 = vmul.f32 %v4455, %v4614
        %v4616 = vrcp.pop %v4536
        %v4617 = vmul.f32 %v4457, %v4616
        %v4618 = vrcp.pop %v4539
        %v4619 = vmul.f32 %v4459, %v4618
        %v4620 = vrcp.pop %v4542
        %v4621 = vmul.f32 %v4461, %v4620
        %v4622 = vrcp.pop %v4545
        %v4623 = vmul.f32 %v4463, %v4622
        %v4624 = vrcp.pop %v4548
        %v4625 = vmul.f32 %v4465, %v4624
        %v4626 = vrcp.pop %v4551
        %v4627 = vmul.f32 %v4467, %v4626
        %v4628 = vrcp.pop %v4554
        %v4629 = vmul.f32 %v4469, %v4628
        %v4630 = vrcp.pop %v4557
        %v4631 = vmul.f32 %v4471, %v4630
        %v4632 = vrcp.pop %v4560
        %v4633 = vmul.f32 %v4473, %v4632
        %v4634 = vrcp.pop %v4563
        %v4635 = vmul.f32 %v4475, %v4634
        %v4636 = vrcp.pop %v4566
        %v4637 = vmul.f32 %v4477, %v4636
        %v4638 = vrcp.pop %v4569
        %v4639 = vmul.f32 %v4479, %v4638
        %v4640 = vrcp.pop %v4572
        %v4641 = vmul.f32 %v4481, %v4640
        %v4642 = vrcp.pop %v4575
        %v4643 = vmul.f32 %v4483, %v4642
        %v4644 = vrcp.pop %v4578
        %v4645 = vmul.f32 %v4485, %v4644
        %v4646 = vrcp.pop %v4581
        %v4647 = vmul.f32 %v4487, %v4646
        %v4648 = vrcp.pop %v4584
        %v4649 = vmul.f32 %v4489, %v4648
        %v4650 = vrcp.pop %v4587
        %v4651 = vmul.f32 %v4491, %v4650
        %4652 = vrot.lane.b32.xlu0 %v1088, 124
        %v4653 = vpop.permute.xlu0 %4652
        %v4655 = vsel %vm1451, %v4589, 0
        %v4658 = vsel %vm1451, %v4591, 0
        %v4661 = vsel %vm1451, %v4593, 0
        %v4664 = vsel %vm1451, %v4595, 0
        %v4667 = vsel %vm1451, %v4597, 0
        %v4670 = vsel %vm1451, %v4599, 0
        %v4673 = vsel %vm1451, %v4601, 0
        %v4676 = vsel %vm1451, %v4603, 0
        %v4679 = vsel %vm1451, %v4605, 0
        %v4682 = vsel %vm1451, %v4607, 0
        %v4685 = vsel %vm1451, %v4609, 0
        %v4688 = vsel %vm1451, %v4611, 0
        %v4691 = vsel %vm1451, %v4613, 0
        %v4694 = vsel %vm1451, %v4615, 0
        %v4697 = vsel %vm1451, %v4617, 0
        %v4700 = vsel %vm1451, %v4619, 0
        %v4703 = vsel %vm1451, %v4621, 0
        %v4706 = vsel %vm1451, %v4623, 0
        %v4709 = vsel %vm1451, %v4625, 0
        %v4712 = vsel %vm1451, %v4627, 0
        %v4715 = vsel %vm1451, %v4629, 0
        %v4718 = vsel %vm1451, %v4631, 0
        %v4721 = vsel %vm1451, %v4633, 0
        %v4724 = vsel %vm1451, %v4635, 0
        %v4727 = vsel %vm1451, %v4637, 0
        %v4730 = vsel %vm1451, %v4639, 0
        %v4733 = vsel %vm1451, %v4641, 0
        %v4736 = vsel %vm1451, %v4643, 0
        %v4739 = vsel %vm1451, %v4645, 0
        %v4742 = vsel %vm1451, %v4647, 0
        %v4745 = vsel %vm1451, %v4649, 0
        %v4748 = vsel %vm1451, %v4651, 0
        %v4750 = vsel %vm1900, %v4653, 0
        %4752 = vmatprep.subr.mxu0 0.0
        %4753 = vmatpush1.msra.mxu0 %v4750
        %4754 = vmatprep.subr.mxu0 0.0
        %4755 = vmatpush1.msra.mxu0 0.0
        %4756 = vmatprep.subr.mxu0 0.0
        %4757 = vmatpush1.msra.mxu0 0.0
        %4758 = vmatprep.subr.mxu0 0.0
        %4759 = vmatpush1.msra.mxu0 0.0
        %4760 = vmatprep.subr.mxu0 0.0
        %4761 = vmatpush1.msra.mxu0 0.0
        %4762 = vmatprep.subr.mxu0 0.0
        %4763 = vmatpush1.msra.mxu0 0.0
        %4764 = vmatprep.subr.mxu0 0.0
        %4765 = vmatpush1.msra.mxu0 0.0
        %4766 = vmatprep.subr.mxu0 0.0
        %4767 = vmatpush1.msra.mxu0 0.0
        %4768 = vmatprep.subr.mxu0 0.0
        %4769 = vmatpush1.msra.mxu0 0.0
        %4770 = vmatprep.subr.mxu0 0.0
        %4771 = vmatpush1.msra.mxu0 0.0
        %4772 = vmatprep.subr.mxu0 0.0
        %4773 = vmatpush1.msra.mxu0 0.0
        %4774 = vmatprep.subr.mxu0 0.0
        %4775 = vmatpush1.msra.mxu0 0.0
        %4776 = vmatprep.subr.mxu0 0.0
        %4777 = vmatpush1.msra.mxu0 0.0
        %4778 = vmatprep.subr.mxu0 0.0
        %4779 = vmatpush1.msra.mxu0 0.0
        %4780 = vmatprep.subr.mxu0 0.0
        %4781 = vmatpush1.msra.mxu0 0.0
        %4782 = vmatprep.subr.mxu0 0.0
        %4783 = vmatpush1.msra.mxu0 0.0
        %4784 = vmatprep.subr.mxu0 0.0
        %4785 = vmatpush1.msra.mxu0 0.0
        %4786 = vmatprep.subr.mxu0 0.0
        %4787 = vmatpush1.msra.mxu0 0.0
        %4788 = vmatprep.subr.mxu0 0.0
        %4789 = vmatpush1.msra.mxu0 0.0
        %4790 = vmatprep.subr.mxu0 0.0
        %4791 = vmatpush1.msra.mxu0 0.0
        %4792 = vmatprep.subr.mxu0 0.0
        %4793 = vmatpush1.msra.mxu0 0.0
        %4794 = vmatprep.subr.mxu0 0.0
        %4795 = vmatpush1.msra.mxu0 0.0
        %4796 = vmatprep.subr.mxu0 0.0
        %4797 = vmatpush1.msra.mxu0 0.0
        %4798 = vmatprep.subr.mxu0 0.0
        %4799 = vmatpush1.msra.mxu0 0.0
        %4800 = vmatprep.subr.mxu0 0.0
        %4801 = vmatpush1.msra.mxu0 0.0
        %4802 = vmatprep.subr.mxu0 0.0
        %4803 = vmatpush1.msra.mxu0 0.0
        %4804 = vmatprep.subr.mxu0 0.0
        %4805 = vmatpush1.msra.mxu0 0.0
        %4806 = vmatprep.subr.mxu0 0.0
        %4807 = vmatpush1.msra.mxu0 0.0
        %4808 = vmatprep.subr.mxu0 0.0
        %4809 = vmatpush1.msra.mxu0 0.0
        %4810 = vmatprep.subr.mxu0 0.0
        %4811 = vmatpush1.msra.mxu0 0.0
        %4812 = vmatprep.subr.mxu0 0.0
        %4813 = vmatpush1.msra.mxu0 0.0
        %4814 = vmatprep.subr.mxu0 0.0
        %4815 = vmatpush1.msra.mxu0 0.0
        %4816 = vmatprep.mubr.f32.mxu0 0.0
        %4817 = vmatmul.mubr.f32.gmra.mrb[0].mxu0 %v4655
        %v4818 = vpop.f32.mrb[0].mxu0
        %v4819 = vadd.f32 0.0, %v4818
        %v4820 = vpop.f32.mrb[0].mxu0
        %4821 = vmatprep.mubr.f32.mxu0 0.0
        %4822 = vmatmul.mubr.f32.gmra.mrb[0].mxu0 %v4658
        %v4823 = vpop.f32.mrb[0].mxu0
        %v4824 = vadd.f32 0.0, %v4823
        %v4825 = vpop.f32.mrb[0].mxu0
        %4826 = vmatprep.mubr.f32.mxu0 0.0
        %4827 = vmatmul.mubr.f32.gmra.mrb[0].mxu0 %v4661
        %v4828 = vpop.f32.mrb[0].mxu0
        %v4829 = vadd.f32 0.0, %v4828
        %v4830 = vpop.f32.mrb[0].mxu0
        %4831 = vmatprep.mubr.f32.mxu0 0.0
        %4832 = vmatmul.mubr.f32.gmra.mrb[0].mxu0 %v4664
        %v4833 = vpop.f32.mrb[0].mxu0
        %v4834 = vadd.f32 0.0, %v4833
        %v4835 = vpop.f32.mrb[0].mxu0
        %4836 = vmatprep.mubr.f32.mxu0 0.0
        %4837 = vmatmul.mubr.f32.gmra.mrb[0].mxu0 %v4667
        %v4838 = vpop.f32.mrb[0].mxu0
        %v4839 = vadd.f32 0.0, %v4838
        %v4840 = vpop.f32.mrb[0].mxu0
        %4841 = vmatprep.mubr.f32.mxu0 0.0
        %4842 = vmatmul.mubr.f32.gmra.mrb[0].mxu0 %v4670
        %v4843 = vpop.f32.mrb[0].mxu0
        %v4844 = vadd.f32 0.0, %v4843
        %v4845 = vpop.f32.mrb[0].mxu0
        %4846 = vmatprep.mubr.f32.mxu0 0.0
        %4847 = vmatmul.mubr.f32.gmra.mrb[0].mxu0 %v4673
        %v4848 = vpop.f32.mrb[0].mxu0
        %v4849 = vadd.f32 0.0, %v4848
        %v4850 = vpop.f32.mrb[0].mxu0
        %4851 = vmatprep.mubr.f32.mxu0 0.0
        %4852 = vmatmul.mubr.f32.gmra.mrb[0].mxu0 %v4676
        %v4853 = vpop.f32.mrb[0].mxu0
        %v4854 = vadd.f32 0.0, %v4853
        %v4855 = vpop.f32.mrb[0].mxu0
        %4856 = vmatprep.mubr.f32.mxu0 0.0
        %4857 = vmatmul.mubr.f32.gmra.mrb[0].mxu0 %v4679
        %v4858 = vpop.f32.mrb[0].mxu0
        %v4859 = vadd.f32 0.0, %v4858
        %v4860 = vpop.f32.mrb[0].mxu0
        %4861 = vmatprep.mubr.f32.mxu0 0.0
        %4862 = vmatmul.mubr.f32.gmra.mrb[0].mxu0 %v4682
        %v4863 = vpop.f32.mrb[0].mxu0
        %v4864 = vadd.f32 0.0, %v4863
        %v4865 = vpop.f32.mrb[0].mxu0
        %4866 = vmatprep.mubr.f32.mxu0 0.0
        %4867 = vmatmul.mubr.f32.gmra.mrb[0].mxu0 %v4685
        %v4868 = vpop.f32.mrb[0].mxu0
        %v4869 = vadd.f32 0.0, %v4868
        %v4870 = vpop.f32.mrb[0].mxu0
        %4871 = vmatprep.mubr.f32.mxu0 0.0
        %4872 = vmatmul.mubr.f32.gmra.mrb[0].mxu0 %v4688
        %v4873 = vpop.f32.mrb[0].mxu0
        %v4874 = vadd.f32 0.0, %v4873
        %v4875 = vpop.f32.mrb[0].mxu0
        %4876 = vmatprep.mubr.f32.mxu0 0.0
        %4877 = vmatmul.mubr.f32.gmra.mrb[0].mxu0 %v4691
        %v4878 = vpop.f32.mrb[0].mxu0
        %v4879 = vadd.f32 0.0, %v4878
        %v4880 = vpop.f32.mrb[0].mxu0
        %4881 = vmatprep.mubr.f32.mxu0 0.0
        %4882 = vmatmul.mubr.f32.gmra.mrb[0].mxu0 %v4694
        %v4883 = vpop.f32.mrb[0].mxu0
        %v4884 = vadd.f32 0.0, %v4883
        %v4885 = vpop.f32.mrb[0].mxu0
        %4886 = vmatprep.mubr.f32.mxu0 0.0
        %4887 = vmatmul.mubr.f32.gmra.mrb[0].mxu0 %v4697
        %v4888 = vpop.f32.mrb[0].mxu0
        %v4889 = vadd.f32 0.0, %v4888
        %v4890 = vpop.f32.mrb[0].mxu0
        %4891 = vmatprep.mubr.f32.mxu0 0.0
        %4892 = vmatmul.mubr.f32.gmra.mrb[0].mxu0 %v4700
        %v4893 = vpop.f32.mrb[0].mxu0
        %v4894 = vadd.f32 0.0, %v4893
        %v4895 = vpop.f32.mrb[0].mxu0
        %4896 = vmatprep.mubr.f32.mxu0 0.0
        %4897 = vmatmul.mubr.f32.gmra.mrb[0].mxu0 %v4703
        %v4898 = vpop.f32.mrb[0].mxu0
        %v4899 = vadd.f32 0.0, %v4898
        %v4900 = vpop.f32.mrb[0].mxu0
        %4901 = vmatprep.mubr.f32.mxu0 0.0
        %4902 = vmatmul.mubr.f32.gmra.mrb[0].mxu0 %v4706
        %v4903 = vpop.f32.mrb[0].mxu0
        %v4904 = vadd.f32 0.0, %v4903
        %v4905 = vpop.f32.mrb[0].mxu0
        %4906 = vmatprep.mubr.f32.mxu0 0.0
        %4907 = vmatmul.mubr.f32.gmra.mrb[0].mxu0 %v4709
        %v4908 = vpop.f32.mrb[0].mxu0
        %v4909 = vadd.f32 0.0, %v4908
        %v4910 = vpop.f32.mrb[0].mxu0
        %4911 = vmatprep.mubr.f32.mxu0 0.0
        %4912 = vmatmul.mubr.f32.gmra.mrb[0].mxu0 %v4712
        %v4913 = vpop.f32.mrb[0].mxu0
        %v4914 = vadd.f32 0.0, %v4913
        %v4915 = vpop.f32.mrb[0].mxu0
        %4916 = vmatprep.mubr.f32.mxu0 0.0
        %4917 = vmatmul.mubr.f32.gmra.mrb[0].mxu0 %v4715
        %v4918 = vpop.f32.mrb[0].mxu0
        %v4919 = vadd.f32 0.0, %v4918
        %v4920 = vpop.f32.mrb[0].mxu0
        %4921 = vmatprep.mubr.f32.mxu0 0.0
        %4922 = vmatmul.mubr.f32.gmra.mrb[0].mxu0 %v4718
        %v4923 = vpop.f32.mrb[0].mxu0
        %v4924 = vadd.f32 0.0, %v4923
        %v4925 = vpop.f32.mrb[0].mxu0
        %4926 = vmatprep.mubr.f32.mxu0 0.0
        %4927 = vmatmul.mubr.f32.gmra.mrb[0].mxu0 %v4721
        %v4928 = vpop.f32.mrb[0].mxu0
        %v4929 = vadd.f32 0.0, %v4928
        %v4930 = vpop.f32.mrb[0].mxu0
        %4931 = vmatprep.mubr.f32.mxu0 0.0
        %4932 = vmatmul.mubr.f32.gmra.mrb[0].mxu0 %v4724
        %v4933 = vpop.f32.mrb[0].mxu0
        %v4934 = vadd.f32 0.0, %v4933
        %v4935 = vpop.f32.mrb[0].mxu0
        %4936 = vmatprep.mubr.f32.mxu0 0.0
        %4937 = vmatmul.mubr.f32.gmra.mrb[0].mxu0 %v4727
        %v4938 = vpop.f32.mrb[0].mxu0
        %v4939 = vadd.f32 0.0, %v4938
        %v4940 = vpop.f32.mrb[0].mxu0
        %4941 = vmatprep.mubr.f32.mxu0 0.0
        %4942 = vmatmul.mubr.f32.gmra.mrb[0].mxu0 %v4730
        %v4943 = vpop.f32.mrb[0].mxu0
        %v4944 = vadd.f32 0.0, %v4943
        %v4945 = vpop.f32.mrb[0].mxu0
        %4946 = vmatprep.mubr.f32.mxu0 0.0
        %4947 = vmatmul.mubr.f32.gmra.mrb[0].mxu0 %v4733
        %v4948 = vpop.f32.mrb[0].mxu0
        %v4949 = vadd.f32 0.0, %v4948
        %v4950 = vpop.f32.mrb[0].mxu0
        %4951 = vmatprep.mubr.f32.mxu0 0.0
        %4952 = vmatmul.mubr.f32.gmra.mrb[0].mxu0 %v4736
        %v4953 = vpop.f32.mrb[0].mxu0
        %v4954 = vadd.f32 0.0, %v4953
        %v4955 = vpop.f32.mrb[0].mxu0
        %4956 = vmatprep.mubr.f32.mxu0 0.0
        %4957 = vmatmul.mubr.f32.gmra.mrb[0].mxu0 %v4739
        %v4958 = vpop.f32.mrb[0].mxu0
        %v4959 = vadd.f32 0.0, %v4958
        %v4960 = vpop.f32.mrb[0].mxu0
        %4961 = vmatprep.mubr.f32.mxu0 0.0
        %4962 = vmatmul.mubr.f32.gmra.mrb[0].mxu0 %v4742
        %v4963 = vpop.f32.mrb[0].mxu0
        %v4964 = vadd.f32 0.0, %v4963
        %v4965 = vpop.f32.mrb[0].mxu0
        %4966 = vmatprep.mubr.f32.mxu0 0.0
        %4967 = vmatmul.mubr.f32.gmra.mrb[0].mxu0 %v4745
        %v4968 = vpop.f32.mrb[0].mxu0
        %v4969 = vadd.f32 0.0, %v4968
        %v4970 = vpop.f32.mrb[0].mxu0
        %4971 = vmatprep.mubr.f32.mxu0 0.0
        %4972 = vmatmul.mubr.f32.gmra.mrb[0].mxu0 %v4748
        %v4973 = vpop.f32.mrb[0].mxu0
        %v4974 = vadd.f32 0.0, %v4973
        %v4975 = vpop.f32.mrb[0].mxu0
        %4976 = vdwg.mxu0
        %v4977 = vrot.slane %v1091, 4
        %v4979 = vsel %vm1093, %v4819, 0
        %v4982 = vsel %vm1093, %v4824, 0
        %v4985 = vsel %vm1093, %v4829, 0
        %v4988 = vsel %vm1093, %v4834, 0
        %v4991 = vsel %vm1093, %v4839, 0
        %v4994 = vsel %vm1093, %v4844, 0
        %v4997 = vsel %vm1093, %v4849, 0
        %v5000 = vsel %vm1093, %v4854, 0
        %v5003 = vsel %vm1093, %v4859, 0
        %v5006 = vsel %vm1093, %v4864, 0
        %v5009 = vsel %vm1093, %v4869, 0
        %v5012 = vsel %vm1093, %v4874, 0
        %v5015 = vsel %vm1093, %v4879, 0
        %v5018 = vsel %vm1093, %v4884, 0
        %v5021 = vsel %vm1093, %v4889, 0
        %v5024 = vsel %vm1093, %v4894, 0
        %v5027 = vsel %vm1093, %v4899, 0
        %v5030 = vsel %vm1093, %v4904, 0
        %v5033 = vsel %vm1093, %v4909, 0
        %v5036 = vsel %vm1093, %v4914, 0
        %v5039 = vsel %vm1093, %v4919, 0
        %v5042 = vsel %vm1093, %v4924, 0
        %v5045 = vsel %vm1093, %v4929, 0
        %v5048 = vsel %vm1093, %v4934, 0
        %v5051 = vsel %vm1093, %v4939, 0
        %v5054 = vsel %vm1093, %v4944, 0
        %v5057 = vsel %vm1093, %v4949, 0
        %v5060 = vsel %vm1093, %v4954, 0
        %v5063 = vsel %vm1093, %v4959, 0
        %v5066 = vsel %vm1093, %v4964, 0
        %v5069 = vsel %vm1093, %v4969, 0
        %v5072 = vsel %vm1093, %v4974, 0
        %v5074 = vsel %vm1190, %v4977, 0
        %5076 = vmatprep.subr.mxu0 0.0
        %5077 = vmatpush1.msra.mxu0 %v5074
        %5078 = vmatprep.subr.mxu0 0.0
        %5079 = vmatpush1.msra.mxu0 0.0
        %5080 = vmatprep.subr.mxu0 0.0
        %5081 = vmatpush1.msra.mxu0 0.0
        %5082 = vmatprep.subr.mxu0 0.0
        %5083 = vmatpush1.msra.mxu0 0.0
        %5084 = vmatprep.subr.mxu0 0.0
        %5085 = vmatpush1.msra.mxu0 0.0
        %5086 = vmatprep.subr.mxu0 0.0
        %5087 = vmatpush1.msra.mxu0 0.0
        %5088 = vmatprep.subr.mxu0 0.0
        %5089 = vmatpush1.msra.mxu0 0.0
        %5090 = vmatprep.subr.mxu0 0.0
        %5091 = vmatpush1.msra.mxu0 0.0
        %5092 = vmatprep.subr.mxu0 0.0
        %5093 = vmatpush1.msra.mxu0 0.0
        %5094 = vmatprep.subr.mxu0 0.0
        %5095 = vmatpush1.msra.mxu0 0.0
        %5096 = vmatprep.subr.mxu0 0.0
        %5097 = vmatpush1.msra.mxu0 0.0
        %5098 = vmatprep.subr.mxu0 0.0
        %5099 = vmatpush1.msra.mxu0 0.0
        %5100 = vmatprep.subr.mxu0 0.0
        %5101 = vmatpush1.msra.mxu0 0.0
        %5102 = vmatprep.subr.mxu0 0.0
        %5103 = vmatpush1.msra.mxu0 0.0
        %5104 = vmatprep.subr.mxu0 0.0
        %5105 = vmatpush1.msra.mxu0 0.0
        %5106 = vmatprep.subr.mxu0 0.0
        %5107 = vmatpush1.msra.mxu0 0.0
        %5108 = vmatprep.subr.mxu0 0.0
        %5109 = vmatpush1.msra.mxu0 0.0
        %5110 = vmatprep.subr.mxu0 0.0
        %5111 = vmatpush1.msra.mxu0 0.0
        %5112 = vmatprep.subr.mxu0 0.0
        %5113 = vmatpush1.msra.mxu0 0.0
        %5114 = vmatprep.subr.mxu0 0.0
        %5115 = vmatpush1.msra.mxu0 0.0
        %5116 = vmatprep.subr.mxu0 0.0
        %5117 = vmatpush1.msra.mxu0 0.0
        %5118 = vmatprep.subr.mxu0 0.0
        %5119 = vmatpush1.msra.mxu0 0.0
        %5120 = vmatprep.subr.mxu0 0.0
        %5121 = vmatpush1.msra.mxu0 0.0
        %5122 = vmatprep.subr.mxu0 0.0
        %5123 = vmatpush1.msra.mxu0 0.0
        %5124 = vmatprep.subr.mxu0 0.0
        %5125 = vmatpush1.msra.mxu0 0.0
        %5126 = vmatprep.subr.mxu0 0.0
        %5127 = vmatpush1.msra.mxu0 0.0
        %5128 = vmatprep.subr.mxu0 0.0
        %5129 = vmatpush1.msra.mxu0 0.0
        %5130 = vmatprep.subr.mxu0 0.0
        %5131 = vmatpush1.msra.mxu0 0.0
        %5132 = vmatprep.subr.mxu0 0.0
        %5133 = vmatpush1.msra.mxu0 0.0
        %5134 = vmatprep.subr.mxu0 0.0
        %5135 = vmatpush1.msra.mxu0 0.0
        %5136 = vmatprep.subr.mxu0 0.0
        %5137 = vmatpush1.msra.mxu0 0.0
        %5138 = vmatprep.subr.mxu0 0.0
        %5139 = vmatpush1.msra.mxu0 0.0
        %5140 = vmatprep.mubr.f32.mxu0 0.0
        %5141 = vmatmul.mubr.f32.gmra.mrb[0].mxu0 %v4979
        %v5142 = vpop.f32.mrb[0].mxu0
        %v5143 = vadd.f32 0.0, %v5142
        %v5144 = vpop.f32.mrb[0].mxu0
        %5145 = vmatprep.mubr.f32.mxu0 0.0
        %5146 = vmatmul.mubr.f32.gmra.mrb[0].mxu0 %v4982
        %v5147 = vpop.f32.mrb[0].mxu0
        %v5148 = vadd.f32 0.0, %v5147
        %v5149 = vpop.f32.mrb[0].mxu0
        %5150 = vmatprep.mubr.f32.mxu0 0.0
        %5151 = vmatmul.mubr.f32.gmra.mrb[0].mxu0 %v4985
        %v5152 = vpop.f32.mrb[0].mxu0
        %v5153 = vadd.f32 0.0, %v5152
        %v5154 = vpop.f32.mrb[0].mxu0
        %5155 = vmatprep.mubr.f32.mxu0 0.0
        %5156 = vmatmul.mubr.f32.gmra.mrb[0].mxu0 %v4988
        %v5157 = vpop.f32.mrb[0].mxu0
        %v5158 = vadd.f32 0.0, %v5157
        %v5159 = vpop.f32.mrb[0].mxu0
        %5160 = vmatprep.mubr.f32.mxu0 0.0
        %5161 = vmatmul.mubr.f32.gmra.mrb[0].mxu0 %v4991
        %v5162 = vpop.f32.mrb[0].mxu0
        %v5163 = vadd.f32 0.0, %v5162
        %v5164 = vpop.f32.mrb[0].mxu0
        %5165 = vmatprep.mubr.f32.mxu0 0.0
        %5166 = vmatmul.mubr.f32.gmra.mrb[0].mxu0 %v4994
        %v5167 = vpop.f32.mrb[0].mxu0
        %v5168 = vadd.f32 0.0, %v5167
        %v5169 = vpop.f32.mrb[0].mxu0
        %5170 = vmatprep.mubr.f32.mxu0 0.0
        %5171 = vmatmul.mubr.f32.gmra.mrb[0].mxu0 %v4997
        %v5172 = vpop.f32.mrb[0].mxu0
        %v5173 = vadd.f32 0.0, %v5172
        %v5174 = vpop.f32.mrb[0].mxu0
        %5175 = vmatprep.mubr.f32.mxu0 0.0
        %5176 = vmatmul.mubr.f32.gmra.mrb[0].mxu0 %v5000
        %v5177 = vpop.f32.mrb[0].mxu0
        %v5178 = vadd.f32 0.0, %v5177
        %v5179 = vpop.f32.mrb[0].mxu0
        %5180 = vmatprep.mubr.f32.mxu0 0.0
        %5181 = vmatmul.mubr.f32.gmra.mrb[0].mxu0 %v5003
        %v5182 = vpop.f32.mrb[0].mxu0
        %v5183 = vadd.f32 0.0, %v5182
        %v5184 = vpop.f32.mrb[0].mxu0
        %5185 = vmatprep.mubr.f32.mxu0 0.0
        %5186 = vmatmul.mubr.f32.gmra.mrb[0].mxu0 %v5006
        %v5187 = vpop.f32.mrb[0].mxu0
        %v5188 = vadd.f32 0.0, %v5187
        %v5189 = vpop.f32.mrb[0].mxu0
        %5190 = vmatprep.mubr.f32.mxu0 0.0
        %5191 = vmatmul.mubr.f32.gmra.mrb[0].mxu0 %v5009
        %v5192 = vpop.f32.mrb[0].mxu0
        %v5193 = vadd.f32 0.0, %v5192
        %v5194 = vpop.f32.mrb[0].mxu0
        %5195 = vmatprep.mubr.f32.mxu0 0.0
        %5196 = vmatmul.mubr.f32.gmra.mrb[0].mxu0 %v5012
        %v5197 = vpop.f32.mrb[0].mxu0
        %v5198 = vadd.f32 0.0, %v5197
        %v5199 = vpop.f32.mrb[0].mxu0
        %5200 = vmatprep.mubr.f32.mxu0 0.0
        %5201 = vmatmul.mubr.f32.gmra.mrb[0].mxu0 %v5015
        %v5202 = vpop.f32.mrb[0].mxu0
        %v5203 = vadd.f32 0.0, %v5202
        %v5204 = vpop.f32.mrb[0].mxu0
        %5205 = vmatprep.mubr.f32.mxu0 0.0
        %5206 = vmatmul.mubr.f32.gmra.mrb[0].mxu0 %v5018
        %v5207 = vpop.f32.mrb[0].mxu0
        %v5208 = vadd.f32 0.0, %v5207
        %v5209 = vpop.f32.mrb[0].mxu0
        %5210 = vmatprep.mubr.f32.mxu0 0.0
        %5211 = vmatmul.mubr.f32.gmra.mrb[0].mxu0 %v5021
        %v5212 = vpop.f32.mrb[0].mxu0
        %v5213 = vadd.f32 0.0, %v5212
        %v5214 = vpop.f32.mrb[0].mxu0
        %5215 = vmatprep.mubr.f32.mxu0 0.0
        %5216 = vmatmul.mubr.f32.gmra.mrb[0].mxu0 %v5024
        %v5217 = vpop.f32.mrb[0].mxu0
        %v5218 = vadd.f32 0.0, %v5217
        %v5219 = vpop.f32.mrb[0].mxu0
        %5220 = vmatprep.mubr.f32.mxu0 0.0
        %5221 = vmatmul.mubr.f32.gmra.mrb[0].mxu0 %v5027
        %v5222 = vpop.f32.mrb[0].mxu0
        %v5223 = vadd.f32 0.0, %v5222
        %v5224 = vpop.f32.mrb[0].mxu0
        %5225 = vmatprep.mubr.f32.mxu0 0.0
        %5226 = vmatmul.mubr.f32.gmra.mrb[0].mxu0 %v5030
        %v5227 = vpop.f32.mrb[0].mxu0
        %v5228 = vadd.f32 0.0, %v5227
        %v5229 = vpop.f32.mrb[0].mxu0
        %5230 = vmatprep.mubr.f32.mxu0 0.0
        %5231 = vmatmul.mubr.f32.gmra.mrb[0].mxu0 %v5033
        %v5232 = vpop.f32.mrb[0].mxu0
        %v5233 = vadd.f32 0.0, %v5232
        %v5234 = vpop.f32.mrb[0].mxu0
        %5235 = vmatprep.mubr.f32.mxu0 0.0
        %5236 = vmatmul.mubr.f32.gmra.mrb[0].mxu0 %v5036
        %v5237 = vpop.f32.mrb[0].mxu0
        %v5238 = vadd.f32 0.0, %v5237
        %v5239 = vpop.f32.mrb[0].mxu0
        %5240 = vmatprep.mubr.f32.mxu0 0.0
        %5241 = vmatmul.mubr.f32.gmra.mrb[0].mxu0 %v5039
        %v5242 = vpop.f32.mrb[0].mxu0
        %v5243 = vadd.f32 0.0, %v5242
        %v5244 = vpop.f32.mrb[0].mxu0
        %5245 = vmatprep.mubr.f32.mxu0 0.0
        %5246 = vmatmul.mubr.f32.gmra.mrb[0].mxu0 %v5042
        %v5247 = vpop.f32.mrb[0].mxu0
        %v5248 = vadd.f32 0.0, %v5247
        %v5249 = vpop.f32.mrb[0].mxu0
        %5250 = vmatprep.mubr.f32.mxu0 0.0
        %5251 = vmatmul.mubr.f32.gmra.mrb[0].mxu0 %v5045
        %v5252 = vpop.f32.mrb[0].mxu0
        %v5253 = vadd.f32 0.0, %v5252
        %v5254 = vpop.f32.mrb[0].mxu0
        %5255 = vmatprep.mubr.f32.mxu0 0.0
        %5256 = vmatmul.mubr.f32.gmra.mrb[0].mxu0 %v5048
        %v5257 = vpop.f32.mrb[0].mxu0
        %v5258 = vadd.f32 0.0, %v5257
        %v5259 = vpop.f32.mrb[0].mxu0
        %5260 = vmatprep.mubr.f32.mxu0 0.0
        %5261 = vmatmul.mubr.f32.gmra.mrb[0].mxu0 %v5051
        %v5262 = vpop.f32.mrb[0].mxu0
        %v5263 = vadd.f32 0.0, %v5262
        %v5264 = vpop.f32.mrb[0].mxu0
        %5265 = vmatprep.mubr.f32.mxu0 0.0
        %5266 = vmatmul.mubr.f32.gmra.mrb[0].mxu0 %v5054
        %v5267 = vpop.f32.mrb[0].mxu0
        %v5268 = vadd.f32 0.0, %v5267
        %v5269 = vpop.f32.mrb[0].mxu0
        %5270 = vmatprep.mubr.f32.mxu0 0.0
        %5271 = vmatmul.mubr.f32.gmra.mrb[0].mxu0 %v5057
        %v5272 = vpop.f32.mrb[0].mxu0
        %v5273 = vadd.f32 0.0, %v5272
        %v5274 = vpop.f32.mrb[0].mxu0
        %5275 = vmatprep.mubr.f32.mxu0 0.0
        %5276 = vmatmul.mubr.f32.gmra.mrb[0].mxu0 %v5060
        %v5277 = vpop.f32.mrb[0].mxu0
        %v5278 = vadd.f32 0.0, %v5277
        %v5279 = vpop.f32.mrb[0].mxu0
        %5280 = vmatprep.mubr.f32.mxu0 0.0
        %5281 = vmatmul.mubr.f32.gmra.mrb[0].mxu0 %v5063
        %v5282 = vpop.f32.mrb[0].mxu0
        %v5283 = vadd.f32 0.0, %v5282
        %v5284 = vpop.f32.mrb[0].mxu0
        %5285 = vmatprep.mubr.f32.mxu0 0.0
        %5286 = vmatmul.mubr.f32.gmra.mrb[0].mxu0 %v5066
        %v5287 = vpop.f32.mrb[0].mxu0
        %v5288 = vadd.f32 0.0, %v5287
        %v5289 = vpop.f32.mrb[0].mxu0
        %5290 = vmatprep.mubr.f32.mxu0 0.0
        %5291 = vmatmul.mubr.f32.gmra.mrb[0].mxu0 %v5069
        %v5292 = vpop.f32.mrb[0].mxu0
        %v5293 = vadd.f32 0.0, %v5292
        %v5294 = vpop.f32.mrb[0].mxu0
        %5295 = vmatprep.mubr.f32.mxu0 0.0
        %5296 = vmatmul.mubr.f32.gmra.mrb[0].mxu0 %v5072
        %v5297 = vpop.f32.mrb[0].mxu0
        %v5298 = vadd.f32 0.0, %v5297
        %v5299 = vpop.f32.mrb[0].mxu0
        %5300 = vdwg.mxu0
        %v5301 = vadd.f32 %v3880, %v5143
        %v5302 = vadd.f32 %v3881, %v5148
        %v5303 = vadd.f32 %v3882, %v5153
        %v5304 = vadd.f32 %v3883, %v5158
        %v5305 = vadd.f32 %v3884, %v5163
        %v5306 = vadd.f32 %v3885, %v5168
        %v5307 = vadd.f32 %v3886, %v5173
        %v5308 = vadd.f32 %v3887, %v5178
        %v5309 = vadd.f32 %v3888, %v5183
        %v5310 = vadd.f32 %v3889, %v5188
        %v5311 = vadd.f32 %v3890, %v5193
        %v5312 = vadd.f32 %v3891, %v5198
        %v5313 = vadd.f32 %v3892, %v5203
        %v5314 = vadd.f32 %v3893, %v5208
        %v5315 = vadd.f32 %v3894, %v5213
        %v5316 = vadd.f32 %v3895, %v5218
        %v5317 = vadd.f32 %v3896, %v5223
        %v5318 = vadd.f32 %v3897, %v5228
        %v5319 = vadd.f32 %v3898, %v5233
        %v5320 = vadd.f32 %v3899, %v5238
        %v5321 = vadd.f32 %v3900, %v5243
        %v5322 = vadd.f32 %v3901, %v5248
        %v5323 = vadd.f32 %v3902, %v5253
        %v5324 = vadd.f32 %v3903, %v5258
        %v5325 = vadd.f32 %v3904, %v5263
        %v5326 = vadd.f32 %v3905, %v5268
        %v5327 = vadd.f32 %v3906, %v5273
        %v5328 = vadd.f32 %v3907, %v5278
        %v5329 = vadd.f32 %v3908, %v5283
        %v5330 = vadd.f32 %v3909, %v5288
        %v5331 = vadd.f32 %v3910, %v5293
        %v5332 = vadd.f32 %v3911, %v5298
        %5333 = vrot.lane.b32.xlu0 %v772, 122
        %v5334 = vpop.permute.xlu0 %5333
        %5335 = vrot.lane.b32.xlu0 %v777, 122
        %v5336 = vpop.permute.xlu0 %5335
        %5337 = vrot.lane.b32.xlu0 %v782, 122
        %v5338 = vpop.permute.xlu0 %5337
        %5339 = vrot.lane.b32.xlu0 %v787, 122
        %v5340 = vpop.permute.xlu0 %5339
        %5341 = vrot.lane.b32.xlu0 %v792, 122
        %v5342 = vpop.permute.xlu0 %5341
        %5343 = vrot.lane.b32.xlu0 %v797, 122
        %v5344 = vpop.permute.xlu0 %5343
        %5345 = vrot.lane.b32.xlu0 %v802, 122
        %v5346 = vpop.permute.xlu0 %5345
        %5347 = vrot.lane.b32.xlu0 %v807, 122
        %v5348 = vpop.permute.xlu0 %5347
        %5349 = vrot.lane.b32.xlu0 %v812, 122
        %v5350 = vpop.permute.xlu0 %5349
        %5351 = vrot.lane.b32.xlu0 %v817, 122
        %v5352 = vpop.permute.xlu0 %5351
        %5353 = vrot.lane.b32.xlu0 %v822, 122
        %v5354 = vpop.permute.xlu0 %5353
        %5355 = vrot.lane.b32.xlu0 %v827, 122
        %v5356 = vpop.permute.xlu0 %5355
        %5357 = vrot.lane.b32.xlu0 %v832, 122
        %v5358 = vpop.permute.xlu0 %5357
        %5359 = vrot.lane.b32.xlu0 %v837, 122
        %v5360 = vpop.permute.xlu0 %5359
        %5361 = vrot.lane.b32.xlu0 %v842, 122
        %v5362 = vpop.permute.xlu0 %5361
        %5363 = vrot.lane.b32.xlu0 %v847, 122
        %v5364 = vpop.permute.xlu0 %5363
        %5365 = vrot.lane.b32.xlu0 %v852, 122
        %v5366 = vpop.permute.xlu0 %5365
        %5367 = vrot.lane.b32.xlu0 %v857, 122
        %v5368 = vpop.permute.xlu0 %5367
        %5369 = vrot.lane.b32.xlu0 %v862, 122
        %v5370 = vpop.permute.xlu0 %5369
        %5371 = vrot.lane.b32.xlu0 %v867, 122
        %v5372 = vpop.permute.xlu0 %5371
        %5373 = vrot.lane.b32.xlu0 %v872, 122
        %v5374 = vpop.permute.xlu0 %5373
        %5375 = vrot.lane.b32.xlu0 %v877, 122
        %v5376 = vpop.permute.xlu0 %5375
        %5377 = vrot.lane.b32.xlu0 %v882, 122
        %v5378 = vpop.permute.xlu0 %5377
        %5379 = vrot.lane.b32.xlu0 %v887, 122
        %v5380 = vpop.permute.xlu0 %5379
        %5381 = vrot.lane.b32.xlu0 %v892, 122
        %v5382 = vpop.permute.xlu0 %5381
        %5383 = vrot.lane.b32.xlu0 %v897, 122
        %v5384 = vpop.permute.xlu0 %5383
        %5385 = vrot.lane.b32.xlu0 %v902, 122
        %v5386 = vpop.permute.xlu0 %5385
        %5387 = vrot.lane.b32.xlu0 %v907, 122
        %v5388 = vpop.permute.xlu0 %5387
        %5389 = vrot.lane.b32.xlu0 %v912, 122
        %v5390 = vpop.permute.xlu0 %5389
        %5391 = vrot.lane.b32.xlu0 %v917, 122
        %v5392 = vpop.permute.xlu0 %5391
        %5393 = vrot.lane.b32.xlu0 %v922, 122
        %v5394 = vpop.permute.xlu0 %5393
        %5395 = vrot.lane.b32.xlu0 %v927, 122
        %v5396 = vpop.permute.xlu0 %5395
        %v5397 = vrot.slane %v1007, 6
        %v5398 = vsel %vm1093, %v5334, 0
        %v5400 = vsel %vm1093, %v5336, 0
        %v5402 = vsel %vm1093, %v5338, 0
        %v5404 = vsel %vm1093, %v5340, 0
        %v5406 = vsel %vm1093, %v5342, 0
        %v5408 = vsel %vm1093, %v5344, 0
        %v5410 = vsel %vm1093, %v5346, 0
        %v5412 = vsel %vm1093, %v5348, 0
        %v5414 = vsel %vm1093, %v5350, 0
        %v5416 = vsel %vm1093, %v5352, 0
        %v5418 = vsel %vm1093, %v5354, 0
        %v5420 = vsel %vm1093, %v5356, 0
        %v5422 = vsel %vm1093, %v5358, 0
        %v5424 = vsel %vm1093, %v5360, 0
        %v5426 = vsel %vm1093, %v5362, 0
        %v5428 = vsel %vm1093, %v5364, 0
        %v5430 = vsel %vm1093, %v5366, 0
        %v5432 = vsel %vm1093, %v5368, 0
        %v5434 = vsel %vm1093, %v5370, 0
        %v5436 = vsel %vm1093, %v5372, 0
        %v5438 = vsel %vm1093, %v5374, 0
        %v5440 = vsel %vm1093, %v5376, 0
        %v5442 = vsel %vm1093, %v5378, 0
        %v5444 = vsel %vm1093, %v5380, 0
        %v5446 = vsel %vm1093, %v5382, 0
        %v5448 = vsel %vm1093, %v5384, 0
        %v5450 = vsel %vm1093, %v5386, 0
        %v5452 = vsel %vm1093, %v5388, 0
        %v5454 = vsel %vm1093, %v5390, 0
        %v5456 = vsel %vm1093, %v5392, 0
        %v5458 = vsel %vm1093, %v5394, 0
        %v5460 = vsel %vm1093, %v5396, 0
        %v5462 = vsel %vm1190, %v5397, 0
        %5464 = vmatprep.subr.mxu0 0.0
        %5465 = vmatpush1.msra.mxu0 %v5462
        %5466 = vmatprep.subr.mxu0 0.0
        %5467 = vmatpush1.msra.mxu0 0.0
        %5468 = vmatprep.subr.mxu0 0.0
        %5469 = vmatpush1.msra.mxu0 0.0
        %5470 = vmatprep.subr.mxu0 0.0
        %5471 = vmatpush1.msra.mxu0 0.0
        %5472 = vmatprep.subr.mxu0 0.0
        %5473 = vmatpush1.msra.mxu0 0.0
        %5474 = vmatprep.subr.mxu0 0.0
        %5475 = vmatpush1.msra.mxu0 0.0
        %5476 = vmatprep.subr.mxu0 0.0
        %5477 = vmatpush1.msra.mxu0 0.0
        %5478 = vmatprep.subr.mxu0 0.0
        %5479 = vmatpush1.msra.mxu0 0.0
        %5480 = vmatprep.subr.mxu0 0.0
        %5481 = vmatpush1.msra.mxu0 0.0
        %5482 = vmatprep.subr.mxu0 0.0
        %5483 = vmatpush1.msra.mxu0 0.0
        %5484 = vmatprep.subr.mxu0 0.0
        %5485 = vmatpush1.msra.mxu0 0.0
        %5486 = vmatprep.subr.mxu0 0.0
        %5487 = vmatpush1.msra.mxu0 0.0
        %5488 = vmatprep.subr.mxu0 0.0
        %5489 = vmatpush1.msra.mxu0 0.0
        %5490 = vmatprep.subr.mxu0 0.0
        %5491 = vmatpush1.msra.mxu0 0.0
        %5492 = vmatprep.subr.mxu0 0.0
        %5493 = vmatpush1.msra.mxu0 0.0
        %5494 = vmatprep.subr.mxu0 0.0
        %5495 = vmatpush1.msra.mxu0 0.0
        %5496 = vmatprep.subr.mxu0 0.0
        %5497 = vmatpush1.msra.mxu0 0.0
        %5498 = vmatprep.subr.mxu0 0.0
        %5499 = vmatpush1.msra.mxu0 0.0
        %5500 = vmatprep.subr.mxu0 0.0
        %5501 = vmatpush1.msra.mxu0 0.0
        %5502 = vmatprep.subr.mxu0 0.0
        %5503 = vmatpush1.msra.mxu0 0.0
        %5504 = vmatprep.subr.mxu0 0.0
        %5505 = vmatpush1.msra.mxu0 0.0
        %5506 = vmatprep.subr.mxu0 0.0
        %5507 = vmatpush1.msra.mxu0 0.0
        %5508 = vmatprep.subr.mxu0 0.0
        %5509 = vmatpush1.msra.mxu0 0.0
        %5510 = vmatprep.subr.mxu0 0.0
        %5511 = vmatpush1.msra.mxu0 0.0
        %5512 = vmatprep.subr.mxu0 0.0
        %5513 = vmatpush1.msra.mxu0 0.0
        %5514 = vmatprep.subr.mxu0 0.0
        %5515 = vmatpush1.msra.mxu0 0.0
        %5516 = vmatprep.subr.mxu0 0.0
        %5517 = vmatpush1.msra.mxu0 0.0
        %5518 = vmatprep.subr.mxu0 0.0
        %5519 = vmatpush1.msra.mxu0 0.0
        %5520 = vmatprep.subr.mxu0 0.0
        %5521 = vmatpush1.msra.mxu0 0.0
        %5522 = vmatprep.subr.mxu0 0.0
        %5523 = vmatpush1.msra.mxu0 0.0
        %5524 = vmatprep.subr.mxu0 0.0
        %5525 = vmatpush1.msra.mxu0 0.0
        %5526 = vmatprep.subr.mxu0 0.0
        %5527 = vmatpush1.msra.mxu0 0.0
        %5528 = vmatprep.mubr.f32.mxu0 0.0
        %5529 = vmatmul.mubr.f32.gmra.mrb[0].mxu0 %v5398
        %v5530 = vpop.f32.mrb[0].mxu0
        %v5531 = vadd.f32 0.0, %v5530
        %v5532 = vpop.f32.mrb[0].mxu0
        %5533 = vmatprep.mubr.f32.mxu0 0.0
        %5534 = vmatmul.mubr.f32.gmra.mrb[0].mxu0 %v5400
        %v5535 = vpop.f32.mrb[0].mxu0
        %v5536 = vadd.f32 0.0, %v5535
        %v5537 = vpop.f32.mrb[0].mxu0
        %5538 = vmatprep.mubr.f32.mxu0 0.0
        %5539 = vmatmul.mubr.f32.gmra.mrb[0].mxu0 %v5402
        %v5540 = vpop.f32.mrb[0].mxu0
        %v5541 = vadd.f32 0.0, %v5540
        %v5542 = vpop.f32.mrb[0].mxu0
        %5543 = vmatprep.mubr.f32.mxu0 0.0
        %5544 = vmatmul.mubr.f32.gmra.mrb[0].mxu0 %v5404
        %v5545 = vpop.f32.mrb[0].mxu0
        %v5546 = vadd.f32 0.0, %v5545
        %v5547 = vpop.f32.mrb[0].mxu0
        %5548 = vmatprep.mubr.f32.mxu0 0.0
        %5549 = vmatmul.mubr.f32.gmra.mrb[0].mxu0 %v5406
        %v5550 = vpop.f32.mrb[0].mxu0
        %v5551 = vadd.f32 0.0, %v5550
        %v5552 = vpop.f32.mrb[0].mxu0
        %5553 = vmatprep.mubr.f32.mxu0 0.0
        %5554 = vmatmul.mubr.f32.gmra.mrb[0].mxu0 %v5408
        %v5555 = vpop.f32.mrb[0].mxu0
        %v5556 = vadd.f32 0.0, %v5555
        %v5557 = vpop.f32.mrb[0].mxu0
        %5558 = vmatprep.mubr.f32.mxu0 0.0
        %5559 = vmatmul.mubr.f32.gmra.mrb[0].mxu0 %v5410
        %v5560 = vpop.f32.mrb[0].mxu0
        %v5561 = vadd.f32 0.0, %v5560
        %v5562 = vpop.f32.mrb[0].mxu0
        %5563 = vmatprep.mubr.f32.mxu0 0.0
        %5564 = vmatmul.mubr.f32.gmra.mrb[0].mxu0 %v5412
        %v5565 = vpop.f32.mrb[0].mxu0
        %v5566 = vadd.f32 0.0, %v5565
        %v5567 = vpop.f32.mrb[0].mxu0
        %5568 = vmatprep.mubr.f32.mxu0 0.0
        %5569 = vmatmul.mubr.f32.gmra.mrb[0].mxu0 %v5414
        %v5570 = vpop.f32.mrb[0].mxu0
        %v5571 = vadd.f32 0.0, %v5570
        %v5572 = vpop.f32.mrb[0].mxu0
        %5573 = vmatprep.mubr.f32.mxu0 0.0
        %5574 = vmatmul.mubr.f32.gmra.mrb[0].mxu0 %v5416
        %v5575 = vpop.f32.mrb[0].mxu0
        %v5576 = vadd.f32 0.0, %v5575
        %v5577 = vpop.f32.mrb[0].mxu0
        %5578 = vmatprep.mubr.f32.mxu0 0.0
        %5579 = vmatmul.mubr.f32.gmra.mrb[0].mxu0 %v5418
        %v5580 = vpop.f32.mrb[0].mxu0
        %v5581 = vadd.f32 0.0, %v5580
        %v5582 = vpop.f32.mrb[0].mxu0
        %5583 = vmatprep.mubr.f32.mxu0 0.0
        %5584 = vmatmul.mubr.f32.gmra.mrb[0].mxu0 %v5420
        %v5585 = vpop.f32.mrb[0].mxu0
        %v5586 = vadd.f32 0.0, %v5585
        %v5587 = vpop.f32.mrb[0].mxu0
        %5588 = vmatprep.mubr.f32.mxu0 0.0
        %5589 = vmatmul.mubr.f32.gmra.mrb[0].mxu0 %v5422
        %v5590 = vpop.f32.mrb[0].mxu0
        %v5591 = vadd.f32 0.0, %v5590
        %v5592 = vpop.f32.mrb[0].mxu0
        %5593 = vmatprep.mubr.f32.mxu0 0.0
        %5594 = vmatmul.mubr.f32.gmra.mrb[0].mxu0 %v5424
        %v5595 = vpop.f32.mrb[0].mxu0
        %v5596 = vadd.f32 0.0, %v5595
        %v5597 = vpop.f32.mrb[0].mxu0
        %5598 = vmatprep.mubr.f32.mxu0 0.0
        %5599 = vmatmul.mubr.f32.gmra.mrb[0].mxu0 %v5426
        %v5600 = vpop.f32.mrb[0].mxu0
        %v5601 = vadd.f32 0.0, %v5600
        %v5602 = vpop.f32.mrb[0].mxu0
        %5603 = vmatprep.mubr.f32.mxu0 0.0
        %5604 = vmatmul.mubr.f32.gmra.mrb[0].mxu0 %v5428
        %v5605 = vpop.f32.mrb[0].mxu0
        %v5606 = vadd.f32 0.0, %v5605
        %v5607 = vpop.f32.mrb[0].mxu0
        %5608 = vmatprep.mubr.f32.mxu0 0.0
        %5609 = vmatmul.mubr.f32.gmra.mrb[0].mxu0 %v5430
        %v5610 = vpop.f32.mrb[0].mxu0
        %v5611 = vadd.f32 0.0, %v5610
        %v5612 = vpop.f32.mrb[0].mxu0
        %5613 = vmatprep.mubr.f32.mxu0 0.0
        %5614 = vmatmul.mubr.f32.gmra.mrb[0].mxu0 %v5432
        %v5615 = vpop.f32.mrb[0].mxu0
        %v5616 = vadd.f32 0.0, %v5615
        %v5617 = vpop.f32.mrb[0].mxu0
        %5618 = vmatprep.mubr.f32.mxu0 0.0
        %5619 = vmatmul.mubr.f32.gmra.mrb[0].mxu0 %v5434
        %v5620 = vpop.f32.mrb[0].mxu0
        %v5621 = vadd.f32 0.0, %v5620
        %v5622 = vpop.f32.mrb[0].mxu0
        %5623 = vmatprep.mubr.f32.mxu0 0.0
        %5624 = vmatmul.mubr.f32.gmra.mrb[0].mxu0 %v5436
        %v5625 = vpop.f32.mrb[0].mxu0
        %v5626 = vadd.f32 0.0, %v5625
        %v5627 = vpop.f32.mrb[0].mxu0
        %5628 = vmatprep.mubr.f32.mxu0 0.0
        %5629 = vmatmul.mubr.f32.gmra.mrb[0].mxu0 %v5438
        %v5630 = vpop.f32.mrb[0].mxu0
        %v5631 = vadd.f32 0.0, %v5630
        %v5632 = vpop.f32.mrb[0].mxu0
        %5633 = vmatprep.mubr.f32.mxu0 0.0
        %5634 = vmatmul.mubr.f32.gmra.mrb[0].mxu0 %v5440
        %v5635 = vpop.f32.mrb[0].mxu0
        %v5636 = vadd.f32 0.0, %v5635
        %v5637 = vpop.f32.mrb[0].mxu0
        %5638 = vmatprep.mubr.f32.mxu0 0.0
        %5639 = vmatmul.mubr.f32.gmra.mrb[0].mxu0 %v5442
        %v5640 = vpop.f32.mrb[0].mxu0
        %v5641 = vadd.f32 0.0, %v5640
        %v5642 = vpop.f32.mrb[0].mxu0
        %5643 = vmatprep.mubr.f32.mxu0 0.0
        %5644 = vmatmul.mubr.f32.gmra.mrb[0].mxu0 %v5444
        %v5645 = vpop.f32.mrb[0].mxu0
        %v5646 = vadd.f32 0.0, %v5645
        %v5647 = vpop.f32.mrb[0].mxu0
        %5648 = vmatprep.mubr.f32.mxu0 0.0
        %5649 = vmatmul.mubr.f32.gmra.mrb[0].mxu0 %v5446
        %v5650 = vpop.f32.mrb[0].mxu0
        %v5651 = vadd.f32 0.0, %v5650
        %v5652 = vpop.f32.mrb[0].mxu0
        %5653 = vmatprep.mubr.f32.mxu0 0.0
        %5654 = vmatmul.mubr.f32.gmra.mrb[0].mxu0 %v5448
        %v5655 = vpop.f32.mrb[0].mxu0
        %v5656 = vadd.f32 0.0, %v5655
        %v5657 = vpop.f32.mrb[0].mxu0
        %5658 = vmatprep.mubr.f32.mxu0 0.0
        %5659 = vmatmul.mubr.f32.gmra.mrb[0].mxu0 %v5450
        %v5660 = vpop.f32.mrb[0].mxu0
        %v5661 = vadd.f32 0.0, %v5660
        %v5662 = vpop.f32.mrb[0].mxu0
        %5663 = vmatprep.mubr.f32.mxu0 0.0
        %5664 = vmatmul.mubr.f32.gmra.mrb[0].mxu0 %v5452
        %v5665 = vpop.f32.mrb[0].mxu0
        %v5666 = vadd.f32 0.0, %v5665
        %v5667 = vpop.f32.mrb[0].mxu0
        %5668 = vmatprep.mubr.f32.mxu0 0.0
        %5669 = vmatmul.mubr.f32.gmra.mrb[0].mxu0 %v5454
        %v5670 = vpop.f32.mrb[0].mxu0
        %v5671 = vadd.f32 0.0, %v5670
        %v5672 = vpop.f32.mrb[0].mxu0
        %5673 = vmatprep.mubr.f32.mxu0 0.0
        %5674 = vmatmul.mubr.f32.gmra.mrb[0].mxu0 %v5456
        %v5675 = vpop.f32.mrb[0].mxu0
        %v5676 = vadd.f32 0.0, %v5675
        %v5677 = vpop.f32.mrb[0].mxu0
        %5678 = vmatprep.mubr.f32.mxu0 0.0
        %5679 = vmatmul.mubr.f32.gmra.mrb[0].mxu0 %v5458
        %v5680 = vpop.f32.mrb[0].mxu0
        %v5681 = vadd.f32 0.0, %v5680
        %v5682 = vpop.f32.mrb[0].mxu0
        %5683 = vmatprep.mubr.f32.mxu0 0.0
        %5684 = vmatmul.mubr.f32.gmra.mrb[0].mxu0 %v5460
        %v5685 = vpop.f32.mrb[0].mxu0
        %v5686 = vadd.f32 0.0, %v5685
        %v5687 = vpop.f32.mrb[0].mxu0
        %5688 = vdwg.mxu0
        %v5689 = vmul.f32 %v5531, 0.70710677
        %v5690 = vmul.f32 %v5536, 0.70710677
        %v5691 = vmul.f32 %v5541, 0.70710677
        %v5692 = vmul.f32 %v5546, 0.70710677
        %v5693 = vmul.f32 %v5551, 0.70710677
        %v5694 = vmul.f32 %v5556, 0.70710677
        %v5695 = vmul.f32 %v5561, 0.70710677
        %v5696 = vmul.f32 %v5566, 0.70710677
        %v5697 = vmul.f32 %v5571, 0.70710677
        %v5698 = vmul.f32 %v5576, 0.70710677
        %v5699 = vmul.f32 %v5581, 0.70710677
        %v5700 = vmul.f32 %v5586, 0.70710677
        %v5701 = vmul.f32 %v5591, 0.70710677
        %v5702 = vmul.f32 %v5596, 0.70710677
        %v5703 = vmul.f32 %v5601, 0.70710677
        %v5704 = vmul.f32 %v5606, 0.70710677
        %v5705 = vmul.f32 %v5611, 0.70710677
        %v5706 = vmul.f32 %v5616, 0.70710677
        %v5707 = vmul.f32 %v5621, 0.70710677
        %v5708 = vmul.f32 %v5626, 0.70710677
        %v5709 = vmul.f32 %v5631, 0.70710677
        %v5710 = vmul.f32 %v5636, 0.70710677
        %v5711 = vmul.f32 %v5641, 0.70710677
        %v5712 = vmul.f32 %v5646, 0.70710677
        %v5713 = vmul.f32 %v5651, 0.70710677
        %v5714 = vmul.f32 %v5656, 0.70710677
        %v5715 = vmul.f32 %v5661, 0.70710677
        %v5716 = vmul.f32 %v5666, 0.70710677
        %v5717 = vmul.f32 %v5671, 0.70710677
        %v5718 = vmul.f32 %v5676, 0.70710677
        %v5719 = vmul.f32 %v5681, 0.70710677
        %v5720 = vmul.f32 %v5686, 0.70710677
        %v5721 = vsel %vm1451, %v5689, -inf
        %5722 = vmax.xlane.f32.xlu0 %v5721
        %v5723 = vpop.xlane.xlu0 %5722
        %v5724 = vsel %vm1451, %v5690, -inf
        %5725 = vmax.xlane.f32.xlu0 %v5724
        %v5726 = vpop.xlane.xlu0 %5725
        %v5727 = vsel %vm1451, %v5691, -inf
        %5728 = vmax.xlane.f32.xlu0 %v5727
        %v5729 = vpop.xlane.xlu0 %5728
        %v5730 = vsel %vm1451, %v5692, -inf
        %5731 = vmax.xlane.f32.xlu0 %v5730
        %v5732 = vpop.xlane.xlu0 %5731
        %v5733 = vsel %vm1451, %v5693, -inf
        %5734 = vmax.xlane.f32.xlu0 %v5733
        %v5735 = vpop.xlane.xlu0 %5734
        %v5736 = vsel %vm1451, %v5694, -inf
        %5737 = vmax.xlane.f32.xlu0 %v5736
        %v5738 = vpop.xlane.xlu0 %5737
        %v5739 = vsel %vm1451, %v5695, -inf
        %5740 = vmax.xlane.f32.xlu0 %v5739
        %v5741 = vpop.xlane.xlu0 %5740
        %v5742 = vsel %vm1451, %v5696, -inf
        %5743 = vmax.xlane.f32.xlu0 %v5742
        %v5744 = vpop.xlane.xlu0 %5743
        %v5745 = vsel %vm1451, %v5697, -inf
        %5746 = vmax.xlane.f32.xlu0 %v5745
        %v5747 = vpop.xlane.xlu0 %5746
        %v5748 = vsel %vm1451, %v5698, -inf
        %5749 = vmax.xlane.f32.xlu0 %v5748
        %v5750 = vpop.xlane.xlu0 %5749
        %v5751 = vsel %vm1451, %v5699, -inf
        %5752 = vmax.xlane.f32.xlu0 %v5751
        %v5753 = vpop.xlane.xlu0 %5752
        %v5754 = vsel %vm1451, %v5700, -inf
        %5755 = vmax.xlane.f32.xlu0 %v5754
        %v5756 = vpop.xlane.xlu0 %5755
        %v5757 = vsel %vm1451, %v5701, -inf
        %5758 = vmax.xlane.f32.xlu0 %v5757
        %v5759 = vpop.xlane.xlu0 %5758
        %v5760 = vsel %vm1451, %v5702, -inf
        %5761 = vmax.xlane.f32.xlu0 %v5760
        %v5762 = vpop.xlane.xlu0 %5761
        %v5763 = vsel %vm1451, %v5703, -inf
        %5764 = vmax.xlane.f32.xlu0 %v5763
        %v5765 = vpop.xlane.xlu0 %5764
        %v5766 = vsel %vm1451, %v5704, -inf
        %5767 = vmax.xlane.f32.xlu0 %v5766
        %v5768 = vpop.xlane.xlu0 %5767
        %v5769 = vsel %vm1451, %v5705, -inf
        %5770 = vmax.xlane.f32.xlu0 %v5769
        %v5771 = vpop.xlane.xlu0 %5770
        %v5772 = vsel %vm1451, %v5706, -inf
        %5773 = vmax.xlane.f32.xlu0 %v5772
        %v5774 = vpop.xlane.xlu0 %5773
        %v5775 = vsel %vm1451, %v5707, -inf
        %5776 = vmax.xlane.f32.xlu0 %v5775
        %v5777 = vpop.xlane.xlu0 %5776
        %v5778 = vsel %vm1451, %v5708, -inf
        %5779 = vmax.xlane.f32.xlu0 %v5778
        %v5780 = vpop.xlane.xlu0 %5779
        %v5781 = vsel %vm1451, %v5709, -inf
        %5782 = vmax.xlane.f32.xlu0 %v5781
        %v5783 = vpop.xlane.xlu0 %5782
        %v5784 = vsel %vm1451, %v5710, -inf
        %5785 = vmax.xlane.f32.xlu0 %v5784
        %v5786 = vpop.xlane.xlu0 %5785
        %v5787 = vsel %vm1451, %v5711, -inf
        %5788 = vmax.xlane.f32.xlu0 %v5787
        %v5789 = vpop.xlane.xlu0 %5788
        %v5790 = vsel %vm1451, %v5712, -inf
        %5791 = vmax.xlane.f32.xlu0 %v5790
        %v5792 = vpop.xlane.xlu0 %5791
        %v5793 = vsel %vm1451, %v5713, -inf
        %5794 = vmax.xlane.f32.xlu0 %v5793
        %v5795 = vpop.xlane.xlu0 %5794
        %v5796 = vsel %vm1451, %v5714, -inf
        %5797 = vmax.xlane.f32.xlu0 %v5796
        %v5798 = vpop.xlane.xlu0 %5797
        %v5799 = vsel %vm1451, %v5715, -inf
        %5800 = vmax.xlane.f32.xlu0 %v5799
        %v5801 = vpop.xlane.xlu0 %5800
        %v5802 = vsel %vm1451, %v5716, -inf
        %5803 = vmax.xlane.f32.xlu0 %v5802
        %v5804 = vpop.xlane.xlu0 %5803
        %v5805 = vsel %vm1451, %v5717, -inf
        %5806 = vmax.xlane.f32.xlu0 %v5805
        %v5807 = vpop.xlane.xlu0 %5806
        %v5808 = vsel %vm1451, %v5718, -inf
        %5809 = vmax.xlane.f32.xlu0 %v5808
        %v5810 = vpop.xlane.xlu0 %5809
        %v5811 = vsel %vm1451, %v5719, -inf
        %5812 = vmax.xlane.f32.xlu0 %v5811
        %v5813 = vpop.xlane.xlu0 %5812
        %v5814 = vsel %vm1451, %v5720, -inf
        %5815 = vmax.xlane.f32.xlu0 %v5814
        %v5816 = vpop.xlane.xlu0 %5815
        %v5817 = vsub.f32 %v5689, %v5723
        %v5818 = vsub.f32 %v5690, %v5726
        %v5819 = vsub.f32 %v5691, %v5729
        %v5820 = vsub.f32 %v5692, %v5732
        %v5821 = vsub.f32 %v5693, %v5735
        %v5822 = vsub.f32 %v5694, %v5738
        %v5823 = vsub.f32 %v5695, %v5741
        %v5824 = vsub.f32 %v5696, %v5744
        %v5825 = vsub.f32 %v5697, %v5747
        %v5826 = vsub.f32 %v5698, %v5750
        %v5827 = vsub.f32 %v5699, %v5753
        %v5828 = vsub.f32 %v5700, %v5756
        %v5829 = vsub.f32 %v5701, %v5759
        %v5830 = vsub.f32 %v5702, %v5762
        %v5831 = vsub.f32 %v5703, %v5765
        %v5832 = vsub.f32 %v5704, %v5768
        %v5833 = vsub.f32 %v5705, %v5771
        %v5834 = vsub.f32 %v5706, %v5774
        %v5835 = vsub.f32 %v5707, %v5777
        %v5836 = vsub.f32 %v5708, %v5780
        %v5837 = vsub.f32 %v5709, %v5783
        %v5838 = vsub.f32 %v5710, %v5786
        %v5839 = vsub.f32 %v5711, %v5789
        %v5840 = vsub.f32 %v5712, %v5792
        %v5841 = vsub.f32 %v5713, %v5795
        %v5842 = vsub.f32 %v5714, %v5798
        %v5843 = vsub.f32 %v5715, %v5801
        %v5844 = vsub.f32 %v5716, %v5804
        %v5845 = vsub.f32 %v5717, %v5807
        %v5846 = vsub.f32 %v5718, %v5810
        %v5847 = vsub.f32 %v5719, %v5813
        %v5848 = vsub.f32 %v5720, %v5816
        %v5849 = vmul.f32 %v5817, 1.442695
        %v5850 = vpow.pop %v5849
        %v5851 = vmul.f32 %v5818, 1.442695
        %v5852 = vpow.pop %v5851
        %v5853 = vmul.f32 %v5819, 1.442695
        %v5854 = vpow.pop %v5853
        %v5855 = vmul.f32 %v5820, 1.442695
        %v5856 = vpow.pop %v5855
        %v5857 = vmul.f32 %v5821, 1.442695
        %v5858 = vpow.pop %v5857
        %v5859 = vmul.f32 %v5822, 1.442695
        %v5860 = vpow.pop %v5859
        %v5861 = vmul.f32 %v5823, 1.442695
        %v5862 = vpow.pop %v5861
        %v5863 = vmul.f32 %v5824, 1.442695
        %v5864 = vpow.pop %v5863
        %v5865 = vmul.f32 %v5825, 1.442695
        %v5866 = vpow.pop %v5865
        %v5867 = vmul.f32 %v5826, 1.442695
        %v5868 = vpow.pop %v5867
        %v5869 = vmul.f32 %v5827, 1.442695
        %v5870 = vpow.pop %v5869
        %v5871 = vmul.f32 %v5828, 1.442695
        %v5872 = vpow.pop %v5871
        %v5873 = vmul.f32 %v5829, 1.442695
        %v5874 = vpow.pop %v5873
        %v5875 = vmul.f32 %v5830, 1.442695
        %v5876 = vpow.pop %v5875
        %v5877 = vmul.f32 %v5831, 1.442695
        %v5878 = vpow.pop %v5877
        %v5879 = vmul.f32 %v5832, 1.442695
        %v5880 = vpow.pop %v5879
        %v5881 = vmul.f32 %v5833, 1.442695
        %v5882 = vpow.pop %v5881
        %v5883 = vmul.f32 %v5834, 1.442695
        %v5884 = vpow.pop %v5883
        %v5885 = vmul.f32 %v5835, 1.442695
        %v5886 = vpow.pop %v5885
        %v5887 = vmul.f32 %v5836, 1.442695
        %v5888 = vpow.pop %v5887
        %v5889 = vmul.f32 %v5837, 1.442695
        %v5890 = vpow.pop %v5889
        %v5891 = vmul.f32 %v5838, 1.442695
        %v5892 = vpow.pop %v5891
        %v5893 = vmul.f32 %v5839, 1.442695
        %v5894 = vpow.pop %v5893
        %v5895 = vmul.f32 %v5840, 1.442695
        %v5896 = vpow.pop %v5895
        %v5897 = vmul.f32 %v5841, 1.442695
        %v5898 = vpow.pop %v5897
        %v5899 = vmul.f32 %v5842, 1.442695
        %v5900 = vpow.pop %v5899
        %v5901 = vmul.f32 %v5843, 1.442695
        %v5902 = vpow.pop %v5901
        %v5903 = vmul.f32 %v5844, 1.442695
        %v5904 = vpow.pop %v5903
        %v5905 = vmul.f32 %v5845, 1.442695
        %v5906 = vpow.pop %v5905
        %v5907 = vmul.f32 %v5846, 1.442695
        %v5908 = vpow.pop %v5907
        %v5909 = vmul.f32 %v5847, 1.442695
        %v5910 = vpow.pop %v5909
        %v5911 = vmul.f32 %v5848, 1.442695
        %v5912 = vpow.pop %v5911
        %v5913 = vsel %vm1451, %v5850, 0.0
        %5914 = vadd.xlane.f32.xlu0 %v5913
        %v5915 = vpop.xlane.xlu0 %5914
        %v5916 = vsel %vm1451, %v5852, 0.0
        %5917 = vadd.xlane.f32.xlu0 %v5916
        %v5918 = vpop.xlane.xlu0 %5917
        %v5919 = vsel %vm1451, %v5854, 0.0
        %5920 = vadd.xlane.f32.xlu0 %v5919
        %v5921 = vpop.xlane.xlu0 %5920
        %v5922 = vsel %vm1451, %v5856, 0.0
        %5923 = vadd.xlane.f32.xlu0 %v5922
        %v5924 = vpop.xlane.xlu0 %5923
        %v5925 = vsel %vm1451, %v5858, 0.0
        %5926 = vadd.xlane.f32.xlu0 %v5925
        %v5927 = vpop.xlane.xlu0 %5926
        %v5928 = vsel %vm1451, %v5860, 0.0
        %5929 = vadd.xlane.f32.xlu0 %v5928
        %v5930 = vpop.xlane.xlu0 %5929
        %v5931 = vsel %vm1451, %v5862, 0.0
        %5932 = vadd.xlane.f32.xlu0 %v5931
        %v5933 = vpop.xlane.xlu0 %5932
        %v5934 = vsel %vm1451, %v5864, 0.0
        %5935 = vadd.xlane.f32.xlu0 %v5934
        %v5936 = vpop.xlane.xlu0 %5935
        %v5937 = vsel %vm1451, %v5866, 0.0
        %5938 = vadd.xlane.f32.xlu0 %v5937
        %v5939 = vpop.xlane.xlu0 %5938
        %v5940 = vsel %vm1451, %v5868, 0.0
        %5941 = vadd.xlane.f32.xlu0 %v5940
        %v5942 = vpop.xlane.xlu0 %5941
        %v5943 = vsel %vm1451, %v5870, 0.0
        %5944 = vadd.xlane.f32.xlu0 %v5943
        %v5945 = vpop.xlane.xlu0 %5944
        %v5946 = vsel %vm1451, %v5872, 0.0
        %5947 = vadd.xlane.f32.xlu0 %v5946
        %v5948 = vpop.xlane.xlu0 %5947
        %v5949 = vsel %vm1451, %v5874, 0.0
        %5950 = vadd.xlane.f32.xlu0 %v5949
        %v5951 = vpop.xlane.xlu0 %5950
        %v5952 = vsel %vm1451, %v5876, 0.0
        %5953 = vadd.xlane.f32.xlu0 %v5952
        %v5954 = vpop.xlane.xlu0 %5953
        %v5955 = vsel %vm1451, %v5878, 0.0
        %5956 = vadd.xlane.f32.xlu0 %v5955
        %v5957 = vpop.xlane.xlu0 %5956
        %v5958 = vsel %vm1451, %v5880, 0.0
        %5959 = vadd.xlane.f32.xlu0 %v5958
        %v5960 = vpop.xlane.xlu0 %5959
        %v5961 = vsel %vm1451, %v5882, 0.0
        %5962 = vadd.xlane.f32.xlu0 %v5961
        %v5963 = vpop.xlane.xlu0 %5962
        %v5964 = vsel %vm1451, %v5884, 0.0
        %5965 = vadd.xlane.f32.xlu0 %v5964
        %v5966 = vpop.xlane.xlu0 %5965
        %v5967 = vsel %vm1451, %v5886, 0.0
        %5968 = vadd.xlane.f32.xlu0 %v5967
        %v5969 = vpop.xlane.xlu0 %5968
        %v5970 = vsel %vm1451, %v5888, 0.0
        %5971 = vadd.xlane.f32.xlu0 %v5970
        %v5972 = vpop.xlane.xlu0 %5971
        %v5973 = vsel %vm1451, %v5890, 0.0
        %5974 = vadd.xlane.f32.xlu0 %v5973
        %v5975 = vpop.xlane.xlu0 %5974
        %v5976 = vsel %vm1451, %v5892, 0.0
        %5977 = vadd.xlane.f32.xlu0 %v5976
        %v5978 = vpop.xlane.xlu0 %5977
        %v5979 = vsel %vm1451, %v5894, 0.0
        %5980 = vadd.xlane.f32.xlu0 %v5979
        %v5981 = vpop.xlane.xlu0 %5980
        %v5982 = vsel %vm1451, %v5896, 0.0
        %5983 = vadd.xlane.f32.xlu0 %v5982
        %v5984 = vpop.xlane.xlu0 %5983
        %v5985 = vsel %vm1451, %v5898, 0.0
        %5986 = vadd.xlane.f32.xlu0 %v5985
        %v5987 = vpop.xlane.xlu0 %5986
        %v5988 = vsel %vm1451, %v5900, 0.0
        %5989 = vadd.xlane.f32.xlu0 %v5988
        %v5990 = vpop.xlane.xlu0 %5989
        %v5991 = vsel %vm1451, %v5902, 0.0
        %5992 = vadd.xlane.f32.xlu0 %v5991
        %v5993 = vpop.xlane.xlu0 %5992
        %v5994 = vsel %vm1451, %v5904, 0.0
        %5995 = vadd.xlane.f32.xlu0 %v5994
        %v5996 = vpop.xlane.xlu0 %5995
        %v5997 = vsel %vm1451, %v5906, 0.0
        %5998 = vadd.xlane.f32.xlu0 %v5997
        %v5999 = vpop.xlane.xlu0 %5998
        %v6000 = vsel %vm1451, %v5908, 0.0
        %6001 = vadd.xlane.f32.xlu0 %v6000
        %v6002 = vpop.xlane.xlu0 %6001
        %v6003 = vsel %vm1451, %v5910, 0.0
        %6004 = vadd.xlane.f32.xlu0 %v6003
        %v6005 = vpop.xlane.xlu0 %6004
        %v6006 = vsel %vm1451, %v5912, 0.0
        %6007 = vadd.xlane.f32.xlu0 %v6006
        %v6008 = vpop.xlane.xlu0 %6007
        %v6009 = vrcp.pop %v5915
        %v6010 = vmul.f32 %v5850, %v6009
        %v6011 = vrcp.pop %v5918
        %v6012 = vmul.f32 %v5852, %v6011
        %v6013 = vrcp.pop %v5921
        %v6014 = vmul.f32 %v5854, %v6013
        %v6015 = vrcp.pop %v5924
        %v6016 = vmul.f32 %v5856, %v6015
        %v6017 = vrcp.pop %v5927
        %v6018 = vmul.f32 %v5858, %v6017
        %v6019 = vrcp.pop %v5930
        %v6020 = vmul.f32 %v5860, %v6019
        %v6021 = vrcp.pop %v5933
        %v6022 = vmul.f32 %v5862, %v6021
        %v6023 = vrcp.pop %v5936
        %v6024 = vmul.f32 %v5864, %v6023
        %v6025 = vrcp.pop %v5939
        %v6026 = vmul.f32 %v5866, %v6025
        %v6027 = vrcp.pop %v5942
        %v6028 = vmul.f32 %v5868, %v6027
        %v6029 = vrcp.pop %v5945
        %v6030 = vmul.f32 %v5870, %v6029
        %v6031 = vrcp.pop %v5948
        %v6032 = vmul.f32 %v5872, %v6031
        %v6033 = vrcp.pop %v5951
        %v6034 = vmul.f32 %v5874, %v6033
        %v6035 = vrcp.pop %v5954
        %v6036 = vmul.f32 %v5876, %v6035
        %v6037 = vrcp.pop %v5957
        %v6038 = vmul.f32 %v5878, %v6037
        %v6039 = vrcp.pop %v5960
        %v6040 = vmul.f32 %v5880, %v6039
        %v6041 = vrcp.pop %v5963
        %v6042 = vmul.f32 %v5882, %v6041
        %v6043 = vrcp.pop %v5966
        %v6044 = vmul.f32 %v5884, %v6043
        %v6045 = vrcp.pop %v5969
        %v6046 = vmul.f32 %v5886, %v6045
        %v6047 = vrcp.pop %v5972
        %v6048 = vmul.f32 %v5888, %v6047
        %v6049 = vrcp.pop %v5975
        %v6050 = vmul.f32 %v5890, %v6049
        %v6051 = vrcp.pop %v5978
        %v6052 = vmul.f32 %v5892, %v6051
        %v6053 = vrcp.pop %v5981
        %v6054 = vmul.f32 %v5894, %v6053
        %v6055 = vrcp.pop %v5984
        %v6056 = vmul.f32 %v5896, %v6055
        %v6057 = vrcp.pop %v5987
        %v6058 = vmul.f32 %v5898, %v6057
        %v6059 = vrcp.pop %v5990
        %v6060 = vmul.f32 %v5900, %v6059
        %v6061 = vrcp.pop %v5993
        %v6062 = vmul.f32 %v5902, %v6061
        %v6063 = vrcp.pop %v5996
        %v6064 = vmul.f32 %v5904, %v6063
        %v6065 = vrcp.pop %v5999
        %v6066 = vmul.f32 %v5906, %v6065
        %v6067 = vrcp.pop %v6002
        %v6068 = vmul.f32 %v5908, %v6067
        %v6069 = vrcp.pop %v6005
        %v6070 = vmul.f32 %v5910, %v6069
        %v6071 = vrcp.pop %v6008
        %v6072 = vmul.f32 %v5912, %v6071
        %6073 = vrot.lane.b32.xlu0 %v1088, 122
        %v6074 = vpop.permute.xlu0 %6073
        %v6076 = vsel %vm1451, %v6010, 0
        %v6079 = vsel %vm1451, %v6012, 0
        %v6082 = vsel %vm1451, %v6014, 0
        %v6085 = vsel %vm1451, %v6016, 0
        %v6088 = vsel %vm1451, %v6018, 0
        %v6091 = vsel %vm1451, %v6020, 0
        %v6094 = vsel %vm1451, %v6022, 0
        %v6097 = vsel %vm1451, %v6024, 0
        %v6100 = vsel %vm1451, %v6026, 0
        %v6103 = vsel %vm1451, %v6028, 0
        %v6106 = vsel %vm1451, %v6030, 0
        %v6109 = vsel %vm1451, %v6032, 0
        %v6112 = vsel %vm1451, %v6034, 0
        %v6115 = vsel %vm1451, %v6036, 0
        %v6118 = vsel %vm1451, %v6038, 0
        %v6121 = vsel %vm1451, %v6040, 0
        %v6124 = vsel %vm1451, %v6042, 0
        %v6127 = vsel %vm1451, %v6044, 0
        %v6130 = vsel %vm1451, %v6046, 0
        %v6133 = vsel %vm1451, %v6048, 0
        %v6136 = vsel %vm1451, %v6050, 0
        %v6139 = vsel %vm1451, %v6052, 0
        %v6142 = vsel %vm1451, %v6054, 0
        %v6145 = vsel %vm1451, %v6056, 0
        %v6148 = vsel %vm1451, %v6058, 0
        %v6151 = vsel %vm1451, %v6060, 0
        %v6154 = vsel %vm1451, %v6062, 0
        %v6157 = vsel %vm1451, %v6064, 0
        %v6160 = vsel %vm1451, %v6066, 0
        %v6163 = vsel %vm1451, %v6068, 0
        %v6166 = vsel %vm1451, %v6070, 0
        %v6169 = vsel %vm1451, %v6072, 0
        %v6171 = vsel %vm1900, %v6074, 0
        %6173 = vmatprep.subr.mxu0 0.0
        %6174 = vmatpush1.msra.mxu0 %v6171
        %6175 = vmatprep.subr.mxu0 0.0
        %6176 = vmatpush1.msra.mxu0 0.0
        %6177 = vmatprep.subr.mxu0 0.0
        %6178 = vmatpush1.msra.mxu0 0.0
        %6179 = vmatprep.subr.mxu0 0.0
        %6180 = vmatpush1.msra.mxu0 0.0
        %6181 = vmatprep.subr.mxu0 0.0
        %6182 = vmatpush1.msra.mxu0 0.0
        %6183 = vmatprep.subr.mxu0 0.0
        %6184 = vmatpush1.msra.mxu0 0.0
        %6185 = vmatprep.subr.mxu0 0.0
        %6186 = vmatpush1.msra.mxu0 0.0
        %6187 = vmatprep.subr.mxu0 0.0
        %6188 = vmatpush1.msra.mxu0 0.0
        %6189 = vmatprep.subr.mxu0 0.0
        %6190 = vmatpush1.msra.mxu0 0.0
        %6191 = vmatprep.subr.mxu0 0.0
        %6192 = vmatpush1.msra.mxu0 0.0
        %6193 = vmatprep.subr.mxu0 0.0
        %6194 = vmatpush1.msra.mxu0 0.0
        %6195 = vmatprep.subr.mxu0 0.0
        %6196 = vmatpush1.msra.mxu0 0.0
        %6197 = vmatprep.subr.mxu0 0.0
        %6198 = vmatpush1.msra.mxu0 0.0
        %6199 = vmatprep.subr.mxu0 0.0
        %6200 = vmatpush1.msra.mxu0 0.0
        %6201 = vmatprep.subr.mxu0 0.0
        %6202 = vmatpush1.msra.mxu0 0.0
        %6203 = vmatprep.subr.mxu0 0.0
        %6204 = vmatpush1.msra.mxu0 0.0
        %6205 = vmatprep.subr.mxu0 0.0
        %6206 = vmatpush1.msra.mxu0 0.0
        %6207 = vmatprep.subr.mxu0 0.0
        %6208 = vmatpush1.msra.mxu0 0.0
        %6209 = vmatprep.subr.mxu0 0.0
        %6210 = vmatpush1.msra.mxu0 0.0
        %6211 = vmatprep.subr.mxu0 0.0
        %6212 = vmatpush1.msra.mxu0 0.0
        %6213 = vmatprep.subr.mxu0 0.0
        %6214 = vmatpush1.msra.mxu0 0.0
        %6215 = vmatprep.subr.mxu0 0.0
        %6216 = vmatpush1.msra.mxu0 0.0
        %6217 = vmatprep.subr.mxu0 0.0
        %6218 = vmatpush1.msra.mxu0 0.0
        %6219 = vmatprep.subr.mxu0 0.0
        %6220 = vmatpush1.msra.mxu0 0.0
        %6221 = vmatprep.subr.mxu0 0.0
        %6222 = vmatpush1.msra.mxu0 0.0
        %6223 = vmatprep.subr.mxu0 0.0
        %6224 = vmatpush1.msra.mxu0 0.0
        %6225 = vmatprep.subr.mxu0 0.0
        %6226 = vmatpush1.msra.mxu0 0.0
        %6227 = vmatprep.subr.mxu0 0.0
        %6228 = vmatpush1.msra.mxu0 0.0
        %6229 = vmatprep.subr.mxu0 0.0
        %6230 = vmatpush1.msra.mxu0 0.0
        %6231 = vmatprep.subr.mxu0 0.0
        %6232 = vmatpush1.msra.mxu0 0.0
        %6233 = vmatprep.subr.mxu0 0.0
        %6234 = vmatpush1.msra.mxu0 0.0
        %6235 = vmatprep.subr.mxu0 0.0
        %6236 = vmatpush1.msra.mxu0 0.0
        %6237 = vmatprep.mubr.f32.mxu0 0.0
        %6238 = vmatmul.mubr.f32.gmra.mrb[0].mxu0 %v6076
        %v6239 = vpop.f32.mrb[0].mxu0
        %v6240 = vadd.f32 0.0, %v6239
        %v6241 = vpop.f32.mrb[0].mxu0
        %6242 = vmatprep.mubr.f32.mxu0 0.0
        %6243 = vmatmul.mubr.f32.gmra.mrb[0].mxu0 %v6079
        %v6244 = vpop.f32.mrb[0].mxu0
        %v6245 = vadd.f32 0.0, %v6244
        %v6246 = vpop.f32.mrb[0].mxu0
        %6247 = vmatprep.mubr.f32.mxu0 0.0
        %6248 = vmatmul.mubr.f32.gmra.mrb[0].mxu0 %v6082
        %v6249 = vpop.f32.mrb[0].mxu0
        %v6250 = vadd.f32 0.0, %v6249
        %v6251 = vpop.f32.mrb[0].mxu0
        %6252 = vmatprep.mubr.f32.mxu0 0.0
        %6253 = vmatmul.mubr.f32.gmra.mrb[0].mxu0 %v6085
        %v6254 = vpop.f32.mrb[0].mxu0
        %v6255 = vadd.f32 0.0, %v6254
        %v6256 = vpop.f32.mrb[0].mxu0
        %6257 = vmatprep.mubr.f32.mxu0 0.0
        %6258 = vmatmul.mubr.f32.gmra.mrb[0].mxu0 %v6088
        %v6259 = vpop.f32.mrb[0].mxu0
        %v6260 = vadd.f32 0.0, %v6259
        %v6261 = vpop.f32.mrb[0].mxu0
        %6262 = vmatprep.mubr.f32.mxu0 0.0
        %6263 = vmatmul.mubr.f32.gmra.mrb[0].mxu0 %v6091
        %v6264 = vpop.f32.mrb[0].mxu0
        %v6265 = vadd.f32 0.0, %v6264
        %v6266 = vpop.f32.mrb[0].mxu0
        %6267 = vmatprep.mubr.f32.mxu0 0.0
        %6268 = vmatmul.mubr.f32.gmra.mrb[0].mxu0 %v6094
        %v6269 = vpop.f32.mrb[0].mxu0
        %v6270 = vadd.f32 0.0, %v6269
        %v6271 = vpop.f32.mrb[0].mxu0
        %6272 = vmatprep.mubr.f32.mxu0 0.0
        %6273 = vmatmul.mubr.f32.gmra.mrb[0].mxu0 %v6097
        %v6274 = vpop.f32.mrb[0].mxu0
        %v6275 = vadd.f32 0.0, %v6274
        %v6276 = vpop.f32.mrb[0].mxu0
        %6277 = vmatprep.mubr.f32.mxu0 0.0
        %6278 = vmatmul.mubr.f32.gmra.mrb[0].mxu0 %v6100
        %v6279 = vpop.f32.mrb[0].mxu0
        %v6280 = vadd.f32 0.0, %v6279
        %v6281 = vpop.f32.mrb[0].mxu0
        %6282 = vmatprep.mubr.f32.mxu0 0.0
        %6283 = vmatmul.mubr.f32.gmra.mrb[0].mxu0 %v6103
        %v6284 = vpop.f32.mrb[0].mxu0
        %v6285 = vadd.f32 0.0, %v6284
        %v6286 = vpop.f32.mrb[0].mxu0
        %6287 = vmatprep.mubr.f32.mxu0 0.0
        %6288 = vmatmul.mubr.f32.gmra.mrb[0].mxu0 %v6106
        %v6289 = vpop.f32.mrb[0].mxu0
        %v6290 = vadd.f32 0.0, %v6289
        %v6291 = vpop.f32.mrb[0].mxu0
        %6292 = vmatprep.mubr.f32.mxu0 0.0
        %6293 = vmatmul.mubr.f32.gmra.mrb[0].mxu0 %v6109
        %v6294 = vpop.f32.mrb[0].mxu0
        %v6295 = vadd.f32 0.0, %v6294
        %v6296 = vpop.f32.mrb[0].mxu0
        %6297 = vmatprep.mubr.f32.mxu0 0.0
        %6298 = vmatmul.mubr.f32.gmra.mrb[0].mxu0 %v6112
        %v6299 = vpop.f32.mrb[0].mxu0
        %v6300 = vadd.f32 0.0, %v6299
        %v6301 = vpop.f32.mrb[0].mxu0
        %6302 = vmatprep.mubr.f32.mxu0 0.0
        %6303 = vmatmul.mubr.f32.gmra.mrb[0].mxu0 %v6115
        %v6304 = vpop.f32.mrb[0].mxu0
        %v6305 = vadd.f32 0.0, %v6304
        %v6306 = vpop.f32.mrb[0].mxu0
        %6307 = vmatprep.mubr.f32.mxu0 0.0
        %6308 = vmatmul.mubr.f32.gmra.mrb[0].mxu0 %v6118
        %v6309 = vpop.f32.mrb[0].mxu0
        %v6310 = vadd.f32 0.0, %v6309
        %v6311 = vpop.f32.mrb[0].mxu0
        %6312 = vmatprep.mubr.f32.mxu0 0.0
        %6313 = vmatmul.mubr.f32.gmra.mrb[0].mxu0 %v6121
        %v6314 = vpop.f32.mrb[0].mxu0
        %v6315 = vadd.f32 0.0, %v6314
        %v6316 = vpop.f32.mrb[0].mxu0
        %6317 = vmatprep.mubr.f32.mxu0 0.0
        %6318 = vmatmul.mubr.f32.gmra.mrb[0].mxu0 %v6124
        %v6319 = vpop.f32.mrb[0].mxu0
        %v6320 = vadd.f32 0.0, %v6319
        %v6321 = vpop.f32.mrb[0].mxu0
        %6322 = vmatprep.mubr.f32.mxu0 0.0
        %6323 = vmatmul.mubr.f32.gmra.mrb[0].mxu0 %v6127
        %v6324 = vpop.f32.mrb[0].mxu0
        %v6325 = vadd.f32 0.0, %v6324
        %v6326 = vpop.f32.mrb[0].mxu0
        %6327 = vmatprep.mubr.f32.mxu0 0.0
        %6328 = vmatmul.mubr.f32.gmra.mrb[0].mxu0 %v6130
        %v6329 = vpop.f32.mrb[0].mxu0
        %v6330 = vadd.f32 0.0, %v6329
        %v6331 = vpop.f32.mrb[0].mxu0
        %6332 = vmatprep.mubr.f32.mxu0 0.0
        %6333 = vmatmul.mubr.f32.gmra.mrb[0].mxu0 %v6133
        %v6334 = vpop.f32.mrb[0].mxu0
        %v6335 = vadd.f32 0.0, %v6334
        %v6336 = vpop.f32.mrb[0].mxu0
        %6337 = vmatprep.mubr.f32.mxu0 0.0
        %6338 = vmatmul.mubr.f32.gmra.mrb[0].mxu0 %v6136
        %v6339 = vpop.f32.mrb[0].mxu0
        %v6340 = vadd.f32 0.0, %v6339
        %v6341 = vpop.f32.mrb[0].mxu0
        %6342 = vmatprep.mubr.f32.mxu0 0.0
        %6343 = vmatmul.mubr.f32.gmra.mrb[0].mxu0 %v6139
        %v6344 = vpop.f32.mrb[0].mxu0
        %v6345 = vadd.f32 0.0, %v6344
        %v6346 = vpop.f32.mrb[0].mxu0
        %6347 = vmatprep.mubr.f32.mxu0 0.0
        %6348 = vmatmul.mubr.f32.gmra.mrb[0].mxu0 %v6142
        %v6349 = vpop.f32.mrb[0].mxu0
        %v6350 = vadd.f32 0.0, %v6349
        %v6351 = vpop.f32.mrb[0].mxu0
        %6352 = vmatprep.mubr.f32.mxu0 0.0
        %6353 = vmatmul.mubr.f32.gmra.mrb[0].mxu0 %v6145
        %v6354 = vpop.f32.mrb[0].mxu0
        %v6355 = vadd.f32 0.0, %v6354
        %v6356 = vpop.f32.mrb[0].mxu0
        %6357 = vmatprep.mubr.f32.mxu0 0.0
        %6358 = vmatmul.mubr.f32.gmra.mrb[0].mxu0 %v6148
        %v6359 = vpop.f32.mrb[0].mxu0
        %v6360 = vadd.f32 0.0, %v6359
        %v6361 = vpop.f32.mrb[0].mxu0
        %6362 = vmatprep.mubr.f32.mxu0 0.0
        %6363 = vmatmul.mubr.f32.gmra.mrb[0].mxu0 %v6151
        %v6364 = vpop.f32.mrb[0].mxu0
        %v6365 = vadd.f32 0.0, %v6364
        %v6366 = vpop.f32.mrb[0].mxu0
        %6367 = vmatprep.mubr.f32.mxu0 0.0
        %6368 = vmatmul.mubr.f32.gmra.mrb[0].mxu0 %v6154
        %v6369 = vpop.f32.mrb[0].mxu0
        %v6370 = vadd.f32 0.0, %v6369
        %v6371 = vpop.f32.mrb[0].mxu0
        %6372 = vmatprep.mubr.f32.mxu0 0.0
        %6373 = vmatmul.mubr.f32.gmra.mrb[0].mxu0 %v6157
        %v6374 = vpop.f32.mrb[0].mxu0
        %v6375 = vadd.f32 0.0, %v6374
        %v6376 = vpop.f32.mrb[0].mxu0
        %6377 = vmatprep.mubr.f32.mxu0 0.0
        %6378 = vmatmul.mubr.f32.gmra.mrb[0].mxu0 %v6160
        %v6379 = vpop.f32.mrb[0].mxu0
        %v6380 = vadd.f32 0.0, %v6379
        %v6381 = vpop.f32.mrb[0].mxu0
        %6382 = vmatprep.mubr.f32.mxu0 0.0
        %6383 = vmatmul.mubr.f32.gmra.mrb[0].mxu0 %v6163
        %v6384 = vpop.f32.mrb[0].mxu0
        %v6385 = vadd.f32 0.0, %v6384
        %v6386 = vpop.f32.mrb[0].mxu0
        %6387 = vmatprep.mubr.f32.mxu0 0.0
        %6388 = vmatmul.mubr.f32.gmra.mrb[0].mxu0 %v6166
        %v6389 = vpop.f32.mrb[0].mxu0
        %v6390 = vadd.f32 0.0, %v6389
        %v6391 = vpop.f32.mrb[0].mxu0
        %6392 = vmatprep.mubr.f32.mxu0 0.0
        %6393 = vmatmul.mubr.f32.gmra.mrb[0].mxu0 %v6169
        %v6394 = vpop.f32.mrb[0].mxu0
        %v6395 = vadd.f32 0.0, %v6394
        %v6396 = vpop.f32.mrb[0].mxu0
        %6397 = vdwg.mxu0
        %v6398 = vrot.slane %v1091, 6
        %v6400 = vsel %vm1093, %v6240, 0
        %v6403 = vsel %vm1093, %v6245, 0
        %v6406 = vsel %vm1093, %v6250, 0
        %v6409 = vsel %vm1093, %v6255, 0
        %v6412 = vsel %vm1093, %v6260, 0
        %v6415 = vsel %vm1093, %v6265, 0
        %v6418 = vsel %vm1093, %v6270, 0
        %v6421 = vsel %vm1093, %v6275, 0
        %v6424 = vsel %vm1093, %v6280, 0
        %v6427 = vsel %vm1093, %v6285, 0
        %v6430 = vsel %vm1093, %v6290, 0
        %v6433 = vsel %vm1093, %v6295, 0
        %v6436 = vsel %vm1093, %v6300, 0
        %v6439 = vsel %vm1093, %v6305, 0
        %v6442 = vsel %vm1093, %v6310, 0
        %v6445 = vsel %vm1093, %v6315, 0
        %v6448 = vsel %vm1093, %v6320, 0
        %v6451 = vsel %vm1093, %v6325, 0
        %v6454 = vsel %vm1093, %v6330, 0
        %v6457 = vsel %vm1093, %v6335, 0
        %v6460 = vsel %vm1093, %v6340, 0
        %v6463 = vsel %vm1093, %v6345, 0
        %v6466 = vsel %vm1093, %v6350, 0
        %v6469 = vsel %vm1093, %v6355, 0
        %v6472 = vsel %vm1093, %v6360, 0
        %v6475 = vsel %vm1093, %v6365, 0
        %v6478 = vsel %vm1093, %v6370, 0
        %v6481 = vsel %vm1093, %v6375, 0
        %v6484 = vsel %vm1093, %v6380, 0
        %v6487 = vsel %vm1093, %v6385, 0
        %v6490 = vsel %vm1093, %v6390, 0
        %v6493 = vsel %vm1093, %v6395, 0
        %v6495 = vsel %vm1190, %v6398, 0
        %6497 = vmatprep.subr.mxu0 0.0
        %6498 = vmatpush1.msra.mxu0 %v6495
        %6499 = vmatprep.subr.mxu0 0.0
        %6500 = vmatpush1.msra.mxu0 0.0
        %6501 = vmatprep.subr.mxu0 0.0
        %6502 = vmatpush1.msra.mxu0 0.0
        %6503 = vmatprep.subr.mxu0 0.0
        %6504 = vmatpush1.msra.mxu0 0.0
        %6505 = vmatprep.subr.mxu0 0.0
        %6506 = vmatpush1.msra.mxu0 0.0
        %6507 = vmatprep.subr.mxu0 0.0
        %6508 = vmatpush1.msra.mxu0 0.0
        %6509 = vmatprep.subr.mxu0 0.0
        %6510 = vmatpush1.msra.mxu0 0.0
        %6511 = vmatprep.subr.mxu0 0.0
        %6512 = vmatpush1.msra.mxu0 0.0
        %6513 = vmatprep.subr.mxu0 0.0
        %6514 = vmatpush1.msra.mxu0 0.0
        %6515 = vmatprep.subr.mxu0 0.0
        %6516 = vmatpush1.msra.mxu0 0.0
        %6517 = vmatprep.subr.mxu0 0.0
        %6518 = vmatpush1.msra.mxu0 0.0
        %6519 = vmatprep.subr.mxu0 0.0
        %6520 = vmatpush1.msra.mxu0 0.0
        %6521 = vmatprep.subr.mxu0 0.0
        %6522 = vmatpush1.msra.mxu0 0.0
        %6523 = vmatprep.subr.mxu0 0.0
        %6524 = vmatpush1.msra.mxu0 0.0
        %6525 = vmatprep.subr.mxu0 0.0
        %6526 = vmatpush1.msra.mxu0 0.0
        %6527 = vmatprep.subr.mxu0 0.0
        %6528 = vmatpush1.msra.mxu0 0.0
        %6529 = vmatprep.subr.mxu0 0.0
        %6530 = vmatpush1.msra.mxu0 0.0
        %6531 = vmatprep.subr.mxu0 0.0
        %6532 = vmatpush1.msra.mxu0 0.0
        %6533 = vmatprep.subr.mxu0 0.0
        %6534 = vmatpush1.msra.mxu0 0.0
        %6535 = vmatprep.subr.mxu0 0.0
        %6536 = vmatpush1.msra.mxu0 0.0
        %6537 = vmatprep.subr.mxu0 0.0
        %6538 = vmatpush1.msra.mxu0 0.0
        %6539 = vmatprep.subr.mxu0 0.0
        %6540 = vmatpush1.msra.mxu0 0.0
        %6541 = vmatprep.subr.mxu0 0.0
        %6542 = vmatpush1.msra.mxu0 0.0
        %6543 = vmatprep.subr.mxu0 0.0
        %6544 = vmatpush1.msra.mxu0 0.0
        %6545 = vmatprep.subr.mxu0 0.0
        %6546 = vmatpush1.msra.mxu0 0.0
        %6547 = vmatprep.subr.mxu0 0.0
        %6548 = vmatpush1.msra.mxu0 0.0
        %6549 = vmatprep.subr.mxu0 0.0
        %6550 = vmatpush1.msra.mxu0 0.0
        %6551 = vmatprep.subr.mxu0 0.0
        %6552 = vmatpush1.msra.mxu0 0.0
        %6553 = vmatprep.subr.mxu0 0.0
        %6554 = vmatpush1.msra.mxu0 0.0
        %6555 = vmatprep.subr.mxu0 0.0
        %6556 = vmatpush1.msra.mxu0 0.0
        %6557 = vmatprep.subr.mxu0 0.0
        %6558 = vmatpush1.msra.mxu0 0.0
        %6559 = vmatprep.subr.mxu0 0.0
        %6560 = vmatpush1.msra.mxu0 0.0
        %6561 = vmatprep.mubr.f32.mxu0 0.0
        %6562 = vmatmul.mubr.f32.gmra.mrb[0].mxu0 %v6400
        %v6563 = vpop.f32.mrb[0].mxu0
        %v6564 = vadd.f32 0.0, %v6563
        %v6565 = vpop.f32.mrb[0].mxu0
        %6566 = vmatprep.mubr.f32.mxu0 0.0
        %6567 = vmatmul.mubr.f32.gmra.mrb[0].mxu0 %v6403
        %v6568 = vpop.f32.mrb[0].mxu0
        %v6569 = vadd.f32 0.0, %v6568
        %v6570 = vpop.f32.mrb[0].mxu0
        %6571 = vmatprep.mubr.f32.mxu0 0.0
        %6572 = vmatmul.mubr.f32.gmra.mrb[0].mxu0 %v6406
        %v6573 = vpop.f32.mrb[0].mxu0
        %v6574 = vadd.f32 0.0, %v6573
        %v6575 = vpop.f32.mrb[0].mxu0
        %6576 = vmatprep.mubr.f32.mxu0 0.0
        %6577 = vmatmul.mubr.f32.gmra.mrb[0].mxu0 %v6409
        %v6578 = vpop.f32.mrb[0].mxu0
        %v6579 = vadd.f32 0.0, %v6578
        %v6580 = vpop.f32.mrb[0].mxu0
        %6581 = vmatprep.mubr.f32.mxu0 0.0
        %6582 = vmatmul.mubr.f32.gmra.mrb[0].mxu0 %v6412
        %v6583 = vpop.f32.mrb[0].mxu0
        %v6584 = vadd.f32 0.0, %v6583
        %v6585 = vpop.f32.mrb[0].mxu0
        %6586 = vmatprep.mubr.f32.mxu0 0.0
        %6587 = vmatmul.mubr.f32.gmra.mrb[0].mxu0 %v6415
        %v6588 = vpop.f32.mrb[0].mxu0
        %v6589 = vadd.f32 0.0, %v6588
        %v6590 = vpop.f32.mrb[0].mxu0
        %6591 = vmatprep.mubr.f32.mxu0 0.0
        %6592 = vmatmul.mubr.f32.gmra.mrb[0].mxu0 %v6418
        %v6593 = vpop.f32.mrb[0].mxu0
        %v6594 = vadd.f32 0.0, %v6593
        %v6595 = vpop.f32.mrb[0].mxu0
        %6596 = vmatprep.mubr.f32.mxu0 0.0
        %6597 = vmatmul.mubr.f32.gmra.mrb[0].mxu0 %v6421
        %v6598 = vpop.f32.mrb[0].mxu0
        %v6599 = vadd.f32 0.0, %v6598
        %v6600 = vpop.f32.mrb[0].mxu0
        %6601 = vmatprep.mubr.f32.mxu0 0.0
        %6602 = vmatmul.mubr.f32.gmra.mrb[0].mxu0 %v6424
        %v6603 = vpop.f32.mrb[0].mxu0
        %v6604 = vadd.f32 0.0, %v6603
        %v6605 = vpop.f32.mrb[0].mxu0
        %6606 = vmatprep.mubr.f32.mxu0 0.0
        %6607 = vmatmul.mubr.f32.gmra.mrb[0].mxu0 %v6427
        %v6608 = vpop.f32.mrb[0].mxu0
        %v6609 = vadd.f32 0.0, %v6608
        %v6610 = vpop.f32.mrb[0].mxu0
        %6611 = vmatprep.mubr.f32.mxu0 0.0
        %6612 = vmatmul.mubr.f32.gmra.mrb[0].mxu0 %v6430
        %v6613 = vpop.f32.mrb[0].mxu0
        %v6614 = vadd.f32 0.0, %v6613
        %v6615 = vpop.f32.mrb[0].mxu0
        %6616 = vmatprep.mubr.f32.mxu0 0.0
        %6617 = vmatmul.mubr.f32.gmra.mrb[0].mxu0 %v6433
        %v6618 = vpop.f32.mrb[0].mxu0
        %v6619 = vadd.f32 0.0, %v6618
        %v6620 = vpop.f32.mrb[0].mxu0
        %6621 = vmatprep.mubr.f32.mxu0 0.0
        %6622 = vmatmul.mubr.f32.gmra.mrb[0].mxu0 %v6436
        %v6623 = vpop.f32.mrb[0].mxu0
        %v6624 = vadd.f32 0.0, %v6623
        %v6625 = vpop.f32.mrb[0].mxu0
        %6626 = vmatprep.mubr.f32.mxu0 0.0
        %6627 = vmatmul.mubr.f32.gmra.mrb[0].mxu0 %v6439
        %v6628 = vpop.f32.mrb[0].mxu0
        %v6629 = vadd.f32 0.0, %v6628
        %v6630 = vpop.f32.mrb[0].mxu0
        %6631 = vmatprep.mubr.f32.mxu0 0.0
        %6632 = vmatmul.mubr.f32.gmra.mrb[0].mxu0 %v6442
        %v6633 = vpop.f32.mrb[0].mxu0
        %v6634 = vadd.f32 0.0, %v6633
        %v6635 = vpop.f32.mrb[0].mxu0
        %6636 = vmatprep.mubr.f32.mxu0 0.0
        %6637 = vmatmul.mubr.f32.gmra.mrb[0].mxu0 %v6445
        %v6638 = vpop.f32.mrb[0].mxu0
        %v6639 = vadd.f32 0.0, %v6638
        %v6640 = vpop.f32.mrb[0].mxu0
        %6641 = vmatprep.mubr.f32.mxu0 0.0
        %6642 = vmatmul.mubr.f32.gmra.mrb[0].mxu0 %v6448
        %v6643 = vpop.f32.mrb[0].mxu0
        %v6644 = vadd.f32 0.0, %v6643
        %v6645 = vpop.f32.mrb[0].mxu0
        %6646 = vmatprep.mubr.f32.mxu0 0.0
        %6647 = vmatmul.mubr.f32.gmra.mrb[0].mxu0 %v6451
        %v6648 = vpop.f32.mrb[0].mxu0
        %v6649 = vadd.f32 0.0, %v6648
        %v6650 = vpop.f32.mrb[0].mxu0
        %6651 = vmatprep.mubr.f32.mxu0 0.0
        %6652 = vmatmul.mubr.f32.gmra.mrb[0].mxu0 %v6454
        %v6653 = vpop.f32.mrb[0].mxu0
        %v6654 = vadd.f32 0.0, %v6653
        %v6655 = vpop.f32.mrb[0].mxu0
        %6656 = vmatprep.mubr.f32.mxu0 0.0
        %6657 = vmatmul.mubr.f32.gmra.mrb[0].mxu0 %v6457
        %v6658 = vpop.f32.mrb[0].mxu0
        %v6659 = vadd.f32 0.0, %v6658
        %v6660 = vpop.f32.mrb[0].mxu0
        %6661 = vmatprep.mubr.f32.mxu0 0.0
        %6662 = vmatmul.mubr.f32.gmra.mrb[0].mxu0 %v6460
        %v6663 = vpop.f32.mrb[0].mxu0
        %v6664 = vadd.f32 0.0, %v6663
        %v6665 = vpop.f32.mrb[0].mxu0
        %6666 = vmatprep.mubr.f32.mxu0 0.0
        %6667 = vmatmul.mubr.f32.gmra.mrb[0].mxu0 %v6463
        %v6668 = vpop.f32.mrb[0].mxu0
        %v6669 = vadd.f32 0.0, %v6668
        %v6670 = vpop.f32.mrb[0].mxu0
        %6671 = vmatprep.mubr.f32.mxu0 0.0
        %6672 = vmatmul.mubr.f32.gmra.mrb[0].mxu0 %v6466
        %v6673 = vpop.f32.mrb[0].mxu0
        %v6674 = vadd.f32 0.0, %v6673
        %v6675 = vpop.f32.mrb[0].mxu0
        %6676 = vmatprep.mubr.f32.mxu0 0.0
        %6677 = vmatmul.mubr.f32.gmra.mrb[0].mxu0 %v6469
        %v6678 = vpop.f32.mrb[0].mxu0
        %v6679 = vadd.f32 0.0, %v6678
        %v6680 = vpop.f32.mrb[0].mxu0
        %6681 = vmatprep.mubr.f32.mxu0 0.0
        %6682 = vmatmul.mubr.f32.gmra.mrb[0].mxu0 %v6472
        %v6683 = vpop.f32.mrb[0].mxu0
        %v6684 = vadd.f32 0.0, %v6683
        %v6685 = vpop.f32.mrb[0].mxu0
        %6686 = vmatprep.mubr.f32.mxu0 0.0
        %6687 = vmatmul.mubr.f32.gmra.mrb[0].mxu0 %v6475
        %v6688 = vpop.f32.mrb[0].mxu0
        %v6689 = vadd.f32 0.0, %v6688
        %v6690 = vpop.f32.mrb[0].mxu0
        %6691 = vmatprep.mubr.f32.mxu0 0.0
        %6692 = vmatmul.mubr.f32.gmra.mrb[0].mxu0 %v6478
        %v6693 = vpop.f32.mrb[0].mxu0
        %v6694 = vadd.f32 0.0, %v6693
        %v6695 = vpop.f32.mrb[0].mxu0
        %6696 = vmatprep.mubr.f32.mxu0 0.0
        %6697 = vmatmul.mubr.f32.gmra.mrb[0].mxu0 %v6481
        %v6698 = vpop.f32.mrb[0].mxu0
        %v6699 = vadd.f32 0.0, %v6698
        %v6700 = vpop.f32.mrb[0].mxu0
        %6701 = vmatprep.mubr.f32.mxu0 0.0
        %6702 = vmatmul.mubr.f32.gmra.mrb[0].mxu0 %v6484
        %v6703 = vpop.f32.mrb[0].mxu0
        %v6704 = vadd.f32 0.0, %v6703
        %v6705 = vpop.f32.mrb[0].mxu0
        %6706 = vmatprep.mubr.f32.mxu0 0.0
        %6707 = vmatmul.mubr.f32.gmra.mrb[0].mxu0 %v6487
        %v6708 = vpop.f32.mrb[0].mxu0
        %v6709 = vadd.f32 0.0, %v6708
        %v6710 = vpop.f32.mrb[0].mxu0
        %6711 = vmatprep.mubr.f32.mxu0 0.0
        %6712 = vmatmul.mubr.f32.gmra.mrb[0].mxu0 %v6490
        %v6713 = vpop.f32.mrb[0].mxu0
        %v6714 = vadd.f32 0.0, %v6713
        %v6715 = vpop.f32.mrb[0].mxu0
        %6716 = vmatprep.mubr.f32.mxu0 0.0
        %6717 = vmatmul.mubr.f32.gmra.mrb[0].mxu0 %v6493
        %v6718 = vpop.f32.mrb[0].mxu0
        %v6719 = vadd.f32 0.0, %v6718
        %v6720 = vpop.f32.mrb[0].mxu0
        %6721 = vdwg.mxu0
        %v6722 = vadd.f32 %v5301, %v6564
        %v6723 = vadd.f32 %v5302, %v6569
        %v6724 = vadd.f32 %v5303, %v6574
        %v6725 = vadd.f32 %v5304, %v6579
        %v6726 = vadd.f32 %v5305, %v6584
        %v6727 = vadd.f32 %v5306, %v6589
        %v6728 = vadd.f32 %v5307, %v6594
        %v6729 = vadd.f32 %v5308, %v6599
        %v6730 = vadd.f32 %v5309, %v6604
        %v6731 = vadd.f32 %v5310, %v6609
        %v6732 = vadd.f32 %v5311, %v6614
        %v6733 = vadd.f32 %v5312, %v6619
        %v6734 = vadd.f32 %v5313, %v6624
        %v6735 = vadd.f32 %v5314, %v6629
        %v6736 = vadd.f32 %v5315, %v6634
        %v6737 = vadd.f32 %v5316, %v6639
        %v6738 = vadd.f32 %v5317, %v6644
        %v6739 = vadd.f32 %v5318, %v6649
        %v6740 = vadd.f32 %v5319, %v6654
        %v6741 = vadd.f32 %v5320, %v6659
        %v6742 = vadd.f32 %v5321, %v6664
        %v6743 = vadd.f32 %v5322, %v6669
        %v6744 = vadd.f32 %v5323, %v6674
        %v6745 = vadd.f32 %v5324, %v6679
        %v6746 = vadd.f32 %v5325, %v6684
        %v6747 = vadd.f32 %v5326, %v6689
        %v6748 = vadd.f32 %v5327, %v6694
        %v6749 = vadd.f32 %v5328, %v6699
        %v6750 = vadd.f32 %v5329, %v6704
        %v6751 = vadd.f32 %v5330, %v6709
        %v6752 = vadd.f32 %v5331, %v6714
        %v6753 = vadd.f32 %v5332, %v6719
        %6754 = vxpose.xlu0.b32.start [1/16] %v6722, 128
        %6755 = vxpose.xlu0.b32.cont [2/16] %v6723, 128
        %6756 = vxpose.xlu0.b32.cont [3/16] %v6724, 128
        %6757 = vxpose.xlu0.b32.cont [4/16] %v6725, 128
        %6758 = vxpose.xlu0.b32.cont [5/16] %v6726, 128
        %6759 = vxpose.xlu0.b32.cont [6/16] %v6727, 128
        %6760 = vxpose.xlu0.b32.cont [7/16] %v6728, 128
        %6761 = vxpose.xlu0.b32.cont [8/16] %v6729, 128
        %6762 = vxpose.xlu0.b32.cont [9/16] %v6730, 128
        %6763 = vxpose.xlu0.b32.cont [10/16] %v6731, 128
        %6764 = vxpose.xlu0.b32.cont [11/16] %v6732, 128
        %6765 = vxpose.xlu0.b32.cont [12/16] %v6733, 128
        %6766 = vxpose.xlu0.b32.cont [13/16] %v6734, 128
        %6767 = vxpose.xlu0.b32.cont [14/16] %v6735, 128
        %6768 = vxpose.xlu0.b32.cont [15/16] %v6736, 128
        %6769 = vxpose.xlu0.b32.end [16/16] %v6737, 128
        %v6770 = vpop.trf.xlu0
        %v6771 = vpop.trf.xlu0
        %v6772 = vpop.trf.xlu0
        %v6773 = vpop.trf.xlu0
        %v6774 = vpop.trf.xlu0
        %v6775 = vpop.trf.xlu0
        %v6776 = vpop.trf.xlu0
        %v6777 = vpop.trf.xlu0
        %v6778 = vpop.trf.xlu0
        %v6779 = vpop.trf.xlu0
        %v6780 = vpop.trf.xlu0
        %v6781 = vpop.trf.xlu0
        %v6782 = vpop.trf.xlu0
        %v6783 = vpop.trf.xlu0
        %v6784 = vpop.trf.xlu0
        %v6785 = vpop.trf.xlu0
        %6786 = vxpose.xlu0.b32.start [1/16] %v6738, 128
        %6787 = vxpose.xlu0.b32.cont [2/16] %v6739, 128
        %6788 = vxpose.xlu0.b32.cont [3/16] %v6740, 128
        %6789 = vxpose.xlu0.b32.cont [4/16] %v6741, 128
        %6790 = vxpose.xlu0.b32.cont [5/16] %v6742, 128
        %6791 = vxpose.xlu0.b32.cont [6/16] %v6743, 128
        %6792 = vxpose.xlu0.b32.cont [7/16] %v6744, 128
        %6793 = vxpose.xlu0.b32.cont [8/16] %v6745, 128
        %6794 = vxpose.xlu0.b32.cont [9/16] %v6746, 128
        %6795 = vxpose.xlu0.b32.cont [10/16] %v6747, 128
        %6796 = vxpose.xlu0.b32.cont [11/16] %v6748, 128
        %6797 = vxpose.xlu0.b32.cont [12/16] %v6749, 128
        %6798 = vxpose.xlu0.b32.cont [13/16] %v6750, 128
        %6799 = vxpose.xlu0.b32.cont [14/16] %v6751, 128
        %6800 = vxpose.xlu0.b32.cont [15/16] %v6752, 128
        %6801 = vxpose.xlu0.b32.end [16/16] %v6753, 128
        %v6802 = vpop.trf.xlu0
        %v6803 = vpop.trf.xlu0
        %v6804 = vpop.trf.xlu0
        %v6805 = vpop.trf.xlu0
        %v6806 = vpop.trf.xlu0
        %v6807 = vpop.trf.xlu0
        %v6808 = vpop.trf.xlu0
        %v6809 = vpop.trf.xlu0
        %v6810 = vpop.trf.xlu0
        %v6811 = vpop.trf.xlu0
        %v6812 = vpop.trf.xlu0
        %v6813 = vpop.trf.xlu0
        %v6814 = vpop.trf.xlu0
        %v6815 = vpop.trf.xlu0
        %v6816 = vpop.trf.xlu0
        %v6817 = vpop.trf.xlu0
        %v6818 = vld [vmem:[%s493] sm:$0xff]
        %v6819 = vld [vmem:[%s493 + $0x8] sm:$0xff]
        %v6820 = vadd.f32 %v6818, %v6770
        %v6821 = vadd.f32 %v6819, %v6802
        %6822 = vst [vmem:[%s484] sm:$0xff] %v6820
        %6823 = vst [vmem:[%s484 + $0x8] sm:$0xff] %v6821
        %s6824 = sand.u32 %s301, 1
        %s6825 = scalar_lea.sflag [#allocation4], %s6824
        %s6826 = sand.u32 %s301, 1
        %s6827 = smul.addr %s6826, 16
        %s6828 = scalar_lea.vmem [#allocation8], %s6827
        // Predicated region
        $region77: #{tpu_custom_call.1} parent=63 // pred_check
          %p6829 = pneg %p311
        $region78: #{tpu_custom_call.1} parent=63 // pred_check_branch
          %6831 = sbr.rel (%p6829) target = $region80
        $region79: #{tpu_custom_call.1} parent=63 // pred_region
          %s6832 = smul.u32 2, %s34
          %s6834 = ssub.s32 256, 256
          %6835 = vsyncadd %s6825, %s6834
          %s6836 = smul.addr %s33, 2
          %s6837 = sadd.s32 %s6832, %s6836
          %s6838 = smul.addr %s6837, 128
          %s6839 = scalar_lea.hbm %s11, %s6838
          %s6841 = sshll.u32 %s6828, 4
          %s6842 = int_to_ptr.vmem [resolvable:$true] %s6841
          %6844 = dma.vmem_to_hbm [thread:$0]  %s6842, 256, %s6839, %s6825
        $region80: #{tpu_custom_call.1} parent=63 // pred_fallthru
          _
      $region64: #{tpu_custom_call.1} parent=5 // pred_fallthru
        _
      %p6845 = scmp.le.s32.totalorder 2, %s24
      // Predicated region
      $region81: #{tpu_custom_call.1} parent=5 // pred_check
        %p6846 = pneg %p6845
      $region82: #{tpu_custom_call.1} parent=5 // pred_check_branch
        %6848 = sbr.rel (%p6846) target = $region84
      $region83: #{tpu_custom_call.1} parent=5 // pred_region
        %s6849 = ssub.s32 %s24, 2
        // Predicated region
        $region85: #{tpu_custom_call.1} parent=83 // pred_check
          %p6850 = pneg %p317
        $region86: #{tpu_custom_call.1} parent=83 // pred_check_branch
          %6852 = sbr.rel (%p6850) target = $region88
        $region87: #{tpu_custom_call.1} parent=83 // pred_region
          %s6853 = sand.u32 %s302, 1
          %s6854 = scalar_lea.sflag [#allocation4], %s6853
          %s6855 = sand.u32 %s302, 1
          %s6856 = smul.addr %s6855, 16
          %s6857 = scalar_lea.vmem [#allocation8], %s6856
          %6858 = dma.done %s6854, 256
        $region88: #{tpu_custom_call.1} parent=83 // pred_fallthru
          _
      $region84: #{tpu_custom_call.1} parent=5 // pred_fallthru
        _
    $region6: #{tpu_custom_call.1} parent=1 // loop_footer
      %s28 = sadd.s32 1, %s24
    $region7: #{tpu_custom_call.1} parent=1 // loop_footer_branch
      %23 = sbr.rel target = $region3
    $region8: #{tpu_custom_call.1} parent=1 // loop_exit
      _
    %6859 = vsyncpa [#allocation3], 1
    %s6860 = scalar_lea.sflag [#allocation3], 1
    %6861 = vsyncpa %s6860, 1
    %6862 = vsyncpa [#allocation6], 1
    %6863 = vsyncpa [#allocation4], 1
    %s6864 = scalar_lea.sflag [#allocation4], 1
    %6865 = vsyncpa %s6864, 1

</llo_original>
